<compile_context>
chip_gen: v6e
topology: v6e:2x2x1
jax: 0.10.0
libtpu: 0.0.40
codegen_flags: <defaults>
</compile_context>

<pallas_src>
import math

import jax
import jax.numpy as jnp
from jax import lax
from jax.experimental import pallas as pl
from jax.experimental.pallas import tpu as pltpu

# ---------------------------------------------------------------- configuration
B = 2                                  # point clouds in the batch
NB = 64                                # points per cloud
C = 4                                  # input feature channels
RATIO = 0.5                            # fps ratio
R = 0.4                                # ball-query radius
K = 64                                 # max_num_neighbors
DIN = C + 3                            # concat[x_j, pos_j - pos_i]
DIN_PAD = DIN + 1                      # + constant-1 lane carrying the folded bias
H = 32                                 # MLP hidden width
H1 = H + 1                             # + ones row that carries b2 into layer 2
DOUT = 32                              # MLP output width
M_PER = int(math.ceil(RATIO * NB))     # sampled centers per cloud
M = B * M_PER                          # total sampled centers
E = K * M                              # total (padded) edges
P = B * NB                             # total points (gather-table width)


# ------------------------------------------------------------------ Pallas kernel
def _sa_conv_kernel(nsrc_ref, csrc_ref, nidx_ref, cidx_ref, mask_ref,
                    w1t_ref, w2t_ref, out_ref):
    """In-kernel edge gather (one-hot MXU matmul) + 2-layer MLP + masked K-max.

    nsrc_ref : (DIN_PAD, P) bf16  = [x^T ; pos^T ; 1]   (neighbor source table)
    csrc_ref : (DIN_PAD, P) bf16  = [0   ; pos^T ; 0]   (center-subtraction table)
    nidx_ref : (1, E) int32       global neighbor index per edge lane (k-major)
    cidx_ref : (1, E) int32       global center   index per edge lane
    mask_ref : (1, E) f32         1.0 for valid edges, 0.0 for padding
    w1t_ref  : (H1, DIN_PAD) bf16 (b1 folded on ones lane; row H = ones-lane pass-through)
    w2t_ref  : (DOUT, H1)    bf16 (b2 folded into last column)
    out_ref  : (DOUT, 2*M)   f32  (one halving step short of the full K-max)
    """
    # ---- one-hot selection matrices (VPU) -------------------------------------
    pid = lax.broadcasted_iota(jnp.int32, (P, E), 0)          # point id per sublane
    sel_n = jnp.where(pid == nidx_ref[...], 1.0, 0.0).astype(jnp.bfloat16)  # (P, E)
    sel_c = jnp.where(pid == cidx_ref[...], 1.0, 0.0).astype(jnp.bfloat16)  # (P, E)

    # ---- edge-feature gather on the MXU ----------------------------------------
    # feat = [x_j ; pos_j ; 1] - [0 ; pos_i ; 0]  (exact: one 1.0 per column, f32 acc)
    feat = (jnp.dot(nsrc_ref[...], sel_n, preferred_element_type=jnp.float32)
            - jnp.dot(csrc_ref[...], sel_c, preferred_element_type=jnp.float32))

    # ---- layer 1: bf16 x bf16 -> f32 (b1 via the ones lane) ---------------------
    h = jnp.dot(w1t_ref[...], feat.astype(jnp.bfloat16),
                preferred_element_type=jnp.float32)            # (H1, E)
    h = jnp.maximum(h, 0.0)                                    # row H stays exactly 1.0

    # ---- layer 2: bf16 x bf16 -> f32 (b2 via the ones row; no bias add pass) ----
    h = jnp.dot(w2t_ref[...], h.astype(jnp.bfloat16),
                preferred_element_type=jnp.float32)            # (DOUT, E)
    h = jnp.maximum(h, 0.0)

    # Invalid edges -> 0.  Post-ReLU h >= 0 and every center lies inside its own
    # radius ball (self-edge always valid), so max over (h * mask) == max over the
    # valid edges only.
    h = h * mask_ref[...]

    # Max over the K neighbors of each center: lane-halving tree.  With the k-major
    # edge ordering (lane = k*M + i) each halving pairs the same center at two
    # different k.  Stop at 2*M (=128) lanes so the store stays lane-dense/unmasked.
    e = h.shape[-1]
    while e > 2 * M:
        half = e // 2
        h = jnp.maximum(h[:, :half], h[:, half:])
        e = half
    out_ref[...] = h                                           # (DOUT, 128)


def pointnet_conv_pallas(nsrc, csrc, nidx, cidx, mask_km, w1t, w2t):
    """Runs the single-step SA-conv kernel; returns (DOUT, 2*M) f32."""
    flops = 2 * E * (2 * DIN_PAD * P + DIN_PAD * H1 + H1 * DOUT)
    bytes_accessed = (2 * DIN_PAD * P * 2 + 3 * E * 4
                      + H1 * DIN_PAD * 2 + DOUT * H1 * 2 + DOUT * 2 * M * 4)
    return pl.pallas_call(
        _sa_conv_kernel,
        out_shape=jax.ShapeDtypeStruct((DOUT, 2 * M), jnp.float32),
        grid_spec=pltpu.PrefetchScalarGridSpec(
            num_scalar_prefetch=0,
            grid=(1,),                       # whole problem in one grid step
            in_specs=[
                pl.BlockSpec((DIN_PAD, P), lambda i: (0, 0)),
                pl.BlockSpec((DIN_PAD, P), lambda i: (0, 0)),
                pl.BlockSpec((1, E), lambda i: (0, 0)),
                pl.BlockSpec((1, E), lambda i: (0, 0)),
                pl.BlockSpec((1, E), lambda i: (0, 0)),
                pl.BlockSpec((H1, DIN_PAD), lambda i: (0, 0)),
                pl.BlockSpec((DOUT, H1), lambda i: (0, 0)),
            ],
            out_specs=pl.BlockSpec((DOUT, 2 * M), lambda i: (0, 0)),
        ),
        compiler_params=pltpu.CompilerParams(
            dimension_semantics=("arbitrary",),
            vmem_limit_bytes=32 * 1024 * 1024),   # headroom for one-hot temporaries
        cost_estimate=pl.CostEstimate(flops=flops, transcendentals=0,
                                      bytes_accessed=bytes_accessed),
    )(nsrc, csrc, nidx, cidx, mask_km, w1t, w2t)


# -------------------------------------------------------------------- plain-JAX glue
def _fps_one(pos, m):
    """Farthest-point sampling on one cloud (deterministic start at index 0).
    TODO(synk): torch_geometric fps defaults to random_start=True."""
    nb = pos.shape[0]

    def step(carry, _):
        min_d, last = carry
        d = jnp.sum((pos - pos[last]) ** 2, axis=-1)
        min_d = jnp.minimum(min_d, d)
        nxt = jnp.argmax(min_d).astype(jnp.int32)
        return (min_d, nxt), last

    init = (jnp.full((nb,), jnp.inf, dtype=pos.dtype), jnp.int32(0))
    _, idxs = lax.scan(step, init, None, length=m)
    return idxs  # (m,)


def _pack_params(w1, b1, w2, b2):
    """Pack MLP params (Linear(DIN,H)->ReLU->Linear(H,DOUT)->ReLU) into the kernel
    layout: w1^T with b1 folded onto the constant-1 feature lane plus a pass-through
    row for that lane; w2^T with b2 folded into the extra column."""
    w1t = jnp.zeros((H1, DIN_PAD), jnp.float32)
    w1t = w1t.at[:H, :DIN].set(w1.T)
    w1t = w1t.at[:H, DIN_PAD - 1].set(b1)
    w1t = w1t.at[H, DIN_PAD - 1].set(1.0)        # carries the ones lane into layer 2
    w2t = jnp.zeros((DOUT, H1), jnp.float32)
    w2t = w2t.at[:, :H].set(w2.T)
    w2t = w2t.at[:, H].set(b2)                   # b2 rides the guaranteed-1.0 row
    return w1t.astype(jnp.bfloat16), w2t.astype(jnp.bfloat16)


def _build_graph(x, pos):
    """FPS + radius neighbor search; emits only tiny index/mask vectors and the two
    (DIN_PAD, P) source tables -- the (DIN_PAD, E) edge slab is built in-kernel."""
    pos_b = pos.reshape(B, NB, 3)

    # ---- farthest point sampling (per cloud) ----
    idx_local = jax.vmap(lambda p: _fps_one(p, M_PER))(pos_b)               # (B, m)
    centers = pos_b[jnp.arange(B)[:, None], idx_local]                      # (B, m, 3)

    # ---- radius neighbor search: first K in-index-order neighbors within r ----
    # TODO(synk): torch_cluster truncation order for >K in-ball points is unspecified;
    # benign here because K == NB.
    d2 = jnp.sum((centers[:, :, None, :] - pos_b[:, None, :, :]) ** 2, -1)  # (B, m, NB)
    key = jnp.where(d2 <= R * R, jnp.arange(NB)[None, None, :], NB)         # invalid -> NB
    order = jnp.argsort(key, axis=-1)[:, :, :K]                             # (B, m, K)
    mask = (jnp.take_along_axis(key, order, axis=-1) < NB)                  # (B, m, K)
    neigh_global = order + (jnp.arange(B) * NB)[:, None, None]              # (B, m, K)

    idx_global = (idx_local + (jnp.arange(B) * NB)[:, None]).reshape(M)
    batch_vec = jnp.repeat(jnp.arange(B, dtype=jnp.int32), NB)

    # ---- k-major (lane = k*M + i) index / mask vectors for the kernel ----
    nidx = neigh_global.reshape(M, K).T.reshape(1, E).astype(jnp.int32)
    cidx = jnp.tile(idx_global.reshape(1, M), (1, K)).astype(jnp.int32)
    mask_km = mask.reshape(M, K).T.reshape(1, E).astype(jnp.float32)

    # ---- tiny channels-major source tables for the in-kernel one-hot gather ----
    nsrc = jnp.concatenate(
        [x.T, pos.T, jnp.ones((1, P), jnp.float32)], axis=0).astype(jnp.bfloat16)
    csrc = jnp.concatenate(
        [jnp.zeros((C, P), jnp.float32), pos.T, jnp.zeros((1, P), jnp.float32)],
        axis=0).astype(jnp.bfloat16)

    return nsrc, csrc, nidx, cidx, mask_km, idx_global, batch_vec


def sa_module_forward(x, pos, params):
    """x: (B*NB, C) f32, pos: (B*NB, 3) f32, params = (w1, b1, w2, b2)."""
    w1t, w2t = _pack_params(*params)
    nsrc, csrc, nidx, cidx, mask_km, idx_global, batch_vec = _build_graph(x, pos)
    out2 = pointnet_conv_pallas(nsrc, csrc, nidx, cidx, mask_km, w1t, w2t)   # (DOUT, 2*M)
    out_x = jnp.max(out2.reshape(DOUT, 2, M), axis=1).T                      # (M, DOUT)
    return out_x, pos[idx_global], batch_vec[idx_global]


def sa_module_reference(x, pos, params):
    """Pure-JAX reference: same graph construction / packed weights, but explicit
    gather and f32 HIGHEST matmuls end to end."""
    w1t, w2t = _pack_params(*params)
    nsrc, csrc, nidx, cidx, mask_km, idx_global, batch_vec = _build_graph(x, pos)
    nsrc_f = nsrc.astype(jnp.float32)
    csrc_f = csrc.astype(jnp.float32)
    feat = nsrc_f[:, nidx[0]] - csrc_f[:, cidx[0]]                           # (DIN_PAD, E)
    h = jnp.maximum(jnp.dot(w1t.astype(jnp.float32), feat,
                            precision=lax.Precision.HIGHEST), 0.0)
    h = jnp.maximum(jnp.dot(w2t.astype(jnp.float32), h,
                            precision=lax.Precision.HIGHEST), 0.0)
    h = h * mask_km
    out_x = jnp.max(h.reshape(DOUT, K, M), axis=1).T                         # (M, DOUT)
    return out_x, pos[idx_global], batch_vec[idx_global]


# ---------------------------------------------------------------------------- main
if __name__ == "__main__":
    key = jax.random.PRNGKey(0)
    kx, kp, k1, k2, k3, k4 = jax.random.split(key, 6)

    x = jax.random.normal(kx, (B * NB, C), dtype=jnp.float32)
    pos = jax.random.uniform(kp, (B * NB, 3), dtype=jnp.float32)

    # local_nn of PointNetConv: Linear(7->32) -> ReLU -> Linear(32->32) -> ReLU
    w1 = jax.random.normal(k1, (DIN, H), dtype=jnp.float32) * 0.1
    b1 = jax.random.normal(k2, (H,), dtype=jnp.float32) * 0.1
    w2 = jax.random.normal(k3, (H, DOUT), dtype=jnp.float32) * 0.1
    b2 = jax.random.normal(k4, (DOUT,), dtype=jnp.float32) * 0.1
    params = (w1, b1, w2, b2)

    out_x, out_pos, out_batch = jax.jit(sa_module_forward)(x, pos, params)
    jax.block_until_ready((out_x, out_pos, out_batch))

    ref_x, ref_pos, ref_batch = jax.jit(sa_module_reference)(x, pos, params)
    jax.block_until_ready((ref_x, ref_pos, ref_batch))

    assert out_x.shape == (M, DOUT)
    assert out_pos.shape == (M, 3)
    assert out_batch.shape == (M,)
    # Tolerance covers bf16 MXU accumulation + the bf16 cast of the layer-1
    # activation vs the f32-HIGHEST reference (H=32 contraction).
    assert jnp.allclose(out_x, ref_x, atol=2e-2, rtol=2e-2)
    assert jnp.array_equal(out_pos, ref_pos)
    assert jnp.array_equal(out_batch, ref_batch)

    print("KERNEL_OK")
</pallas_src>

<mosaic_0001>
module attributes {stable_mosaic.version = 11 : i64} {
  func.func @_sa_conv_kernel(%arg0: i32, %arg1: memref<8x128xbf16, #tpu.memory_space<vmem>>, %arg2: memref<8x128xbf16, #tpu.memory_space<vmem>>, %arg3: memref<1x4096xi32, #tpu.memory_space<vmem>>, %arg4: memref<1x4096xi32, #tpu.memory_space<vmem>>, %arg5: memref<1x4096xf32, #tpu.memory_space<vmem>>, %arg6: memref<33x8xbf16, #tpu.memory_space<vmem>>, %arg7: memref<32x33xbf16, #tpu.memory_space<vmem>>, %arg8: memref<32x128xf32, #tpu.memory_space<vmem>>) attributes {dimension_semantics = [#tpu.dimension_semantics<arbitrary>], iteration_bounds = array<i64: 1>, scalar_prefetch = 0 : i64, scratch_operands = 0 : i64, tpu.core_type = #tpu.core_type<tc>, window_params = [{pipeline_mode = #tpu.pipeline_mode<synchronous>, transform_indices = @transform_0, window_bounds = array<i64: 8, 128>}, {pipeline_mode = #tpu.pipeline_mode<synchronous>, transform_indices = @transform_1, window_bounds = array<i64: 8, 128>}, {pipeline_mode = #tpu.pipeline_mode<synchronous>, transform_indices = @transform_2, window_bounds = array<i64: 1, 4096>}, {pipeline_mode = #tpu.pipeline_mode<synchronous>, transform_indices = @transform_3, window_bounds = array<i64: 1, 4096>}, {pipeline_mode = #tpu.pipeline_mode<synchronous>, transform_indices = @transform_4, window_bounds = array<i64: 1, 4096>}, {pipeline_mode = #tpu.pipeline_mode<synchronous>, transform_indices = @transform_5, window_bounds = array<i64: 33, 8>}, {pipeline_mode = #tpu.pipeline_mode<synchronous>, transform_indices = @transform_6, window_bounds = array<i64: 32, 33>}, {pipeline_mode = #tpu.pipeline_mode<synchronous>, transform_indices = @transform_7, window_bounds = array<i64: 32, 128>}]} {
    %0 = tpu.iota {dimensions = array<i32: 0>} : vector<128x4096xi32>
    %c0 = arith.constant 0 : index
    %c0_0 = arith.constant 0 : index
    %1 = vector.load %arg3[%c0, %c0_0] : memref<1x4096xi32, #tpu.memory_space<vmem>>, vector<1x4096xi32>
    %2 = vector.broadcast %1 : vector<1x4096xi32> to vector<128x4096xi32>
    %3 = arith.cmpi eq, %0, %2 : vector<128x4096xi32>
    %cst = arith.constant 1.000000e+00 : f32
    %cst_1 = arith.constant 0.000000e+00 : f32
    %4 = vector.broadcast %cst : f32 to vector<128x4096xf32>
    %5 = vector.broadcast %cst_1 : f32 to vector<128x4096xf32>
    %6 = arith.select %3, %4, %5 : vector<128x4096xi1>, vector<128x4096xf32>
    %7 = arith.truncf %6 : vector<128x4096xf32> to vector<128x4096xbf16>
    %c0_2 = arith.constant 0 : index
    %c0_3 = arith.constant 0 : index
    %8 = vector.load %arg4[%c0_2, %c0_3] : memref<1x4096xi32, #tpu.memory_space<vmem>>, vector<1x4096xi32>
    %9 = vector.broadcast %8 : vector<1x4096xi32> to vector<128x4096xi32>
    %10 = arith.cmpi eq, %0, %9 : vector<128x4096xi32>
    %cst_4 = arith.constant 1.000000e+00 : f32
    %cst_5 = arith.constant 0.000000e+00 : f32
    %11 = vector.broadcast %cst_4 : f32 to vector<128x4096xf32>
    %12 = vector.broadcast %cst_5 : f32 to vector<128x4096xf32>
    %13 = arith.select %10, %11, %12 : vector<128x4096xi1>, vector<128x4096xf32>
    %14 = arith.truncf %13 : vector<128x4096xf32> to vector<128x4096xbf16>
    %c0_6 = arith.constant 0 : index
    %c0_7 = arith.constant 0 : index
    %15 = vector.load %arg1[%c0_6, %c0_7] : memref<8x128xbf16, #tpu.memory_space<vmem>>, vector<8x128xbf16>
    %cst_8 = arith.constant dense<0.000000e+00> : vector<8x4096xf32>
    %16 = tpu.matmul %15, %7, %cst_8 {dimension_numbers = #tpu.dot_dimension_numbers<[1], [0], [0], [1], [0, 0, 1, 1], [], []>} : vector<8x128xbf16>, vector<128x4096xbf16>, vector<8x4096xf32> -> vector<8x4096xf32>
    %c0_9 = arith.constant 0 : index
    %c0_10 = arith.constant 0 : index
    %17 = vector.load %arg2[%c0_9, %c0_10] : memref<8x128xbf16, #tpu.memory_space<vmem>>, vector<8x128xbf16>
    %cst_11 = arith.constant dense<0.000000e+00> : vector<8x4096xf32>
    %18 = tpu.matmul %17, %14, %cst_11 {dimension_numbers = #tpu.dot_dimension_numbers<[1], [0], [0], [1], [0, 0, 1, 1], [], []>} : vector<8x128xbf16>, vector<128x4096xbf16>, vector<8x4096xf32> -> vector<8x4096xf32>
    %19 = arith.subf %16, %18 : vector<8x4096xf32>
    %c0_12 = arith.constant 0 : index
    %c0_13 = arith.constant 0 : index
    %20 = vector.load %arg6[%c0_12, %c0_13] : memref<33x8xbf16, #tpu.memory_space<vmem>>, vector<33x8xbf16>
    %21 = arith.truncf %19 : vector<8x4096xf32> to vector<8x4096xbf16>
    %cst_14 = arith.constant dense<0.000000e+00> : vector<33x4096xf32>
    %22 = tpu.matmul %20, %21, %cst_14 {dimension_numbers = #tpu.dot_dimension_numbers<[1], [0], [0], [1], [0, 0, 1, 1], [], []>} : vector<33x8xbf16>, vector<8x4096xbf16>, vector<33x4096xf32> -> vector<33x4096xf32>
    %cst_15 = arith.constant 0.000000e+00 : f32
    %23 = vector.broadcast %cst_15 : f32 to vector<33x4096xf32>
    %24 = arith.maximumf %22, %23 : vector<33x4096xf32>
    %c0_16 = arith.constant 0 : index
    %c0_17 = arith.constant 0 : index
    %25 = vector.load %arg7[%c0_16, %c0_17] : memref<32x33xbf16, #tpu.memory_space<vmem>>, vector<32x33xbf16>
    %26 = arith.truncf %24 : vector<33x4096xf32> to vector<33x4096xbf16>
    %cst_18 = arith.constant dense<0.000000e+00> : vector<32x4096xf32>
    %27 = tpu.matmul %25, %26, %cst_18 {dimension_numbers = #tpu.dot_dimension_numbers<[1], [0], [0], [1], [0, 0, 1, 1], [], []>} : vector<32x33xbf16>, vector<33x4096xbf16>, vector<32x4096xf32> -> vector<32x4096xf32>
    %cst_19 = arith.constant 0.000000e+00 : f32
    %28 = vector.broadcast %cst_19 : f32 to vector<32x4096xf32>
    %29 = arith.maximumf %27, %28 : vector<32x4096xf32>
    %c0_20 = arith.constant 0 : index
    %c0_21 = arith.constant 0 : index
    %30 = vector.load %arg5[%c0_20, %c0_21] : memref<1x4096xf32, #tpu.memory_space<vmem>>, vector<1x4096xf32>
    %31 = vector.broadcast %30 : vector<1x4096xf32> to vector<32x4096xf32>
    %32 = arith.mulf %29, %31 : vector<32x4096xf32>
    %33 = vector.extract_strided_slice %32 {offsets = [0, 0], sizes = [32, 2048], strides = [1, 1]} : vector<32x4096xf32> to vector<32x2048xf32>
    %34 = vector.extract_strided_slice %32 {offsets = [0, 2048], sizes = [32, 2048], strides = [1, 1]} : vector<32x4096xf32> to vector<32x2048xf32>
    %35 = arith.maximumf %33, %34 : vector<32x2048xf32>
    %36 = vector.extract_strided_slice %35 {offsets = [0, 0], sizes = [32, 1024], strides = [1, 1]} : vector<32x2048xf32> to vector<32x1024xf32>
    %37 = vector.extract_strided_slice %35 {offsets = [0, 1024], sizes = [32, 1024], strides = [1, 1]} : vector<32x2048xf32> to vector<32x1024xf32>
    %38 = arith.maximumf %36, %37 : vector<32x1024xf32>
    %39 = vector.extract_strided_slice %38 {offsets = [0, 0], sizes = [32, 512], strides = [1, 1]} : vector<32x1024xf32> to vector<32x512xf32>
    %40 = vector.extract_strided_slice %38 {offsets = [0, 512], sizes = [32, 512], strides = [1, 1]} : vector<32x1024xf32> to vector<32x512xf32>
    %41 = arith.maximumf %39, %40 : vector<32x512xf32>
    %42 = vector.extract_strided_slice %41 {offsets = [0, 0], sizes = [32, 256], strides = [1, 1]} : vector<32x512xf32> to vector<32x256xf32>
    %43 = vector.extract_strided_slice %41 {offsets = [0, 256], sizes = [32, 256], strides = [1, 1]} : vector<32x512xf32> to vector<32x256xf32>
    %44 = arith.maximumf %42, %43 : vector<32x256xf32>
    %45 = vector.extract_strided_slice %44 {offsets = [0, 0], sizes = [32, 128], strides = [1, 1]} : vector<32x256xf32> to vector<32x128xf32>
    %46 = vector.extract_strided_slice %44 {offsets = [0, 128], sizes = [32, 128], strides = [1, 1]} : vector<32x256xf32> to vector<32x128xf32>
    %47 = arith.maximumf %45, %46 : vector<32x128xf32>
    %c0_22 = arith.constant 0 : index
    %c0_23 = arith.constant 0 : index
    %48 = vector.load %arg8[%c0_22, %c0_23] : memref<32x128xf32, #tpu.memory_space<vmem>>, vector<32x128xf32>
    tpu.vector_store %arg8[%c0_22, %c0_23], %47 {strides = array<i32>} : memref<32x128xf32, #tpu.memory_space<vmem>>, vector<32x128xf32>,
    return
  }
  func.func @transform_0(%arg0: i32) -> (i32, i32) {
    %c0_i32 = arith.constant 0 : i32
    %c0_i32_0 = arith.constant 0 : i32
    %c0_i32_1 = arith.constant 0 : i32
    return %c0_i32, %c0_i32_0 : i32, i32
  }
  func.func @transform_1(%arg0: i32) -> (i32, i32) {
    %c0_i32 = arith.constant 0 : i32
    %c0_i32_0 = arith.constant 0 : i32
    %c0_i32_1 = arith.constant 0 : i32
    return %c0_i32, %c0_i32_0 : i32, i32
  }
  func.func @transform_2(%arg0: i32) -> (i32, i32) {
    %c0_i32 = arith.constant 0 : i32
    %c0_i32_0 = arith.constant 0 : i32
    %c0_i32_1 = arith.constant 0 : i32
    return %c0_i32, %c0_i32_0 : i32, i32
  }
  func.func @transform_3(%arg0: i32) -> (i32, i32) {
    %c0_i32 = arith.constant 0 : i32
    %c0_i32_0 = arith.constant 0 : i32
    %c0_i32_1 = arith.constant 0 : i32
    return %c0_i32, %c0_i32_0 : i32, i32
  }
  func.func @transform_4(%arg0: i32) -> (i32, i32) {
    %c0_i32 = arith.constant 0 : i32
    %c0_i32_0 = arith.constant 0 : i32
    %c0_i32_1 = arith.constant 0 : i32
    return %c0_i32, %c0_i32_0 : i32, i32
  }
  func.func @transform_5(%arg0: i32) -> (i32, i32) {
    %c0_i32 = arith.constant 0 : i32
    %c0_i32_0 = arith.constant 0 : i32
    %c0_i32_1 = arith.constant 0 : i32
    return %c0_i32, %c0_i32_0 : i32, i32
  }
  func.func @transform_6(%arg0: i32) -> (i32, i32) {
    %c0_i32 = arith.constant 0 : i32
    %c0_i32_0 = arith.constant 0 : i32
    %c0_i32_1 = arith.constant 0 : i32
    return %c0_i32, %c0_i32_0 : i32, i32
  }
  func.func @transform_7(%arg0: i32) -> (i32, i32) {
    %c0_i32 = arith.constant 0 : i32
    %c0_i32_0 = arith.constant 0 : i32
    %c0_i32_1 = arith.constant 0 : i32
    return %c0_i32, %c0_i32_0 : i32, i32
  }
}

</mosaic_0001>

<llo_original>
// kernel: custom-call.6
$region0: #{custom-call.6}
  %s0 = inlined_call_operand.vmem [shape: f32[2,64], index: 0, kind: output, shape index: {}]

// kernel: custom-call.12
$region0: #{custom-call.12}
  %s0 = inlined_call_operand.vmem [shape: s32[32,2], index: 0, kind: output, shape index: {}]

// kernel: sa_module_forward.1
$region0: #{sa_module_forward.1}
  #allocation0 [shape = 'u32[]', space=smem, size = 0x4, offset = 0x4, fixed_abs, tag = 'smem constant byte address 0x4 - core index']
  #allocation1 [shape = 'u32[144,128]{1,0:T(1,128)}', space=vmem, size = 0x12000, scoped, tag = 'internal scratch']
  %s0 = inlined_call_operand.vmem [shape: bf16[8,128], index: 0, kind: input, shape index: {}]
  %s1 = inlined_call_operand.vmem [shape: bf16[8,128], index: 1, kind: input, shape index: {}]
  %s2 = inlined_call_operand.vmem [shape: s32[1,4096], index: 2, kind: input, shape index: {}]
  %s3 = inlined_call_operand.vmem [shape: s32[1,4096], index: 3, kind: input, shape index: {}]
  %s4 = inlined_call_operand.vmem [shape: f32[1,4096], index: 4, kind: input, shape index: {}]
  %s5 = inlined_call_operand.vmem [shape: bf16[33,8], index: 5, kind: input, shape index: {}]
  %s6 = inlined_call_operand.vmem [shape: bf16[32,33], index: 6, kind: input, shape index: {}]
  %s7 = inlined_call_operand.vmem [shape: f32[32,128], index: 7, kind: output, shape index: {}]
  %s8 = sld [smem:[#allocation0]]
  $region38: #{sa_module_forward.1} parent=0
    _
  %s10 = ssub.s32 1, %s8
  %s11 = scalar_select 0, %s10, %s8
  // Predicated region
  $region2: #{sa_module_forward.1} parent=0 // pred_check
    _
  $region3: #{sa_module_forward.1} parent=0 // pred_check_branch
    %13 = sbr.rel (0) target = $region5
  $region4: #{sa_module_forward.1} parent=0 // pred_region
    _
  $region5: #{sa_module_forward.1} parent=0 // pred_fallthru
    _
  // Predicated region
  $region6: #{sa_module_forward.1} parent=0 // pred_check
    _
  $region7: #{sa_module_forward.1} parent=0 // pred_check_branch
    %15 = sbr.rel (0) target = $region9
  $region8: #{sa_module_forward.1} parent=0 // pred_region
    _
  $region9: #{sa_module_forward.1} parent=0 // pred_fallthru
    _
  // Predicated region
  $region10: #{sa_module_forward.1} parent=0 // pred_check
    _
  $region11: #{sa_module_forward.1} parent=0 // pred_check_branch
    %17 = sbr.rel (0) target = $region13
  $region12: #{sa_module_forward.1} parent=0 // pred_region
    _
  $region13: #{sa_module_forward.1} parent=0 // pred_fallthru
    _
  // Predicated region
  $region14: #{sa_module_forward.1} parent=0 // pred_check
    _
  $region15: #{sa_module_forward.1} parent=0 // pred_check_branch
    %19 = sbr.rel (0) target = $region17
  $region16: #{sa_module_forward.1} parent=0 // pred_region
    _
  $region17: #{sa_module_forward.1} parent=0 // pred_fallthru
    _
  // Predicated region
  $region18: #{sa_module_forward.1} parent=0 // pred_check
    _
  $region19: #{sa_module_forward.1} parent=0 // pred_check_branch
    %21 = sbr.rel (0) target = $region21
  $region20: #{sa_module_forward.1} parent=0 // pred_region
    _
  $region21: #{sa_module_forward.1} parent=0 // pred_fallthru
    _
  // Predicated region
  $region22: #{sa_module_forward.1} parent=0 // pred_check
    _
  $region23: #{sa_module_forward.1} parent=0 // pred_check_branch
    %23 = sbr.rel (0) target = $region25
  $region24: #{sa_module_forward.1} parent=0 // pred_region
    _
  $region25: #{sa_module_forward.1} parent=0 // pred_fallthru
    _
  // Predicated region
  $region26: #{sa_module_forward.1} parent=0 // pred_check
    _
  $region27: #{sa_module_forward.1} parent=0 // pred_check_branch
    %25 = sbr.rel (0) target = $region29
  $region28: #{sa_module_forward.1} parent=0 // pred_region
    _
  $region29: #{sa_module_forward.1} parent=0 // pred_fallthru
    _
  %v27 = vlaneseq
  %v28 = vshrl.u32 %v27, 7
  %v29 = vadd.s32 %v28, 8
  %v30 = vadd.s32 %v28, 16
  %v31 = vadd.s32 %v28, 24
  %v32 = vadd.s32 %v28, 32
  %v33 = vadd.s32 %v28, 40
  %v34 = vadd.s32 %v28, 48
  %v35 = vadd.s32 %v28, 56
  %v36 = vadd.s32 %v28, 64
  %v37 = vadd.s32 %v28, 72
  %v38 = vadd.s32 %v28, 80
  %v39 = vadd.s32 %v28, 88
  %v40 = vadd.s32 %v28, 96
  %v41 = vadd.s32 %v28, 104
  %v42 = vadd.s32 %v28, 112
  %v43 = vadd.s32 %v28, 120
  %v44 = vld [vmem:[%s2] sm:$0xff]
  %v45 = vld [vmem:[%s2 + $0x8] sm:$0xff]
  %v46 = vld [vmem:[%s2 + $0x10] sm:$0xff]
  %v47 = vld [vmem:[%s2 + $0x18] sm:$0xff]
  %v48 = vlaneseq
  %v49 = vshrl.u32 %v48, 7
  %v50 = vsub.s32 0, %v49
  %v51 = vrot.slane %v44, %v50
  %v52 = vlaneseq
  %v53 = vshrl.u32 %v52, 7
  %v54 = vsub.s32 1, %v53
  %v55 = vrot.slane %v44, %v54
  %v56 = vlaneseq
  %v57 = vshrl.u32 %v56, 7
  %v58 = vsub.s32 2, %v57
  %v59 = vrot.slane %v44, %v58
  %v60 = vlaneseq
  %v61 = vshrl.u32 %v60, 7
  %v62 = vsub.s32 3, %v61
  %v63 = vrot.slane %v44, %v62
  %v64 = vlaneseq
  %v65 = vshrl.u32 %v64, 7
  %v66 = vsub.s32 4, %v65
  %v67 = vrot.slane %v44, %v66
  %v68 = vlaneseq
  %v69 = vshrl.u32 %v68, 7
  %v70 = vsub.s32 5, %v69
  %v71 = vrot.slane %v44, %v70
  %v72 = vlaneseq
  %v73 = vshrl.u32 %v72, 7
  %v74 = vsub.s32 6, %v73
  %v75 = vrot.slane %v44, %v74
  %v76 = vlaneseq
  %v77 = vshrl.u32 %v76, 7
  %v78 = vsub.s32 7, %v77
  %v79 = vrot.slane %v44, %v78
  %v80 = vlaneseq
  %v81 = vshrl.u32 %v80, 7
  %v82 = vsub.s32 0, %v81
  %v83 = vrot.slane %v45, %v82
  %v84 = vlaneseq
  %v85 = vshrl.u32 %v84, 7
  %v86 = vsub.s32 1, %v85
  %v87 = vrot.slane %v45, %v86
  %v88 = vlaneseq
  %v89 = vshrl.u32 %v88, 7
  %v90 = vsub.s32 2, %v89
  %v91 = vrot.slane %v45, %v90
  %v92 = vlaneseq
  %v93 = vshrl.u32 %v92, 7
  %v94 = vsub.s32 3, %v93
  %v95 = vrot.slane %v45, %v94
  %v96 = vlaneseq
  %v97 = vshrl.u32 %v96, 7
  %v98 = vsub.s32 4, %v97
  %v99 = vrot.slane %v45, %v98
  %v100 = vlaneseq
  %v101 = vshrl.u32 %v100, 7
  %v102 = vsub.s32 5, %v101
  %v103 = vrot.slane %v45, %v102
  %v104 = vlaneseq
  %v105 = vshrl.u32 %v104, 7
  %v106 = vsub.s32 6, %v105
  %v107 = vrot.slane %v45, %v106
  %v108 = vlaneseq
  %v109 = vshrl.u32 %v108, 7
  %v110 = vsub.s32 7, %v109
  %v111 = vrot.slane %v45, %v110
  %v112 = vlaneseq
  %v113 = vshrl.u32 %v112, 7
  %v114 = vsub.s32 0, %v113
  %v115 = vrot.slane %v46, %v114
  %v116 = vlaneseq
  %v117 = vshrl.u32 %v116, 7
  %v118 = vsub.s32 1, %v117
  %v119 = vrot.slane %v46, %v118
  %v120 = vlaneseq
  %v121 = vshrl.u32 %v120, 7
  %v122 = vsub.s32 2, %v121
  %v123 = vrot.slane %v46, %v122
  %v124 = vlaneseq
  %v125 = vshrl.u32 %v124, 7
  %v126 = vsub.s32 3, %v125
  %v127 = vrot.slane %v46, %v126
  %v128 = vlaneseq
  %v129 = vshrl.u32 %v128, 7
  %v130 = vsub.s32 4, %v129
  %v131 = vrot.slane %v46, %v130
  %v132 = vlaneseq
  %v133 = vshrl.u32 %v132, 7
  %v134 = vsub.s32 5, %v133
  %v135 = vrot.slane %v46, %v134
  %v136 = vlaneseq
  %v137 = vshrl.u32 %v136, 7
  %v138 = vsub.s32 6, %v137
  %v139 = vrot.slane %v46, %v138
  %v140 = vlaneseq
  %v141 = vshrl.u32 %v140, 7
  %v142 = vsub.s32 7, %v141
  %v143 = vrot.slane %v46, %v142
  %v144 = vlaneseq
  %v145 = vshrl.u32 %v144, 7
  %v146 = vsub.s32 0, %v145
  %v147 = vrot.slane %v47, %v146
  %v148 = vlaneseq
  %v149 = vshrl.u32 %v148, 7
  %v150 = vsub.s32 1, %v149
  %v151 = vrot.slane %v47, %v150
  %v152 = vlaneseq
  %v153 = vshrl.u32 %v152, 7
  %v154 = vsub.s32 2, %v153
  %v155 = vrot.slane %v47, %v154
  %v156 = vlaneseq
  %v157 = vshrl.u32 %v156, 7
  %v158 = vsub.s32 3, %v157
  %v159 = vrot.slane %v47, %v158
  %v160 = vlaneseq
  %v161 = vshrl.u32 %v160, 7
  %v162 = vsub.s32 4, %v161
  %v163 = vrot.slane %v47, %v162
  %v164 = vlaneseq
  %v165 = vshrl.u32 %v164, 7
  %v166 = vsub.s32 5, %v165
  %v167 = vrot.slane %v47, %v166
  %v168 = vlaneseq
  %v169 = vshrl.u32 %v168, 7
  %v170 = vsub.s32 6, %v169
  %v171 = vrot.slane %v47, %v170
  %v172 = vlaneseq
  %v173 = vshrl.u32 %v172, 7
  %v174 = vsub.s32 7, %v173
  %v175 = vrot.slane %v47, %v174
  %vm176 = vcmp.eq.s32.totalorder %v28, %v51
  %vm177 = vcmp.eq.s32.totalorder %v28, %v55
  %vm178 = vcmp.eq.s32.totalorder %v28, %v59
  %vm179 = vcmp.eq.s32.totalorder %v28, %v63
  %vm180 = vcmp.eq.s32.totalorder %v28, %v67
  %vm181 = vcmp.eq.s32.totalorder %v28, %v71
  %vm182 = vcmp.eq.s32.totalorder %v28, %v75
  %vm183 = vcmp.eq.s32.totalorder %v28, %v79
  %vm184 = vcmp.eq.s32.totalorder %v28, %v83
  %vm185 = vcmp.eq.s32.totalorder %v28, %v87
  %vm186 = vcmp.eq.s32.totalorder %v28, %v91
  %vm187 = vcmp.eq.s32.totalorder %v28, %v95
  %vm188 = vcmp.eq.s32.totalorder %v28, %v99
  %vm189 = vcmp.eq.s32.totalorder %v28, %v103
  %vm190 = vcmp.eq.s32.totalorder %v28, %v107
  %vm191 = vcmp.eq.s32.totalorder %v28, %v111
  %vm192 = vcmp.eq.s32.totalorder %v28, %v115
  %vm193 = vcmp.eq.s32.totalorder %v28, %v119
  %vm194 = vcmp.eq.s32.totalorder %v28, %v123
  %vm195 = vcmp.eq.s32.totalorder %v28, %v127
  %vm196 = vcmp.eq.s32.totalorder %v28, %v131
  %vm197 = vcmp.eq.s32.totalorder %v28, %v135
  %vm198 = vcmp.eq.s32.totalorder %v28, %v139
  %vm199 = vcmp.eq.s32.totalorder %v28, %v143
  %vm200 = vcmp.eq.s32.totalorder %v28, %v147
  %vm201 = vcmp.eq.s32.totalorder %v28, %v151
  %vm202 = vcmp.eq.s32.totalorder %v28, %v155
  %vm203 = vcmp.eq.s32.totalorder %v28, %v159
  %vm204 = vcmp.eq.s32.totalorder %v28, %v163
  %vm205 = vcmp.eq.s32.totalorder %v28, %v167
  %vm206 = vcmp.eq.s32.totalorder %v28, %v171
  %vm207 = vcmp.eq.s32.totalorder %v28, %v175
  %vm208 = vcmp.eq.s32.totalorder %v29, %v51
  %vm209 = vcmp.eq.s32.totalorder %v29, %v55
  %vm210 = vcmp.eq.s32.totalorder %v29, %v59
  %vm211 = vcmp.eq.s32.totalorder %v29, %v63
  %vm212 = vcmp.eq.s32.totalorder %v29, %v67
  %vm213 = vcmp.eq.s32.totalorder %v29, %v71
  %vm214 = vcmp.eq.s32.totalorder %v29, %v75
  %vm215 = vcmp.eq.s32.totalorder %v29, %v79
  %vm216 = vcmp.eq.s32.totalorder %v29, %v83
  %vm217 = vcmp.eq.s32.totalorder %v29, %v87
  %vm218 = vcmp.eq.s32.totalorder %v29, %v91
  %vm219 = vcmp.eq.s32.totalorder %v29, %v95
  %vm220 = vcmp.eq.s32.totalorder %v29, %v99
  %vm221 = vcmp.eq.s32.totalorder %v29, %v103
  %vm222 = vcmp.eq.s32.totalorder %v29, %v107
  %vm223 = vcmp.eq.s32.totalorder %v29, %v111
  %vm224 = vcmp.eq.s32.totalorder %v29, %v115
  %vm225 = vcmp.eq.s32.totalorder %v29, %v119
  %vm226 = vcmp.eq.s32.totalorder %v29, %v123
  %vm227 = vcmp.eq.s32.totalorder %v29, %v127
  %vm228 = vcmp.eq.s32.totalorder %v29, %v131
  %vm229 = vcmp.eq.s32.totalorder %v29, %v135
  %vm230 = vcmp.eq.s32.totalorder %v29, %v139
  %vm231 = vcmp.eq.s32.totalorder %v29, %v143
  %vm232 = vcmp.eq.s32.totalorder %v29, %v147
  %vm233 = vcmp.eq.s32.totalorder %v29, %v151
  %vm234 = vcmp.eq.s32.totalorder %v29, %v155
  %vm235 = vcmp.eq.s32.totalorder %v29, %v159
  %vm236 = vcmp.eq.s32.totalorder %v29, %v163
  %vm237 = vcmp.eq.s32.totalorder %v29, %v167
  %vm238 = vcmp.eq.s32.totalorder %v29, %v171
  %vm239 = vcmp.eq.s32.totalorder %v29, %v175
  %vm240 = vcmp.eq.s32.totalorder %v30, %v51
  %vm241 = vcmp.eq.s32.totalorder %v30, %v55
  %vm242 = vcmp.eq.s32.totalorder %v30, %v59
  %vm243 = vcmp.eq.s32.totalorder %v30, %v63
  %vm244 = vcmp.eq.s32.totalorder %v30, %v67
  %vm245 = vcmp.eq.s32.totalorder %v30, %v71
  %vm246 = vcmp.eq.s32.totalorder %v30, %v75
  %vm247 = vcmp.eq.s32.totalorder %v30, %v79
  %vm248 = vcmp.eq.s32.totalorder %v30, %v83
  %vm249 = vcmp.eq.s32.totalorder %v30, %v87
  %vm250 = vcmp.eq.s32.totalorder %v30, %v91
  %vm251 = vcmp.eq.s32.totalorder %v30, %v95
  %vm252 = vcmp.eq.s32.totalorder %v30, %v99
  %vm253 = vcmp.eq.s32.totalorder %v30, %v103
  %vm254 = vcmp.eq.s32.totalorder %v30, %v107
  %vm255 = vcmp.eq.s32.totalorder %v30, %v111
  %vm256 = vcmp.eq.s32.totalorder %v30, %v115
  %vm257 = vcmp.eq.s32.totalorder %v30, %v119
  %vm258 = vcmp.eq.s32.totalorder %v30, %v123
  %vm259 = vcmp.eq.s32.totalorder %v30, %v127
  %vm260 = vcmp.eq.s32.totalorder %v30, %v131
  %vm261 = vcmp.eq.s32.totalorder %v30, %v135
  %vm262 = vcmp.eq.s32.totalorder %v30, %v139
  %vm263 = vcmp.eq.s32.totalorder %v30, %v143
  %vm264 = vcmp.eq.s32.totalorder %v30, %v147
  %vm265 = vcmp.eq.s32.totalorder %v30, %v151
  %vm266 = vcmp.eq.s32.totalorder %v30, %v155
  %vm267 = vcmp.eq.s32.totalorder %v30, %v159
  %vm268 = vcmp.eq.s32.totalorder %v30, %v163
  %vm269 = vcmp.eq.s32.totalorder %v30, %v167
  %vm270 = vcmp.eq.s32.totalorder %v30, %v171
  %vm271 = vcmp.eq.s32.totalorder %v30, %v175
  %vm272 = vcmp.eq.s32.totalorder %v31, %v51
  %vm273 = vcmp.eq.s32.totalorder %v31, %v55
  %vm274 = vcmp.eq.s32.totalorder %v31, %v59
  %vm275 = vcmp.eq.s32.totalorder %v31, %v63
  %vm276 = vcmp.eq.s32.totalorder %v31, %v67
  %vm277 = vcmp.eq.s32.totalorder %v31, %v71
  %vm278 = vcmp.eq.s32.totalorder %v31, %v75
  %vm279 = vcmp.eq.s32.totalorder %v31, %v79
  %vm280 = vcmp.eq.s32.totalorder %v31, %v83
  %vm281 = vcmp.eq.s32.totalorder %v31, %v87
  %vm282 = vcmp.eq.s32.totalorder %v31, %v91
  %vm283 = vcmp.eq.s32.totalorder %v31, %v95
  %vm284 = vcmp.eq.s32.totalorder %v31, %v99
  %vm285 = vcmp.eq.s32.totalorder %v31, %v103
  %vm286 = vcmp.eq.s32.totalorder %v31, %v107
  %vm287 = vcmp.eq.s32.totalorder %v31, %v111
  %vm288 = vcmp.eq.s32.totalorder %v31, %v115
  %vm289 = vcmp.eq.s32.totalorder %v31, %v119
  %vm290 = vcmp.eq.s32.totalorder %v31, %v123
  %vm291 = vcmp.eq.s32.totalorder %v31, %v127
  %vm292 = vcmp.eq.s32.totalorder %v31, %v131
  %vm293 = vcmp.eq.s32.totalorder %v31, %v135
  %vm294 = vcmp.eq.s32.totalorder %v31, %v139
  %vm295 = vcmp.eq.s32.totalorder %v31, %v143
  %vm296 = vcmp.eq.s32.totalorder %v31, %v147
  %vm297 = vcmp.eq.s32.totalorder %v31, %v151
  %vm298 = vcmp.eq.s32.totalorder %v31, %v155
  %vm299 = vcmp.eq.s32.totalorder %v31, %v159
  %vm300 = vcmp.eq.s32.totalorder %v31, %v163
  %vm301 = vcmp.eq.s32.totalorder %v31, %v167
  %vm302 = vcmp.eq.s32.totalorder %v31, %v171
  %vm303 = vcmp.eq.s32.totalorder %v31, %v175
  %vm304 = vcmp.eq.s32.totalorder %v32, %v51
  %vm305 = vcmp.eq.s32.totalorder %v32, %v55
  %vm306 = vcmp.eq.s32.totalorder %v32, %v59
  %vm307 = vcmp.eq.s32.totalorder %v32, %v63
  %vm308 = vcmp.eq.s32.totalorder %v32, %v67
  %vm309 = vcmp.eq.s32.totalorder %v32, %v71
  %vm310 = vcmp.eq.s32.totalorder %v32, %v75
  %vm311 = vcmp.eq.s32.totalorder %v32, %v79
  %vm312 = vcmp.eq.s32.totalorder %v32, %v83
  %vm313 = vcmp.eq.s32.totalorder %v32, %v87
  %vm314 = vcmp.eq.s32.totalorder %v32, %v91
  %vm315 = vcmp.eq.s32.totalorder %v32, %v95
  %vm316 = vcmp.eq.s32.totalorder %v32, %v99
  %vm317 = vcmp.eq.s32.totalorder %v32, %v103
  %vm318 = vcmp.eq.s32.totalorder %v32, %v107
  %vm319 = vcmp.eq.s32.totalorder %v32, %v111
  %vm320 = vcmp.eq.s32.totalorder %v32, %v115
  %vm321 = vcmp.eq.s32.totalorder %v32, %v119
  %vm322 = vcmp.eq.s32.totalorder %v32, %v123
  %vm323 = vcmp.eq.s32.totalorder %v32, %v127
  %vm324 = vcmp.eq.s32.totalorder %v32, %v131
  %vm325 = vcmp.eq.s32.totalorder %v32, %v135
  %vm326 = vcmp.eq.s32.totalorder %v32, %v139
  %vm327 = vcmp.eq.s32.totalorder %v32, %v143
  %vm328 = vcmp.eq.s32.totalorder %v32, %v147
  %vm329 = vcmp.eq.s32.totalorder %v32, %v151
  %vm330 = vcmp.eq.s32.totalorder %v32, %v155
  %vm331 = vcmp.eq.s32.totalorder %v32, %v159
  %vm332 = vcmp.eq.s32.totalorder %v32, %v163
  %vm333 = vcmp.eq.s32.totalorder %v32, %v167
  %vm334 = vcmp.eq.s32.totalorder %v32, %v171
  %vm335 = vcmp.eq.s32.totalorder %v32, %v175
  %vm336 = vcmp.eq.s32.totalorder %v33, %v51
  %vm337 = vcmp.eq.s32.totalorder %v33, %v55
  %vm338 = vcmp.eq.s32.totalorder %v33, %v59
  %vm339 = vcmp.eq.s32.totalorder %v33, %v63
  %vm340 = vcmp.eq.s32.totalorder %v33, %v67
  %vm341 = vcmp.eq.s32.totalorder %v33, %v71
  %vm342 = vcmp.eq.s32.totalorder %v33, %v75
  %vm343 = vcmp.eq.s32.totalorder %v33, %v79
  %vm344 = vcmp.eq.s32.totalorder %v33, %v83
  %vm345 = vcmp.eq.s32.totalorder %v33, %v87
  %vm346 = vcmp.eq.s32.totalorder %v33, %v91
  %vm347 = vcmp.eq.s32.totalorder %v33, %v95
  %vm348 = vcmp.eq.s32.totalorder %v33, %v99
  %vm349 = vcmp.eq.s32.totalorder %v33, %v103
  %vm350 = vcmp.eq.s32.totalorder %v33, %v107
  %vm351 = vcmp.eq.s32.totalorder %v33, %v111
  %vm352 = vcmp.eq.s32.totalorder %v33, %v115
  %vm353 = vcmp.eq.s32.totalorder %v33, %v119
  %vm354 = vcmp.eq.s32.totalorder %v33, %v123
  %vm355 = vcmp.eq.s32.totalorder %v33, %v127
  %vm356 = vcmp.eq.s32.totalorder %v33, %v131
  %vm357 = vcmp.eq.s32.totalorder %v33, %v135
  %vm358 = vcmp.eq.s32.totalorder %v33, %v139
  %vm359 = vcmp.eq.s32.totalorder %v33, %v143
  %vm360 = vcmp.eq.s32.totalorder %v33, %v147
  %vm361 = vcmp.eq.s32.totalorder %v33, %v151
  %vm362 = vcmp.eq.s32.totalorder %v33, %v155
  %vm363 = vcmp.eq.s32.totalorder %v33, %v159
  %vm364 = vcmp.eq.s32.totalorder %v33, %v163
  %vm365 = vcmp.eq.s32.totalorder %v33, %v167
  %vm366 = vcmp.eq.s32.totalorder %v33, %v171
  %vm367 = vcmp.eq.s32.totalorder %v33, %v175
  %vm368 = vcmp.eq.s32.totalorder %v34, %v51
  %vm369 = vcmp.eq.s32.totalorder %v34, %v55
  %vm370 = vcmp.eq.s32.totalorder %v34, %v59
  %vm371 = vcmp.eq.s32.totalorder %v34, %v63
  %vm372 = vcmp.eq.s32.totalorder %v34, %v67
  %vm373 = vcmp.eq.s32.totalorder %v34, %v71
  %vm374 = vcmp.eq.s32.totalorder %v34, %v75
  %vm375 = vcmp.eq.s32.totalorder %v34, %v79
  %vm376 = vcmp.eq.s32.totalorder %v34, %v83
  %vm377 = vcmp.eq.s32.totalorder %v34, %v87
  %vm378 = vcmp.eq.s32.totalorder %v34, %v91
  %vm379 = vcmp.eq.s32.totalorder %v34, %v95
  %vm380 = vcmp.eq.s32.totalorder %v34, %v99
  %vm381 = vcmp.eq.s32.totalorder %v34, %v103
  %vm382 = vcmp.eq.s32.totalorder %v34, %v107
  %vm383 = vcmp.eq.s32.totalorder %v34, %v111
  %vm384 = vcmp.eq.s32.totalorder %v34, %v115
  %vm385 = vcmp.eq.s32.totalorder %v34, %v119
  %vm386 = vcmp.eq.s32.totalorder %v34, %v123
  %vm387 = vcmp.eq.s32.totalorder %v34, %v127
  %vm388 = vcmp.eq.s32.totalorder %v34, %v131
  %vm389 = vcmp.eq.s32.totalorder %v34, %v135
  %vm390 = vcmp.eq.s32.totalorder %v34, %v139
  %vm391 = vcmp.eq.s32.totalorder %v34, %v143
  %vm392 = vcmp.eq.s32.totalorder %v34, %v147
  %vm393 = vcmp.eq.s32.totalorder %v34, %v151
  %vm394 = vcmp.eq.s32.totalorder %v34, %v155
  %vm395 = vcmp.eq.s32.totalorder %v34, %v159
  %vm396 = vcmp.eq.s32.totalorder %v34, %v163
  %vm397 = vcmp.eq.s32.totalorder %v34, %v167
  %vm398 = vcmp.eq.s32.totalorder %v34, %v171
  %vm399 = vcmp.eq.s32.totalorder %v34, %v175
  %vm400 = vcmp.eq.s32.totalorder %v35, %v51
  %vm401 = vcmp.eq.s32.totalorder %v35, %v55
  %vm402 = vcmp.eq.s32.totalorder %v35, %v59
  %vm403 = vcmp.eq.s32.totalorder %v35, %v63
  %vm404 = vcmp.eq.s32.totalorder %v35, %v67
  %vm405 = vcmp.eq.s32.totalorder %v35, %v71
  %vm406 = vcmp.eq.s32.totalorder %v35, %v75
  %vm407 = vcmp.eq.s32.totalorder %v35, %v79
  %vm408 = vcmp.eq.s32.totalorder %v35, %v83
  %vm409 = vcmp.eq.s32.totalorder %v35, %v87
  %vm410 = vcmp.eq.s32.totalorder %v35, %v91
  %vm411 = vcmp.eq.s32.totalorder %v35, %v95
  %vm412 = vcmp.eq.s32.totalorder %v35, %v99
  %vm413 = vcmp.eq.s32.totalorder %v35, %v103
  %vm414 = vcmp.eq.s32.totalorder %v35, %v107
  %vm415 = vcmp.eq.s32.totalorder %v35, %v111
  %vm416 = vcmp.eq.s32.totalorder %v35, %v115
  %vm417 = vcmp.eq.s32.totalorder %v35, %v119
  %vm418 = vcmp.eq.s32.totalorder %v35, %v123
  %vm419 = vcmp.eq.s32.totalorder %v35, %v127
  %vm420 = vcmp.eq.s32.totalorder %v35, %v131
  %vm421 = vcmp.eq.s32.totalorder %v35, %v135
  %vm422 = vcmp.eq.s32.totalorder %v35, %v139
  %vm423 = vcmp.eq.s32.totalorder %v35, %v143
  %vm424 = vcmp.eq.s32.totalorder %v35, %v147
  %vm425 = vcmp.eq.s32.totalorder %v35, %v151
  %vm426 = vcmp.eq.s32.totalorder %v35, %v155
  %vm427 = vcmp.eq.s32.totalorder %v35, %v159
  %vm428 = vcmp.eq.s32.totalorder %v35, %v163
  %vm429 = vcmp.eq.s32.totalorder %v35, %v167
  %vm430 = vcmp.eq.s32.totalorder %v35, %v171
  %vm431 = vcmp.eq.s32.totalorder %v35, %v175
  %vm432 = vcmp.eq.s32.totalorder %v36, %v51
  %vm433 = vcmp.eq.s32.totalorder %v36, %v55
  %vm434 = vcmp.eq.s32.totalorder %v36, %v59
  %vm435 = vcmp.eq.s32.totalorder %v36, %v63
  %vm436 = vcmp.eq.s32.totalorder %v36, %v67
  %vm437 = vcmp.eq.s32.totalorder %v36, %v71
  %vm438 = vcmp.eq.s32.totalorder %v36, %v75
  %vm439 = vcmp.eq.s32.totalorder %v36, %v79
  %vm440 = vcmp.eq.s32.totalorder %v36, %v83
  %vm441 = vcmp.eq.s32.totalorder %v36, %v87
  %vm442 = vcmp.eq.s32.totalorder %v36, %v91
  %vm443 = vcmp.eq.s32.totalorder %v36, %v95
  %vm444 = vcmp.eq.s32.totalorder %v36, %v99
  %vm445 = vcmp.eq.s32.totalorder %v36, %v103
  %vm446 = vcmp.eq.s32.totalorder %v36, %v107
  %vm447 = vcmp.eq.s32.totalorder %v36, %v111
  %vm448 = vcmp.eq.s32.totalorder %v36, %v115
  %vm449 = vcmp.eq.s32.totalorder %v36, %v119
  %vm450 = vcmp.eq.s32.totalorder %v36, %v123
  %vm451 = vcmp.eq.s32.totalorder %v36, %v127
  %vm452 = vcmp.eq.s32.totalorder %v36, %v131
  %vm453 = vcmp.eq.s32.totalorder %v36, %v135
  %vm454 = vcmp.eq.s32.totalorder %v36, %v139
  %vm455 = vcmp.eq.s32.totalorder %v36, %v143
  %vm456 = vcmp.eq.s32.totalorder %v36, %v147
  %vm457 = vcmp.eq.s32.totalorder %v36, %v151
  %vm458 = vcmp.eq.s32.totalorder %v36, %v155
  %vm459 = vcmp.eq.s32.totalorder %v36, %v159
  %vm460 = vcmp.eq.s32.totalorder %v36, %v163
  %vm461 = vcmp.eq.s32.totalorder %v36, %v167
  %vm462 = vcmp.eq.s32.totalorder %v36, %v171
  %vm463 = vcmp.eq.s32.totalorder %v36, %v175
  %vm464 = vcmp.eq.s32.totalorder %v37, %v51
  %vm465 = vcmp.eq.s32.totalorder %v37, %v55
  %vm466 = vcmp.eq.s32.totalorder %v37, %v59
  %vm467 = vcmp.eq.s32.totalorder %v37, %v63
  %vm468 = vcmp.eq.s32.totalorder %v37, %v67
  %vm469 = vcmp.eq.s32.totalorder %v37, %v71
  %vm470 = vcmp.eq.s32.totalorder %v37, %v75
  %vm471 = vcmp.eq.s32.totalorder %v37, %v79
  %vm472 = vcmp.eq.s32.totalorder %v37, %v83
  %vm473 = vcmp.eq.s32.totalorder %v37, %v87
  %vm474 = vcmp.eq.s32.totalorder %v37, %v91
  %vm475 = vcmp.eq.s32.totalorder %v37, %v95
  %vm476 = vcmp.eq.s32.totalorder %v37, %v99
  %vm477 = vcmp.eq.s32.totalorder %v37, %v103
  %vm478 = vcmp.eq.s32.totalorder %v37, %v107
  %vm479 = vcmp.eq.s32.totalorder %v37, %v111
  %vm480 = vcmp.eq.s32.totalorder %v37, %v115
  %vm481 = vcmp.eq.s32.totalorder %v37, %v119
  %vm482 = vcmp.eq.s32.totalorder %v37, %v123
  %vm483 = vcmp.eq.s32.totalorder %v37, %v127
  %vm484 = vcmp.eq.s32.totalorder %v37, %v131
  %vm485 = vcmp.eq.s32.totalorder %v37, %v135
  %vm486 = vcmp.eq.s32.totalorder %v37, %v139
  %vm487 = vcmp.eq.s32.totalorder %v37, %v143
  %vm488 = vcmp.eq.s32.totalorder %v37, %v147
  %vm489 = vcmp.eq.s32.totalorder %v37, %v151
  %vm490 = vcmp.eq.s32.totalorder %v37, %v155
  %vm491 = vcmp.eq.s32.totalorder %v37, %v159
  %vm492 = vcmp.eq.s32.totalorder %v37, %v163
  %vm493 = vcmp.eq.s32.totalorder %v37, %v167
  %vm494 = vcmp.eq.s32.totalorder %v37, %v171
  %vm495 = vcmp.eq.s32.totalorder %v37, %v175
  %vm496 = vcmp.eq.s32.totalorder %v38, %v51
  %vm497 = vcmp.eq.s32.totalorder %v38, %v55
  %vm498 = vcmp.eq.s32.totalorder %v38, %v59
  %vm499 = vcmp.eq.s32.totalorder %v38, %v63
  %vm500 = vcmp.eq.s32.totalorder %v38, %v67
  %vm501 = vcmp.eq.s32.totalorder %v38, %v71
  %vm502 = vcmp.eq.s32.totalorder %v38, %v75
  %vm503 = vcmp.eq.s32.totalorder %v38, %v79
  %vm504 = vcmp.eq.s32.totalorder %v38, %v83
  %vm505 = vcmp.eq.s32.totalorder %v38, %v87
  %vm506 = vcmp.eq.s32.totalorder %v38, %v91
  %vm507 = vcmp.eq.s32.totalorder %v38, %v95
  %vm508 = vcmp.eq.s32.totalorder %v38, %v99
  %vm509 = vcmp.eq.s32.totalorder %v38, %v103
  %vm510 = vcmp.eq.s32.totalorder %v38, %v107
  %vm511 = vcmp.eq.s32.totalorder %v38, %v111
  %vm512 = vcmp.eq.s32.totalorder %v38, %v115
  %vm513 = vcmp.eq.s32.totalorder %v38, %v119
  %vm514 = vcmp.eq.s32.totalorder %v38, %v123
  %vm515 = vcmp.eq.s32.totalorder %v38, %v127
  %vm516 = vcmp.eq.s32.totalorder %v38, %v131
  %vm517 = vcmp.eq.s32.totalorder %v38, %v135
  %vm518 = vcmp.eq.s32.totalorder %v38, %v139
  %vm519 = vcmp.eq.s32.totalorder %v38, %v143
  %vm520 = vcmp.eq.s32.totalorder %v38, %v147
  %vm521 = vcmp.eq.s32.totalorder %v38, %v151
  %vm522 = vcmp.eq.s32.totalorder %v38, %v155
  %vm523 = vcmp.eq.s32.totalorder %v38, %v159
  %vm524 = vcmp.eq.s32.totalorder %v38, %v163
  %vm525 = vcmp.eq.s32.totalorder %v38, %v167
  %vm526 = vcmp.eq.s32.totalorder %v38, %v171
  %vm527 = vcmp.eq.s32.totalorder %v38, %v175
  %vm528 = vcmp.eq.s32.totalorder %v39, %v51
  %vm529 = vcmp.eq.s32.totalorder %v39, %v55
  %vm530 = vcmp.eq.s32.totalorder %v39, %v59
  %vm531 = vcmp.eq.s32.totalorder %v39, %v63
  %vm532 = vcmp.eq.s32.totalorder %v39, %v67
  %vm533 = vcmp.eq.s32.totalorder %v39, %v71
  %vm534 = vcmp.eq.s32.totalorder %v39, %v75
  %vm535 = vcmp.eq.s32.totalorder %v39, %v79
  %vm536 = vcmp.eq.s32.totalorder %v39, %v83
  %vm537 = vcmp.eq.s32.totalorder %v39, %v87
  %vm538 = vcmp.eq.s32.totalorder %v39, %v91
  %vm539 = vcmp.eq.s32.totalorder %v39, %v95
  %vm540 = vcmp.eq.s32.totalorder %v39, %v99
  %vm541 = vcmp.eq.s32.totalorder %v39, %v103
  %vm542 = vcmp.eq.s32.totalorder %v39, %v107
  %vm543 = vcmp.eq.s32.totalorder %v39, %v111
  %vm544 = vcmp.eq.s32.totalorder %v39, %v115
  %vm545 = vcmp.eq.s32.totalorder %v39, %v119
  %vm546 = vcmp.eq.s32.totalorder %v39, %v123
  %vm547 = vcmp.eq.s32.totalorder %v39, %v127
  %vm548 = vcmp.eq.s32.totalorder %v39, %v131
  %vm549 = vcmp.eq.s32.totalorder %v39, %v135
  %vm550 = vcmp.eq.s32.totalorder %v39, %v139
  %vm551 = vcmp.eq.s32.totalorder %v39, %v143
  %vm552 = vcmp.eq.s32.totalorder %v39, %v147
  %vm553 = vcmp.eq.s32.totalorder %v39, %v151
  %vm554 = vcmp.eq.s32.totalorder %v39, %v155
  %vm555 = vcmp.eq.s32.totalorder %v39, %v159
  %vm556 = vcmp.eq.s32.totalorder %v39, %v163
  %vm557 = vcmp.eq.s32.totalorder %v39, %v167
  %vm558 = vcmp.eq.s32.totalorder %v39, %v171
  %vm559 = vcmp.eq.s32.totalorder %v39, %v175
  %vm560 = vcmp.eq.s32.totalorder %v40, %v51
  %vm561 = vcmp.eq.s32.totalorder %v40, %v55
  %vm562 = vcmp.eq.s32.totalorder %v40, %v59
  %vm563 = vcmp.eq.s32.totalorder %v40, %v63
  %vm564 = vcmp.eq.s32.totalorder %v40, %v67
  %vm565 = vcmp.eq.s32.totalorder %v40, %v71
  %vm566 = vcmp.eq.s32.totalorder %v40, %v75
  %vm567 = vcmp.eq.s32.totalorder %v40, %v79
  %vm568 = vcmp.eq.s32.totalorder %v40, %v83
  %vm569 = vcmp.eq.s32.totalorder %v40, %v87
  %vm570 = vcmp.eq.s32.totalorder %v40, %v91
  %vm571 = vcmp.eq.s32.totalorder %v40, %v95
  %vm572 = vcmp.eq.s32.totalorder %v40, %v99
  %vm573 = vcmp.eq.s32.totalorder %v40, %v103
  %vm574 = vcmp.eq.s32.totalorder %v40, %v107
  %vm575 = vcmp.eq.s32.totalorder %v40, %v111
  %vm576 = vcmp.eq.s32.totalorder %v40, %v115
  %vm577 = vcmp.eq.s32.totalorder %v40, %v119
  %vm578 = vcmp.eq.s32.totalorder %v40, %v123
  %vm579 = vcmp.eq.s32.totalorder %v40, %v127
  %vm580 = vcmp.eq.s32.totalorder %v40, %v131
  %vm581 = vcmp.eq.s32.totalorder %v40, %v135
  %vm582 = vcmp.eq.s32.totalorder %v40, %v139
  %vm583 = vcmp.eq.s32.totalorder %v40, %v143
  %vm584 = vcmp.eq.s32.totalorder %v40, %v147
  %vm585 = vcmp.eq.s32.totalorder %v40, %v151
  %vm586 = vcmp.eq.s32.totalorder %v40, %v155
  %vm587 = vcmp.eq.s32.totalorder %v40, %v159
  %vm588 = vcmp.eq.s32.totalorder %v40, %v163
  %vm589 = vcmp.eq.s32.totalorder %v40, %v167
  %vm590 = vcmp.eq.s32.totalorder %v40, %v171
  %vm591 = vcmp.eq.s32.totalorder %v40, %v175
  %vm592 = vcmp.eq.s32.totalorder %v41, %v51
  %vm593 = vcmp.eq.s32.totalorder %v41, %v55
  %vm594 = vcmp.eq.s32.totalorder %v41, %v59
  %vm595 = vcmp.eq.s32.totalorder %v41, %v63
  %vm596 = vcmp.eq.s32.totalorder %v41, %v67
  %vm597 = vcmp.eq.s32.totalorder %v41, %v71
  %vm598 = vcmp.eq.s32.totalorder %v41, %v75
  %vm599 = vcmp.eq.s32.totalorder %v41, %v79
  %vm600 = vcmp.eq.s32.totalorder %v41, %v83
  %vm601 = vcmp.eq.s32.totalorder %v41, %v87
  %vm602 = vcmp.eq.s32.totalorder %v41, %v91
  %vm603 = vcmp.eq.s32.totalorder %v41, %v95
  %vm604 = vcmp.eq.s32.totalorder %v41, %v99
  %vm605 = vcmp.eq.s32.totalorder %v41, %v103
  %vm606 = vcmp.eq.s32.totalorder %v41, %v107
  %vm607 = vcmp.eq.s32.totalorder %v41, %v111
  %vm608 = vcmp.eq.s32.totalorder %v41, %v115
  %vm609 = vcmp.eq.s32.totalorder %v41, %v119
  %vm610 = vcmp.eq.s32.totalorder %v41, %v123
  %vm611 = vcmp.eq.s32.totalorder %v41, %v127
  %vm612 = vcmp.eq.s32.totalorder %v41, %v131
  %vm613 = vcmp.eq.s32.totalorder %v41, %v135
  %vm614 = vcmp.eq.s32.totalorder %v41, %v139
  %vm615 = vcmp.eq.s32.totalorder %v41, %v143
  %vm616 = vcmp.eq.s32.totalorder %v41, %v147
  %vm617 = vcmp.eq.s32.totalorder %v41, %v151
  %vm618 = vcmp.eq.s32.totalorder %v41, %v155
  %vm619 = vcmp.eq.s32.totalorder %v41, %v159
  %vm620 = vcmp.eq.s32.totalorder %v41, %v163
  %vm621 = vcmp.eq.s32.totalorder %v41, %v167
  %vm622 = vcmp.eq.s32.totalorder %v41, %v171
  %vm623 = vcmp.eq.s32.totalorder %v41, %v175
  %vm624 = vcmp.eq.s32.totalorder %v42, %v51
  %vm625 = vcmp.eq.s32.totalorder %v42, %v55
  %vm626 = vcmp.eq.s32.totalorder %v42, %v59
  %vm627 = vcmp.eq.s32.totalorder %v42, %v63
  %vm628 = vcmp.eq.s32.totalorder %v42, %v67
  %vm629 = vcmp.eq.s32.totalorder %v42, %v71
  %vm630 = vcmp.eq.s32.totalorder %v42, %v75
  %vm631 = vcmp.eq.s32.totalorder %v42, %v79
  %vm632 = vcmp.eq.s32.totalorder %v42, %v83
  %vm633 = vcmp.eq.s32.totalorder %v42, %v87
  %vm634 = vcmp.eq.s32.totalorder %v42, %v91
  %vm635 = vcmp.eq.s32.totalorder %v42, %v95
  %vm636 = vcmp.eq.s32.totalorder %v42, %v99
  %vm637 = vcmp.eq.s32.totalorder %v42, %v103
  %vm638 = vcmp.eq.s32.totalorder %v42, %v107
  %vm639 = vcmp.eq.s32.totalorder %v42, %v111
  %vm640 = vcmp.eq.s32.totalorder %v42, %v115
  %vm641 = vcmp.eq.s32.totalorder %v42, %v119
  %vm642 = vcmp.eq.s32.totalorder %v42, %v123
  %vm643 = vcmp.eq.s32.totalorder %v42, %v127
  %vm644 = vcmp.eq.s32.totalorder %v42, %v131
  %vm645 = vcmp.eq.s32.totalorder %v42, %v135
  %vm646 = vcmp.eq.s32.totalorder %v42, %v139
  %vm647 = vcmp.eq.s32.totalorder %v42, %v143
  %vm648 = vcmp.eq.s32.totalorder %v42, %v147
  %vm649 = vcmp.eq.s32.totalorder %v42, %v151
  %vm650 = vcmp.eq.s32.totalorder %v42, %v155
  %vm651 = vcmp.eq.s32.totalorder %v42, %v159
  %vm652 = vcmp.eq.s32.totalorder %v42, %v163
  %vm653 = vcmp.eq.s32.totalorder %v42, %v167
  %vm654 = vcmp.eq.s32.totalorder %v42, %v171
  %vm655 = vcmp.eq.s32.totalorder %v42, %v175
  %vm656 = vcmp.eq.s32.totalorder %v43, %v51
  %vm657 = vcmp.eq.s32.totalorder %v43, %v55
  %vm658 = vcmp.eq.s32.totalorder %v43, %v59
  %vm659 = vcmp.eq.s32.totalorder %v43, %v63
  %vm660 = vcmp.eq.s32.totalorder %v43, %v67
  %vm661 = vcmp.eq.s32.totalorder %v43, %v71
  %vm662 = vcmp.eq.s32.totalorder %v43, %v75
  %vm663 = vcmp.eq.s32.totalorder %v43, %v79
  %vm664 = vcmp.eq.s32.totalorder %v43, %v83
  %vm665 = vcmp.eq.s32.totalorder %v43, %v87
  %vm666 = vcmp.eq.s32.totalorder %v43, %v91
  %vm667 = vcmp.eq.s32.totalorder %v43, %v95
  %vm668 = vcmp.eq.s32.totalorder %v43, %v99
  %vm669 = vcmp.eq.s32.totalorder %v43, %v103
  %vm670 = vcmp.eq.s32.totalorder %v43, %v107
  %vm671 = vcmp.eq.s32.totalorder %v43, %v111
  %vm672 = vcmp.eq.s32.totalorder %v43, %v115
  %vm673 = vcmp.eq.s32.totalorder %v43, %v119
  %vm674 = vcmp.eq.s32.totalorder %v43, %v123
  %vm675 = vcmp.eq.s32.totalorder %v43, %v127
  %vm676 = vcmp.eq.s32.totalorder %v43, %v131
  %vm677 = vcmp.eq.s32.totalorder %v43, %v135
  %vm678 = vcmp.eq.s32.totalorder %v43, %v139
  %vm679 = vcmp.eq.s32.totalorder %v43, %v143
  %vm680 = vcmp.eq.s32.totalorder %v43, %v147
  %vm681 = vcmp.eq.s32.totalorder %v43, %v151
  %vm682 = vcmp.eq.s32.totalorder %v43, %v155
  %vm683 = vcmp.eq.s32.totalorder %v43, %v159
  %vm684 = vcmp.eq.s32.totalorder %v43, %v163
  %vm685 = vcmp.eq.s32.totalorder %v43, %v167
  %vm686 = vcmp.eq.s32.totalorder %v43, %v171
  %vm687 = vcmp.eq.s32.totalorder %v43, %v175
  %v688 = vsel %vm176, 1.0, 0.0
  %v689 = vsel %vm177, 1.0, 0.0
  %v690 = vsel %vm178, 1.0, 0.0
  %v691 = vsel %vm179, 1.0, 0.0
  %v692 = vsel %vm180, 1.0, 0.0
  %v693 = vsel %vm181, 1.0, 0.0
  %v694 = vsel %vm182, 1.0, 0.0
  %v695 = vsel %vm183, 1.0, 0.0
  %v696 = vsel %vm184, 1.0, 0.0
  %v697 = vsel %vm185, 1.0, 0.0
  %v698 = vsel %vm186, 1.0, 0.0
  %v699 = vsel %vm187, 1.0, 0.0
  %v700 = vsel %vm188, 1.0, 0.0
  %v701 = vsel %vm189, 1.0, 0.0
  %v702 = vsel %vm190, 1.0, 0.0
  %v703 = vsel %vm191, 1.0, 0.0
  %v704 = vsel %vm192, 1.0, 0.0
  %v705 = vsel %vm193, 1.0, 0.0
  %v706 = vsel %vm194, 1.0, 0.0
  %v707 = vsel %vm195, 1.0, 0.0
  %v708 = vsel %vm196, 1.0, 0.0
  %v709 = vsel %vm197, 1.0, 0.0
  %v710 = vsel %vm198, 1.0, 0.0
  %v711 = vsel %vm199, 1.0, 0.0
  %v712 = vsel %vm200, 1.0, 0.0
  %v713 = vsel %vm201, 1.0, 0.0
  %v714 = vsel %vm202, 1.0, 0.0
  %v715 = vsel %vm203, 1.0, 0.0
  %v716 = vsel %vm204, 1.0, 0.0
  %v717 = vsel %vm205, 1.0, 0.0
  %v718 = vsel %vm206, 1.0, 0.0
  %v719 = vsel %vm207, 1.0, 0.0
  %v720 = vsel %vm208, 1.0, 0.0
  %v721 = vsel %vm209, 1.0, 0.0
  %v722 = vsel %vm210, 1.0, 0.0
  %v723 = vsel %vm211, 1.0, 0.0
  %v724 = vsel %vm212, 1.0, 0.0
  %v725 = vsel %vm213, 1.0, 0.0
  %v726 = vsel %vm214, 1.0, 0.0
  %v727 = vsel %vm215, 1.0, 0.0
  %v728 = vsel %vm216, 1.0, 0.0
  %v729 = vsel %vm217, 1.0, 0.0
  %v730 = vsel %vm218, 1.0, 0.0
  %v731 = vsel %vm219, 1.0, 0.0
  %v732 = vsel %vm220, 1.0, 0.0
  %v733 = vsel %vm221, 1.0, 0.0
  %v734 = vsel %vm222, 1.0, 0.0
  %v735 = vsel %vm223, 1.0, 0.0
  %v736 = vsel %vm224, 1.0, 0.0
  %v737 = vsel %vm225, 1.0, 0.0
  %v738 = vsel %vm226, 1.0, 0.0
  %v739 = vsel %vm227, 1.0, 0.0
  %v740 = vsel %vm228, 1.0, 0.0
  %v741 = vsel %vm229, 1.0, 0.0
  %v742 = vsel %vm230, 1.0, 0.0
  %v743 = vsel %vm231, 1.0, 0.0
  %v744 = vsel %vm232, 1.0, 0.0
  %v745 = vsel %vm233, 1.0, 0.0
  %v746 = vsel %vm234, 1.0, 0.0
  %v747 = vsel %vm235, 1.0, 0.0
  %v748 = vsel %vm236, 1.0, 0.0
  %v749 = vsel %vm237, 1.0, 0.0
  %v750 = vsel %vm238, 1.0, 0.0
  %v751 = vsel %vm239, 1.0, 0.0
  %v752 = vsel %vm240, 1.0, 0.0
  %v753 = vsel %vm241, 1.0, 0.0
  %v754 = vsel %vm242, 1.0, 0.0
  %v755 = vsel %vm243, 1.0, 0.0
  %v756 = vsel %vm244, 1.0, 0.0
  %v757 = vsel %vm245, 1.0, 0.0
  %v758 = vsel %vm246, 1.0, 0.0
  %v759 = vsel %vm247, 1.0, 0.0
  %v760 = vsel %vm248, 1.0, 0.0
  %v761 = vsel %vm249, 1.0, 0.0
  %v762 = vsel %vm250, 1.0, 0.0
  %v763 = vsel %vm251, 1.0, 0.0
  %v764 = vsel %vm252, 1.0, 0.0
  %v765 = vsel %vm253, 1.0, 0.0
  %v766 = vsel %vm254, 1.0, 0.0
  %v767 = vsel %vm255, 1.0, 0.0
  %v768 = vsel %vm256, 1.0, 0.0
  %v769 = vsel %vm257, 1.0, 0.0
  %v770 = vsel %vm258, 1.0, 0.0
  %v771 = vsel %vm259, 1.0, 0.0
  %v772 = vsel %vm260, 1.0, 0.0
  %v773 = vsel %vm261, 1.0, 0.0
  %v774 = vsel %vm262, 1.0, 0.0
  %v775 = vsel %vm263, 1.0, 0.0
  %v776 = vsel %vm264, 1.0, 0.0
  %v777 = vsel %vm265, 1.0, 0.0
  %v778 = vsel %vm266, 1.0, 0.0
  %v779 = vsel %vm267, 1.0, 0.0
  %v780 = vsel %vm268, 1.0, 0.0
  %v781 = vsel %vm269, 1.0, 0.0
  %v782 = vsel %vm270, 1.0, 0.0
  %v783 = vsel %vm271, 1.0, 0.0
  %v784 = vsel %vm272, 1.0, 0.0
  %v785 = vsel %vm273, 1.0, 0.0
  %v786 = vsel %vm274, 1.0, 0.0
  %v787 = vsel %vm275, 1.0, 0.0
  %v788 = vsel %vm276, 1.0, 0.0
  %v789 = vsel %vm277, 1.0, 0.0
  %v790 = vsel %vm278, 1.0, 0.0
  %v791 = vsel %vm279, 1.0, 0.0
  %v792 = vsel %vm280, 1.0, 0.0
  %v793 = vsel %vm281, 1.0, 0.0
  %v794 = vsel %vm282, 1.0, 0.0
  %v795 = vsel %vm283, 1.0, 0.0
  %v796 = vsel %vm284, 1.0, 0.0
  %v797 = vsel %vm285, 1.0, 0.0
  %v798 = vsel %vm286, 1.0, 0.0
  %v799 = vsel %vm287, 1.0, 0.0
  %v800 = vsel %vm288, 1.0, 0.0
  %v801 = vsel %vm289, 1.0, 0.0
  %v802 = vsel %vm290, 1.0, 0.0
  %v803 = vsel %vm291, 1.0, 0.0
  %v804 = vsel %vm292, 1.0, 0.0
  %v805 = vsel %vm293, 1.0, 0.0
  %v806 = vsel %vm294, 1.0, 0.0
  %v807 = vsel %vm295, 1.0, 0.0
  %v808 = vsel %vm296, 1.0, 0.0
  %v809 = vsel %vm297, 1.0, 0.0
  %v810 = vsel %vm298, 1.0, 0.0
  %v811 = vsel %vm299, 1.0, 0.0
  %v812 = vsel %vm300, 1.0, 0.0
  %v813 = vsel %vm301, 1.0, 0.0
  %v814 = vsel %vm302, 1.0, 0.0
  %v815 = vsel %vm303, 1.0, 0.0
  %v816 = vsel %vm304, 1.0, 0.0
  %v817 = vsel %vm305, 1.0, 0.0
  %v818 = vsel %vm306, 1.0, 0.0
  %v819 = vsel %vm307, 1.0, 0.0
  %v820 = vsel %vm308, 1.0, 0.0
  %v821 = vsel %vm309, 1.0, 0.0
  %v822 = vsel %vm310, 1.0, 0.0
  %v823 = vsel %vm311, 1.0, 0.0
  %v824 = vsel %vm312, 1.0, 0.0
  %v825 = vsel %vm313, 1.0, 0.0
  %v826 = vsel %vm314, 1.0, 0.0
  %v827 = vsel %vm315, 1.0, 0.0
  %v828 = vsel %vm316, 1.0, 0.0
  %v829 = vsel %vm317, 1.0, 0.0
  %v830 = vsel %vm318, 1.0, 0.0
  %v831 = vsel %vm319, 1.0, 0.0
  %v832 = vsel %vm320, 1.0, 0.0
  %v833 = vsel %vm321, 1.0, 0.0
  %v834 = vsel %vm322, 1.0, 0.0
  %v835 = vsel %vm323, 1.0, 0.0
  %v836 = vsel %vm324, 1.0, 0.0
  %v837 = vsel %vm325, 1.0, 0.0
  %v838 = vsel %vm326, 1.0, 0.0
  %v839 = vsel %vm327, 1.0, 0.0
  %v840 = vsel %vm328, 1.0, 0.0
  %v841 = vsel %vm329, 1.0, 0.0
  %v842 = vsel %vm330, 1.0, 0.0
  %v843 = vsel %vm331, 1.0, 0.0
  %v844 = vsel %vm332, 1.0, 0.0
  %v845 = vsel %vm333, 1.0, 0.0
  %v846 = vsel %vm334, 1.0, 0.0
  %v847 = vsel %vm335, 1.0, 0.0
  %v848 = vsel %vm336, 1.0, 0.0
  %v849 = vsel %vm337, 1.0, 0.0
  %v850 = vsel %vm338, 1.0, 0.0
  %v851 = vsel %vm339, 1.0, 0.0
  %v852 = vsel %vm340, 1.0, 0.0
  %v853 = vsel %vm341, 1.0, 0.0
  %v854 = vsel %vm342, 1.0, 0.0
  %v855 = vsel %vm343, 1.0, 0.0
  %v856 = vsel %vm344, 1.0, 0.0
  %v857 = vsel %vm345, 1.0, 0.0
  %v858 = vsel %vm346, 1.0, 0.0
  %v859 = vsel %vm347, 1.0, 0.0
  %v860 = vsel %vm348, 1.0, 0.0
  %v861 = vsel %vm349, 1.0, 0.0
  %v862 = vsel %vm350, 1.0, 0.0
  %v863 = vsel %vm351, 1.0, 0.0
  %v864 = vsel %vm352, 1.0, 0.0
  %v865 = vsel %vm353, 1.0, 0.0
  %v866 = vsel %vm354, 1.0, 0.0
  %v867 = vsel %vm355, 1.0, 0.0
  %v868 = vsel %vm356, 1.0, 0.0
  %v869 = vsel %vm357, 1.0, 0.0
  %v870 = vsel %vm358, 1.0, 0.0
  %v871 = vsel %vm359, 1.0, 0.0
  %v872 = vsel %vm360, 1.0, 0.0
  %v873 = vsel %vm361, 1.0, 0.0
  %v874 = vsel %vm362, 1.0, 0.0
  %v875 = vsel %vm363, 1.0, 0.0
  %v876 = vsel %vm364, 1.0, 0.0
  %v877 = vsel %vm365, 1.0, 0.0
  %v878 = vsel %vm366, 1.0, 0.0
  %v879 = vsel %vm367, 1.0, 0.0
  %v880 = vsel %vm368, 1.0, 0.0
  %v881 = vsel %vm369, 1.0, 0.0
  %v882 = vsel %vm370, 1.0, 0.0
  %v883 = vsel %vm371, 1.0, 0.0
  %v884 = vsel %vm372, 1.0, 0.0
  %v885 = vsel %vm373, 1.0, 0.0
  %v886 = vsel %vm374, 1.0, 0.0
  %v887 = vsel %vm375, 1.0, 0.0
  %v888 = vsel %vm376, 1.0, 0.0
  %v889 = vsel %vm377, 1.0, 0.0
  %v890 = vsel %vm378, 1.0, 0.0
  %v891 = vsel %vm379, 1.0, 0.0
  %v892 = vsel %vm380, 1.0, 0.0
  %v893 = vsel %vm381, 1.0, 0.0
  %v894 = vsel %vm382, 1.0, 0.0
  %v895 = vsel %vm383, 1.0, 0.0
  %v896 = vsel %vm384, 1.0, 0.0
  %v897 = vsel %vm385, 1.0, 0.0
  %v898 = vsel %vm386, 1.0, 0.0
  %v899 = vsel %vm387, 1.0, 0.0
  %v900 = vsel %vm388, 1.0, 0.0
  %v901 = vsel %vm389, 1.0, 0.0
  %v902 = vsel %vm390, 1.0, 0.0
  %v903 = vsel %vm391, 1.0, 0.0
  %v904 = vsel %vm392, 1.0, 0.0
  %v905 = vsel %vm393, 1.0, 0.0
  %v906 = vsel %vm394, 1.0, 0.0
  %v907 = vsel %vm395, 1.0, 0.0
  %v908 = vsel %vm396, 1.0, 0.0
  %v909 = vsel %vm397, 1.0, 0.0
  %v910 = vsel %vm398, 1.0, 0.0
  %v911 = vsel %vm399, 1.0, 0.0
  %v912 = vsel %vm400, 1.0, 0.0
  %v913 = vsel %vm401, 1.0, 0.0
  %v914 = vsel %vm402, 1.0, 0.0
  %v915 = vsel %vm403, 1.0, 0.0
  %v916 = vsel %vm404, 1.0, 0.0
  %v917 = vsel %vm405, 1.0, 0.0
  %v918 = vsel %vm406, 1.0, 0.0
  %v919 = vsel %vm407, 1.0, 0.0
  %v920 = vsel %vm408, 1.0, 0.0
  %v921 = vsel %vm409, 1.0, 0.0
  %v922 = vsel %vm410, 1.0, 0.0
  %v923 = vsel %vm411, 1.0, 0.0
  %v924 = vsel %vm412, 1.0, 0.0
  %v925 = vsel %vm413, 1.0, 0.0
  %v926 = vsel %vm414, 1.0, 0.0
  %v927 = vsel %vm415, 1.0, 0.0
  %v928 = vsel %vm416, 1.0, 0.0
  %v929 = vsel %vm417, 1.0, 0.0
  %v930 = vsel %vm418, 1.0, 0.0
  %v931 = vsel %vm419, 1.0, 0.0
  %v932 = vsel %vm420, 1.0, 0.0
  %v933 = vsel %vm421, 1.0, 0.0
  %v934 = vsel %vm422, 1.0, 0.0
  %v935 = vsel %vm423, 1.0, 0.0
  %v936 = vsel %vm424, 1.0, 0.0
  %v937 = vsel %vm425, 1.0, 0.0
  %v938 = vsel %vm426, 1.0, 0.0
  %v939 = vsel %vm427, 1.0, 0.0
  %v940 = vsel %vm428, 1.0, 0.0
  %v941 = vsel %vm429, 1.0, 0.0
  %v942 = vsel %vm430, 1.0, 0.0
  %v943 = vsel %vm431, 1.0, 0.0
  %v944 = vsel %vm432, 1.0, 0.0
  %v945 = vsel %vm433, 1.0, 0.0
  %v946 = vsel %vm434, 1.0, 0.0
  %v947 = vsel %vm435, 1.0, 0.0
  %v948 = vsel %vm436, 1.0, 0.0
  %v949 = vsel %vm437, 1.0, 0.0
  %v950 = vsel %vm438, 1.0, 0.0
  %v951 = vsel %vm439, 1.0, 0.0
  %v952 = vsel %vm440, 1.0, 0.0
  %v953 = vsel %vm441, 1.0, 0.0
  %v954 = vsel %vm442, 1.0, 0.0
  %v955 = vsel %vm443, 1.0, 0.0
  %v956 = vsel %vm444, 1.0, 0.0
  %v957 = vsel %vm445, 1.0, 0.0
  %v958 = vsel %vm446, 1.0, 0.0
  %v959 = vsel %vm447, 1.0, 0.0
  %v960 = vsel %vm448, 1.0, 0.0
  %v961 = vsel %vm449, 1.0, 0.0
  %v962 = vsel %vm450, 1.0, 0.0
  %v963 = vsel %vm451, 1.0, 0.0
  %v964 = vsel %vm452, 1.0, 0.0
  %v965 = vsel %vm453, 1.0, 0.0
  %v966 = vsel %vm454, 1.0, 0.0
  %v967 = vsel %vm455, 1.0, 0.0
  %v968 = vsel %vm456, 1.0, 0.0
  %v969 = vsel %vm457, 1.0, 0.0
  %v970 = vsel %vm458, 1.0, 0.0
  %v971 = vsel %vm459, 1.0, 0.0
  %v972 = vsel %vm460, 1.0, 0.0
  %v973 = vsel %vm461, 1.0, 0.0
  %v974 = vsel %vm462, 1.0, 0.0
  %v975 = vsel %vm463, 1.0, 0.0
  %v976 = vsel %vm464, 1.0, 0.0
  %v977 = vsel %vm465, 1.0, 0.0
  %v978 = vsel %vm466, 1.0, 0.0
  %v979 = vsel %vm467, 1.0, 0.0
  %v980 = vsel %vm468, 1.0, 0.0
  %v981 = vsel %vm469, 1.0, 0.0
  %v982 = vsel %vm470, 1.0, 0.0
  %v983 = vsel %vm471, 1.0, 0.0
  %v984 = vsel %vm472, 1.0, 0.0
  %v985 = vsel %vm473, 1.0, 0.0
  %v986 = vsel %vm474, 1.0, 0.0
  %v987 = vsel %vm475, 1.0, 0.0
  %v988 = vsel %vm476, 1.0, 0.0
  %v989 = vsel %vm477, 1.0, 0.0
  %v990 = vsel %vm478, 1.0, 0.0
  %v991 = vsel %vm479, 1.0, 0.0
  %v992 = vsel %vm480, 1.0, 0.0
  %v993 = vsel %vm481, 1.0, 0.0
  %v994 = vsel %vm482, 1.0, 0.0
  %v995 = vsel %vm483, 1.0, 0.0
  %v996 = vsel %vm484, 1.0, 0.0
  %v997 = vsel %vm485, 1.0, 0.0
  %v998 = vsel %vm486, 1.0, 0.0
  %v999 = vsel %vm487, 1.0, 0.0
  %v1000 = vsel %vm488, 1.0, 0.0
  %v1001 = vsel %vm489, 1.0, 0.0
  %v1002 = vsel %vm490, 1.0, 0.0
  %v1003 = vsel %vm491, 1.0, 0.0
  %v1004 = vsel %vm492, 1.0, 0.0
  %v1005 = vsel %vm493, 1.0, 0.0
  %v1006 = vsel %vm494, 1.0, 0.0
  %v1007 = vsel %vm495, 1.0, 0.0
  %v1008 = vsel %vm496, 1.0, 0.0
  %v1009 = vsel %vm497, 1.0, 0.0
  %v1010 = vsel %vm498, 1.0, 0.0
  %v1011 = vsel %vm499, 1.0, 0.0
  %v1012 = vsel %vm500, 1.0, 0.0
  %v1013 = vsel %vm501, 1.0, 0.0
  %v1014 = vsel %vm502, 1.0, 0.0
  %v1015 = vsel %vm503, 1.0, 0.0
  %v1016 = vsel %vm504, 1.0, 0.0
  %v1017 = vsel %vm505, 1.0, 0.0
  %v1018 = vsel %vm506, 1.0, 0.0
  %v1019 = vsel %vm507, 1.0, 0.0
  %v1020 = vsel %vm508, 1.0, 0.0
  %v1021 = vsel %vm509, 1.0, 0.0
  %v1022 = vsel %vm510, 1.0, 0.0
  %v1023 = vsel %vm511, 1.0, 0.0
  %v1024 = vsel %vm512, 1.0, 0.0
  %v1025 = vsel %vm513, 1.0, 0.0
  %v1026 = vsel %vm514, 1.0, 0.0
  %v1027 = vsel %vm515, 1.0, 0.0
  %v1028 = vsel %vm516, 1.0, 0.0
  %v1029 = vsel %vm517, 1.0, 0.0
  %v1030 = vsel %vm518, 1.0, 0.0
  %v1031 = vsel %vm519, 1.0, 0.0
  %v1032 = vsel %vm520, 1.0, 0.0
  %v1033 = vsel %vm521, 1.0, 0.0
  %v1034 = vsel %vm522, 1.0, 0.0
  %v1035 = vsel %vm523, 1.0, 0.0
  %v1036 = vsel %vm524, 1.0, 0.0
  %v1037 = vsel %vm525, 1.0, 0.0
  %v1038 = vsel %vm526, 1.0, 0.0
  %v1039 = vsel %vm527, 1.0, 0.0
  %v1040 = vsel %vm528, 1.0, 0.0
  %v1041 = vsel %vm529, 1.0, 0.0
  %v1042 = vsel %vm530, 1.0, 0.0
  %v1043 = vsel %vm531, 1.0, 0.0
  %v1044 = vsel %vm532, 1.0, 0.0
  %v1045 = vsel %vm533, 1.0, 0.0
  %v1046 = vsel %vm534, 1.0, 0.0
  %v1047 = vsel %vm535, 1.0, 0.0
  %v1048 = vsel %vm536, 1.0, 0.0
  %v1049 = vsel %vm537, 1.0, 0.0
  %v1050 = vsel %vm538, 1.0, 0.0
  %v1051 = vsel %vm539, 1.0, 0.0
  %v1052 = vsel %vm540, 1.0, 0.0
  %v1053 = vsel %vm541, 1.0, 0.0
  %v1054 = vsel %vm542, 1.0, 0.0
  %v1055 = vsel %vm543, 1.0, 0.0
  %v1056 = vsel %vm544, 1.0, 0.0
  %v1057 = vsel %vm545, 1.0, 0.0
  %v1058 = vsel %vm546, 1.0, 0.0
  %v1059 = vsel %vm547, 1.0, 0.0
  %v1060 = vsel %vm548, 1.0, 0.0
  %v1061 = vsel %vm549, 1.0, 0.0
  %v1062 = vsel %vm550, 1.0, 0.0
  %v1063 = vsel %vm551, 1.0, 0.0
  %v1064 = vsel %vm552, 1.0, 0.0
  %v1065 = vsel %vm553, 1.0, 0.0
  %v1066 = vsel %vm554, 1.0, 0.0
  %v1067 = vsel %vm555, 1.0, 0.0
  %v1068 = vsel %vm556, 1.0, 0.0
  %v1069 = vsel %vm557, 1.0, 0.0
  %v1070 = vsel %vm558, 1.0, 0.0
  %v1071 = vsel %vm559, 1.0, 0.0
  %v1072 = vsel %vm560, 1.0, 0.0
  %v1073 = vsel %vm561, 1.0, 0.0
  %v1074 = vsel %vm562, 1.0, 0.0
  %v1075 = vsel %vm563, 1.0, 0.0
  %v1076 = vsel %vm564, 1.0, 0.0
  %v1077 = vsel %vm565, 1.0, 0.0
  %v1078 = vsel %vm566, 1.0, 0.0
  %v1079 = vsel %vm567, 1.0, 0.0
  %v1080 = vsel %vm568, 1.0, 0.0
  %v1081 = vsel %vm569, 1.0, 0.0
  %v1082 = vsel %vm570, 1.0, 0.0
  %v1083 = vsel %vm571, 1.0, 0.0
  %v1084 = vsel %vm572, 1.0, 0.0
  %v1085 = vsel %vm573, 1.0, 0.0
  %v1086 = vsel %vm574, 1.0, 0.0
  %v1087 = vsel %vm575, 1.0, 0.0
  %v1088 = vsel %vm576, 1.0, 0.0
  %v1089 = vsel %vm577, 1.0, 0.0
  %v1090 = vsel %vm578, 1.0, 0.0
  %v1091 = vsel %vm579, 1.0, 0.0
  %v1092 = vsel %vm580, 1.0, 0.0
  %v1093 = vsel %vm581, 1.0, 0.0
  %v1094 = vsel %vm582, 1.0, 0.0
  %v1095 = vsel %vm583, 1.0, 0.0
  %v1096 = vsel %vm584, 1.0, 0.0
  %v1097 = vsel %vm585, 1.0, 0.0
  %v1098 = vsel %vm586, 1.0, 0.0
  %v1099 = vsel %vm587, 1.0, 0.0
  %v1100 = vsel %vm588, 1.0, 0.0
  %v1101 = vsel %vm589, 1.0, 0.0
  %v1102 = vsel %vm590, 1.0, 0.0
  %v1103 = vsel %vm591, 1.0, 0.0
  %v1104 = vsel %vm592, 1.0, 0.0
  %v1105 = vsel %vm593, 1.0, 0.0
  %v1106 = vsel %vm594, 1.0, 0.0
  %v1107 = vsel %vm595, 1.0, 0.0
  %v1108 = vsel %vm596, 1.0, 0.0
  %v1109 = vsel %vm597, 1.0, 0.0
  %v1110 = vsel %vm598, 1.0, 0.0
  %v1111 = vsel %vm599, 1.0, 0.0
  %v1112 = vsel %vm600, 1.0, 0.0
  %v1113 = vsel %vm601, 1.0, 0.0
  %v1114 = vsel %vm602, 1.0, 0.0
  %v1115 = vsel %vm603, 1.0, 0.0
  %v1116 = vsel %vm604, 1.0, 0.0
  %v1117 = vsel %vm605, 1.0, 0.0
  %v1118 = vsel %vm606, 1.0, 0.0
  %v1119 = vsel %vm607, 1.0, 0.0
  %v1120 = vsel %vm608, 1.0, 0.0
  %v1121 = vsel %vm609, 1.0, 0.0
  %v1122 = vsel %vm610, 1.0, 0.0
  %v1123 = vsel %vm611, 1.0, 0.0
  %v1124 = vsel %vm612, 1.0, 0.0
  %v1125 = vsel %vm613, 1.0, 0.0
  %v1126 = vsel %vm614, 1.0, 0.0
  %v1127 = vsel %vm615, 1.0, 0.0
  %v1128 = vsel %vm616, 1.0, 0.0
  %v1129 = vsel %vm617, 1.0, 0.0
  %v1130 = vsel %vm618, 1.0, 0.0
  %v1131 = vsel %vm619, 1.0, 0.0
  %v1132 = vsel %vm620, 1.0, 0.0
  %v1133 = vsel %vm621, 1.0, 0.0
  %v1134 = vsel %vm622, 1.0, 0.0
  %v1135 = vsel %vm623, 1.0, 0.0
  %v1136 = vsel %vm624, 1.0, 0.0
  %v1137 = vsel %vm625, 1.0, 0.0
  %v1138 = vsel %vm626, 1.0, 0.0
  %v1139 = vsel %vm627, 1.0, 0.0
  %v1140 = vsel %vm628, 1.0, 0.0
  %v1141 = vsel %vm629, 1.0, 0.0
  %v1142 = vsel %vm630, 1.0, 0.0
  %v1143 = vsel %vm631, 1.0, 0.0
  %v1144 = vsel %vm632, 1.0, 0.0
  %v1145 = vsel %vm633, 1.0, 0.0
  %v1146 = vsel %vm634, 1.0, 0.0
  %v1147 = vsel %vm635, 1.0, 0.0
  %v1148 = vsel %vm636, 1.0, 0.0
  %v1149 = vsel %vm637, 1.0, 0.0
  %v1150 = vsel %vm638, 1.0, 0.0
  %v1151 = vsel %vm639, 1.0, 0.0
  %v1152 = vsel %vm640, 1.0, 0.0
  %v1153 = vsel %vm641, 1.0, 0.0
  %v1154 = vsel %vm642, 1.0, 0.0
  %v1155 = vsel %vm643, 1.0, 0.0
  %v1156 = vsel %vm644, 1.0, 0.0
  %v1157 = vsel %vm645, 1.0, 0.0
  %v1158 = vsel %vm646, 1.0, 0.0
  %v1159 = vsel %vm647, 1.0, 0.0
  %v1160 = vsel %vm648, 1.0, 0.0
  %v1161 = vsel %vm649, 1.0, 0.0
  %v1162 = vsel %vm650, 1.0, 0.0
  %v1163 = vsel %vm651, 1.0, 0.0
  %v1164 = vsel %vm652, 1.0, 0.0
  %v1165 = vsel %vm653, 1.0, 0.0
  %v1166 = vsel %vm654, 1.0, 0.0
  %v1167 = vsel %vm655, 1.0, 0.0
  %v1168 = vsel %vm656, 1.0, 0.0
  %v1169 = vsel %vm657, 1.0, 0.0
  %v1170 = vsel %vm658, 1.0, 0.0
  %v1171 = vsel %vm659, 1.0, 0.0
  %v1172 = vsel %vm660, 1.0, 0.0
  %v1173 = vsel %vm661, 1.0, 0.0
  %v1174 = vsel %vm662, 1.0, 0.0
  %v1175 = vsel %vm663, 1.0, 0.0
  %v1176 = vsel %vm664, 1.0, 0.0
  %v1177 = vsel %vm665, 1.0, 0.0
  %v1178 = vsel %vm666, 1.0, 0.0
  %v1179 = vsel %vm667, 1.0, 0.0
  %v1180 = vsel %vm668, 1.0, 0.0
  %v1181 = vsel %vm669, 1.0, 0.0
  %v1182 = vsel %vm670, 1.0, 0.0
  %v1183 = vsel %vm671, 1.0, 0.0
  %v1184 = vsel %vm672, 1.0, 0.0
  %v1185 = vsel %vm673, 1.0, 0.0
  %v1186 = vsel %vm674, 1.0, 0.0
  %v1187 = vsel %vm675, 1.0, 0.0
  %v1188 = vsel %vm676, 1.0, 0.0
  %v1189 = vsel %vm677, 1.0, 0.0
  %v1190 = vsel %vm678, 1.0, 0.0
  %v1191 = vsel %vm679, 1.0, 0.0
  %v1192 = vsel %vm680, 1.0, 0.0
  %v1193 = vsel %vm681, 1.0, 0.0
  %v1194 = vsel %vm682, 1.0, 0.0
  %v1195 = vsel %vm683, 1.0, 0.0
  %v1196 = vsel %vm684, 1.0, 0.0
  %v1197 = vsel %vm685, 1.0, 0.0
  %v1198 = vsel %vm686, 1.0, 0.0
  %v1199 = vsel %vm687, 1.0, 0.0
  %v1200 = vpack.c.bf16 %v720, %v688
  %v1201 = vpack.c.bf16 %v721, %v689
  %v1202 = vpack.c.bf16 %v722, %v690
  %v1203 = vpack.c.bf16 %v723, %v691
  %v1204 = vpack.c.bf16 %v724, %v692
  %v1205 = vpack.c.bf16 %v725, %v693
  %v1206 = vpack.c.bf16 %v726, %v694
  %v1207 = vpack.c.bf16 %v727, %v695
  %v1208 = vpack.c.bf16 %v728, %v696
  %v1209 = vpack.c.bf16 %v729, %v697
  %v1210 = vpack.c.bf16 %v730, %v698
  %v1211 = vpack.c.bf16 %v731, %v699
  %v1212 = vpack.c.bf16 %v732, %v700
  %v1213 = vpack.c.bf16 %v733, %v701
  %v1214 = vpack.c.bf16 %v734, %v702
  %v1215 = vpack.c.bf16 %v735, %v703
  %v1216 = vpack.c.bf16 %v736, %v704
  %v1217 = vpack.c.bf16 %v737, %v705
  %v1218 = vpack.c.bf16 %v738, %v706
  %v1219 = vpack.c.bf16 %v739, %v707
  %v1220 = vpack.c.bf16 %v740, %v708
  %v1221 = vpack.c.bf16 %v741, %v709
  %v1222 = vpack.c.bf16 %v742, %v710
  %v1223 = vpack.c.bf16 %v743, %v711
  %v1224 = vpack.c.bf16 %v744, %v712
  %v1225 = vpack.c.bf16 %v745, %v713
  %v1226 = vpack.c.bf16 %v746, %v714
  %v1227 = vpack.c.bf16 %v747, %v715
  %v1228 = vpack.c.bf16 %v748, %v716
  %v1229 = vpack.c.bf16 %v749, %v717
  %v1230 = vpack.c.bf16 %v750, %v718
  %v1231 = vpack.c.bf16 %v751, %v719
  %v1232 = vpack.c.bf16 %v784, %v752
  %v1233 = vpack.c.bf16 %v785, %v753
  %v1234 = vpack.c.bf16 %v786, %v754
  %v1235 = vpack.c.bf16 %v787, %v755
  %v1236 = vpack.c.bf16 %v788, %v756
  %v1237 = vpack.c.bf16 %v789, %v757
  %v1238 = vpack.c.bf16 %v790, %v758
  %v1239 = vpack.c.bf16 %v791, %v759
  %v1240 = vpack.c.bf16 %v792, %v760
  %v1241 = vpack.c.bf16 %v793, %v761
  %v1242 = vpack.c.bf16 %v794, %v762
  %v1243 = vpack.c.bf16 %v795, %v763
  %v1244 = vpack.c.bf16 %v796, %v764
  %v1245 = vpack.c.bf16 %v797, %v765
  %v1246 = vpack.c.bf16 %v798, %v766
  %v1247 = vpack.c.bf16 %v799, %v767
  %v1248 = vpack.c.bf16 %v800, %v768
  %v1249 = vpack.c.bf16 %v801, %v769
  %v1250 = vpack.c.bf16 %v802, %v770
  %v1251 = vpack.c.bf16 %v803, %v771
  %v1252 = vpack.c.bf16 %v804, %v772
  %v1253 = vpack.c.bf16 %v805, %v773
  %v1254 = vpack.c.bf16 %v806, %v774
  %v1255 = vpack.c.bf16 %v807, %v775
  %v1256 = vpack.c.bf16 %v808, %v776
  %v1257 = vpack.c.bf16 %v809, %v777
  %v1258 = vpack.c.bf16 %v810, %v778
  %v1259 = vpack.c.bf16 %v811, %v779
  %v1260 = vpack.c.bf16 %v812, %v780
  %v1261 = vpack.c.bf16 %v813, %v781
  %v1262 = vpack.c.bf16 %v814, %v782
  %v1263 = vpack.c.bf16 %v815, %v783
  %v1264 = vpack.c.bf16 %v848, %v816
  %v1265 = vpack.c.bf16 %v849, %v817
  %v1266 = vpack.c.bf16 %v850, %v818
  %v1267 = vpack.c.bf16 %v851, %v819
  %v1268 = vpack.c.bf16 %v852, %v820
  %v1269 = vpack.c.bf16 %v853, %v821
  %v1270 = vpack.c.bf16 %v854, %v822
  %v1271 = vpack.c.bf16 %v855, %v823
  %v1272 = vpack.c.bf16 %v856, %v824
  %v1273 = vpack.c.bf16 %v857, %v825
  %v1274 = vpack.c.bf16 %v858, %v826
  %v1275 = vpack.c.bf16 %v859, %v827
  %v1276 = vpack.c.bf16 %v860, %v828
  %v1277 = vpack.c.bf16 %v861, %v829
  %v1278 = vpack.c.bf16 %v862, %v830
  %v1279 = vpack.c.bf16 %v863, %v831
  %v1280 = vpack.c.bf16 %v864, %v832
  %v1281 = vpack.c.bf16 %v865, %v833
  %v1282 = vpack.c.bf16 %v866, %v834
  %v1283 = vpack.c.bf16 %v867, %v835
  %v1284 = vpack.c.bf16 %v868, %v836
  %v1285 = vpack.c.bf16 %v869, %v837
  %v1286 = vpack.c.bf16 %v870, %v838
  %v1287 = vpack.c.bf16 %v871, %v839
  %v1288 = vpack.c.bf16 %v872, %v840
  %v1289 = vpack.c.bf16 %v873, %v841
  %v1290 = vpack.c.bf16 %v874, %v842
  %v1291 = vpack.c.bf16 %v875, %v843
  %v1292 = vpack.c.bf16 %v876, %v844
  %v1293 = vpack.c.bf16 %v877, %v845
  %v1294 = vpack.c.bf16 %v878, %v846
  %v1295 = vpack.c.bf16 %v879, %v847
  %v1296 = vpack.c.bf16 %v912, %v880
  %v1297 = vpack.c.bf16 %v913, %v881
  %v1298 = vpack.c.bf16 %v914, %v882
  %v1299 = vpack.c.bf16 %v915, %v883
  %v1300 = vpack.c.bf16 %v916, %v884
  %v1301 = vpack.c.bf16 %v917, %v885
  %v1302 = vpack.c.bf16 %v918, %v886
  %v1303 = vpack.c.bf16 %v919, %v887
  %v1304 = vpack.c.bf16 %v920, %v888
  %v1305 = vpack.c.bf16 %v921, %v889
  %v1306 = vpack.c.bf16 %v922, %v890
  %v1307 = vpack.c.bf16 %v923, %v891
  %v1308 = vpack.c.bf16 %v924, %v892
  %v1309 = vpack.c.bf16 %v925, %v893
  %v1310 = vpack.c.bf16 %v926, %v894
  %v1311 = vpack.c.bf16 %v927, %v895
  %v1312 = vpack.c.bf16 %v928, %v896
  %v1313 = vpack.c.bf16 %v929, %v897
  %v1314 = vpack.c.bf16 %v930, %v898
  %v1315 = vpack.c.bf16 %v931, %v899
  %v1316 = vpack.c.bf16 %v932, %v900
  %v1317 = vpack.c.bf16 %v933, %v901
  %v1318 = vpack.c.bf16 %v934, %v902
  %v1319 = vpack.c.bf16 %v935, %v903
  %v1320 = vpack.c.bf16 %v936, %v904
  %v1321 = vpack.c.bf16 %v937, %v905
  %v1322 = vpack.c.bf16 %v938, %v906
  %v1323 = vpack.c.bf16 %v939, %v907
  %v1324 = vpack.c.bf16 %v940, %v908
  %v1325 = vpack.c.bf16 %v941, %v909
  %v1326 = vpack.c.bf16 %v942, %v910
  %v1327 = vpack.c.bf16 %v943, %v911
  %v1328 = vpack.c.bf16 %v976, %v944
  %v1329 = vpack.c.bf16 %v977, %v945
  %v1330 = vpack.c.bf16 %v978, %v946
  %v1331 = vpack.c.bf16 %v979, %v947
  %v1332 = vpack.c.bf16 %v980, %v948
  %v1333 = vpack.c.bf16 %v981, %v949
  %v1334 = vpack.c.bf16 %v982, %v950
  %v1335 = vpack.c.bf16 %v983, %v951
  %v1336 = vpack.c.bf16 %v984, %v952
  %v1337 = vpack.c.bf16 %v985, %v953
  %v1338 = vpack.c.bf16 %v986, %v954
  %v1339 = vpack.c.bf16 %v987, %v955
  %v1340 = vpack.c.bf16 %v988, %v956
  %v1341 = vpack.c.bf16 %v989, %v957
  %v1342 = vpack.c.bf16 %v990, %v958
  %v1343 = vpack.c.bf16 %v991, %v959
  %v1344 = vpack.c.bf16 %v992, %v960
  %v1345 = vpack.c.bf16 %v993, %v961
  %v1346 = vpack.c.bf16 %v994, %v962
  %v1347 = vpack.c.bf16 %v995, %v963
  %v1348 = vpack.c.bf16 %v996, %v964
  %v1349 = vpack.c.bf16 %v997, %v965
  %v1350 = vpack.c.bf16 %v998, %v966
  %v1351 = vpack.c.bf16 %v999, %v967
  %v1352 = vpack.c.bf16 %v1000, %v968
  %v1353 = vpack.c.bf16 %v1001, %v969
  %v1354 = vpack.c.bf16 %v1002, %v970
  %v1355 = vpack.c.bf16 %v1003, %v971
  %v1356 = vpack.c.bf16 %v1004, %v972
  %v1357 = vpack.c.bf16 %v1005, %v973
  %v1358 = vpack.c.bf16 %v1006, %v974
  %v1359 = vpack.c.bf16 %v1007, %v975
  %v1360 = vpack.c.bf16 %v1040, %v1008
  %v1361 = vpack.c.bf16 %v1041, %v1009
  %v1362 = vpack.c.bf16 %v1042, %v1010
  %v1363 = vpack.c.bf16 %v1043, %v1011
  %v1364 = vpack.c.bf16 %v1044, %v1012
  %v1365 = vpack.c.bf16 %v1045, %v1013
  %v1366 = vpack.c.bf16 %v1046, %v1014
  %v1367 = vpack.c.bf16 %v1047, %v1015
  %v1368 = vpack.c.bf16 %v1048, %v1016
  %v1369 = vpack.c.bf16 %v1049, %v1017
  %v1370 = vpack.c.bf16 %v1050, %v1018
  %v1371 = vpack.c.bf16 %v1051, %v1019
  %v1372 = vpack.c.bf16 %v1052, %v1020
  %v1373 = vpack.c.bf16 %v1053, %v1021
  %v1374 = vpack.c.bf16 %v1054, %v1022
  %v1375 = vpack.c.bf16 %v1055, %v1023
  %v1376 = vpack.c.bf16 %v1056, %v1024
  %v1377 = vpack.c.bf16 %v1057, %v1025
  %v1378 = vpack.c.bf16 %v1058, %v1026
  %v1379 = vpack.c.bf16 %v1059, %v1027
  %v1380 = vpack.c.bf16 %v1060, %v1028
  %v1381 = vpack.c.bf16 %v1061, %v1029
  %v1382 = vpack.c.bf16 %v1062, %v1030
  %v1383 = vpack.c.bf16 %v1063, %v1031
  %v1384 = vpack.c.bf16 %v1064, %v1032
  %v1385 = vpack.c.bf16 %v1065, %v1033
  %v1386 = vpack.c.bf16 %v1066, %v1034
  %v1387 = vpack.c.bf16 %v1067, %v1035
  %v1388 = vpack.c.bf16 %v1068, %v1036
  %v1389 = vpack.c.bf16 %v1069, %v1037
  %v1390 = vpack.c.bf16 %v1070, %v1038
  %v1391 = vpack.c.bf16 %v1071, %v1039
  %v1392 = vpack.c.bf16 %v1104, %v1072
  %v1393 = vpack.c.bf16 %v1105, %v1073
  %v1394 = vpack.c.bf16 %v1106, %v1074
  %v1395 = vpack.c.bf16 %v1107, %v1075
  %v1396 = vpack.c.bf16 %v1108, %v1076
  %v1397 = vpack.c.bf16 %v1109, %v1077
  %v1398 = vpack.c.bf16 %v1110, %v1078
  %v1399 = vpack.c.bf16 %v1111, %v1079
  %v1400 = vpack.c.bf16 %v1112, %v1080
  %v1401 = vpack.c.bf16 %v1113, %v1081
  %v1402 = vpack.c.bf16 %v1114, %v1082
  %v1403 = vpack.c.bf16 %v1115, %v1083
  %v1404 = vpack.c.bf16 %v1116, %v1084
  %v1405 = vpack.c.bf16 %v1117, %v1085
  %v1406 = vpack.c.bf16 %v1118, %v1086
  %v1407 = vpack.c.bf16 %v1119, %v1087
  %v1408 = vpack.c.bf16 %v1120, %v1088
  %v1409 = vpack.c.bf16 %v1121, %v1089
  %v1410 = vpack.c.bf16 %v1122, %v1090
  %v1411 = vpack.c.bf16 %v1123, %v1091
  %v1412 = vpack.c.bf16 %v1124, %v1092
  %v1413 = vpack.c.bf16 %v1125, %v1093
  %v1414 = vpack.c.bf16 %v1126, %v1094
  %v1415 = vpack.c.bf16 %v1127, %v1095
  %v1416 = vpack.c.bf16 %v1128, %v1096
  %v1417 = vpack.c.bf16 %v1129, %v1097
  %v1418 = vpack.c.bf16 %v1130, %v1098
  %v1419 = vpack.c.bf16 %v1131, %v1099
  %v1420 = vpack.c.bf16 %v1132, %v1100
  %v1421 = vpack.c.bf16 %v1133, %v1101
  %v1422 = vpack.c.bf16 %v1134, %v1102
  %v1423 = vpack.c.bf16 %v1135, %v1103
  %v1424 = vpack.c.bf16 %v1168, %v1136
  %v1425 = vpack.c.bf16 %v1169, %v1137
  %v1426 = vpack.c.bf16 %v1170, %v1138
  %v1427 = vpack.c.bf16 %v1171, %v1139
  %v1428 = vpack.c.bf16 %v1172, %v1140
  %v1429 = vpack.c.bf16 %v1173, %v1141
  %v1430 = vpack.c.bf16 %v1174, %v1142
  %v1431 = vpack.c.bf16 %v1175, %v1143
  %v1432 = vpack.c.bf16 %v1176, %v1144
  %v1433 = vpack.c.bf16 %v1177, %v1145
  %v1434 = vpack.c.bf16 %v1178, %v1146
  %v1435 = vpack.c.bf16 %v1179, %v1147
  %v1436 = vpack.c.bf16 %v1180, %v1148
  %v1437 = vpack.c.bf16 %v1181, %v1149
  %v1438 = vpack.c.bf16 %v1182, %v1150
  %v1439 = vpack.c.bf16 %v1183, %v1151
  %v1440 = vpack.c.bf16 %v1184, %v1152
  %v1441 = vpack.c.bf16 %v1185, %v1153
  %v1442 = vpack.c.bf16 %v1186, %v1154
  %v1443 = vpack.c.bf16 %v1187, %v1155
  %v1444 = vpack.c.bf16 %v1188, %v1156
  %v1445 = vpack.c.bf16 %v1189, %v1157
  %v1446 = vpack.c.bf16 %v1190, %v1158
  %v1447 = vpack.c.bf16 %v1191, %v1159
  %v1448 = vpack.c.bf16 %v1192, %v1160
  %v1449 = vpack.c.bf16 %v1193, %v1161
  %v1450 = vpack.c.bf16 %v1194, %v1162
  %v1451 = vpack.c.bf16 %v1195, %v1163
  %v1452 = vpack.c.bf16 %v1196, %v1164
  %v1453 = vpack.c.bf16 %v1197, %v1165
  %v1454 = vpack.c.bf16 %v1198, %v1166
  %v1455 = vpack.c.bf16 %v1199, %v1167
  %v1456 = vld [vmem:[%s3] sm:$0xff]
  %v1457 = vld [vmem:[%s3 + $0x8] sm:$0xff]
  %v1458 = vld [vmem:[%s3 + $0x10] sm:$0xff]
  %v1459 = vld [vmem:[%s3 + $0x18] sm:$0xff]
  %v1460 = vlaneseq
  %v1461 = vshrl.u32 %v1460, 7
  %v1462 = vsub.s32 0, %v1461
  %v1463 = vrot.slane %v1456, %v1462
  %v1464 = vlaneseq
  %v1465 = vshrl.u32 %v1464, 7
  %v1466 = vsub.s32 1, %v1465
  %v1467 = vrot.slane %v1456, %v1466
  %v1468 = vlaneseq
  %v1469 = vshrl.u32 %v1468, 7
  %v1470 = vsub.s32 2, %v1469
  %v1471 = vrot.slane %v1456, %v1470
  %v1472 = vlaneseq
  %v1473 = vshrl.u32 %v1472, 7
  %v1474 = vsub.s32 3, %v1473
  %v1475 = vrot.slane %v1456, %v1474
  %v1476 = vlaneseq
  %v1477 = vshrl.u32 %v1476, 7
  %v1478 = vsub.s32 4, %v1477
  %v1479 = vrot.slane %v1456, %v1478
  %v1480 = vlaneseq
  %v1481 = vshrl.u32 %v1480, 7
  %v1482 = vsub.s32 5, %v1481
  %v1483 = vrot.slane %v1456, %v1482
  %v1484 = vlaneseq
  %v1485 = vshrl.u32 %v1484, 7
  %v1486 = vsub.s32 6, %v1485
  %v1487 = vrot.slane %v1456, %v1486
  %v1488 = vlaneseq
  %v1489 = vshrl.u32 %v1488, 7
  %v1490 = vsub.s32 7, %v1489
  %v1491 = vrot.slane %v1456, %v1490
  %v1492 = vlaneseq
  %v1493 = vshrl.u32 %v1492, 7
  %v1494 = vsub.s32 0, %v1493
  %v1495 = vrot.slane %v1457, %v1494
  %v1496 = vlaneseq
  %v1497 = vshrl.u32 %v1496, 7
  %v1498 = vsub.s32 1, %v1497
  %v1499 = vrot.slane %v1457, %v1498
  %v1500 = vlaneseq
  %v1501 = vshrl.u32 %v1500, 7
  %v1502 = vsub.s32 2, %v1501
  %v1503 = vrot.slane %v1457, %v1502
  %v1504 = vlaneseq
  %v1505 = vshrl.u32 %v1504, 7
  %v1506 = vsub.s32 3, %v1505
  %v1507 = vrot.slane %v1457, %v1506
  %v1508 = vlaneseq
  %v1509 = vshrl.u32 %v1508, 7
  %v1510 = vsub.s32 4, %v1509
  %v1511 = vrot.slane %v1457, %v1510
  %v1512 = vlaneseq
  %v1513 = vshrl.u32 %v1512, 7
  %v1514 = vsub.s32 5, %v1513
  %v1515 = vrot.slane %v1457, %v1514
  %v1516 = vlaneseq
  %v1517 = vshrl.u32 %v1516, 7
  %v1518 = vsub.s32 6, %v1517
  %v1519 = vrot.slane %v1457, %v1518
  %v1520 = vlaneseq
  %v1521 = vshrl.u32 %v1520, 7
  %v1522 = vsub.s32 7, %v1521
  %v1523 = vrot.slane %v1457, %v1522
  %v1524 = vlaneseq
  %v1525 = vshrl.u32 %v1524, 7
  %v1526 = vsub.s32 0, %v1525
  %v1527 = vrot.slane %v1458, %v1526
  %v1528 = vlaneseq
  %v1529 = vshrl.u32 %v1528, 7
  %v1530 = vsub.s32 1, %v1529
  %v1531 = vrot.slane %v1458, %v1530
  %v1532 = vlaneseq
  %v1533 = vshrl.u32 %v1532, 7
  %v1534 = vsub.s32 2, %v1533
  %v1535 = vrot.slane %v1458, %v1534
  %v1536 = vlaneseq
  %v1537 = vshrl.u32 %v1536, 7
  %v1538 = vsub.s32 3, %v1537
  %v1539 = vrot.slane %v1458, %v1538
  %v1540 = vlaneseq
  %v1541 = vshrl.u32 %v1540, 7
  %v1542 = vsub.s32 4, %v1541
  %v1543 = vrot.slane %v1458, %v1542
  %v1544 = vlaneseq
  %v1545 = vshrl.u32 %v1544, 7
  %v1546 = vsub.s32 5, %v1545
  %v1547 = vrot.slane %v1458, %v1546
  %v1548 = vlaneseq
  %v1549 = vshrl.u32 %v1548, 7
  %v1550 = vsub.s32 6, %v1549
  %v1551 = vrot.slane %v1458, %v1550
  %v1552 = vlaneseq
  %v1553 = vshrl.u32 %v1552, 7
  %v1554 = vsub.s32 7, %v1553
  %v1555 = vrot.slane %v1458, %v1554
  %v1556 = vlaneseq
  %v1557 = vshrl.u32 %v1556, 7
  %v1558 = vsub.s32 0, %v1557
  %v1559 = vrot.slane %v1459, %v1558
  %v1560 = vlaneseq
  %v1561 = vshrl.u32 %v1560, 7
  %v1562 = vsub.s32 1, %v1561
  %v1563 = vrot.slane %v1459, %v1562
  %v1564 = vlaneseq
  %v1565 = vshrl.u32 %v1564, 7
  %v1566 = vsub.s32 2, %v1565
  %v1567 = vrot.slane %v1459, %v1566
  %v1568 = vlaneseq
  %v1569 = vshrl.u32 %v1568, 7
  %v1570 = vsub.s32 3, %v1569
  %v1571 = vrot.slane %v1459, %v1570
  %v1572 = vlaneseq
  %v1573 = vshrl.u32 %v1572, 7
  %v1574 = vsub.s32 4, %v1573
  %v1575 = vrot.slane %v1459, %v1574
  %v1576 = vlaneseq
  %v1577 = vshrl.u32 %v1576, 7
  %v1578 = vsub.s32 5, %v1577
  %v1579 = vrot.slane %v1459, %v1578
  %v1580 = vlaneseq
  %v1581 = vshrl.u32 %v1580, 7
  %v1582 = vsub.s32 6, %v1581
  %v1583 = vrot.slane %v1459, %v1582
  %v1584 = vlaneseq
  %v1585 = vshrl.u32 %v1584, 7
  %v1586 = vsub.s32 7, %v1585
  %v1587 = vrot.slane %v1459, %v1586
  %vm1588 = vcmp.eq.s32.totalorder %v28, %v1463
  %vm1589 = vcmp.eq.s32.totalorder %v28, %v1467
  %vm1590 = vcmp.eq.s32.totalorder %v28, %v1471
  %vm1591 = vcmp.eq.s32.totalorder %v28, %v1475
  %vm1592 = vcmp.eq.s32.totalorder %v28, %v1479
  %vm1593 = vcmp.eq.s32.totalorder %v28, %v1483
  %vm1594 = vcmp.eq.s32.totalorder %v28, %v1487
  %vm1595 = vcmp.eq.s32.totalorder %v28, %v1491
  %vm1596 = vcmp.eq.s32.totalorder %v28, %v1495
  %vm1597 = vcmp.eq.s32.totalorder %v28, %v1499
  %vm1598 = vcmp.eq.s32.totalorder %v28, %v1503
  %vm1599 = vcmp.eq.s32.totalorder %v28, %v1507
  %vm1600 = vcmp.eq.s32.totalorder %v28, %v1511
  %vm1601 = vcmp.eq.s32.totalorder %v28, %v1515
  %vm1602 = vcmp.eq.s32.totalorder %v28, %v1519
  %vm1603 = vcmp.eq.s32.totalorder %v28, %v1523
  %vm1604 = vcmp.eq.s32.totalorder %v28, %v1527
  %vm1605 = vcmp.eq.s32.totalorder %v28, %v1531
  %vm1606 = vcmp.eq.s32.totalorder %v28, %v1535
  %vm1607 = vcmp.eq.s32.totalorder %v28, %v1539
  %vm1608 = vcmp.eq.s32.totalorder %v28, %v1543
  %vm1609 = vcmp.eq.s32.totalorder %v28, %v1547
  %vm1610 = vcmp.eq.s32.totalorder %v28, %v1551
  %vm1611 = vcmp.eq.s32.totalorder %v28, %v1555
  %vm1612 = vcmp.eq.s32.totalorder %v28, %v1559
  %vm1613 = vcmp.eq.s32.totalorder %v28, %v1563
  %vm1614 = vcmp.eq.s32.totalorder %v28, %v1567
  %vm1615 = vcmp.eq.s32.totalorder %v28, %v1571
  %vm1616 = vcmp.eq.s32.totalorder %v28, %v1575
  %vm1617 = vcmp.eq.s32.totalorder %v28, %v1579
  %vm1618 = vcmp.eq.s32.totalorder %v28, %v1583
  %vm1619 = vcmp.eq.s32.totalorder %v28, %v1587
  %vm1620 = vcmp.eq.s32.totalorder %v29, %v1463
  %vm1621 = vcmp.eq.s32.totalorder %v29, %v1467
  %vm1622 = vcmp.eq.s32.totalorder %v29, %v1471
  %vm1623 = vcmp.eq.s32.totalorder %v29, %v1475
  %vm1624 = vcmp.eq.s32.totalorder %v29, %v1479
  %vm1625 = vcmp.eq.s32.totalorder %v29, %v1483
  %vm1626 = vcmp.eq.s32.totalorder %v29, %v1487
  %vm1627 = vcmp.eq.s32.totalorder %v29, %v1491
  %vm1628 = vcmp.eq.s32.totalorder %v29, %v1495
  %vm1629 = vcmp.eq.s32.totalorder %v29, %v1499
  %vm1630 = vcmp.eq.s32.totalorder %v29, %v1503
  %vm1631 = vcmp.eq.s32.totalorder %v29, %v1507
  %vm1632 = vcmp.eq.s32.totalorder %v29, %v1511
  %vm1633 = vcmp.eq.s32.totalorder %v29, %v1515
  %vm1634 = vcmp.eq.s32.totalorder %v29, %v1519
  %vm1635 = vcmp.eq.s32.totalorder %v29, %v1523
  %vm1636 = vcmp.eq.s32.totalorder %v29, %v1527
  %vm1637 = vcmp.eq.s32.totalorder %v29, %v1531
  %vm1638 = vcmp.eq.s32.totalorder %v29, %v1535
  %vm1639 = vcmp.eq.s32.totalorder %v29, %v1539
  %vm1640 = vcmp.eq.s32.totalorder %v29, %v1543
  %vm1641 = vcmp.eq.s32.totalorder %v29, %v1547
  %vm1642 = vcmp.eq.s32.totalorder %v29, %v1551
  %vm1643 = vcmp.eq.s32.totalorder %v29, %v1555
  %vm1644 = vcmp.eq.s32.totalorder %v29, %v1559
  %vm1645 = vcmp.eq.s32.totalorder %v29, %v1563
  %vm1646 = vcmp.eq.s32.totalorder %v29, %v1567
  %vm1647 = vcmp.eq.s32.totalorder %v29, %v1571
  %vm1648 = vcmp.eq.s32.totalorder %v29, %v1575
  %vm1649 = vcmp.eq.s32.totalorder %v29, %v1579
  %vm1650 = vcmp.eq.s32.totalorder %v29, %v1583
  %vm1651 = vcmp.eq.s32.totalorder %v29, %v1587
  %vm1652 = vcmp.eq.s32.totalorder %v30, %v1463
  %vm1653 = vcmp.eq.s32.totalorder %v30, %v1467
  %vm1654 = vcmp.eq.s32.totalorder %v30, %v1471
  %vm1655 = vcmp.eq.s32.totalorder %v30, %v1475
  %vm1656 = vcmp.eq.s32.totalorder %v30, %v1479
  %vm1657 = vcmp.eq.s32.totalorder %v30, %v1483
  %vm1658 = vcmp.eq.s32.totalorder %v30, %v1487
  %vm1659 = vcmp.eq.s32.totalorder %v30, %v1491
  %vm1660 = vcmp.eq.s32.totalorder %v30, %v1495
  %vm1661 = vcmp.eq.s32.totalorder %v30, %v1499
  %vm1662 = vcmp.eq.s32.totalorder %v30, %v1503
  %vm1663 = vcmp.eq.s32.totalorder %v30, %v1507
  %vm1664 = vcmp.eq.s32.totalorder %v30, %v1511
  %vm1665 = vcmp.eq.s32.totalorder %v30, %v1515
  %vm1666 = vcmp.eq.s32.totalorder %v30, %v1519
  %vm1667 = vcmp.eq.s32.totalorder %v30, %v1523
  %vm1668 = vcmp.eq.s32.totalorder %v30, %v1527
  %vm1669 = vcmp.eq.s32.totalorder %v30, %v1531
  %vm1670 = vcmp.eq.s32.totalorder %v30, %v1535
  %vm1671 = vcmp.eq.s32.totalorder %v30, %v1539
  %vm1672 = vcmp.eq.s32.totalorder %v30, %v1543
  %vm1673 = vcmp.eq.s32.totalorder %v30, %v1547
  %vm1674 = vcmp.eq.s32.totalorder %v30, %v1551
  %vm1675 = vcmp.eq.s32.totalorder %v30, %v1555
  %vm1676 = vcmp.eq.s32.totalorder %v30, %v1559
  %vm1677 = vcmp.eq.s32.totalorder %v30, %v1563
  %vm1678 = vcmp.eq.s32.totalorder %v30, %v1567
  %vm1679 = vcmp.eq.s32.totalorder %v30, %v1571
  %vm1680 = vcmp.eq.s32.totalorder %v30, %v1575
  %vm1681 = vcmp.eq.s32.totalorder %v30, %v1579
  %vm1682 = vcmp.eq.s32.totalorder %v30, %v1583
  %vm1683 = vcmp.eq.s32.totalorder %v30, %v1587
  %vm1684 = vcmp.eq.s32.totalorder %v31, %v1463
  %vm1685 = vcmp.eq.s32.totalorder %v31, %v1467
  %vm1686 = vcmp.eq.s32.totalorder %v31, %v1471
  %vm1687 = vcmp.eq.s32.totalorder %v31, %v1475
  %vm1688 = vcmp.eq.s32.totalorder %v31, %v1479
  %vm1689 = vcmp.eq.s32.totalorder %v31, %v1483
  %vm1690 = vcmp.eq.s32.totalorder %v31, %v1487
  %vm1691 = vcmp.eq.s32.totalorder %v31, %v1491
  %vm1692 = vcmp.eq.s32.totalorder %v31, %v1495
  %vm1693 = vcmp.eq.s32.totalorder %v31, %v1499
  %vm1694 = vcmp.eq.s32.totalorder %v31, %v1503
  %vm1695 = vcmp.eq.s32.totalorder %v31, %v1507
  %vm1696 = vcmp.eq.s32.totalorder %v31, %v1511
  %vm1697 = vcmp.eq.s32.totalorder %v31, %v1515
  %vm1698 = vcmp.eq.s32.totalorder %v31, %v1519
  %vm1699 = vcmp.eq.s32.totalorder %v31, %v1523
  %vm1700 = vcmp.eq.s32.totalorder %v31, %v1527
  %vm1701 = vcmp.eq.s32.totalorder %v31, %v1531
  %vm1702 = vcmp.eq.s32.totalorder %v31, %v1535
  %vm1703 = vcmp.eq.s32.totalorder %v31, %v1539
  %vm1704 = vcmp.eq.s32.totalorder %v31, %v1543
  %vm1705 = vcmp.eq.s32.totalorder %v31, %v1547
  %vm1706 = vcmp.eq.s32.totalorder %v31, %v1551
  %vm1707 = vcmp.eq.s32.totalorder %v31, %v1555
  %vm1708 = vcmp.eq.s32.totalorder %v31, %v1559
  %vm1709 = vcmp.eq.s32.totalorder %v31, %v1563
  %vm1710 = vcmp.eq.s32.totalorder %v31, %v1567
  %vm1711 = vcmp.eq.s32.totalorder %v31, %v1571
  %vm1712 = vcmp.eq.s32.totalorder %v31, %v1575
  %vm1713 = vcmp.eq.s32.totalorder %v31, %v1579
  %vm1714 = vcmp.eq.s32.totalorder %v31, %v1583
  %vm1715 = vcmp.eq.s32.totalorder %v31, %v1587
  %vm1716 = vcmp.eq.s32.totalorder %v32, %v1463
  %vm1717 = vcmp.eq.s32.totalorder %v32, %v1467
  %vm1718 = vcmp.eq.s32.totalorder %v32, %v1471
  %vm1719 = vcmp.eq.s32.totalorder %v32, %v1475
  %vm1720 = vcmp.eq.s32.totalorder %v32, %v1479
  %vm1721 = vcmp.eq.s32.totalorder %v32, %v1483
  %vm1722 = vcmp.eq.s32.totalorder %v32, %v1487
  %vm1723 = vcmp.eq.s32.totalorder %v32, %v1491
  %vm1724 = vcmp.eq.s32.totalorder %v32, %v1495
  %vm1725 = vcmp.eq.s32.totalorder %v32, %v1499
  %vm1726 = vcmp.eq.s32.totalorder %v32, %v1503
  %vm1727 = vcmp.eq.s32.totalorder %v32, %v1507
  %vm1728 = vcmp.eq.s32.totalorder %v32, %v1511
  %vm1729 = vcmp.eq.s32.totalorder %v32, %v1515
  %vm1730 = vcmp.eq.s32.totalorder %v32, %v1519
  %vm1731 = vcmp.eq.s32.totalorder %v32, %v1523
  %vm1732 = vcmp.eq.s32.totalorder %v32, %v1527
  %vm1733 = vcmp.eq.s32.totalorder %v32, %v1531
  %vm1734 = vcmp.eq.s32.totalorder %v32, %v1535
  %vm1735 = vcmp.eq.s32.totalorder %v32, %v1539
  %vm1736 = vcmp.eq.s32.totalorder %v32, %v1543
  %vm1737 = vcmp.eq.s32.totalorder %v32, %v1547
  %vm1738 = vcmp.eq.s32.totalorder %v32, %v1551
  %vm1739 = vcmp.eq.s32.totalorder %v32, %v1555
  %vm1740 = vcmp.eq.s32.totalorder %v32, %v1559
  %vm1741 = vcmp.eq.s32.totalorder %v32, %v1563
  %vm1742 = vcmp.eq.s32.totalorder %v32, %v1567
  %vm1743 = vcmp.eq.s32.totalorder %v32, %v1571
  %vm1744 = vcmp.eq.s32.totalorder %v32, %v1575
  %vm1745 = vcmp.eq.s32.totalorder %v32, %v1579
  %vm1746 = vcmp.eq.s32.totalorder %v32, %v1583
  %vm1747 = vcmp.eq.s32.totalorder %v32, %v1587
  %vm1748 = vcmp.eq.s32.totalorder %v33, %v1463
  %vm1749 = vcmp.eq.s32.totalorder %v33, %v1467
  %vm1750 = vcmp.eq.s32.totalorder %v33, %v1471
  %vm1751 = vcmp.eq.s32.totalorder %v33, %v1475
  %vm1752 = vcmp.eq.s32.totalorder %v33, %v1479
  %vm1753 = vcmp.eq.s32.totalorder %v33, %v1483
  %vm1754 = vcmp.eq.s32.totalorder %v33, %v1487
  %vm1755 = vcmp.eq.s32.totalorder %v33, %v1491
  %vm1756 = vcmp.eq.s32.totalorder %v33, %v1495
  %vm1757 = vcmp.eq.s32.totalorder %v33, %v1499
  %vm1758 = vcmp.eq.s32.totalorder %v33, %v1503
  %vm1759 = vcmp.eq.s32.totalorder %v33, %v1507
  %vm1760 = vcmp.eq.s32.totalorder %v33, %v1511
  %vm1761 = vcmp.eq.s32.totalorder %v33, %v1515
  %vm1762 = vcmp.eq.s32.totalorder %v33, %v1519
  %vm1763 = vcmp.eq.s32.totalorder %v33, %v1523
  %vm1764 = vcmp.eq.s32.totalorder %v33, %v1527
  %vm1765 = vcmp.eq.s32.totalorder %v33, %v1531
  %vm1766 = vcmp.eq.s32.totalorder %v33, %v1535
  %vm1767 = vcmp.eq.s32.totalorder %v33, %v1539
  %vm1768 = vcmp.eq.s32.totalorder %v33, %v1543
  %vm1769 = vcmp.eq.s32.totalorder %v33, %v1547
  %vm1770 = vcmp.eq.s32.totalorder %v33, %v1551
  %vm1771 = vcmp.eq.s32.totalorder %v33, %v1555
  %vm1772 = vcmp.eq.s32.totalorder %v33, %v1559
  %vm1773 = vcmp.eq.s32.totalorder %v33, %v1563
  %vm1774 = vcmp.eq.s32.totalorder %v33, %v1567
  %vm1775 = vcmp.eq.s32.totalorder %v33, %v1571
  %vm1776 = vcmp.eq.s32.totalorder %v33, %v1575
  %vm1777 = vcmp.eq.s32.totalorder %v33, %v1579
  %vm1778 = vcmp.eq.s32.totalorder %v33, %v1583
  %vm1779 = vcmp.eq.s32.totalorder %v33, %v1587
  %vm1780 = vcmp.eq.s32.totalorder %v34, %v1463
  %vm1781 = vcmp.eq.s32.totalorder %v34, %v1467
  %vm1782 = vcmp.eq.s32.totalorder %v34, %v1471
  %vm1783 = vcmp.eq.s32.totalorder %v34, %v1475
  %vm1784 = vcmp.eq.s32.totalorder %v34, %v1479
  %vm1785 = vcmp.eq.s32.totalorder %v34, %v1483
  %vm1786 = vcmp.eq.s32.totalorder %v34, %v1487
  %vm1787 = vcmp.eq.s32.totalorder %v34, %v1491
  %vm1788 = vcmp.eq.s32.totalorder %v34, %v1495
  %vm1789 = vcmp.eq.s32.totalorder %v34, %v1499
  %vm1790 = vcmp.eq.s32.totalorder %v34, %v1503
  %vm1791 = vcmp.eq.s32.totalorder %v34, %v1507
  %vm1792 = vcmp.eq.s32.totalorder %v34, %v1511
  %vm1793 = vcmp.eq.s32.totalorder %v34, %v1515
  %vm1794 = vcmp.eq.s32.totalorder %v34, %v1519
  %vm1795 = vcmp.eq.s32.totalorder %v34, %v1523
  %vm1796 = vcmp.eq.s32.totalorder %v34, %v1527
  %vm1797 = vcmp.eq.s32.totalorder %v34, %v1531
  %vm1798 = vcmp.eq.s32.totalorder %v34, %v1535
  %vm1799 = vcmp.eq.s32.totalorder %v34, %v1539
  %vm1800 = vcmp.eq.s32.totalorder %v34, %v1543
  %vm1801 = vcmp.eq.s32.totalorder %v34, %v1547
  %vm1802 = vcmp.eq.s32.totalorder %v34, %v1551
  %vm1803 = vcmp.eq.s32.totalorder %v34, %v1555
  %vm1804 = vcmp.eq.s32.totalorder %v34, %v1559
  %vm1805 = vcmp.eq.s32.totalorder %v34, %v1563
  %vm1806 = vcmp.eq.s32.totalorder %v34, %v1567
  %vm1807 = vcmp.eq.s32.totalorder %v34, %v1571
  %vm1808 = vcmp.eq.s32.totalorder %v34, %v1575
  %vm1809 = vcmp.eq.s32.totalorder %v34, %v1579
  %vm1810 = vcmp.eq.s32.totalorder %v34, %v1583
  %vm1811 = vcmp.eq.s32.totalorder %v34, %v1587
  %vm1812 = vcmp.eq.s32.totalorder %v35, %v1463
  %vm1813 = vcmp.eq.s32.totalorder %v35, %v1467
  %vm1814 = vcmp.eq.s32.totalorder %v35, %v1471
  %vm1815 = vcmp.eq.s32.totalorder %v35, %v1475
  %vm1816 = vcmp.eq.s32.totalorder %v35, %v1479
  %vm1817 = vcmp.eq.s32.totalorder %v35, %v1483
  %vm1818 = vcmp.eq.s32.totalorder %v35, %v1487
  %vm1819 = vcmp.eq.s32.totalorder %v35, %v1491
  %vm1820 = vcmp.eq.s32.totalorder %v35, %v1495
  %vm1821 = vcmp.eq.s32.totalorder %v35, %v1499
  %vm1822 = vcmp.eq.s32.totalorder %v35, %v1503
  %vm1823 = vcmp.eq.s32.totalorder %v35, %v1507
  %vm1824 = vcmp.eq.s32.totalorder %v35, %v1511
  %vm1825 = vcmp.eq.s32.totalorder %v35, %v1515
  %vm1826 = vcmp.eq.s32.totalorder %v35, %v1519
  %vm1827 = vcmp.eq.s32.totalorder %v35, %v1523
  %vm1828 = vcmp.eq.s32.totalorder %v35, %v1527
  %vm1829 = vcmp.eq.s32.totalorder %v35, %v1531
  %vm1830 = vcmp.eq.s32.totalorder %v35, %v1535
  %vm1831 = vcmp.eq.s32.totalorder %v35, %v1539
  %vm1832 = vcmp.eq.s32.totalorder %v35, %v1543
  %vm1833 = vcmp.eq.s32.totalorder %v35, %v1547
  %vm1834 = vcmp.eq.s32.totalorder %v35, %v1551
  %vm1835 = vcmp.eq.s32.totalorder %v35, %v1555
  %vm1836 = vcmp.eq.s32.totalorder %v35, %v1559
  %vm1837 = vcmp.eq.s32.totalorder %v35, %v1563
  %vm1838 = vcmp.eq.s32.totalorder %v35, %v1567
  %vm1839 = vcmp.eq.s32.totalorder %v35, %v1571
  %vm1840 = vcmp.eq.s32.totalorder %v35, %v1575
  %vm1841 = vcmp.eq.s32.totalorder %v35, %v1579
  %vm1842 = vcmp.eq.s32.totalorder %v35, %v1583
  %vm1843 = vcmp.eq.s32.totalorder %v35, %v1587
  %vm1844 = vcmp.eq.s32.totalorder %v36, %v1463
  %vm1845 = vcmp.eq.s32.totalorder %v36, %v1467
  %vm1846 = vcmp.eq.s32.totalorder %v36, %v1471
  %vm1847 = vcmp.eq.s32.totalorder %v36, %v1475
  %vm1848 = vcmp.eq.s32.totalorder %v36, %v1479
  %vm1849 = vcmp.eq.s32.totalorder %v36, %v1483
  %vm1850 = vcmp.eq.s32.totalorder %v36, %v1487
  %vm1851 = vcmp.eq.s32.totalorder %v36, %v1491
  %vm1852 = vcmp.eq.s32.totalorder %v36, %v1495
  %vm1853 = vcmp.eq.s32.totalorder %v36, %v1499
  %vm1854 = vcmp.eq.s32.totalorder %v36, %v1503
  %vm1855 = vcmp.eq.s32.totalorder %v36, %v1507
  %vm1856 = vcmp.eq.s32.totalorder %v36, %v1511
  %vm1857 = vcmp.eq.s32.totalorder %v36, %v1515
  %vm1858 = vcmp.eq.s32.totalorder %v36, %v1519
  %vm1859 = vcmp.eq.s32.totalorder %v36, %v1523
  %vm1860 = vcmp.eq.s32.totalorder %v36, %v1527
  %vm1861 = vcmp.eq.s32.totalorder %v36, %v1531
  %vm1862 = vcmp.eq.s32.totalorder %v36, %v1535
  %vm1863 = vcmp.eq.s32.totalorder %v36, %v1539
  %vm1864 = vcmp.eq.s32.totalorder %v36, %v1543
  %vm1865 = vcmp.eq.s32.totalorder %v36, %v1547
  %vm1866 = vcmp.eq.s32.totalorder %v36, %v1551
  %vm1867 = vcmp.eq.s32.totalorder %v36, %v1555
  %vm1868 = vcmp.eq.s32.totalorder %v36, %v1559
  %vm1869 = vcmp.eq.s32.totalorder %v36, %v1563
  %vm1870 = vcmp.eq.s32.totalorder %v36, %v1567
  %vm1871 = vcmp.eq.s32.totalorder %v36, %v1571
  %vm1872 = vcmp.eq.s32.totalorder %v36, %v1575
  %vm1873 = vcmp.eq.s32.totalorder %v36, %v1579
  %vm1874 = vcmp.eq.s32.totalorder %v36, %v1583
  %vm1875 = vcmp.eq.s32.totalorder %v36, %v1587
  %vm1876 = vcmp.eq.s32.totalorder %v37, %v1463
  %vm1877 = vcmp.eq.s32.totalorder %v37, %v1467
  %vm1878 = vcmp.eq.s32.totalorder %v37, %v1471
  %vm1879 = vcmp.eq.s32.totalorder %v37, %v1475
  %vm1880 = vcmp.eq.s32.totalorder %v37, %v1479
  %vm1881 = vcmp.eq.s32.totalorder %v37, %v1483
  %vm1882 = vcmp.eq.s32.totalorder %v37, %v1487
  %vm1883 = vcmp.eq.s32.totalorder %v37, %v1491
  %vm1884 = vcmp.eq.s32.totalorder %v37, %v1495
  %vm1885 = vcmp.eq.s32.totalorder %v37, %v1499
  %vm1886 = vcmp.eq.s32.totalorder %v37, %v1503
  %vm1887 = vcmp.eq.s32.totalorder %v37, %v1507
  %vm1888 = vcmp.eq.s32.totalorder %v37, %v1511
  %vm1889 = vcmp.eq.s32.totalorder %v37, %v1515
  %vm1890 = vcmp.eq.s32.totalorder %v37, %v1519
  %vm1891 = vcmp.eq.s32.totalorder %v37, %v1523
  %vm1892 = vcmp.eq.s32.totalorder %v37, %v1527
  %vm1893 = vcmp.eq.s32.totalorder %v37, %v1531
  %vm1894 = vcmp.eq.s32.totalorder %v37, %v1535
  %vm1895 = vcmp.eq.s32.totalorder %v37, %v1539
  %vm1896 = vcmp.eq.s32.totalorder %v37, %v1543
  %vm1897 = vcmp.eq.s32.totalorder %v37, %v1547
  %vm1898 = vcmp.eq.s32.totalorder %v37, %v1551
  %vm1899 = vcmp.eq.s32.totalorder %v37, %v1555
  %vm1900 = vcmp.eq.s32.totalorder %v37, %v1559
  %vm1901 = vcmp.eq.s32.totalorder %v37, %v1563
  %vm1902 = vcmp.eq.s32.totalorder %v37, %v1567
  %vm1903 = vcmp.eq.s32.totalorder %v37, %v1571
  %vm1904 = vcmp.eq.s32.totalorder %v37, %v1575
  %vm1905 = vcmp.eq.s32.totalorder %v37, %v1579
  %vm1906 = vcmp.eq.s32.totalorder %v37, %v1583
  %vm1907 = vcmp.eq.s32.totalorder %v37, %v1587
  %vm1908 = vcmp.eq.s32.totalorder %v38, %v1463
  %vm1909 = vcmp.eq.s32.totalorder %v38, %v1467
  %vm1910 = vcmp.eq.s32.totalorder %v38, %v1471
  %vm1911 = vcmp.eq.s32.totalorder %v38, %v1475
  %vm1912 = vcmp.eq.s32.totalorder %v38, %v1479
  %vm1913 = vcmp.eq.s32.totalorder %v38, %v1483
  %vm1914 = vcmp.eq.s32.totalorder %v38, %v1487
  %vm1915 = vcmp.eq.s32.totalorder %v38, %v1491
  %vm1916 = vcmp.eq.s32.totalorder %v38, %v1495
  %vm1917 = vcmp.eq.s32.totalorder %v38, %v1499
  %vm1918 = vcmp.eq.s32.totalorder %v38, %v1503
  %vm1919 = vcmp.eq.s32.totalorder %v38, %v1507
  %vm1920 = vcmp.eq.s32.totalorder %v38, %v1511
  %vm1921 = vcmp.eq.s32.totalorder %v38, %v1515
  %vm1922 = vcmp.eq.s32.totalorder %v38, %v1519
  %vm1923 = vcmp.eq.s32.totalorder %v38, %v1523
  %vm1924 = vcmp.eq.s32.totalorder %v38, %v1527
  %vm1925 = vcmp.eq.s32.totalorder %v38, %v1531
  %vm1926 = vcmp.eq.s32.totalorder %v38, %v1535
  %vm1927 = vcmp.eq.s32.totalorder %v38, %v1539
  %vm1928 = vcmp.eq.s32.totalorder %v38, %v1543
  %vm1929 = vcmp.eq.s32.totalorder %v38, %v1547
  %vm1930 = vcmp.eq.s32.totalorder %v38, %v1551
  %vm1931 = vcmp.eq.s32.totalorder %v38, %v1555
  %vm1932 = vcmp.eq.s32.totalorder %v38, %v1559
  %vm1933 = vcmp.eq.s32.totalorder %v38, %v1563
  %vm1934 = vcmp.eq.s32.totalorder %v38, %v1567
  %vm1935 = vcmp.eq.s32.totalorder %v38, %v1571
  %vm1936 = vcmp.eq.s32.totalorder %v38, %v1575
  %vm1937 = vcmp.eq.s32.totalorder %v38, %v1579
  %vm1938 = vcmp.eq.s32.totalorder %v38, %v1583
  %vm1939 = vcmp.eq.s32.totalorder %v38, %v1587
  %vm1940 = vcmp.eq.s32.totalorder %v39, %v1463
  %vm1941 = vcmp.eq.s32.totalorder %v39, %v1467
  %vm1942 = vcmp.eq.s32.totalorder %v39, %v1471
  %vm1943 = vcmp.eq.s32.totalorder %v39, %v1475
  %vm1944 = vcmp.eq.s32.totalorder %v39, %v1479
  %vm1945 = vcmp.eq.s32.totalorder %v39, %v1483
  %vm1946 = vcmp.eq.s32.totalorder %v39, %v1487
  %vm1947 = vcmp.eq.s32.totalorder %v39, %v1491
  %vm1948 = vcmp.eq.s32.totalorder %v39, %v1495
  %vm1949 = vcmp.eq.s32.totalorder %v39, %v1499
  %vm1950 = vcmp.eq.s32.totalorder %v39, %v1503
  %vm1951 = vcmp.eq.s32.totalorder %v39, %v1507
  %vm1952 = vcmp.eq.s32.totalorder %v39, %v1511
  %vm1953 = vcmp.eq.s32.totalorder %v39, %v1515
  %vm1954 = vcmp.eq.s32.totalorder %v39, %v1519
  %vm1955 = vcmp.eq.s32.totalorder %v39, %v1523
  %vm1956 = vcmp.eq.s32.totalorder %v39, %v1527
  %vm1957 = vcmp.eq.s32.totalorder %v39, %v1531
  %vm1958 = vcmp.eq.s32.totalorder %v39, %v1535
  %vm1959 = vcmp.eq.s32.totalorder %v39, %v1539
  %vm1960 = vcmp.eq.s32.totalorder %v39, %v1543
  %vm1961 = vcmp.eq.s32.totalorder %v39, %v1547
  %vm1962 = vcmp.eq.s32.totalorder %v39, %v1551
  %vm1963 = vcmp.eq.s32.totalorder %v39, %v1555
  %vm1964 = vcmp.eq.s32.totalorder %v39, %v1559
  %vm1965 = vcmp.eq.s32.totalorder %v39, %v1563
  %vm1966 = vcmp.eq.s32.totalorder %v39, %v1567
  %vm1967 = vcmp.eq.s32.totalorder %v39, %v1571
  %vm1968 = vcmp.eq.s32.totalorder %v39, %v1575
  %vm1969 = vcmp.eq.s32.totalorder %v39, %v1579
  %vm1970 = vcmp.eq.s32.totalorder %v39, %v1583
  %vm1971 = vcmp.eq.s32.totalorder %v39, %v1587
  %vm1972 = vcmp.eq.s32.totalorder %v40, %v1463
  %vm1973 = vcmp.eq.s32.totalorder %v40, %v1467
  %vm1974 = vcmp.eq.s32.totalorder %v40, %v1471
  %vm1975 = vcmp.eq.s32.totalorder %v40, %v1475
  %vm1976 = vcmp.eq.s32.totalorder %v40, %v1479
  %vm1977 = vcmp.eq.s32.totalorder %v40, %v1483
  %vm1978 = vcmp.eq.s32.totalorder %v40, %v1487
  %vm1979 = vcmp.eq.s32.totalorder %v40, %v1491
  %vm1980 = vcmp.eq.s32.totalorder %v40, %v1495
  %vm1981 = vcmp.eq.s32.totalorder %v40, %v1499
  %vm1982 = vcmp.eq.s32.totalorder %v40, %v1503
  %vm1983 = vcmp.eq.s32.totalorder %v40, %v1507
  %vm1984 = vcmp.eq.s32.totalorder %v40, %v1511
  %vm1985 = vcmp.eq.s32.totalorder %v40, %v1515
  %vm1986 = vcmp.eq.s32.totalorder %v40, %v1519
  %vm1987 = vcmp.eq.s32.totalorder %v40, %v1523
  %vm1988 = vcmp.eq.s32.totalorder %v40, %v1527
  %vm1989 = vcmp.eq.s32.totalorder %v40, %v1531
  %vm1990 = vcmp.eq.s32.totalorder %v40, %v1535
  %vm1991 = vcmp.eq.s32.totalorder %v40, %v1539
  %vm1992 = vcmp.eq.s32.totalorder %v40, %v1543
  %vm1993 = vcmp.eq.s32.totalorder %v40, %v1547
  %vm1994 = vcmp.eq.s32.totalorder %v40, %v1551
  %vm1995 = vcmp.eq.s32.totalorder %v40, %v1555
  %vm1996 = vcmp.eq.s32.totalorder %v40, %v1559
  %vm1997 = vcmp.eq.s32.totalorder %v40, %v1563
  %vm1998 = vcmp.eq.s32.totalorder %v40, %v1567
  %vm1999 = vcmp.eq.s32.totalorder %v40, %v1571
  %vm2000 = vcmp.eq.s32.totalorder %v40, %v1575
  %vm2001 = vcmp.eq.s32.totalorder %v40, %v1579
  %vm2002 = vcmp.eq.s32.totalorder %v40, %v1583
  %vm2003 = vcmp.eq.s32.totalorder %v40, %v1587
  %vm2004 = vcmp.eq.s32.totalorder %v41, %v1463
  %vm2005 = vcmp.eq.s32.totalorder %v41, %v1467
  %vm2006 = vcmp.eq.s32.totalorder %v41, %v1471
  %vm2007 = vcmp.eq.s32.totalorder %v41, %v1475
  %vm2008 = vcmp.eq.s32.totalorder %v41, %v1479
  %vm2009 = vcmp.eq.s32.totalorder %v41, %v1483
  %vm2010 = vcmp.eq.s32.totalorder %v41, %v1487
  %vm2011 = vcmp.eq.s32.totalorder %v41, %v1491
  %vm2012 = vcmp.eq.s32.totalorder %v41, %v1495
  %vm2013 = vcmp.eq.s32.totalorder %v41, %v1499
  %vm2014 = vcmp.eq.s32.totalorder %v41, %v1503
  %vm2015 = vcmp.eq.s32.totalorder %v41, %v1507
  %vm2016 = vcmp.eq.s32.totalorder %v41, %v1511
  %vm2017 = vcmp.eq.s32.totalorder %v41, %v1515
  %vm2018 = vcmp.eq.s32.totalorder %v41, %v1519
  %vm2019 = vcmp.eq.s32.totalorder %v41, %v1523
  %vm2020 = vcmp.eq.s32.totalorder %v41, %v1527
  %vm2021 = vcmp.eq.s32.totalorder %v41, %v1531
  %vm2022 = vcmp.eq.s32.totalorder %v41, %v1535
  %vm2023 = vcmp.eq.s32.totalorder %v41, %v1539
  %vm2024 = vcmp.eq.s32.totalorder %v41, %v1543
  %vm2025 = vcmp.eq.s32.totalorder %v41, %v1547
  %vm2026 = vcmp.eq.s32.totalorder %v41, %v1551
  %vm2027 = vcmp.eq.s32.totalorder %v41, %v1555
  %vm2028 = vcmp.eq.s32.totalorder %v41, %v1559
  %vm2029 = vcmp.eq.s32.totalorder %v41, %v1563
  %vm2030 = vcmp.eq.s32.totalorder %v41, %v1567
  %vm2031 = vcmp.eq.s32.totalorder %v41, %v1571
  %vm2032 = vcmp.eq.s32.totalorder %v41, %v1575
  %vm2033 = vcmp.eq.s32.totalorder %v41, %v1579
  %vm2034 = vcmp.eq.s32.totalorder %v41, %v1583
  %vm2035 = vcmp.eq.s32.totalorder %v41, %v1587
  %vm2036 = vcmp.eq.s32.totalorder %v42, %v1463
  %vm2037 = vcmp.eq.s32.totalorder %v42, %v1467
  %vm2038 = vcmp.eq.s32.totalorder %v42, %v1471
  %vm2039 = vcmp.eq.s32.totalorder %v42, %v1475
  %vm2040 = vcmp.eq.s32.totalorder %v42, %v1479
  %vm2041 = vcmp.eq.s32.totalorder %v42, %v1483
  %vm2042 = vcmp.eq.s32.totalorder %v42, %v1487
  %vm2043 = vcmp.eq.s32.totalorder %v42, %v1491
  %vm2044 = vcmp.eq.s32.totalorder %v42, %v1495
  %vm2045 = vcmp.eq.s32.totalorder %v42, %v1499
  %vm2046 = vcmp.eq.s32.totalorder %v42, %v1503
  %vm2047 = vcmp.eq.s32.totalorder %v42, %v1507
  %vm2048 = vcmp.eq.s32.totalorder %v42, %v1511
  %vm2049 = vcmp.eq.s32.totalorder %v42, %v1515
  %vm2050 = vcmp.eq.s32.totalorder %v42, %v1519
  %vm2051 = vcmp.eq.s32.totalorder %v42, %v1523
  %vm2052 = vcmp.eq.s32.totalorder %v42, %v1527
  %vm2053 = vcmp.eq.s32.totalorder %v42, %v1531
  %vm2054 = vcmp.eq.s32.totalorder %v42, %v1535
  %vm2055 = vcmp.eq.s32.totalorder %v42, %v1539
  %vm2056 = vcmp.eq.s32.totalorder %v42, %v1543
  %vm2057 = vcmp.eq.s32.totalorder %v42, %v1547
  %vm2058 = vcmp.eq.s32.totalorder %v42, %v1551
  %vm2059 = vcmp.eq.s32.totalorder %v42, %v1555
  %vm2060 = vcmp.eq.s32.totalorder %v42, %v1559
  %vm2061 = vcmp.eq.s32.totalorder %v42, %v1563
  %vm2062 = vcmp.eq.s32.totalorder %v42, %v1567
  %vm2063 = vcmp.eq.s32.totalorder %v42, %v1571
  %vm2064 = vcmp.eq.s32.totalorder %v42, %v1575
  %vm2065 = vcmp.eq.s32.totalorder %v42, %v1579
  %vm2066 = vcmp.eq.s32.totalorder %v42, %v1583
  %vm2067 = vcmp.eq.s32.totalorder %v42, %v1587
  %vm2068 = vcmp.eq.s32.totalorder %v43, %v1463
  %vm2069 = vcmp.eq.s32.totalorder %v43, %v1467
  %vm2070 = vcmp.eq.s32.totalorder %v43, %v1471
  %vm2071 = vcmp.eq.s32.totalorder %v43, %v1475
  %vm2072 = vcmp.eq.s32.totalorder %v43, %v1479
  %vm2073 = vcmp.eq.s32.totalorder %v43, %v1483
  %vm2074 = vcmp.eq.s32.totalorder %v43, %v1487
  %vm2075 = vcmp.eq.s32.totalorder %v43, %v1491
  %vm2076 = vcmp.eq.s32.totalorder %v43, %v1495
  %vm2077 = vcmp.eq.s32.totalorder %v43, %v1499
  %vm2078 = vcmp.eq.s32.totalorder %v43, %v1503
  %vm2079 = vcmp.eq.s32.totalorder %v43, %v1507
  %vm2080 = vcmp.eq.s32.totalorder %v43, %v1511
  %vm2081 = vcmp.eq.s32.totalorder %v43, %v1515
  %vm2082 = vcmp.eq.s32.totalorder %v43, %v1519
  %vm2083 = vcmp.eq.s32.totalorder %v43, %v1523
  %vm2084 = vcmp.eq.s32.totalorder %v43, %v1527
  %vm2085 = vcmp.eq.s32.totalorder %v43, %v1531
  %vm2086 = vcmp.eq.s32.totalorder %v43, %v1535
  %vm2087 = vcmp.eq.s32.totalorder %v43, %v1539
  %vm2088 = vcmp.eq.s32.totalorder %v43, %v1543
  %vm2089 = vcmp.eq.s32.totalorder %v43, %v1547
  %vm2090 = vcmp.eq.s32.totalorder %v43, %v1551
  %vm2091 = vcmp.eq.s32.totalorder %v43, %v1555
  %vm2092 = vcmp.eq.s32.totalorder %v43, %v1559
  %vm2093 = vcmp.eq.s32.totalorder %v43, %v1563
  %vm2094 = vcmp.eq.s32.totalorder %v43, %v1567
  %vm2095 = vcmp.eq.s32.totalorder %v43, %v1571
  %vm2096 = vcmp.eq.s32.totalorder %v43, %v1575
  %vm2097 = vcmp.eq.s32.totalorder %v43, %v1579
  %vm2098 = vcmp.eq.s32.totalorder %v43, %v1583
  %vm2099 = vcmp.eq.s32.totalorder %v43, %v1587
  %v2100 = vsel %vm1588, 1.0, 0.0
  %v2101 = vsel %vm1589, 1.0, 0.0
  %v2102 = vsel %vm1590, 1.0, 0.0
  %v2103 = vsel %vm1591, 1.0, 0.0
  %v2104 = vsel %vm1592, 1.0, 0.0
  %v2105 = vsel %vm1593, 1.0, 0.0
  %v2106 = vsel %vm1594, 1.0, 0.0
  %v2107 = vsel %vm1595, 1.0, 0.0
  %v2108 = vsel %vm1596, 1.0, 0.0
  %v2109 = vsel %vm1597, 1.0, 0.0
  %v2110 = vsel %vm1598, 1.0, 0.0
  %v2111 = vsel %vm1599, 1.0, 0.0
  %v2112 = vsel %vm1600, 1.0, 0.0
  %v2113 = vsel %vm1601, 1.0, 0.0
  %v2114 = vsel %vm1602, 1.0, 0.0
  %v2115 = vsel %vm1603, 1.0, 0.0
  %v2116 = vsel %vm1604, 1.0, 0.0
  %v2117 = vsel %vm1605, 1.0, 0.0
  %v2118 = vsel %vm1606, 1.0, 0.0
  %v2119 = vsel %vm1607, 1.0, 0.0
  %v2120 = vsel %vm1608, 1.0, 0.0
  %v2121 = vsel %vm1609, 1.0, 0.0
  %v2122 = vsel %vm1610, 1.0, 0.0
  %v2123 = vsel %vm1611, 1.0, 0.0
  %v2124 = vsel %vm1612, 1.0, 0.0
  %v2125 = vsel %vm1613, 1.0, 0.0
  %v2126 = vsel %vm1614, 1.0, 0.0
  %v2127 = vsel %vm1615, 1.0, 0.0
  %v2128 = vsel %vm1616, 1.0, 0.0
  %v2129 = vsel %vm1617, 1.0, 0.0
  %v2130 = vsel %vm1618, 1.0, 0.0
  %v2131 = vsel %vm1619, 1.0, 0.0
  %v2132 = vsel %vm1620, 1.0, 0.0
  %v2133 = vsel %vm1621, 1.0, 0.0
  %v2134 = vsel %vm1622, 1.0, 0.0
  %v2135 = vsel %vm1623, 1.0, 0.0
  %v2136 = vsel %vm1624, 1.0, 0.0
  %v2137 = vsel %vm1625, 1.0, 0.0
  %v2138 = vsel %vm1626, 1.0, 0.0
  %v2139 = vsel %vm1627, 1.0, 0.0
  %v2140 = vsel %vm1628, 1.0, 0.0
  %v2141 = vsel %vm1629, 1.0, 0.0
  %v2142 = vsel %vm1630, 1.0, 0.0
  %v2143 = vsel %vm1631, 1.0, 0.0
  %v2144 = vsel %vm1632, 1.0, 0.0
  %v2145 = vsel %vm1633, 1.0, 0.0
  %v2146 = vsel %vm1634, 1.0, 0.0
  %v2147 = vsel %vm1635, 1.0, 0.0
  %v2148 = vsel %vm1636, 1.0, 0.0
  %v2149 = vsel %vm1637, 1.0, 0.0
  %v2150 = vsel %vm1638, 1.0, 0.0
  %v2151 = vsel %vm1639, 1.0, 0.0
  %v2152 = vsel %vm1640, 1.0, 0.0
  %v2153 = vsel %vm1641, 1.0, 0.0
  %v2154 = vsel %vm1642, 1.0, 0.0
  %v2155 = vsel %vm1643, 1.0, 0.0
  %v2156 = vsel %vm1644, 1.0, 0.0
  %v2157 = vsel %vm1645, 1.0, 0.0
  %v2158 = vsel %vm1646, 1.0, 0.0
  %v2159 = vsel %vm1647, 1.0, 0.0
  %v2160 = vsel %vm1648, 1.0, 0.0
  %v2161 = vsel %vm1649, 1.0, 0.0
  %v2162 = vsel %vm1650, 1.0, 0.0
  %v2163 = vsel %vm1651, 1.0, 0.0
  %v2164 = vsel %vm1652, 1.0, 0.0
  %v2165 = vsel %vm1653, 1.0, 0.0
  %v2166 = vsel %vm1654, 1.0, 0.0
  %v2167 = vsel %vm1655, 1.0, 0.0
  %v2168 = vsel %vm1656, 1.0, 0.0
  %v2169 = vsel %vm1657, 1.0, 0.0
  %v2170 = vsel %vm1658, 1.0, 0.0
  %v2171 = vsel %vm1659, 1.0, 0.0
  %v2172 = vsel %vm1660, 1.0, 0.0
  %v2173 = vsel %vm1661, 1.0, 0.0
  %v2174 = vsel %vm1662, 1.0, 0.0
  %v2175 = vsel %vm1663, 1.0, 0.0
  %v2176 = vsel %vm1664, 1.0, 0.0
  %v2177 = vsel %vm1665, 1.0, 0.0
  %v2178 = vsel %vm1666, 1.0, 0.0
  %v2179 = vsel %vm1667, 1.0, 0.0
  %v2180 = vsel %vm1668, 1.0, 0.0
  %v2181 = vsel %vm1669, 1.0, 0.0
  %v2182 = vsel %vm1670, 1.0, 0.0
  %v2183 = vsel %vm1671, 1.0, 0.0
  %v2184 = vsel %vm1672, 1.0, 0.0
  %v2185 = vsel %vm1673, 1.0, 0.0
  %v2186 = vsel %vm1674, 1.0, 0.0
  %v2187 = vsel %vm1675, 1.0, 0.0
  %v2188 = vsel %vm1676, 1.0, 0.0
  %v2189 = vsel %vm1677, 1.0, 0.0
  %v2190 = vsel %vm1678, 1.0, 0.0
  %v2191 = vsel %vm1679, 1.0, 0.0
  %v2192 = vsel %vm1680, 1.0, 0.0
  %v2193 = vsel %vm1681, 1.0, 0.0
  %v2194 = vsel %vm1682, 1.0, 0.0
  %v2195 = vsel %vm1683, 1.0, 0.0
  %v2196 = vsel %vm1684, 1.0, 0.0
  %v2197 = vsel %vm1685, 1.0, 0.0
  %v2198 = vsel %vm1686, 1.0, 0.0
  %v2199 = vsel %vm1687, 1.0, 0.0
  %v2200 = vsel %vm1688, 1.0, 0.0
  %v2201 = vsel %vm1689, 1.0, 0.0
  %v2202 = vsel %vm1690, 1.0, 0.0
  %v2203 = vsel %vm1691, 1.0, 0.0
  %v2204 = vsel %vm1692, 1.0, 0.0
  %v2205 = vsel %vm1693, 1.0, 0.0
  %v2206 = vsel %vm1694, 1.0, 0.0
  %v2207 = vsel %vm1695, 1.0, 0.0
  %v2208 = vsel %vm1696, 1.0, 0.0
  %v2209 = vsel %vm1697, 1.0, 0.0
  %v2210 = vsel %vm1698, 1.0, 0.0
  %v2211 = vsel %vm1699, 1.0, 0.0
  %v2212 = vsel %vm1700, 1.0, 0.0
  %v2213 = vsel %vm1701, 1.0, 0.0
  %v2214 = vsel %vm1702, 1.0, 0.0
  %v2215 = vsel %vm1703, 1.0, 0.0
  %v2216 = vsel %vm1704, 1.0, 0.0
  %v2217 = vsel %vm1705, 1.0, 0.0
  %v2218 = vsel %vm1706, 1.0, 0.0
  %v2219 = vsel %vm1707, 1.0, 0.0
  %v2220 = vsel %vm1708, 1.0, 0.0
  %v2221 = vsel %vm1709, 1.0, 0.0
  %v2222 = vsel %vm1710, 1.0, 0.0
  %v2223 = vsel %vm1711, 1.0, 0.0
  %v2224 = vsel %vm1712, 1.0, 0.0
  %v2225 = vsel %vm1713, 1.0, 0.0
  %v2226 = vsel %vm1714, 1.0, 0.0
  %v2227 = vsel %vm1715, 1.0, 0.0
  %v2228 = vsel %vm1716, 1.0, 0.0
  %v2229 = vsel %vm1717, 1.0, 0.0
  %v2230 = vsel %vm1718, 1.0, 0.0
  %v2231 = vsel %vm1719, 1.0, 0.0
  %v2232 = vsel %vm1720, 1.0, 0.0
  %v2233 = vsel %vm1721, 1.0, 0.0
  %v2234 = vsel %vm1722, 1.0, 0.0
  %v2235 = vsel %vm1723, 1.0, 0.0
  %v2236 = vsel %vm1724, 1.0, 0.0
  %v2237 = vsel %vm1725, 1.0, 0.0
  %v2238 = vsel %vm1726, 1.0, 0.0
  %v2239 = vsel %vm1727, 1.0, 0.0
  %v2240 = vsel %vm1728, 1.0, 0.0
  %v2241 = vsel %vm1729, 1.0, 0.0
  %v2242 = vsel %vm1730, 1.0, 0.0
  %v2243 = vsel %vm1731, 1.0, 0.0
  %v2244 = vsel %vm1732, 1.0, 0.0
  %v2245 = vsel %vm1733, 1.0, 0.0
  %v2246 = vsel %vm1734, 1.0, 0.0
  %v2247 = vsel %vm1735, 1.0, 0.0
  %v2248 = vsel %vm1736, 1.0, 0.0
  %v2249 = vsel %vm1737, 1.0, 0.0
  %v2250 = vsel %vm1738, 1.0, 0.0
  %v2251 = vsel %vm1739, 1.0, 0.0
  %v2252 = vsel %vm1740, 1.0, 0.0
  %v2253 = vsel %vm1741, 1.0, 0.0
  %v2254 = vsel %vm1742, 1.0, 0.0
  %v2255 = vsel %vm1743, 1.0, 0.0
  %v2256 = vsel %vm1744, 1.0, 0.0
  %v2257 = vsel %vm1745, 1.0, 0.0
  %v2258 = vsel %vm1746, 1.0, 0.0
  %v2259 = vsel %vm1747, 1.0, 0.0
  %v2260 = vsel %vm1748, 1.0, 0.0
  %v2261 = vsel %vm1749, 1.0, 0.0
  %v2262 = vsel %vm1750, 1.0, 0.0
  %v2263 = vsel %vm1751, 1.0, 0.0
  %v2264 = vsel %vm1752, 1.0, 0.0
  %v2265 = vsel %vm1753, 1.0, 0.0
  %v2266 = vsel %vm1754, 1.0, 0.0
  %v2267 = vsel %vm1755, 1.0, 0.0
  %v2268 = vsel %vm1756, 1.0, 0.0
  %v2269 = vsel %vm1757, 1.0, 0.0
  %v2270 = vsel %vm1758, 1.0, 0.0
  %v2271 = vsel %vm1759, 1.0, 0.0
  %v2272 = vsel %vm1760, 1.0, 0.0
  %v2273 = vsel %vm1761, 1.0, 0.0
  %v2274 = vsel %vm1762, 1.0, 0.0
  %v2275 = vsel %vm1763, 1.0, 0.0
  %v2276 = vsel %vm1764, 1.0, 0.0
  %v2277 = vsel %vm1765, 1.0, 0.0
  %v2278 = vsel %vm1766, 1.0, 0.0
  %v2279 = vsel %vm1767, 1.0, 0.0
  %v2280 = vsel %vm1768, 1.0, 0.0
  %v2281 = vsel %vm1769, 1.0, 0.0
  %v2282 = vsel %vm1770, 1.0, 0.0
  %v2283 = vsel %vm1771, 1.0, 0.0
  %v2284 = vsel %vm1772, 1.0, 0.0
  %v2285 = vsel %vm1773, 1.0, 0.0
  %v2286 = vsel %vm1774, 1.0, 0.0
  %v2287 = vsel %vm1775, 1.0, 0.0
  %v2288 = vsel %vm1776, 1.0, 0.0
  %v2289 = vsel %vm1777, 1.0, 0.0
  %v2290 = vsel %vm1778, 1.0, 0.0
  %v2291 = vsel %vm1779, 1.0, 0.0
  %v2292 = vsel %vm1780, 1.0, 0.0
  %v2293 = vsel %vm1781, 1.0, 0.0
  %v2294 = vsel %vm1782, 1.0, 0.0
  %v2295 = vsel %vm1783, 1.0, 0.0
  %v2296 = vsel %vm1784, 1.0, 0.0
  %v2297 = vsel %vm1785, 1.0, 0.0
  %v2298 = vsel %vm1786, 1.0, 0.0
  %v2299 = vsel %vm1787, 1.0, 0.0
  %v2300 = vsel %vm1788, 1.0, 0.0
  %v2301 = vsel %vm1789, 1.0, 0.0
  %v2302 = vsel %vm1790, 1.0, 0.0
  %v2303 = vsel %vm1791, 1.0, 0.0
  %v2304 = vsel %vm1792, 1.0, 0.0
  %v2305 = vsel %vm1793, 1.0, 0.0
  %v2306 = vsel %vm1794, 1.0, 0.0
  %v2307 = vsel %vm1795, 1.0, 0.0
  %v2308 = vsel %vm1796, 1.0, 0.0
  %v2309 = vsel %vm1797, 1.0, 0.0
  %v2310 = vsel %vm1798, 1.0, 0.0
  %v2311 = vsel %vm1799, 1.0, 0.0
  %v2312 = vsel %vm1800, 1.0, 0.0
  %v2313 = vsel %vm1801, 1.0, 0.0
  %v2314 = vsel %vm1802, 1.0, 0.0
  %v2315 = vsel %vm1803, 1.0, 0.0
  %v2316 = vsel %vm1804, 1.0, 0.0
  %v2317 = vsel %vm1805, 1.0, 0.0
  %v2318 = vsel %vm1806, 1.0, 0.0
  %v2319 = vsel %vm1807, 1.0, 0.0
  %v2320 = vsel %vm1808, 1.0, 0.0
  %v2321 = vsel %vm1809, 1.0, 0.0
  %v2322 = vsel %vm1810, 1.0, 0.0
  %v2323 = vsel %vm1811, 1.0, 0.0
  %v2324 = vsel %vm1812, 1.0, 0.0
  %v2325 = vsel %vm1813, 1.0, 0.0
  %v2326 = vsel %vm1814, 1.0, 0.0
  %v2327 = vsel %vm1815, 1.0, 0.0
  %v2328 = vsel %vm1816, 1.0, 0.0
  %v2329 = vsel %vm1817, 1.0, 0.0
  %v2330 = vsel %vm1818, 1.0, 0.0
  %v2331 = vsel %vm1819, 1.0, 0.0
  %v2332 = vsel %vm1820, 1.0, 0.0
  %v2333 = vsel %vm1821, 1.0, 0.0
  %v2334 = vsel %vm1822, 1.0, 0.0
  %v2335 = vsel %vm1823, 1.0, 0.0
  %v2336 = vsel %vm1824, 1.0, 0.0
  %v2337 = vsel %vm1825, 1.0, 0.0
  %v2338 = vsel %vm1826, 1.0, 0.0
  %v2339 = vsel %vm1827, 1.0, 0.0
  %v2340 = vsel %vm1828, 1.0, 0.0
  %v2341 = vsel %vm1829, 1.0, 0.0
  %v2342 = vsel %vm1830, 1.0, 0.0
  %v2343 = vsel %vm1831, 1.0, 0.0
  %v2344 = vsel %vm1832, 1.0, 0.0
  %v2345 = vsel %vm1833, 1.0, 0.0
  %v2346 = vsel %vm1834, 1.0, 0.0
  %v2347 = vsel %vm1835, 1.0, 0.0
  %v2348 = vsel %vm1836, 1.0, 0.0
  %v2349 = vsel %vm1837, 1.0, 0.0
  %v2350 = vsel %vm1838, 1.0, 0.0
  %v2351 = vsel %vm1839, 1.0, 0.0
  %v2352 = vsel %vm1840, 1.0, 0.0
  %v2353 = vsel %vm1841, 1.0, 0.0
  %v2354 = vsel %vm1842, 1.0, 0.0
  %v2355 = vsel %vm1843, 1.0, 0.0
  %v2356 = vsel %vm1844, 1.0, 0.0
  %v2357 = vsel %vm1845, 1.0, 0.0
  %v2358 = vsel %vm1846, 1.0, 0.0
  %v2359 = vsel %vm1847, 1.0, 0.0
  %v2360 = vsel %vm1848, 1.0, 0.0
  %v2361 = vsel %vm1849, 1.0, 0.0
  %v2362 = vsel %vm1850, 1.0, 0.0
  %v2363 = vsel %vm1851, 1.0, 0.0
  %v2364 = vsel %vm1852, 1.0, 0.0
  %v2365 = vsel %vm1853, 1.0, 0.0
  %v2366 = vsel %vm1854, 1.0, 0.0
  %v2367 = vsel %vm1855, 1.0, 0.0
  %v2368 = vsel %vm1856, 1.0, 0.0
  %v2369 = vsel %vm1857, 1.0, 0.0
  %v2370 = vsel %vm1858, 1.0, 0.0
  %v2371 = vsel %vm1859, 1.0, 0.0
  %v2372 = vsel %vm1860, 1.0, 0.0
  %v2373 = vsel %vm1861, 1.0, 0.0
  %v2374 = vsel %vm1862, 1.0, 0.0
  %v2375 = vsel %vm1863, 1.0, 0.0
  %v2376 = vsel %vm1864, 1.0, 0.0
  %v2377 = vsel %vm1865, 1.0, 0.0
  %v2378 = vsel %vm1866, 1.0, 0.0
  %v2379 = vsel %vm1867, 1.0, 0.0
  %v2380 = vsel %vm1868, 1.0, 0.0
  %v2381 = vsel %vm1869, 1.0, 0.0
  %v2382 = vsel %vm1870, 1.0, 0.0
  %v2383 = vsel %vm1871, 1.0, 0.0
  %v2384 = vsel %vm1872, 1.0, 0.0
  %v2385 = vsel %vm1873, 1.0, 0.0
  %v2386 = vsel %vm1874, 1.0, 0.0
  %v2387 = vsel %vm1875, 1.0, 0.0
  %v2388 = vsel %vm1876, 1.0, 0.0
  %v2389 = vsel %vm1877, 1.0, 0.0
  %v2390 = vsel %vm1878, 1.0, 0.0
  %v2391 = vsel %vm1879, 1.0, 0.0
  %v2392 = vsel %vm1880, 1.0, 0.0
  %v2393 = vsel %vm1881, 1.0, 0.0
  %v2394 = vsel %vm1882, 1.0, 0.0
  %v2395 = vsel %vm1883, 1.0, 0.0
  %v2396 = vsel %vm1884, 1.0, 0.0
  %v2397 = vsel %vm1885, 1.0, 0.0
  %v2398 = vsel %vm1886, 1.0, 0.0
  %v2399 = vsel %vm1887, 1.0, 0.0
  %v2400 = vsel %vm1888, 1.0, 0.0
  %v2401 = vsel %vm1889, 1.0, 0.0
  %v2402 = vsel %vm1890, 1.0, 0.0
  %v2403 = vsel %vm1891, 1.0, 0.0
  %v2404 = vsel %vm1892, 1.0, 0.0
  %v2405 = vsel %vm1893, 1.0, 0.0
  %v2406 = vsel %vm1894, 1.0, 0.0
  %v2407 = vsel %vm1895, 1.0, 0.0
  %v2408 = vsel %vm1896, 1.0, 0.0
  %v2409 = vsel %vm1897, 1.0, 0.0
  %v2410 = vsel %vm1898, 1.0, 0.0
  %v2411 = vsel %vm1899, 1.0, 0.0
  %v2412 = vsel %vm1900, 1.0, 0.0
  %v2413 = vsel %vm1901, 1.0, 0.0
  %v2414 = vsel %vm1902, 1.0, 0.0
  %v2415 = vsel %vm1903, 1.0, 0.0
  %v2416 = vsel %vm1904, 1.0, 0.0
  %v2417 = vsel %vm1905, 1.0, 0.0
  %v2418 = vsel %vm1906, 1.0, 0.0
  %v2419 = vsel %vm1907, 1.0, 0.0
  %v2420 = vsel %vm1908, 1.0, 0.0
  %v2421 = vsel %vm1909, 1.0, 0.0
  %v2422 = vsel %vm1910, 1.0, 0.0
  %v2423 = vsel %vm1911, 1.0, 0.0
  %v2424 = vsel %vm1912, 1.0, 0.0
  %v2425 = vsel %vm1913, 1.0, 0.0
  %v2426 = vsel %vm1914, 1.0, 0.0
  %v2427 = vsel %vm1915, 1.0, 0.0
  %v2428 = vsel %vm1916, 1.0, 0.0
  %v2429 = vsel %vm1917, 1.0, 0.0
  %v2430 = vsel %vm1918, 1.0, 0.0
  %v2431 = vsel %vm1919, 1.0, 0.0
  %v2432 = vsel %vm1920, 1.0, 0.0
  %v2433 = vsel %vm1921, 1.0, 0.0
  %v2434 = vsel %vm1922, 1.0, 0.0
  %v2435 = vsel %vm1923, 1.0, 0.0
  %v2436 = vsel %vm1924, 1.0, 0.0
  %v2437 = vsel %vm1925, 1.0, 0.0
  %v2438 = vsel %vm1926, 1.0, 0.0
  %v2439 = vsel %vm1927, 1.0, 0.0
  %v2440 = vsel %vm1928, 1.0, 0.0
  %v2441 = vsel %vm1929, 1.0, 0.0
  %v2442 = vsel %vm1930, 1.0, 0.0
  %v2443 = vsel %vm1931, 1.0, 0.0
  %v2444 = vsel %vm1932, 1.0, 0.0
  %v2445 = vsel %vm1933, 1.0, 0.0
  %v2446 = vsel %vm1934, 1.0, 0.0
  %v2447 = vsel %vm1935, 1.0, 0.0
  %v2448 = vsel %vm1936, 1.0, 0.0
  %v2449 = vsel %vm1937, 1.0, 0.0
  %v2450 = vsel %vm1938, 1.0, 0.0
  %v2451 = vsel %vm1939, 1.0, 0.0
  %v2452 = vsel %vm1940, 1.0, 0.0
  %v2453 = vsel %vm1941, 1.0, 0.0
  %v2454 = vsel %vm1942, 1.0, 0.0
  %v2455 = vsel %vm1943, 1.0, 0.0
  %v2456 = vsel %vm1944, 1.0, 0.0
  %v2457 = vsel %vm1945, 1.0, 0.0
  %v2458 = vsel %vm1946, 1.0, 0.0
  %v2459 = vsel %vm1947, 1.0, 0.0
  %v2460 = vsel %vm1948, 1.0, 0.0
  %v2461 = vsel %vm1949, 1.0, 0.0
  %v2462 = vsel %vm1950, 1.0, 0.0
  %v2463 = vsel %vm1951, 1.0, 0.0
  %v2464 = vsel %vm1952, 1.0, 0.0
  %v2465 = vsel %vm1953, 1.0, 0.0
  %v2466 = vsel %vm1954, 1.0, 0.0
  %v2467 = vsel %vm1955, 1.0, 0.0
  %v2468 = vsel %vm1956, 1.0, 0.0
  %v2469 = vsel %vm1957, 1.0, 0.0
  %v2470 = vsel %vm1958, 1.0, 0.0
  %v2471 = vsel %vm1959, 1.0, 0.0
  %v2472 = vsel %vm1960, 1.0, 0.0
  %v2473 = vsel %vm1961, 1.0, 0.0
  %v2474 = vsel %vm1962, 1.0, 0.0
  %v2475 = vsel %vm1963, 1.0, 0.0
  %v2476 = vsel %vm1964, 1.0, 0.0
  %v2477 = vsel %vm1965, 1.0, 0.0
  %v2478 = vsel %vm1966, 1.0, 0.0
  %v2479 = vsel %vm1967, 1.0, 0.0
  %v2480 = vsel %vm1968, 1.0, 0.0
  %v2481 = vsel %vm1969, 1.0, 0.0
  %v2482 = vsel %vm1970, 1.0, 0.0
  %v2483 = vsel %vm1971, 1.0, 0.0
  %v2484 = vsel %vm1972, 1.0, 0.0
  %v2485 = vsel %vm1973, 1.0, 0.0
  %v2486 = vsel %vm1974, 1.0, 0.0
  %v2487 = vsel %vm1975, 1.0, 0.0
  %v2488 = vsel %vm1976, 1.0, 0.0
  %v2489 = vsel %vm1977, 1.0, 0.0
  %v2490 = vsel %vm1978, 1.0, 0.0
  %v2491 = vsel %vm1979, 1.0, 0.0
  %v2492 = vsel %vm1980, 1.0, 0.0
  %v2493 = vsel %vm1981, 1.0, 0.0
  %v2494 = vsel %vm1982, 1.0, 0.0
  %v2495 = vsel %vm1983, 1.0, 0.0
  %v2496 = vsel %vm1984, 1.0, 0.0
  %v2497 = vsel %vm1985, 1.0, 0.0
  %v2498 = vsel %vm1986, 1.0, 0.0
  %v2499 = vsel %vm1987, 1.0, 0.0
  %v2500 = vsel %vm1988, 1.0, 0.0
  %v2501 = vsel %vm1989, 1.0, 0.0
  %v2502 = vsel %vm1990, 1.0, 0.0
  %v2503 = vsel %vm1991, 1.0, 0.0
  %v2504 = vsel %vm1992, 1.0, 0.0
  %v2505 = vsel %vm1993, 1.0, 0.0
  %v2506 = vsel %vm1994, 1.0, 0.0
  %v2507 = vsel %vm1995, 1.0, 0.0
  %v2508 = vsel %vm1996, 1.0, 0.0
  %v2509 = vsel %vm1997, 1.0, 0.0
  %v2510 = vsel %vm1998, 1.0, 0.0
  %v2511 = vsel %vm1999, 1.0, 0.0
  %v2512 = vsel %vm2000, 1.0, 0.0
  %v2513 = vsel %vm2001, 1.0, 0.0
  %v2514 = vsel %vm2002, 1.0, 0.0
  %v2515 = vsel %vm2003, 1.0, 0.0
  %v2516 = vsel %vm2004, 1.0, 0.0
  %v2517 = vsel %vm2005, 1.0, 0.0
  %v2518 = vsel %vm2006, 1.0, 0.0
  %v2519 = vsel %vm2007, 1.0, 0.0
  %v2520 = vsel %vm2008, 1.0, 0.0
  %v2521 = vsel %vm2009, 1.0, 0.0
  %v2522 = vsel %vm2010, 1.0, 0.0
  %v2523 = vsel %vm2011, 1.0, 0.0
  %v2524 = vsel %vm2012, 1.0, 0.0
  %v2525 = vsel %vm2013, 1.0, 0.0
  %v2526 = vsel %vm2014, 1.0, 0.0
  %v2527 = vsel %vm2015, 1.0, 0.0
  %v2528 = vsel %vm2016, 1.0, 0.0
  %v2529 = vsel %vm2017, 1.0, 0.0
  %v2530 = vsel %vm2018, 1.0, 0.0
  %v2531 = vsel %vm2019, 1.0, 0.0
  %v2532 = vsel %vm2020, 1.0, 0.0
  %v2533 = vsel %vm2021, 1.0, 0.0
  %v2534 = vsel %vm2022, 1.0, 0.0
  %v2535 = vsel %vm2023, 1.0, 0.0
  %v2536 = vsel %vm2024, 1.0, 0.0
  %v2537 = vsel %vm2025, 1.0, 0.0
  %v2538 = vsel %vm2026, 1.0, 0.0
  %v2539 = vsel %vm2027, 1.0, 0.0
  %v2540 = vsel %vm2028, 1.0, 0.0
  %v2541 = vsel %vm2029, 1.0, 0.0
  %v2542 = vsel %vm2030, 1.0, 0.0
  %v2543 = vsel %vm2031, 1.0, 0.0
  %v2544 = vsel %vm2032, 1.0, 0.0
  %v2545 = vsel %vm2033, 1.0, 0.0
  %v2546 = vsel %vm2034, 1.0, 0.0
  %v2547 = vsel %vm2035, 1.0, 0.0
  %v2548 = vsel %vm2036, 1.0, 0.0
  %v2549 = vsel %vm2037, 1.0, 0.0
  %v2550 = vsel %vm2038, 1.0, 0.0
  %v2551 = vsel %vm2039, 1.0, 0.0
  %v2552 = vsel %vm2040, 1.0, 0.0
  %v2553 = vsel %vm2041, 1.0, 0.0
  %v2554 = vsel %vm2042, 1.0, 0.0
  %v2555 = vsel %vm2043, 1.0, 0.0
  %v2556 = vsel %vm2044, 1.0, 0.0
  %v2557 = vsel %vm2045, 1.0, 0.0
  %v2558 = vsel %vm2046, 1.0, 0.0
  %v2559 = vsel %vm2047, 1.0, 0.0
  %v2560 = vsel %vm2048, 1.0, 0.0
  %v2561 = vsel %vm2049, 1.0, 0.0
  %v2562 = vsel %vm2050, 1.0, 0.0
  %v2563 = vsel %vm2051, 1.0, 0.0
  %v2564 = vsel %vm2052, 1.0, 0.0
  %v2565 = vsel %vm2053, 1.0, 0.0
  %v2566 = vsel %vm2054, 1.0, 0.0
  %v2567 = vsel %vm2055, 1.0, 0.0
  %v2568 = vsel %vm2056, 1.0, 0.0
  %v2569 = vsel %vm2057, 1.0, 0.0
  %v2570 = vsel %vm2058, 1.0, 0.0
  %v2571 = vsel %vm2059, 1.0, 0.0
  %v2572 = vsel %vm2060, 1.0, 0.0
  %v2573 = vsel %vm2061, 1.0, 0.0
  %v2574 = vsel %vm2062, 1.0, 0.0
  %v2575 = vsel %vm2063, 1.0, 0.0
  %v2576 = vsel %vm2064, 1.0, 0.0
  %v2577 = vsel %vm2065, 1.0, 0.0
  %v2578 = vsel %vm2066, 1.0, 0.0
  %v2579 = vsel %vm2067, 1.0, 0.0
  %v2580 = vsel %vm2068, 1.0, 0.0
  %v2581 = vsel %vm2069, 1.0, 0.0
  %v2582 = vsel %vm2070, 1.0, 0.0
  %v2583 = vsel %vm2071, 1.0, 0.0
  %v2584 = vsel %vm2072, 1.0, 0.0
  %v2585 = vsel %vm2073, 1.0, 0.0
  %v2586 = vsel %vm2074, 1.0, 0.0
  %v2587 = vsel %vm2075, 1.0, 0.0
  %v2588 = vsel %vm2076, 1.0, 0.0
  %v2589 = vsel %vm2077, 1.0, 0.0
  %v2590 = vsel %vm2078, 1.0, 0.0
  %v2591 = vsel %vm2079, 1.0, 0.0
  %v2592 = vsel %vm2080, 1.0, 0.0
  %v2593 = vsel %vm2081, 1.0, 0.0
  %v2594 = vsel %vm2082, 1.0, 0.0
  %v2595 = vsel %vm2083, 1.0, 0.0
  %v2596 = vsel %vm2084, 1.0, 0.0
  %v2597 = vsel %vm2085, 1.0, 0.0
  %v2598 = vsel %vm2086, 1.0, 0.0
  %v2599 = vsel %vm2087, 1.0, 0.0
  %v2600 = vsel %vm2088, 1.0, 0.0
  %v2601 = vsel %vm2089, 1.0, 0.0
  %v2602 = vsel %vm2090, 1.0, 0.0
  %v2603 = vsel %vm2091, 1.0, 0.0
  %v2604 = vsel %vm2092, 1.0, 0.0
  %v2605 = vsel %vm2093, 1.0, 0.0
  %v2606 = vsel %vm2094, 1.0, 0.0
  %v2607 = vsel %vm2095, 1.0, 0.0
  %v2608 = vsel %vm2096, 1.0, 0.0
  %v2609 = vsel %vm2097, 1.0, 0.0
  %v2610 = vsel %vm2098, 1.0, 0.0
  %v2611 = vsel %vm2099, 1.0, 0.0
  %v2612 = vpack.c.bf16 %v2132, %v2100
  %v2613 = vpack.c.bf16 %v2133, %v2101
  %v2614 = vpack.c.bf16 %v2134, %v2102
  %v2615 = vpack.c.bf16 %v2135, %v2103
  %v2616 = vpack.c.bf16 %v2136, %v2104
  %v2617 = vpack.c.bf16 %v2137, %v2105
  %v2618 = vpack.c.bf16 %v2138, %v2106
  %v2619 = vpack.c.bf16 %v2139, %v2107
  %v2620 = vpack.c.bf16 %v2140, %v2108
  %v2621 = vpack.c.bf16 %v2141, %v2109
  %v2622 = vpack.c.bf16 %v2142, %v2110
  %v2623 = vpack.c.bf16 %v2143, %v2111
  %v2624 = vpack.c.bf16 %v2144, %v2112
  %v2625 = vpack.c.bf16 %v2145, %v2113
  %v2626 = vpack.c.bf16 %v2146, %v2114
  %v2627 = vpack.c.bf16 %v2147, %v2115
  %v2628 = vpack.c.bf16 %v2148, %v2116
  %v2629 = vpack.c.bf16 %v2149, %v2117
  %v2630 = vpack.c.bf16 %v2150, %v2118
  %v2631 = vpack.c.bf16 %v2151, %v2119
  %v2632 = vpack.c.bf16 %v2152, %v2120
  %v2633 = vpack.c.bf16 %v2153, %v2121
  %v2634 = vpack.c.bf16 %v2154, %v2122
  %v2635 = vpack.c.bf16 %v2155, %v2123
  %v2636 = vpack.c.bf16 %v2156, %v2124
  %v2637 = vpack.c.bf16 %v2157, %v2125
  %v2638 = vpack.c.bf16 %v2158, %v2126
  %v2639 = vpack.c.bf16 %v2159, %v2127
  %v2640 = vpack.c.bf16 %v2160, %v2128
  %v2641 = vpack.c.bf16 %v2161, %v2129
  %v2642 = vpack.c.bf16 %v2162, %v2130
  %v2643 = vpack.c.bf16 %v2163, %v2131
  %v2644 = vpack.c.bf16 %v2196, %v2164
  %v2645 = vpack.c.bf16 %v2197, %v2165
  %v2646 = vpack.c.bf16 %v2198, %v2166
  %v2647 = vpack.c.bf16 %v2199, %v2167
  %v2648 = vpack.c.bf16 %v2200, %v2168
  %v2649 = vpack.c.bf16 %v2201, %v2169
  %v2650 = vpack.c.bf16 %v2202, %v2170
  %v2651 = vpack.c.bf16 %v2203, %v2171
  %v2652 = vpack.c.bf16 %v2204, %v2172
  %v2653 = vpack.c.bf16 %v2205, %v2173
  %v2654 = vpack.c.bf16 %v2206, %v2174
  %v2655 = vpack.c.bf16 %v2207, %v2175
  %v2656 = vpack.c.bf16 %v2208, %v2176
  %v2657 = vpack.c.bf16 %v2209, %v2177
  %v2658 = vpack.c.bf16 %v2210, %v2178
  %v2659 = vpack.c.bf16 %v2211, %v2179
  %v2660 = vpack.c.bf16 %v2212, %v2180
  %v2661 = vpack.c.bf16 %v2213, %v2181
  %v2662 = vpack.c.bf16 %v2214, %v2182
  %v2663 = vpack.c.bf16 %v2215, %v2183
  %v2664 = vpack.c.bf16 %v2216, %v2184
  %v2665 = vpack.c.bf16 %v2217, %v2185
  %v2666 = vpack.c.bf16 %v2218, %v2186
  %v2667 = vpack.c.bf16 %v2219, %v2187
  %v2668 = vpack.c.bf16 %v2220, %v2188
  %v2669 = vpack.c.bf16 %v2221, %v2189
  %v2670 = vpack.c.bf16 %v2222, %v2190
  %v2671 = vpack.c.bf16 %v2223, %v2191
  %v2672 = vpack.c.bf16 %v2224, %v2192
  %v2673 = vpack.c.bf16 %v2225, %v2193
  %v2674 = vpack.c.bf16 %v2226, %v2194
  %v2675 = vpack.c.bf16 %v2227, %v2195
  %v2676 = vpack.c.bf16 %v2260, %v2228
  %v2677 = vpack.c.bf16 %v2261, %v2229
  %v2678 = vpack.c.bf16 %v2262, %v2230
  %v2679 = vpack.c.bf16 %v2263, %v2231
  %v2680 = vpack.c.bf16 %v2264, %v2232
  %v2681 = vpack.c.bf16 %v2265, %v2233
  %v2682 = vpack.c.bf16 %v2266, %v2234
  %v2683 = vpack.c.bf16 %v2267, %v2235
  %v2684 = vpack.c.bf16 %v2268, %v2236
  %v2685 = vpack.c.bf16 %v2269, %v2237
  %v2686 = vpack.c.bf16 %v2270, %v2238
  %v2687 = vpack.c.bf16 %v2271, %v2239
  %v2688 = vpack.c.bf16 %v2272, %v2240
  %v2689 = vpack.c.bf16 %v2273, %v2241
  %v2690 = vpack.c.bf16 %v2274, %v2242
  %v2691 = vpack.c.bf16 %v2275, %v2243
  %v2692 = vpack.c.bf16 %v2276, %v2244
  %v2693 = vpack.c.bf16 %v2277, %v2245
  %v2694 = vpack.c.bf16 %v2278, %v2246
  %v2695 = vpack.c.bf16 %v2279, %v2247
  %v2696 = vpack.c.bf16 %v2280, %v2248
  %v2697 = vpack.c.bf16 %v2281, %v2249
  %v2698 = vpack.c.bf16 %v2282, %v2250
  %v2699 = vpack.c.bf16 %v2283, %v2251
  %v2700 = vpack.c.bf16 %v2284, %v2252
  %v2701 = vpack.c.bf16 %v2285, %v2253
  %v2702 = vpack.c.bf16 %v2286, %v2254
  %v2703 = vpack.c.bf16 %v2287, %v2255
  %v2704 = vpack.c.bf16 %v2288, %v2256
  %v2705 = vpack.c.bf16 %v2289, %v2257
  %v2706 = vpack.c.bf16 %v2290, %v2258
  %v2707 = vpack.c.bf16 %v2291, %v2259
  %v2708 = vpack.c.bf16 %v2324, %v2292
  %v2709 = vpack.c.bf16 %v2325, %v2293
  %v2710 = vpack.c.bf16 %v2326, %v2294
  %v2711 = vpack.c.bf16 %v2327, %v2295
  %v2712 = vpack.c.bf16 %v2328, %v2296
  %v2713 = vpack.c.bf16 %v2329, %v2297
  %v2714 = vpack.c.bf16 %v2330, %v2298
  %v2715 = vpack.c.bf16 %v2331, %v2299
  %v2716 = vpack.c.bf16 %v2332, %v2300
  %v2717 = vpack.c.bf16 %v2333, %v2301
  %v2718 = vpack.c.bf16 %v2334, %v2302
  %v2719 = vpack.c.bf16 %v2335, %v2303
  %v2720 = vpack.c.bf16 %v2336, %v2304
  %v2721 = vpack.c.bf16 %v2337, %v2305
  %v2722 = vpack.c.bf16 %v2338, %v2306
  %v2723 = vpack.c.bf16 %v2339, %v2307
  %v2724 = vpack.c.bf16 %v2340, %v2308
  %v2725 = vpack.c.bf16 %v2341, %v2309
  %v2726 = vpack.c.bf16 %v2342, %v2310
  %v2727 = vpack.c.bf16 %v2343, %v2311
  %v2728 = vpack.c.bf16 %v2344, %v2312
  %v2729 = vpack.c.bf16 %v2345, %v2313
  %v2730 = vpack.c.bf16 %v2346, %v2314
  %v2731 = vpack.c.bf16 %v2347, %v2315
  %v2732 = vpack.c.bf16 %v2348, %v2316
  %v2733 = vpack.c.bf16 %v2349, %v2317
  %v2734 = vpack.c.bf16 %v2350, %v2318
  %v2735 = vpack.c.bf16 %v2351, %v2319
  %v2736 = vpack.c.bf16 %v2352, %v2320
  %v2737 = vpack.c.bf16 %v2353, %v2321
  %v2738 = vpack.c.bf16 %v2354, %v2322
  %v2739 = vpack.c.bf16 %v2355, %v2323
  %v2740 = vpack.c.bf16 %v2388, %v2356
  %v2741 = vpack.c.bf16 %v2389, %v2357
  %v2742 = vpack.c.bf16 %v2390, %v2358
  %v2743 = vpack.c.bf16 %v2391, %v2359
  %v2744 = vpack.c.bf16 %v2392, %v2360
  %v2745 = vpack.c.bf16 %v2393, %v2361
  %v2746 = vpack.c.bf16 %v2394, %v2362
  %v2747 = vpack.c.bf16 %v2395, %v2363
  %v2748 = vpack.c.bf16 %v2396, %v2364
  %v2749 = vpack.c.bf16 %v2397, %v2365
  %v2750 = vpack.c.bf16 %v2398, %v2366
  %v2751 = vpack.c.bf16 %v2399, %v2367
  %v2752 = vpack.c.bf16 %v2400, %v2368
  %v2753 = vpack.c.bf16 %v2401, %v2369
  %v2754 = vpack.c.bf16 %v2402, %v2370
  %v2755 = vpack.c.bf16 %v2403, %v2371
  %v2756 = vpack.c.bf16 %v2404, %v2372
  %v2757 = vpack.c.bf16 %v2405, %v2373
  %v2758 = vpack.c.bf16 %v2406, %v2374
  %v2759 = vpack.c.bf16 %v2407, %v2375
  %v2760 = vpack.c.bf16 %v2408, %v2376
  %v2761 = vpack.c.bf16 %v2409, %v2377
  %v2762 = vpack.c.bf16 %v2410, %v2378
  %v2763 = vpack.c.bf16 %v2411, %v2379
  %v2764 = vpack.c.bf16 %v2412, %v2380
  %v2765 = vpack.c.bf16 %v2413, %v2381
  %v2766 = vpack.c.bf16 %v2414, %v2382
  %v2767 = vpack.c.bf16 %v2415, %v2383
  %v2768 = vpack.c.bf16 %v2416, %v2384
  %v2769 = vpack.c.bf16 %v2417, %v2385
  %v2770 = vpack.c.bf16 %v2418, %v2386
  %v2771 = vpack.c.bf16 %v2419, %v2387
  %v2772 = vpack.c.bf16 %v2452, %v2420
  %v2773 = vpack.c.bf16 %v2453, %v2421
  %v2774 = vpack.c.bf16 %v2454, %v2422
  %v2775 = vpack.c.bf16 %v2455, %v2423
  %v2776 = vpack.c.bf16 %v2456, %v2424
  %v2777 = vpack.c.bf16 %v2457, %v2425
  %v2778 = vpack.c.bf16 %v2458, %v2426
  %v2779 = vpack.c.bf16 %v2459, %v2427
  %v2780 = vpack.c.bf16 %v2460, %v2428
  %v2781 = vpack.c.bf16 %v2461, %v2429
  %v2782 = vpack.c.bf16 %v2462, %v2430
  %v2783 = vpack.c.bf16 %v2463, %v2431
  %v2784 = vpack.c.bf16 %v2464, %v2432
  %v2785 = vpack.c.bf16 %v2465, %v2433
  %v2786 = vpack.c.bf16 %v2466, %v2434
  %v2787 = vpack.c.bf16 %v2467, %v2435
  %v2788 = vpack.c.bf16 %v2468, %v2436
  %v2789 = vpack.c.bf16 %v2469, %v2437
  %v2790 = vpack.c.bf16 %v2470, %v2438
  %v2791 = vpack.c.bf16 %v2471, %v2439
  %v2792 = vpack.c.bf16 %v2472, %v2440
  %v2793 = vpack.c.bf16 %v2473, %v2441
  %v2794 = vpack.c.bf16 %v2474, %v2442
  %v2795 = vpack.c.bf16 %v2475, %v2443
  %v2796 = vpack.c.bf16 %v2476, %v2444
  %v2797 = vpack.c.bf16 %v2477, %v2445
  %v2798 = vpack.c.bf16 %v2478, %v2446
  %v2799 = vpack.c.bf16 %v2479, %v2447
  %v2800 = vpack.c.bf16 %v2480, %v2448
  %v2801 = vpack.c.bf16 %v2481, %v2449
  %v2802 = vpack.c.bf16 %v2482, %v2450
  %v2803 = vpack.c.bf16 %v2483, %v2451
  %v2804 = vpack.c.bf16 %v2516, %v2484
  %v2805 = vpack.c.bf16 %v2517, %v2485
  %v2806 = vpack.c.bf16 %v2518, %v2486
  %v2807 = vpack.c.bf16 %v2519, %v2487
  %v2808 = vpack.c.bf16 %v2520, %v2488
  %v2809 = vpack.c.bf16 %v2521, %v2489
  %v2810 = vpack.c.bf16 %v2522, %v2490
  %v2811 = vpack.c.bf16 %v2523, %v2491
  %v2812 = vpack.c.bf16 %v2524, %v2492
  %v2813 = vpack.c.bf16 %v2525, %v2493
  %v2814 = vpack.c.bf16 %v2526, %v2494
  %v2815 = vpack.c.bf16 %v2527, %v2495
  %v2816 = vpack.c.bf16 %v2528, %v2496
  %v2817 = vpack.c.bf16 %v2529, %v2497
  %v2818 = vpack.c.bf16 %v2530, %v2498
  %v2819 = vpack.c.bf16 %v2531, %v2499
  %v2820 = vpack.c.bf16 %v2532, %v2500
  %v2821 = vpack.c.bf16 %v2533, %v2501
  %v2822 = vpack.c.bf16 %v2534, %v2502
  %v2823 = vpack.c.bf16 %v2535, %v2503
  %v2824 = vpack.c.bf16 %v2536, %v2504
  %v2825 = vpack.c.bf16 %v2537, %v2505
  %v2826 = vpack.c.bf16 %v2538, %v2506
  %v2827 = vpack.c.bf16 %v2539, %v2507
  %v2828 = vpack.c.bf16 %v2540, %v2508
  %v2829 = vpack.c.bf16 %v2541, %v2509
  %v2830 = vpack.c.bf16 %v2542, %v2510
  %v2831 = vpack.c.bf16 %v2543, %v2511
  %v2832 = vpack.c.bf16 %v2544, %v2512
  %v2833 = vpack.c.bf16 %v2545, %v2513
  %v2834 = vpack.c.bf16 %v2546, %v2514
  %v2835 = vpack.c.bf16 %v2547, %v2515
  %v2836 = vpack.c.bf16 %v2580, %v2548
  %v2837 = vpack.c.bf16 %v2581, %v2549
  %v2838 = vpack.c.bf16 %v2582, %v2550
  %v2839 = vpack.c.bf16 %v2583, %v2551
  %v2840 = vpack.c.bf16 %v2584, %v2552
  %v2841 = vpack.c.bf16 %v2585, %v2553
  %v2842 = vpack.c.bf16 %v2586, %v2554
  %v2843 = vpack.c.bf16 %v2587, %v2555
  %v2844 = vpack.c.bf16 %v2588, %v2556
  %v2845 = vpack.c.bf16 %v2589, %v2557
  %v2846 = vpack.c.bf16 %v2590, %v2558
  %v2847 = vpack.c.bf16 %v2591, %v2559
  %v2848 = vpack.c.bf16 %v2592, %v2560
  %v2849 = vpack.c.bf16 %v2593, %v2561
  %v2850 = vpack.c.bf16 %v2594, %v2562
  %v2851 = vpack.c.bf16 %v2595, %v2563
  %v2852 = vpack.c.bf16 %v2596, %v2564
  %v2853 = vpack.c.bf16 %v2597, %v2565
  %v2854 = vpack.c.bf16 %v2598, %v2566
  %v2855 = vpack.c.bf16 %v2599, %v2567
  %v2856 = vpack.c.bf16 %v2600, %v2568
  %v2857 = vpack.c.bf16 %v2601, %v2569
  %v2858 = vpack.c.bf16 %v2602, %v2570
  %v2859 = vpack.c.bf16 %v2603, %v2571
  %v2860 = vpack.c.bf16 %v2604, %v2572
  %v2861 = vpack.c.bf16 %v2605, %v2573
  %v2862 = vpack.c.bf16 %v2606, %v2574
  %v2863 = vpack.c.bf16 %v2607, %v2575
  %v2864 = vpack.c.bf16 %v2608, %v2576
  %v2865 = vpack.c.bf16 %v2609, %v2577
  %v2866 = vpack.c.bf16 %v2610, %v2578
  %v2867 = vpack.c.bf16 %v2611, %v2579
  %v2868 = vld [vmem:[%s0] sm:$0xf]
  %2869 = vmatprep.subr.bf16.mxu0 %v1425
  %2870 = vmatpush1.bf16.msra.mxu0 %v1424
  %2871 = vmatprep.subr.bf16.mxu0 %v1393
  %2872 = vmatpush1.bf16.msra.mxu0 %v1392
  %2873 = vmatprep.subr.bf16.mxu0 %v1361
  %2874 = vmatpush1.bf16.msra.mxu0 %v1360
  %2875 = vmatprep.subr.bf16.mxu0 %v1329
  %2876 = vmatpush1.bf16.msra.mxu0 %v1328
  %2877 = vmatprep.subr.bf16.mxu0 %v1297
  %2878 = vmatpush1.bf16.msra.mxu0 %v1296
  %2879 = vmatprep.subr.bf16.mxu0 %v1265
  %2880 = vmatpush1.bf16.msra.mxu0 %v1264
  %2881 = vmatprep.subr.bf16.mxu0 %v1233
  %2882 = vmatpush1.bf16.msra.mxu0 %v1232
  %2883 = vmatprep.subr.bf16.mxu0 %v1201
  %2884 = vmatpush1.bf16.msra.mxu0 %v1200
  %2885 = vmatprep.subr.bf16.mxu0 0
  %2886 = vmatpush2.bf16.msra.mxu0 0
  %2887 = vmatprep.subr.bf16.mxu0 0
  %2888 = vmatpush2.bf16.msra.mxu0 0
  %2889 = vmatprep.subr.bf16.mxu0 0
  %2890 = vmatpush2.bf16.msra.mxu0 0
  %2891 = vmatprep.subr.bf16.mxu0 0
  %2892 = vmatpush2.bf16.msra.mxu0 0
  %2893 = vmatprep.subr.bf16.mxu0 0
  %2894 = vmatpush2.bf16.msra.mxu0 0
  %2895 = vmatprep.subr.bf16.mxu0 0
  %2896 = vmatpush2.bf16.msra.mxu0 0
  %2897 = vmatprep.subr.bf16.mxu0 0
  %2898 = vmatpush2.bf16.msra.mxu0 0
  %2899 = vmatprep.subr.bf16.mxu0 0
  %2900 = vmatpush2.bf16.msra.mxu0 0
  %2901 = vmatprep.mubr.bf16.mxu0 0
  %2902 = vmatmul.mubr.bf16.gmra.mxu0 %v2868
  %v2903 = vpop.f32.mrf.mxu0
  %v2904 = vadd.f32 0.0, %v2903
  %v2905 = vpop.f32.mrf.mxu0
  %v2906 = vadd.f32 0.0, %v2905
  %v2907 = vpop.f32.mrf.mxu0
  %v2908 = vpop.f32.mrf.mxu0
  %2909 = vdwg.mxu0
  %2910 = vmatprep.subr.bf16.mxu0 %v1427
  %2911 = vmatpush1.bf16.msra.mxu0 %v1426
  %2912 = vmatprep.subr.bf16.mxu0 %v1395
  %2913 = vmatpush1.bf16.msra.mxu0 %v1394
  %2914 = vmatprep.subr.bf16.mxu0 %v1363
  %2915 = vmatpush1.bf16.msra.mxu0 %v1362
  %2916 = vmatprep.subr.bf16.mxu0 %v1331
  %2917 = vmatpush1.bf16.msra.mxu0 %v1330
  %2918 = vmatprep.subr.bf16.mxu0 %v1299
  %2919 = vmatpush1.bf16.msra.mxu0 %v1298
  %2920 = vmatprep.subr.bf16.mxu0 %v1267
  %2921 = vmatpush1.bf16.msra.mxu0 %v1266
  %2922 = vmatprep.subr.bf16.mxu0 %v1235
  %2923 = vmatpush1.bf16.msra.mxu0 %v1234
  %2924 = vmatprep.subr.bf16.mxu0 %v1203
  %2925 = vmatpush1.bf16.msra.mxu0 %v1202
  %2926 = vmatprep.subr.bf16.mxu0 0
  %2927 = vmatpush2.bf16.msra.mxu0 0
  %2928 = vmatprep.subr.bf16.mxu0 0
  %2929 = vmatpush2.bf16.msra.mxu0 0
  %2930 = vmatprep.subr.bf16.mxu0 0
  %2931 = vmatpush2.bf16.msra.mxu0 0
  %2932 = vmatprep.subr.bf16.mxu0 0
  %2933 = vmatpush2.bf16.msra.mxu0 0
  %2934 = vmatprep.subr.bf16.mxu0 0
  %2935 = vmatpush2.bf16.msra.mxu0 0
  %2936 = vmatprep.subr.bf16.mxu0 0
  %2937 = vmatpush2.bf16.msra.mxu0 0
  %2938 = vmatprep.subr.bf16.mxu0 0
  %2939 = vmatpush2.bf16.msra.mxu0 0
  %2940 = vmatprep.subr.bf16.mxu0 0
  %2941 = vmatpush2.bf16.msra.mxu0 0
  %2942 = vmatprep.mubr.bf16.mxu0 0
  %2943 = vmatmul.mubr.bf16.gmra.mxu0 %v2868
  %v2944 = vpop.f32.mrf.mxu0
  %v2945 = vadd.f32 0.0, %v2944
  %v2946 = vpop.f32.mrf.mxu0
  %v2947 = vadd.f32 0.0, %v2946
  %v2948 = vpop.f32.mrf.mxu0
  %v2949 = vpop.f32.mrf.mxu0
  %2950 = vdwg.mxu0
  %2951 = vmatprep.subr.bf16.mxu0 %v1429
  %2952 = vmatpush1.bf16.msra.mxu0 %v1428
  %2953 = vmatprep.subr.bf16.mxu0 %v1397
  %2954 = vmatpush1.bf16.msra.mxu0 %v1396
  %2955 = vmatprep.subr.bf16.mxu0 %v1365
  %2956 = vmatpush1.bf16.msra.mxu0 %v1364
  %2957 = vmatprep.subr.bf16.mxu0 %v1333
  %2958 = vmatpush1.bf16.msra.mxu0 %v1332
  %2959 = vmatprep.subr.bf16.mxu0 %v1301
  %2960 = vmatpush1.bf16.msra.mxu0 %v1300
  %2961 = vmatprep.subr.bf16.mxu0 %v1269
  %2962 = vmatpush1.bf16.msra.mxu0 %v1268
  %2963 = vmatprep.subr.bf16.mxu0 %v1237
  %2964 = vmatpush1.bf16.msra.mxu0 %v1236
  %2965 = vmatprep.subr.bf16.mxu0 %v1205
  %2966 = vmatpush1.bf16.msra.mxu0 %v1204
  %2967 = vmatprep.subr.bf16.mxu0 0
  %2968 = vmatpush2.bf16.msra.mxu0 0
  %2969 = vmatprep.subr.bf16.mxu0 0
  %2970 = vmatpush2.bf16.msra.mxu0 0
  %2971 = vmatprep.subr.bf16.mxu0 0
  %2972 = vmatpush2.bf16.msra.mxu0 0
  %2973 = vmatprep.subr.bf16.mxu0 0
  %2974 = vmatpush2.bf16.msra.mxu0 0
  %2975 = vmatprep.subr.bf16.mxu0 0
  %2976 = vmatpush2.bf16.msra.mxu0 0
  %2977 = vmatprep.subr.bf16.mxu0 0
  %2978 = vmatpush2.bf16.msra.mxu0 0
  %2979 = vmatprep.subr.bf16.mxu0 0
  %2980 = vmatpush2.bf16.msra.mxu0 0
  %2981 = vmatprep.subr.bf16.mxu0 0
  %2982 = vmatpush2.bf16.msra.mxu0 0
  %2983 = vmatprep.mubr.bf16.mxu0 0
  %2984 = vmatmul.mubr.bf16.gmra.mxu0 %v2868
  %v2985 = vpop.f32.mrf.mxu0
  %v2986 = vadd.f32 0.0, %v2985
  %v2987 = vpop.f32.mrf.mxu0
  %v2988 = vadd.f32 0.0, %v2987
  %v2989 = vpop.f32.mrf.mxu0
  %v2990 = vpop.f32.mrf.mxu0
  %2991 = vdwg.mxu0
  %2992 = vmatprep.subr.bf16.mxu0 %v1431
  %2993 = vmatpush1.bf16.msra.mxu0 %v1430
  %2994 = vmatprep.subr.bf16.mxu0 %v1399
  %2995 = vmatpush1.bf16.msra.mxu0 %v1398
  %2996 = vmatprep.subr.bf16.mxu0 %v1367
  %2997 = vmatpush1.bf16.msra.mxu0 %v1366
  %2998 = vmatprep.subr.bf16.mxu0 %v1335
  %2999 = vmatpush1.bf16.msra.mxu0 %v1334
  %3000 = vmatprep.subr.bf16.mxu0 %v1303
  %3001 = vmatpush1.bf16.msra.mxu0 %v1302
  %3002 = vmatprep.subr.bf16.mxu0 %v1271
  %3003 = vmatpush1.bf16.msra.mxu0 %v1270
  %3004 = vmatprep.subr.bf16.mxu0 %v1239
  %3005 = vmatpush1.bf16.msra.mxu0 %v1238
  %3006 = vmatprep.subr.bf16.mxu0 %v1207
  %3007 = vmatpush1.bf16.msra.mxu0 %v1206
  %3008 = vmatprep.subr.bf16.mxu0 0
  %3009 = vmatpush2.bf16.msra.mxu0 0
  %3010 = vmatprep.subr.bf16.mxu0 0
  %3011 = vmatpush2.bf16.msra.mxu0 0
  %3012 = vmatprep.subr.bf16.mxu0 0
  %3013 = vmatpush2.bf16.msra.mxu0 0
  %3014 = vmatprep.subr.bf16.mxu0 0
  %3015 = vmatpush2.bf16.msra.mxu0 0
  %3016 = vmatprep.subr.bf16.mxu0 0
  %3017 = vmatpush2.bf16.msra.mxu0 0
  %3018 = vmatprep.subr.bf16.mxu0 0
  %3019 = vmatpush2.bf16.msra.mxu0 0
  %3020 = vmatprep.subr.bf16.mxu0 0
  %3021 = vmatpush2.bf16.msra.mxu0 0
  %3022 = vmatprep.subr.bf16.mxu0 0
  %3023 = vmatpush2.bf16.msra.mxu0 0
  %3024 = vmatprep.mubr.bf16.mxu0 0
  %3025 = vmatmul.mubr.bf16.gmra.mxu0 %v2868
  %v3026 = vpop.f32.mrf.mxu0
  %v3027 = vadd.f32 0.0, %v3026
  %v3028 = vpop.f32.mrf.mxu0
  %v3029 = vadd.f32 0.0, %v3028
  %v3030 = vpop.f32.mrf.mxu0
  %v3031 = vpop.f32.mrf.mxu0
  %3032 = vdwg.mxu0
  %3033 = vmatprep.subr.bf16.mxu0 %v1433
  %3034 = vmatpush1.bf16.msra.mxu0 %v1432
  %3035 = vmatprep.subr.bf16.mxu0 %v1401
  %3036 = vmatpush1.bf16.msra.mxu0 %v1400
  %3037 = vmatprep.subr.bf16.mxu0 %v1369
  %3038 = vmatpush1.bf16.msra.mxu0 %v1368
  %3039 = vmatprep.subr.bf16.mxu0 %v1337
  %3040 = vmatpush1.bf16.msra.mxu0 %v1336
  %3041 = vmatprep.subr.bf16.mxu0 %v1305
  %3042 = vmatpush1.bf16.msra.mxu0 %v1304
  %3043 = vmatprep.subr.bf16.mxu0 %v1273
  %3044 = vmatpush1.bf16.msra.mxu0 %v1272
  %3045 = vmatprep.subr.bf16.mxu0 %v1241
  %3046 = vmatpush1.bf16.msra.mxu0 %v1240
  %3047 = vmatprep.subr.bf16.mxu0 %v1209
  %3048 = vmatpush1.bf16.msra.mxu0 %v1208
  %3049 = vmatprep.subr.bf16.mxu0 0
  %3050 = vmatpush2.bf16.msra.mxu0 0
  %3051 = vmatprep.subr.bf16.mxu0 0
  %3052 = vmatpush2.bf16.msra.mxu0 0
  %3053 = vmatprep.subr.bf16.mxu0 0
  %3054 = vmatpush2.bf16.msra.mxu0 0
  %3055 = vmatprep.subr.bf16.mxu0 0
  %3056 = vmatpush2.bf16.msra.mxu0 0
  %3057 = vmatprep.subr.bf16.mxu0 0
  %3058 = vmatpush2.bf16.msra.mxu0 0
  %3059 = vmatprep.subr.bf16.mxu0 0
  %3060 = vmatpush2.bf16.msra.mxu0 0
  %3061 = vmatprep.subr.bf16.mxu0 0
  %3062 = vmatpush2.bf16.msra.mxu0 0
  %3063 = vmatprep.subr.bf16.mxu0 0
  %3064 = vmatpush2.bf16.msra.mxu0 0
  %3065 = vmatprep.mubr.bf16.mxu0 0
  %3066 = vmatmul.mubr.bf16.gmra.mxu0 %v2868
  %v3067 = vpop.f32.mrf.mxu0
  %v3068 = vadd.f32 0.0, %v3067
  %v3069 = vpop.f32.mrf.mxu0
  %v3070 = vadd.f32 0.0, %v3069
  %v3071 = vpop.f32.mrf.mxu0
  %v3072 = vpop.f32.mrf.mxu0
  %3073 = vdwg.mxu0
  %3074 = vmatprep.subr.bf16.mxu0 %v1435
  %3075 = vmatpush1.bf16.msra.mxu0 %v1434
  %3076 = vmatprep.subr.bf16.mxu0 %v1403
  %3077 = vmatpush1.bf16.msra.mxu0 %v1402
  %3078 = vmatprep.subr.bf16.mxu0 %v1371
  %3079 = vmatpush1.bf16.msra.mxu0 %v1370
  %3080 = vmatprep.subr.bf16.mxu0 %v1339
  %3081 = vmatpush1.bf16.msra.mxu0 %v1338
  %3082 = vmatprep.subr.bf16.mxu0 %v1307
  %3083 = vmatpush1.bf16.msra.mxu0 %v1306
  %3084 = vmatprep.subr.bf16.mxu0 %v1275
  %3085 = vmatpush1.bf16.msra.mxu0 %v1274
  %3086 = vmatprep.subr.bf16.mxu0 %v1243
  %3087 = vmatpush1.bf16.msra.mxu0 %v1242
  %3088 = vmatprep.subr.bf16.mxu0 %v1211
  %3089 = vmatpush1.bf16.msra.mxu0 %v1210
  %3090 = vmatprep.subr.bf16.mxu0 0
  %3091 = vmatpush2.bf16.msra.mxu0 0
  %3092 = vmatprep.subr.bf16.mxu0 0
  %3093 = vmatpush2.bf16.msra.mxu0 0
  %3094 = vmatprep.subr.bf16.mxu0 0
  %3095 = vmatpush2.bf16.msra.mxu0 0
  %3096 = vmatprep.subr.bf16.mxu0 0
  %3097 = vmatpush2.bf16.msra.mxu0 0
  %3098 = vmatprep.subr.bf16.mxu0 0
  %3099 = vmatpush2.bf16.msra.mxu0 0
  %3100 = vmatprep.subr.bf16.mxu0 0
  %3101 = vmatpush2.bf16.msra.mxu0 0
  %3102 = vmatprep.subr.bf16.mxu0 0
  %3103 = vmatpush2.bf16.msra.mxu0 0
  %3104 = vmatprep.subr.bf16.mxu0 0
  %3105 = vmatpush2.bf16.msra.mxu0 0
  %3106 = vmatprep.mubr.bf16.mxu0 0
  %3107 = vmatmul.mubr.bf16.gmra.mxu0 %v2868
  %v3108 = vpop.f32.mrf.mxu0
  %v3109 = vadd.f32 0.0, %v3108
  %v3110 = vpop.f32.mrf.mxu0
  %v3111 = vadd.f32 0.0, %v3110
  %v3112 = vpop.f32.mrf.mxu0
  %v3113 = vpop.f32.mrf.mxu0
  %3114 = vdwg.mxu0
  %3115 = vmatprep.subr.bf16.mxu0 %v1437
  %3116 = vmatpush1.bf16.msra.mxu0 %v1436
  %3117 = vmatprep.subr.bf16.mxu0 %v1405
  %3118 = vmatpush1.bf16.msra.mxu0 %v1404
  %3119 = vmatprep.subr.bf16.mxu0 %v1373
  %3120 = vmatpush1.bf16.msra.mxu0 %v1372
  %3121 = vmatprep.subr.bf16.mxu0 %v1341
  %3122 = vmatpush1.bf16.msra.mxu0 %v1340
  %3123 = vmatprep.subr.bf16.mxu0 %v1309
  %3124 = vmatpush1.bf16.msra.mxu0 %v1308
  %3125 = vmatprep.subr.bf16.mxu0 %v1277
  %3126 = vmatpush1.bf16.msra.mxu0 %v1276
  %3127 = vmatprep.subr.bf16.mxu0 %v1245
  %3128 = vmatpush1.bf16.msra.mxu0 %v1244
  %3129 = vmatprep.subr.bf16.mxu0 %v1213
  %3130 = vmatpush1.bf16.msra.mxu0 %v1212
  %3131 = vmatprep.subr.bf16.mxu0 0
  %3132 = vmatpush2.bf16.msra.mxu0 0
  %3133 = vmatprep.subr.bf16.mxu0 0
  %3134 = vmatpush2.bf16.msra.mxu0 0
  %3135 = vmatprep.subr.bf16.mxu0 0
  %3136 = vmatpush2.bf16.msra.mxu0 0
  %3137 = vmatprep.subr.bf16.mxu0 0
  %3138 = vmatpush2.bf16.msra.mxu0 0
  %3139 = vmatprep.subr.bf16.mxu0 0
  %3140 = vmatpush2.bf16.msra.mxu0 0
  %3141 = vmatprep.subr.bf16.mxu0 0
  %3142 = vmatpush2.bf16.msra.mxu0 0
  %3143 = vmatprep.subr.bf16.mxu0 0
  %3144 = vmatpush2.bf16.msra.mxu0 0
  %3145 = vmatprep.subr.bf16.mxu0 0
  %3146 = vmatpush2.bf16.msra.mxu0 0
  %3147 = vmatprep.mubr.bf16.mxu0 0
  %3148 = vmatmul.mubr.bf16.gmra.mxu0 %v2868
  %v3149 = vpop.f32.mrf.mxu0
  %v3150 = vadd.f32 0.0, %v3149
  %v3151 = vpop.f32.mrf.mxu0
  %v3152 = vadd.f32 0.0, %v3151
  %v3153 = vpop.f32.mrf.mxu0
  %v3154 = vpop.f32.mrf.mxu0
  %3155 = vdwg.mxu0
  %3156 = vmatprep.subr.bf16.mxu0 %v1439
  %3157 = vmatpush1.bf16.msra.mxu0 %v1438
  %3158 = vmatprep.subr.bf16.mxu0 %v1407
  %3159 = vmatpush1.bf16.msra.mxu0 %v1406
  %3160 = vmatprep.subr.bf16.mxu0 %v1375
  %3161 = vmatpush1.bf16.msra.mxu0 %v1374
  %3162 = vmatprep.subr.bf16.mxu0 %v1343
  %3163 = vmatpush1.bf16.msra.mxu0 %v1342
  %3164 = vmatprep.subr.bf16.mxu0 %v1311
  %3165 = vmatpush1.bf16.msra.mxu0 %v1310
  %3166 = vmatprep.subr.bf16.mxu0 %v1279
  %3167 = vmatpush1.bf16.msra.mxu0 %v1278
  %3168 = vmatprep.subr.bf16.mxu0 %v1247
  %3169 = vmatpush1.bf16.msra.mxu0 %v1246
  %3170 = vmatprep.subr.bf16.mxu0 %v1215
  %3171 = vmatpush1.bf16.msra.mxu0 %v1214
  %3172 = vmatprep.subr.bf16.mxu0 0
  %3173 = vmatpush2.bf16.msra.mxu0 0
  %3174 = vmatprep.subr.bf16.mxu0 0
  %3175 = vmatpush2.bf16.msra.mxu0 0
  %3176 = vmatprep.subr.bf16.mxu0 0
  %3177 = vmatpush2.bf16.msra.mxu0 0
  %3178 = vmatprep.subr.bf16.mxu0 0
  %3179 = vmatpush2.bf16.msra.mxu0 0
  %3180 = vmatprep.subr.bf16.mxu0 0
  %3181 = vmatpush2.bf16.msra.mxu0 0
  %3182 = vmatprep.subr.bf16.mxu0 0
  %3183 = vmatpush2.bf16.msra.mxu0 0
  %3184 = vmatprep.subr.bf16.mxu0 0
  %3185 = vmatpush2.bf16.msra.mxu0 0
  %3186 = vmatprep.subr.bf16.mxu0 0
  %3187 = vmatpush2.bf16.msra.mxu0 0
  %3188 = vmatprep.mubr.bf16.mxu0 0
  %3189 = vmatmul.mubr.bf16.gmra.mxu0 %v2868
  %v3190 = vpop.f32.mrf.mxu0
  %v3191 = vadd.f32 0.0, %v3190
  %v3192 = vpop.f32.mrf.mxu0
  %v3193 = vadd.f32 0.0, %v3192
  %v3194 = vpop.f32.mrf.mxu0
  %v3195 = vpop.f32.mrf.mxu0
  %3196 = vdwg.mxu0
  %3197 = vmatprep.subr.bf16.mxu0 %v1441
  %3198 = vmatpush1.bf16.msra.mxu0 %v1440
  %3199 = vmatprep.subr.bf16.mxu0 %v1409
  %3200 = vmatpush1.bf16.msra.mxu0 %v1408
  %3201 = vmatprep.subr.bf16.mxu0 %v1377
  %3202 = vmatpush1.bf16.msra.mxu0 %v1376
  %3203 = vmatprep.subr.bf16.mxu0 %v1345
  %3204 = vmatpush1.bf16.msra.mxu0 %v1344
  %3205 = vmatprep.subr.bf16.mxu0 %v1313
  %3206 = vmatpush1.bf16.msra.mxu0 %v1312
  %3207 = vmatprep.subr.bf16.mxu0 %v1281
  %3208 = vmatpush1.bf16.msra.mxu0 %v1280
  %3209 = vmatprep.subr.bf16.mxu0 %v1249
  %3210 = vmatpush1.bf16.msra.mxu0 %v1248
  %3211 = vmatprep.subr.bf16.mxu0 %v1217
  %3212 = vmatpush1.bf16.msra.mxu0 %v1216
  %3213 = vmatprep.subr.bf16.mxu0 0
  %3214 = vmatpush2.bf16.msra.mxu0 0
  %3215 = vmatprep.subr.bf16.mxu0 0
  %3216 = vmatpush2.bf16.msra.mxu0 0
  %3217 = vmatprep.subr.bf16.mxu0 0
  %3218 = vmatpush2.bf16.msra.mxu0 0
  %3219 = vmatprep.subr.bf16.mxu0 0
  %3220 = vmatpush2.bf16.msra.mxu0 0
  %3221 = vmatprep.subr.bf16.mxu0 0
  %3222 = vmatpush2.bf16.msra.mxu0 0
  %3223 = vmatprep.subr.bf16.mxu0 0
  %3224 = vmatpush2.bf16.msra.mxu0 0
  %3225 = vmatprep.subr.bf16.mxu0 0
  %3226 = vmatpush2.bf16.msra.mxu0 0
  %3227 = vmatprep.subr.bf16.mxu0 0
  %3228 = vmatpush2.bf16.msra.mxu0 0
  %3229 = vmatprep.mubr.bf16.mxu0 0
  %3230 = vmatmul.mubr.bf16.gmra.mxu0 %v2868
  %v3231 = vpop.f32.mrf.mxu0
  %v3232 = vadd.f32 0.0, %v3231
  %v3233 = vpop.f32.mrf.mxu0
  %v3234 = vadd.f32 0.0, %v3233
  %v3235 = vpop.f32.mrf.mxu0
  %v3236 = vpop.f32.mrf.mxu0
  %3237 = vdwg.mxu0
  %3238 = vmatprep.subr.bf16.mxu0 %v1443
  %3239 = vmatpush1.bf16.msra.mxu0 %v1442
  %3240 = vmatprep.subr.bf16.mxu0 %v1411
  %3241 = vmatpush1.bf16.msra.mxu0 %v1410
  %3242 = vmatprep.subr.bf16.mxu0 %v1379
  %3243 = vmatpush1.bf16.msra.mxu0 %v1378
  %3244 = vmatprep.subr.bf16.mxu0 %v1347
  %3245 = vmatpush1.bf16.msra.mxu0 %v1346
  %3246 = vmatprep.subr.bf16.mxu0 %v1315
  %3247 = vmatpush1.bf16.msra.mxu0 %v1314
  %3248 = vmatprep.subr.bf16.mxu0 %v1283
  %3249 = vmatpush1.bf16.msra.mxu0 %v1282
  %3250 = vmatprep.subr.bf16.mxu0 %v1251
  %3251 = vmatpush1.bf16.msra.mxu0 %v1250
  %3252 = vmatprep.subr.bf16.mxu0 %v1219
  %3253 = vmatpush1.bf16.msra.mxu0 %v1218
  %3254 = vmatprep.subr.bf16.mxu0 0
  %3255 = vmatpush2.bf16.msra.mxu0 0
  %3256 = vmatprep.subr.bf16.mxu0 0
  %3257 = vmatpush2.bf16.msra.mxu0 0
  %3258 = vmatprep.subr.bf16.mxu0 0
  %3259 = vmatpush2.bf16.msra.mxu0 0
  %3260 = vmatprep.subr.bf16.mxu0 0
  %3261 = vmatpush2.bf16.msra.mxu0 0
  %3262 = vmatprep.subr.bf16.mxu0 0
  %3263 = vmatpush2.bf16.msra.mxu0 0
  %3264 = vmatprep.subr.bf16.mxu0 0
  %3265 = vmatpush2.bf16.msra.mxu0 0
  %3266 = vmatprep.subr.bf16.mxu0 0
  %3267 = vmatpush2.bf16.msra.mxu0 0
  %3268 = vmatprep.subr.bf16.mxu0 0
  %3269 = vmatpush2.bf16.msra.mxu0 0
  %3270 = vmatprep.mubr.bf16.mxu0 0
  %3271 = vmatmul.mubr.bf16.gmra.mxu0 %v2868
  %v3272 = vpop.f32.mrf.mxu0
  %v3273 = vadd.f32 0.0, %v3272
  %v3274 = vpop.f32.mrf.mxu0
  %v3275 = vadd.f32 0.0, %v3274
  %v3276 = vpop.f32.mrf.mxu0
  %v3277 = vpop.f32.mrf.mxu0
  %3278 = vdwg.mxu0
  %3279 = vmatprep.subr.bf16.mxu0 %v1445
  %3280 = vmatpush1.bf16.msra.mxu0 %v1444
  %3281 = vmatprep.subr.bf16.mxu0 %v1413
  %3282 = vmatpush1.bf16.msra.mxu0 %v1412
  %3283 = vmatprep.subr.bf16.mxu0 %v1381
  %3284 = vmatpush1.bf16.msra.mxu0 %v1380
  %3285 = vmatprep.subr.bf16.mxu0 %v1349
  %3286 = vmatpush1.bf16.msra.mxu0 %v1348
  %3287 = vmatprep.subr.bf16.mxu0 %v1317
  %3288 = vmatpush1.bf16.msra.mxu0 %v1316
  %3289 = vmatprep.subr.bf16.mxu0 %v1285
  %3290 = vmatpush1.bf16.msra.mxu0 %v1284
  %3291 = vmatprep.subr.bf16.mxu0 %v1253
  %3292 = vmatpush1.bf16.msra.mxu0 %v1252
  %3293 = vmatprep.subr.bf16.mxu0 %v1221
  %3294 = vmatpush1.bf16.msra.mxu0 %v1220
  %3295 = vmatprep.subr.bf16.mxu0 0
  %3296 = vmatpush2.bf16.msra.mxu0 0
  %3297 = vmatprep.subr.bf16.mxu0 0
  %3298 = vmatpush2.bf16.msra.mxu0 0
  %3299 = vmatprep.subr.bf16.mxu0 0
  %3300 = vmatpush2.bf16.msra.mxu0 0
  %3301 = vmatprep.subr.bf16.mxu0 0
  %3302 = vmatpush2.bf16.msra.mxu0 0
  %3303 = vmatprep.subr.bf16.mxu0 0
  %3304 = vmatpush2.bf16.msra.mxu0 0
  %3305 = vmatprep.subr.bf16.mxu0 0
  %3306 = vmatpush2.bf16.msra.mxu0 0
  %3307 = vmatprep.subr.bf16.mxu0 0
  %3308 = vmatpush2.bf16.msra.mxu0 0
  %3309 = vmatprep.subr.bf16.mxu0 0
  %3310 = vmatpush2.bf16.msra.mxu0 0
  %3311 = vmatprep.mubr.bf16.mxu0 0
  %3312 = vmatmul.mubr.bf16.gmra.mxu0 %v2868
  %v3313 = vpop.f32.mrf.mxu0
  %v3314 = vadd.f32 0.0, %v3313
  %v3315 = vpop.f32.mrf.mxu0
  %v3316 = vadd.f32 0.0, %v3315
  %v3317 = vpop.f32.mrf.mxu0
  %v3318 = vpop.f32.mrf.mxu0
  %3319 = vdwg.mxu0
  %3320 = vmatprep.subr.bf16.mxu0 %v1447
  %3321 = vmatpush1.bf16.msra.mxu0 %v1446
  %3322 = vmatprep.subr.bf16.mxu0 %v1415
  %3323 = vmatpush1.bf16.msra.mxu0 %v1414
  %3324 = vmatprep.subr.bf16.mxu0 %v1383
  %3325 = vmatpush1.bf16.msra.mxu0 %v1382
  %3326 = vmatprep.subr.bf16.mxu0 %v1351
  %3327 = vmatpush1.bf16.msra.mxu0 %v1350
  %3328 = vmatprep.subr.bf16.mxu0 %v1319
  %3329 = vmatpush1.bf16.msra.mxu0 %v1318
  %3330 = vmatprep.subr.bf16.mxu0 %v1287
  %3331 = vmatpush1.bf16.msra.mxu0 %v1286
  %3332 = vmatprep.subr.bf16.mxu0 %v1255
  %3333 = vmatpush1.bf16.msra.mxu0 %v1254
  %3334 = vmatprep.subr.bf16.mxu0 %v1223
  %3335 = vmatpush1.bf16.msra.mxu0 %v1222
  %3336 = vmatprep.subr.bf16.mxu0 0
  %3337 = vmatpush2.bf16.msra.mxu0 0
  %3338 = vmatprep.subr.bf16.mxu0 0
  %3339 = vmatpush2.bf16.msra.mxu0 0
  %3340 = vmatprep.subr.bf16.mxu0 0
  %3341 = vmatpush2.bf16.msra.mxu0 0
  %3342 = vmatprep.subr.bf16.mxu0 0
  %3343 = vmatpush2.bf16.msra.mxu0 0
  %3344 = vmatprep.subr.bf16.mxu0 0
  %3345 = vmatpush2.bf16.msra.mxu0 0
  %3346 = vmatprep.subr.bf16.mxu0 0
  %3347 = vmatpush2.bf16.msra.mxu0 0
  %3348 = vmatprep.subr.bf16.mxu0 0
  %3349 = vmatpush2.bf16.msra.mxu0 0
  %3350 = vmatprep.subr.bf16.mxu0 0
  %3351 = vmatpush2.bf16.msra.mxu0 0
  %3352 = vmatprep.mubr.bf16.mxu0 0
  %3353 = vmatmul.mubr.bf16.gmra.mxu0 %v2868
  %v3354 = vpop.f32.mrf.mxu0
  %v3355 = vadd.f32 0.0, %v3354
  %v3356 = vpop.f32.mrf.mxu0
  %v3357 = vadd.f32 0.0, %v3356
  %v3358 = vpop.f32.mrf.mxu0
  %v3359 = vpop.f32.mrf.mxu0
  %3360 = vdwg.mxu0
  %3361 = vmatprep.subr.bf16.mxu0 %v1449
  %3362 = vmatpush1.bf16.msra.mxu0 %v1448
  %3363 = vmatprep.subr.bf16.mxu0 %v1417
  %3364 = vmatpush1.bf16.msra.mxu0 %v1416
  %3365 = vmatprep.subr.bf16.mxu0 %v1385
  %3366 = vmatpush1.bf16.msra.mxu0 %v1384
  %3367 = vmatprep.subr.bf16.mxu0 %v1353
  %3368 = vmatpush1.bf16.msra.mxu0 %v1352
  %3369 = vmatprep.subr.bf16.mxu0 %v1321
  %3370 = vmatpush1.bf16.msra.mxu0 %v1320
  %3371 = vmatprep.subr.bf16.mxu0 %v1289
  %3372 = vmatpush1.bf16.msra.mxu0 %v1288
  %3373 = vmatprep.subr.bf16.mxu0 %v1257
  %3374 = vmatpush1.bf16.msra.mxu0 %v1256
  %3375 = vmatprep.subr.bf16.mxu0 %v1225
  %3376 = vmatpush1.bf16.msra.mxu0 %v1224
  %3377 = vmatprep.subr.bf16.mxu0 0
  %3378 = vmatpush2.bf16.msra.mxu0 0
  %3379 = vmatprep.subr.bf16.mxu0 0
  %3380 = vmatpush2.bf16.msra.mxu0 0
  %3381 = vmatprep.subr.bf16.mxu0 0
  %3382 = vmatpush2.bf16.msra.mxu0 0
  %3383 = vmatprep.subr.bf16.mxu0 0
  %3384 = vmatpush2.bf16.msra.mxu0 0
  %3385 = vmatprep.subr.bf16.mxu0 0
  %3386 = vmatpush2.bf16.msra.mxu0 0
  %3387 = vmatprep.subr.bf16.mxu0 0
  %3388 = vmatpush2.bf16.msra.mxu0 0
  %3389 = vmatprep.subr.bf16.mxu0 0
  %3390 = vmatpush2.bf16.msra.mxu0 0
  %3391 = vmatprep.subr.bf16.mxu0 0
  %3392 = vmatpush2.bf16.msra.mxu0 0
  %3393 = vmatprep.mubr.bf16.mxu0 0
  %3394 = vmatmul.mubr.bf16.gmra.mxu0 %v2868
  %v3395 = vpop.f32.mrf.mxu0
  %v3396 = vadd.f32 0.0, %v3395
  %v3397 = vpop.f32.mrf.mxu0
  %v3398 = vadd.f32 0.0, %v3397
  %v3399 = vpop.f32.mrf.mxu0
  %v3400 = vpop.f32.mrf.mxu0
  %3401 = vdwg.mxu0
  %3402 = vmatprep.subr.bf16.mxu0 %v1451
  %3403 = vmatpush1.bf16.msra.mxu0 %v1450
  %3404 = vmatprep.subr.bf16.mxu0 %v1419
  %3405 = vmatpush1.bf16.msra.mxu0 %v1418
  %3406 = vmatprep.subr.bf16.mxu0 %v1387
  %3407 = vmatpush1.bf16.msra.mxu0 %v1386
  %3408 = vmatprep.subr.bf16.mxu0 %v1355
  %3409 = vmatpush1.bf16.msra.mxu0 %v1354
  %3410 = vmatprep.subr.bf16.mxu0 %v1323
  %3411 = vmatpush1.bf16.msra.mxu0 %v1322
  %3412 = vmatprep.subr.bf16.mxu0 %v1291
  %3413 = vmatpush1.bf16.msra.mxu0 %v1290
  %3414 = vmatprep.subr.bf16.mxu0 %v1259
  %3415 = vmatpush1.bf16.msra.mxu0 %v1258
  %3416 = vmatprep.subr.bf16.mxu0 %v1227
  %3417 = vmatpush1.bf16.msra.mxu0 %v1226
  %3418 = vmatprep.subr.bf16.mxu0 0
  %3419 = vmatpush2.bf16.msra.mxu0 0
  %3420 = vmatprep.subr.bf16.mxu0 0
  %3421 = vmatpush2.bf16.msra.mxu0 0
  %3422 = vmatprep.subr.bf16.mxu0 0
  %3423 = vmatpush2.bf16.msra.mxu0 0
  %3424 = vmatprep.subr.bf16.mxu0 0
  %3425 = vmatpush2.bf16.msra.mxu0 0
  %3426 = vmatprep.subr.bf16.mxu0 0
  %3427 = vmatpush2.bf16.msra.mxu0 0
  %3428 = vmatprep.subr.bf16.mxu0 0
  %3429 = vmatpush2.bf16.msra.mxu0 0
  %3430 = vmatprep.subr.bf16.mxu0 0
  %3431 = vmatpush2.bf16.msra.mxu0 0
  %3432 = vmatprep.subr.bf16.mxu0 0
  %3433 = vmatpush2.bf16.msra.mxu0 0
  %3434 = vmatprep.mubr.bf16.mxu0 0
  %3435 = vmatmul.mubr.bf16.gmra.mxu0 %v2868
  %v3436 = vpop.f32.mrf.mxu0
  %v3437 = vadd.f32 0.0, %v3436
  %v3438 = vpop.f32.mrf.mxu0
  %v3439 = vadd.f32 0.0, %v3438
  %v3440 = vpop.f32.mrf.mxu0
  %v3441 = vpop.f32.mrf.mxu0
  %3442 = vdwg.mxu0
  %3443 = vmatprep.subr.bf16.mxu0 %v1453
  %3444 = vmatpush1.bf16.msra.mxu0 %v1452
  %3445 = vmatprep.subr.bf16.mxu0 %v1421
  %3446 = vmatpush1.bf16.msra.mxu0 %v1420
  %3447 = vmatprep.subr.bf16.mxu0 %v1389
  %3448 = vmatpush1.bf16.msra.mxu0 %v1388
  %3449 = vmatprep.subr.bf16.mxu0 %v1357
  %3450 = vmatpush1.bf16.msra.mxu0 %v1356
  %3451 = vmatprep.subr.bf16.mxu0 %v1325
  %3452 = vmatpush1.bf16.msra.mxu0 %v1324
  %3453 = vmatprep.subr.bf16.mxu0 %v1293
  %3454 = vmatpush1.bf16.msra.mxu0 %v1292
  %3455 = vmatprep.subr.bf16.mxu0 %v1261
  %3456 = vmatpush1.bf16.msra.mxu0 %v1260
  %3457 = vmatprep.subr.bf16.mxu0 %v1229
  %3458 = vmatpush1.bf16.msra.mxu0 %v1228
  %3459 = vmatprep.subr.bf16.mxu0 0
  %3460 = vmatpush2.bf16.msra.mxu0 0
  %3461 = vmatprep.subr.bf16.mxu0 0
  %3462 = vmatpush2.bf16.msra.mxu0 0
  %3463 = vmatprep.subr.bf16.mxu0 0
  %3464 = vmatpush2.bf16.msra.mxu0 0
  %3465 = vmatprep.subr.bf16.mxu0 0
  %3466 = vmatpush2.bf16.msra.mxu0 0
  %3467 = vmatprep.subr.bf16.mxu0 0
  %3468 = vmatpush2.bf16.msra.mxu0 0
  %3469 = vmatprep.subr.bf16.mxu0 0
  %3470 = vmatpush2.bf16.msra.mxu0 0
  %3471 = vmatprep.subr.bf16.mxu0 0
  %3472 = vmatpush2.bf16.msra.mxu0 0
  %3473 = vmatprep.subr.bf16.mxu0 0
  %3474 = vmatpush2.bf16.msra.mxu0 0
  %3475 = vmatprep.mubr.bf16.mxu0 0
  %3476 = vmatmul.mubr.bf16.gmra.mxu0 %v2868
  %v3477 = vpop.f32.mrf.mxu0
  %v3478 = vadd.f32 0.0, %v3477
  %v3479 = vpop.f32.mrf.mxu0
  %v3480 = vadd.f32 0.0, %v3479
  %v3481 = vpop.f32.mrf.mxu0
  %v3482 = vpop.f32.mrf.mxu0
  %3483 = vdwg.mxu0
  %3484 = vmatprep.subr.bf16.mxu0 %v1455
  %3485 = vmatpush1.bf16.msra.mxu0 %v1454
  %3486 = vmatprep.subr.bf16.mxu0 %v1423
  %3487 = vmatpush1.bf16.msra.mxu0 %v1422
  %3488 = vmatprep.subr.bf16.mxu0 %v1391
  %3489 = vmatpush1.bf16.msra.mxu0 %v1390
  %3490 = vmatprep.subr.bf16.mxu0 %v1359
  %3491 = vmatpush1.bf16.msra.mxu0 %v1358
  %3492 = vmatprep.subr.bf16.mxu0 %v1327
  %3493 = vmatpush1.bf16.msra.mxu0 %v1326
  %3494 = vmatprep.subr.bf16.mxu0 %v1295
  %3495 = vmatpush1.bf16.msra.mxu0 %v1294
  %3496 = vmatprep.subr.bf16.mxu0 %v1263
  %3497 = vmatpush1.bf16.msra.mxu0 %v1262
  %3498 = vmatprep.subr.bf16.mxu0 %v1231
  %3499 = vmatpush1.bf16.msra.mxu0 %v1230
  %3500 = vmatprep.subr.bf16.mxu0 0
  %3501 = vmatpush2.bf16.msra.mxu0 0
  %3502 = vmatprep.subr.bf16.mxu0 0
  %3503 = vmatpush2.bf16.msra.mxu0 0
  %3504 = vmatprep.subr.bf16.mxu0 0
  %3505 = vmatpush2.bf16.msra.mxu0 0
  %3506 = vmatprep.subr.bf16.mxu0 0
  %3507 = vmatpush2.bf16.msra.mxu0 0
  %3508 = vmatprep.subr.bf16.mxu0 0
  %3509 = vmatpush2.bf16.msra.mxu0 0
  %3510 = vmatprep.subr.bf16.mxu0 0
  %3511 = vmatpush2.bf16.msra.mxu0 0
  %3512 = vmatprep.subr.bf16.mxu0 0
  %3513 = vmatpush2.bf16.msra.mxu0 0
  %3514 = vmatprep.subr.bf16.mxu0 0
  %3515 = vmatpush2.bf16.msra.mxu0 0
  %3516 = vmatprep.mubr.bf16.mxu0 0
  %3517 = vmatmul.mubr.bf16.gmra.mxu0 %v2868
  %v3518 = vpop.f32.mrf.mxu0
  %v3519 = vadd.f32 0.0, %v3518
  %v3520 = vpop.f32.mrf.mxu0
  %v3521 = vadd.f32 0.0, %v3520
  %v3522 = vpop.f32.mrf.mxu0
  %v3523 = vpop.f32.mrf.mxu0
  %3524 = vdwg.mxu0
  %v3525 = vld [vmem:[%s1] sm:$0xf]
  %3526 = vmatprep.subr.bf16.mxu0 %v2837
  %3527 = vmatpush1.bf16.msra.mxu0 %v2836
  %3528 = vmatprep.subr.bf16.mxu0 %v2805
  %3529 = vmatpush1.bf16.msra.mxu0 %v2804
  %3530 = vmatprep.subr.bf16.mxu0 %v2773
  %3531 = vmatpush1.bf16.msra.mxu0 %v2772
  %3532 = vmatprep.subr.bf16.mxu0 %v2741
  %3533 = vmatpush1.bf16.msra.mxu0 %v2740
  %3534 = vmatprep.subr.bf16.mxu0 %v2709
  %3535 = vmatpush1.bf16.msra.mxu0 %v2708
  %3536 = vmatprep.subr.bf16.mxu0 %v2677
  %3537 = vmatpush1.bf16.msra.mxu0 %v2676
  %3538 = vmatprep.subr.bf16.mxu0 %v2645
  %3539 = vmatpush1.bf16.msra.mxu0 %v2644
  %3540 = vmatprep.subr.bf16.mxu0 %v2613
  %3541 = vmatpush1.bf16.msra.mxu0 %v2612
  %3542 = vmatprep.subr.bf16.mxu0 0
  %3543 = vmatpush2.bf16.msra.mxu0 0
  %3544 = vmatprep.subr.bf16.mxu0 0
  %3545 = vmatpush2.bf16.msra.mxu0 0
  %3546 = vmatprep.subr.bf16.mxu0 0
  %3547 = vmatpush2.bf16.msra.mxu0 0
  %3548 = vmatprep.subr.bf16.mxu0 0
  %3549 = vmatpush2.bf16.msra.mxu0 0
  %3550 = vmatprep.subr.bf16.mxu0 0
  %3551 = vmatpush2.bf16.msra.mxu0 0
  %3552 = vmatprep.subr.bf16.mxu0 0
  %3553 = vmatpush2.bf16.msra.mxu0 0
  %3554 = vmatprep.subr.bf16.mxu0 0
  %3555 = vmatpush2.bf16.msra.mxu0 0
  %3556 = vmatprep.subr.bf16.mxu0 0
  %3557 = vmatpush2.bf16.msra.mxu0 0
  %3558 = vmatprep.mubr.bf16.mxu0 0
  %3559 = vmatmul.mubr.bf16.gmra.mxu0 %v3525
  %v3560 = vpop.f32.mrf.mxu0
  %v3561 = vadd.f32 0.0, %v3560
  %v3562 = vpop.f32.mrf.mxu0
  %v3563 = vadd.f32 0.0, %v3562
  %v3564 = vpop.f32.mrf.mxu0
  %v3565 = vpop.f32.mrf.mxu0
  %3566 = vdwg.mxu0
  %3567 = vmatprep.subr.bf16.mxu0 %v2839
  %3568 = vmatpush1.bf16.msra.mxu0 %v2838
  %3569 = vmatprep.subr.bf16.mxu0 %v2807
  %3570 = vmatpush1.bf16.msra.mxu0 %v2806
  %3571 = vmatprep.subr.bf16.mxu0 %v2775
  %3572 = vmatpush1.bf16.msra.mxu0 %v2774
  %3573 = vmatprep.subr.bf16.mxu0 %v2743
  %3574 = vmatpush1.bf16.msra.mxu0 %v2742
  %3575 = vmatprep.subr.bf16.mxu0 %v2711
  %3576 = vmatpush1.bf16.msra.mxu0 %v2710
  %3577 = vmatprep.subr.bf16.mxu0 %v2679
  %3578 = vmatpush1.bf16.msra.mxu0 %v2678
  %3579 = vmatprep.subr.bf16.mxu0 %v2647
  %3580 = vmatpush1.bf16.msra.mxu0 %v2646
  %3581 = vmatprep.subr.bf16.mxu0 %v2615
  %3582 = vmatpush1.bf16.msra.mxu0 %v2614
  %3583 = vmatprep.subr.bf16.mxu0 0
  %3584 = vmatpush2.bf16.msra.mxu0 0
  %3585 = vmatprep.subr.bf16.mxu0 0
  %3586 = vmatpush2.bf16.msra.mxu0 0
  %3587 = vmatprep.subr.bf16.mxu0 0
  %3588 = vmatpush2.bf16.msra.mxu0 0
  %3589 = vmatprep.subr.bf16.mxu0 0
  %3590 = vmatpush2.bf16.msra.mxu0 0
  %3591 = vmatprep.subr.bf16.mxu0 0
  %3592 = vmatpush2.bf16.msra.mxu0 0
  %3593 = vmatprep.subr.bf16.mxu0 0
  %3594 = vmatpush2.bf16.msra.mxu0 0
  %3595 = vmatprep.subr.bf16.mxu0 0
  %3596 = vmatpush2.bf16.msra.mxu0 0
  %3597 = vmatprep.subr.bf16.mxu0 0
  %3598 = vmatpush2.bf16.msra.mxu0 0
  %3599 = vmatprep.mubr.bf16.mxu0 0
  %3600 = vmatmul.mubr.bf16.gmra.mxu0 %v3525
  %v3601 = vpop.f32.mrf.mxu0
  %v3602 = vadd.f32 0.0, %v3601
  %v3603 = vpop.f32.mrf.mxu0
  %v3604 = vadd.f32 0.0, %v3603
  %v3605 = vpop.f32.mrf.mxu0
  %v3606 = vpop.f32.mrf.mxu0
  %3607 = vdwg.mxu0
  %3608 = vmatprep.subr.bf16.mxu0 %v2841
  %3609 = vmatpush1.bf16.msra.mxu0 %v2840
  %3610 = vmatprep.subr.bf16.mxu0 %v2809
  %3611 = vmatpush1.bf16.msra.mxu0 %v2808
  %3612 = vmatprep.subr.bf16.mxu0 %v2777
  %3613 = vmatpush1.bf16.msra.mxu0 %v2776
  %3614 = vmatprep.subr.bf16.mxu0 %v2745
  %3615 = vmatpush1.bf16.msra.mxu0 %v2744
  %3616 = vmatprep.subr.bf16.mxu0 %v2713
  %3617 = vmatpush1.bf16.msra.mxu0 %v2712
  %3618 = vmatprep.subr.bf16.mxu0 %v2681
  %3619 = vmatpush1.bf16.msra.mxu0 %v2680
  %3620 = vmatprep.subr.bf16.mxu0 %v2649
  %3621 = vmatpush1.bf16.msra.mxu0 %v2648
  %3622 = vmatprep.subr.bf16.mxu0 %v2617
  %3623 = vmatpush1.bf16.msra.mxu0 %v2616
  %3624 = vmatprep.subr.bf16.mxu0 0
  %3625 = vmatpush2.bf16.msra.mxu0 0
  %3626 = vmatprep.subr.bf16.mxu0 0
  %3627 = vmatpush2.bf16.msra.mxu0 0
  %3628 = vmatprep.subr.bf16.mxu0 0
  %3629 = vmatpush2.bf16.msra.mxu0 0
  %3630 = vmatprep.subr.bf16.mxu0 0
  %3631 = vmatpush2.bf16.msra.mxu0 0
  %3632 = vmatprep.subr.bf16.mxu0 0
  %3633 = vmatpush2.bf16.msra.mxu0 0
  %3634 = vmatprep.subr.bf16.mxu0 0
  %3635 = vmatpush2.bf16.msra.mxu0 0
  %3636 = vmatprep.subr.bf16.mxu0 0
  %3637 = vmatpush2.bf16.msra.mxu0 0
  %3638 = vmatprep.subr.bf16.mxu0 0
  %3639 = vmatpush2.bf16.msra.mxu0 0
  %3640 = vmatprep.mubr.bf16.mxu0 0
  %3641 = vmatmul.mubr.bf16.gmra.mxu0 %v3525
  %v3642 = vpop.f32.mrf.mxu0
  %v3643 = vadd.f32 0.0, %v3642
  %v3644 = vpop.f32.mrf.mxu0
  %v3645 = vadd.f32 0.0, %v3644
  %v3646 = vpop.f32.mrf.mxu0
  %v3647 = vpop.f32.mrf.mxu0
  %3648 = vdwg.mxu0
  %3649 = vmatprep.subr.bf16.mxu0 %v2843
  %3650 = vmatpush1.bf16.msra.mxu0 %v2842
  %3651 = vmatprep.subr.bf16.mxu0 %v2811
  %3652 = vmatpush1.bf16.msra.mxu0 %v2810
  %3653 = vmatprep.subr.bf16.mxu0 %v2779
  %3654 = vmatpush1.bf16.msra.mxu0 %v2778
  %3655 = vmatprep.subr.bf16.mxu0 %v2747
  %3656 = vmatpush1.bf16.msra.mxu0 %v2746
  %3657 = vmatprep.subr.bf16.mxu0 %v2715
  %3658 = vmatpush1.bf16.msra.mxu0 %v2714
  %3659 = vmatprep.subr.bf16.mxu0 %v2683
  %3660 = vmatpush1.bf16.msra.mxu0 %v2682
  %3661 = vmatprep.subr.bf16.mxu0 %v2651
  %3662 = vmatpush1.bf16.msra.mxu0 %v2650
  %3663 = vmatprep.subr.bf16.mxu0 %v2619
  %3664 = vmatpush1.bf16.msra.mxu0 %v2618
  %3665 = vmatprep.subr.bf16.mxu0 0
  %3666 = vmatpush2.bf16.msra.mxu0 0
  %3667 = vmatprep.subr.bf16.mxu0 0
  %3668 = vmatpush2.bf16.msra.mxu0 0
  %3669 = vmatprep.subr.bf16.mxu0 0
  %3670 = vmatpush2.bf16.msra.mxu0 0
  %3671 = vmatprep.subr.bf16.mxu0 0
  %3672 = vmatpush2.bf16.msra.mxu0 0
  %3673 = vmatprep.subr.bf16.mxu0 0
  %3674 = vmatpush2.bf16.msra.mxu0 0
  %3675 = vmatprep.subr.bf16.mxu0 0
  %3676 = vmatpush2.bf16.msra.mxu0 0
  %3677 = vmatprep.subr.bf16.mxu0 0
  %3678 = vmatpush2.bf16.msra.mxu0 0
  %3679 = vmatprep.subr.bf16.mxu0 0
  %3680 = vmatpush2.bf16.msra.mxu0 0
  %3681 = vmatprep.mubr.bf16.mxu0 0
  %3682 = vmatmul.mubr.bf16.gmra.mxu0 %v3525
  %v3683 = vpop.f32.mrf.mxu0
  %v3684 = vadd.f32 0.0, %v3683
  %v3685 = vpop.f32.mrf.mxu0
  %v3686 = vadd.f32 0.0, %v3685
  %v3687 = vpop.f32.mrf.mxu0
  %v3688 = vpop.f32.mrf.mxu0
  %3689 = vdwg.mxu0
  %3690 = vmatprep.subr.bf16.mxu0 %v2845
  %3691 = vmatpush1.bf16.msra.mxu0 %v2844
  %3692 = vmatprep.subr.bf16.mxu0 %v2813
  %3693 = vmatpush1.bf16.msra.mxu0 %v2812
  %3694 = vmatprep.subr.bf16.mxu0 %v2781
  %3695 = vmatpush1.bf16.msra.mxu0 %v2780
  %3696 = vmatprep.subr.bf16.mxu0 %v2749
  %3697 = vmatpush1.bf16.msra.mxu0 %v2748
  %3698 = vmatprep.subr.bf16.mxu0 %v2717
  %3699 = vmatpush1.bf16.msra.mxu0 %v2716
  %3700 = vmatprep.subr.bf16.mxu0 %v2685
  %3701 = vmatpush1.bf16.msra.mxu0 %v2684
  %3702 = vmatprep.subr.bf16.mxu0 %v2653
  %3703 = vmatpush1.bf16.msra.mxu0 %v2652
  %3704 = vmatprep.subr.bf16.mxu0 %v2621
  %3705 = vmatpush1.bf16.msra.mxu0 %v2620
  %3706 = vmatprep.subr.bf16.mxu0 0
  %3707 = vmatpush2.bf16.msra.mxu0 0
  %3708 = vmatprep.subr.bf16.mxu0 0
  %3709 = vmatpush2.bf16.msra.mxu0 0
  %3710 = vmatprep.subr.bf16.mxu0 0
  %3711 = vmatpush2.bf16.msra.mxu0 0
  %3712 = vmatprep.subr.bf16.mxu0 0
  %3713 = vmatpush2.bf16.msra.mxu0 0
  %3714 = vmatprep.subr.bf16.mxu0 0
  %3715 = vmatpush2.bf16.msra.mxu0 0
  %3716 = vmatprep.subr.bf16.mxu0 0
  %3717 = vmatpush2.bf16.msra.mxu0 0
  %3718 = vmatprep.subr.bf16.mxu0 0
  %3719 = vmatpush2.bf16.msra.mxu0 0
  %3720 = vmatprep.subr.bf16.mxu0 0
  %3721 = vmatpush2.bf16.msra.mxu0 0
  %3722 = vmatprep.mubr.bf16.mxu0 0
  %3723 = vmatmul.mubr.bf16.gmra.mxu0 %v3525
  %v3724 = vpop.f32.mrf.mxu0
  %v3725 = vadd.f32 0.0, %v3724
  %v3726 = vpop.f32.mrf.mxu0
  %v3727 = vadd.f32 0.0, %v3726
  %v3728 = vpop.f32.mrf.mxu0
  %v3729 = vpop.f32.mrf.mxu0
  %3730 = vdwg.mxu0
  %3731 = vmatprep.subr.bf16.mxu0 %v2847
  %3732 = vmatpush1.bf16.msra.mxu0 %v2846
  %3733 = vmatprep.subr.bf16.mxu0 %v2815
  %3734 = vmatpush1.bf16.msra.mxu0 %v2814
  %3735 = vmatprep.subr.bf16.mxu0 %v2783
  %3736 = vmatpush1.bf16.msra.mxu0 %v2782
  %3737 = vmatprep.subr.bf16.mxu0 %v2751
  %3738 = vmatpush1.bf16.msra.mxu0 %v2750
  %3739 = vmatprep.subr.bf16.mxu0 %v2719
  %3740 = vmatpush1.bf16.msra.mxu0 %v2718
  %3741 = vmatprep.subr.bf16.mxu0 %v2687
  %3742 = vmatpush1.bf16.msra.mxu0 %v2686
  %3743 = vmatprep.subr.bf16.mxu0 %v2655
  %3744 = vmatpush1.bf16.msra.mxu0 %v2654
  %3745 = vmatprep.subr.bf16.mxu0 %v2623
  %3746 = vmatpush1.bf16.msra.mxu0 %v2622
  %3747 = vmatprep.subr.bf16.mxu0 0
  %3748 = vmatpush2.bf16.msra.mxu0 0
  %3749 = vmatprep.subr.bf16.mxu0 0
  %3750 = vmatpush2.bf16.msra.mxu0 0
  %3751 = vmatprep.subr.bf16.mxu0 0
  %3752 = vmatpush2.bf16.msra.mxu0 0
  %3753 = vmatprep.subr.bf16.mxu0 0
  %3754 = vmatpush2.bf16.msra.mxu0 0
  %3755 = vmatprep.subr.bf16.mxu0 0
  %3756 = vmatpush2.bf16.msra.mxu0 0
  %3757 = vmatprep.subr.bf16.mxu0 0
  %3758 = vmatpush2.bf16.msra.mxu0 0
  %3759 = vmatprep.subr.bf16.mxu0 0
  %3760 = vmatpush2.bf16.msra.mxu0 0
  %3761 = vmatprep.subr.bf16.mxu0 0
  %3762 = vmatpush2.bf16.msra.mxu0 0
  %3763 = vmatprep.mubr.bf16.mxu0 0
  %3764 = vmatmul.mubr.bf16.gmra.mxu0 %v3525
  %v3765 = vpop.f32.mrf.mxu0
  %v3766 = vadd.f32 0.0, %v3765
  %v3767 = vpop.f32.mrf.mxu0
  %v3768 = vadd.f32 0.0, %v3767
  %v3769 = vpop.f32.mrf.mxu0
  %v3770 = vpop.f32.mrf.mxu0
  %3771 = vdwg.mxu0
  %3772 = vmatprep.subr.bf16.mxu0 %v2849
  %3773 = vmatpush1.bf16.msra.mxu0 %v2848
  %3774 = vmatprep.subr.bf16.mxu0 %v2817
  %3775 = vmatpush1.bf16.msra.mxu0 %v2816
  %3776 = vmatprep.subr.bf16.mxu0 %v2785
  %3777 = vmatpush1.bf16.msra.mxu0 %v2784
  %3778 = vmatprep.subr.bf16.mxu0 %v2753
  %3779 = vmatpush1.bf16.msra.mxu0 %v2752
  %3780 = vmatprep.subr.bf16.mxu0 %v2721
  %3781 = vmatpush1.bf16.msra.mxu0 %v2720
  %3782 = vmatprep.subr.bf16.mxu0 %v2689
  %3783 = vmatpush1.bf16.msra.mxu0 %v2688
  %3784 = vmatprep.subr.bf16.mxu0 %v2657
  %3785 = vmatpush1.bf16.msra.mxu0 %v2656
  %3786 = vmatprep.subr.bf16.mxu0 %v2625
  %3787 = vmatpush1.bf16.msra.mxu0 %v2624
  %3788 = vmatprep.subr.bf16.mxu0 0
  %3789 = vmatpush2.bf16.msra.mxu0 0
  %3790 = vmatprep.subr.bf16.mxu0 0
  %3791 = vmatpush2.bf16.msra.mxu0 0
  %3792 = vmatprep.subr.bf16.mxu0 0
  %3793 = vmatpush2.bf16.msra.mxu0 0
  %3794 = vmatprep.subr.bf16.mxu0 0
  %3795 = vmatpush2.bf16.msra.mxu0 0
  %3796 = vmatprep.subr.bf16.mxu0 0
  %3797 = vmatpush2.bf16.msra.mxu0 0
  %3798 = vmatprep.subr.bf16.mxu0 0
  %3799 = vmatpush2.bf16.msra.mxu0 0
  %3800 = vmatprep.subr.bf16.mxu0 0
  %3801 = vmatpush2.bf16.msra.mxu0 0
  %3802 = vmatprep.subr.bf16.mxu0 0
  %3803 = vmatpush2.bf16.msra.mxu0 0
  %3804 = vmatprep.mubr.bf16.mxu0 0
  %3805 = vmatmul.mubr.bf16.gmra.mxu0 %v3525
  %v3806 = vpop.f32.mrf.mxu0
  %v3807 = vadd.f32 0.0, %v3806
  %v3808 = vpop.f32.mrf.mxu0
  %v3809 = vadd.f32 0.0, %v3808
  %v3810 = vpop.f32.mrf.mxu0
  %v3811 = vpop.f32.mrf.mxu0
  %3812 = vdwg.mxu0
  %3813 = vmatprep.subr.bf16.mxu0 %v2851
  %3814 = vmatpush1.bf16.msra.mxu0 %v2850
  %3815 = vmatprep.subr.bf16.mxu0 %v2819
  %3816 = vmatpush1.bf16.msra.mxu0 %v2818
  %3817 = vmatprep.subr.bf16.mxu0 %v2787
  %3818 = vmatpush1.bf16.msra.mxu0 %v2786
  %3819 = vmatprep.subr.bf16.mxu0 %v2755
  %3820 = vmatpush1.bf16.msra.mxu0 %v2754
  %3821 = vmatprep.subr.bf16.mxu0 %v2723
  %3822 = vmatpush1.bf16.msra.mxu0 %v2722
  %3823 = vmatprep.subr.bf16.mxu0 %v2691
  %3824 = vmatpush1.bf16.msra.mxu0 %v2690
  %3825 = vmatprep.subr.bf16.mxu0 %v2659
  %3826 = vmatpush1.bf16.msra.mxu0 %v2658
  %3827 = vmatprep.subr.bf16.mxu0 %v2627
  %3828 = vmatpush1.bf16.msra.mxu0 %v2626
  %3829 = vmatprep.subr.bf16.mxu0 0
  %3830 = vmatpush2.bf16.msra.mxu0 0
  %3831 = vmatprep.subr.bf16.mxu0 0
  %3832 = vmatpush2.bf16.msra.mxu0 0
  %3833 = vmatprep.subr.bf16.mxu0 0
  %3834 = vmatpush2.bf16.msra.mxu0 0
  %3835 = vmatprep.subr.bf16.mxu0 0
  %3836 = vmatpush2.bf16.msra.mxu0 0
  %3837 = vmatprep.subr.bf16.mxu0 0
  %3838 = vmatpush2.bf16.msra.mxu0 0
  %3839 = vmatprep.subr.bf16.mxu0 0
  %3840 = vmatpush2.bf16.msra.mxu0 0
  %3841 = vmatprep.subr.bf16.mxu0 0
  %3842 = vmatpush2.bf16.msra.mxu0 0
  %3843 = vmatprep.subr.bf16.mxu0 0
  %3844 = vmatpush2.bf16.msra.mxu0 0
  %3845 = vmatprep.mubr.bf16.mxu0 0
  %3846 = vmatmul.mubr.bf16.gmra.mxu0 %v3525
  %v3847 = vpop.f32.mrf.mxu0
  %v3848 = vadd.f32 0.0, %v3847
  %v3849 = vpop.f32.mrf.mxu0
  %v3850 = vadd.f32 0.0, %v3849
  %v3851 = vpop.f32.mrf.mxu0
  %v3852 = vpop.f32.mrf.mxu0
  %3853 = vdwg.mxu0
  %3854 = vmatprep.subr.bf16.mxu0 %v2853
  %3855 = vmatpush1.bf16.msra.mxu0 %v2852
  %3856 = vmatprep.subr.bf16.mxu0 %v2821
  %3857 = vmatpush1.bf16.msra.mxu0 %v2820
  %3858 = vmatprep.subr.bf16.mxu0 %v2789
  %3859 = vmatpush1.bf16.msra.mxu0 %v2788
  %3860 = vmatprep.subr.bf16.mxu0 %v2757
  %3861 = vmatpush1.bf16.msra.mxu0 %v2756
  %3862 = vmatprep.subr.bf16.mxu0 %v2725
  %3863 = vmatpush1.bf16.msra.mxu0 %v2724
  %3864 = vmatprep.subr.bf16.mxu0 %v2693
  %3865 = vmatpush1.bf16.msra.mxu0 %v2692
  %3866 = vmatprep.subr.bf16.mxu0 %v2661
  %3867 = vmatpush1.bf16.msra.mxu0 %v2660
  %3868 = vmatprep.subr.bf16.mxu0 %v2629
  %3869 = vmatpush1.bf16.msra.mxu0 %v2628
  %3870 = vmatprep.subr.bf16.mxu0 0
  %3871 = vmatpush2.bf16.msra.mxu0 0
  %3872 = vmatprep.subr.bf16.mxu0 0
  %3873 = vmatpush2.bf16.msra.mxu0 0
  %3874 = vmatprep.subr.bf16.mxu0 0
  %3875 = vmatpush2.bf16.msra.mxu0 0
  %3876 = vmatprep.subr.bf16.mxu0 0
  %3877 = vmatpush2.bf16.msra.mxu0 0
  %3878 = vmatprep.subr.bf16.mxu0 0
  %3879 = vmatpush2.bf16.msra.mxu0 0
  %3880 = vmatprep.subr.bf16.mxu0 0
  %3881 = vmatpush2.bf16.msra.mxu0 0
  %3882 = vmatprep.subr.bf16.mxu0 0
  %3883 = vmatpush2.bf16.msra.mxu0 0
  %3884 = vmatprep.subr.bf16.mxu0 0
  %3885 = vmatpush2.bf16.msra.mxu0 0
  %3886 = vmatprep.mubr.bf16.mxu0 0
  %3887 = vmatmul.mubr.bf16.gmra.mxu0 %v3525
  %v3888 = vpop.f32.mrf.mxu0
  %v3889 = vadd.f32 0.0, %v3888
  %v3890 = vpop.f32.mrf.mxu0
  %v3891 = vadd.f32 0.0, %v3890
  %v3892 = vpop.f32.mrf.mxu0
  %v3893 = vpop.f32.mrf.mxu0
  %3894 = vdwg.mxu0
  %3895 = vmatprep.subr.bf16.mxu0 %v2855
  %3896 = vmatpush1.bf16.msra.mxu0 %v2854
  %3897 = vmatprep.subr.bf16.mxu0 %v2823
  %3898 = vmatpush1.bf16.msra.mxu0 %v2822
  %3899 = vmatprep.subr.bf16.mxu0 %v2791
  %3900 = vmatpush1.bf16.msra.mxu0 %v2790
  %3901 = vmatprep.subr.bf16.mxu0 %v2759
  %3902 = vmatpush1.bf16.msra.mxu0 %v2758
  %3903 = vmatprep.subr.bf16.mxu0 %v2727
  %3904 = vmatpush1.bf16.msra.mxu0 %v2726
  %3905 = vmatprep.subr.bf16.mxu0 %v2695
  %3906 = vmatpush1.bf16.msra.mxu0 %v2694
  %3907 = vmatprep.subr.bf16.mxu0 %v2663
  %3908 = vmatpush1.bf16.msra.mxu0 %v2662
  %3909 = vmatprep.subr.bf16.mxu0 %v2631
  %3910 = vmatpush1.bf16.msra.mxu0 %v2630
  %3911 = vmatprep.subr.bf16.mxu0 0
  %3912 = vmatpush2.bf16.msra.mxu0 0
  %3913 = vmatprep.subr.bf16.mxu0 0
  %3914 = vmatpush2.bf16.msra.mxu0 0
  %3915 = vmatprep.subr.bf16.mxu0 0
  %3916 = vmatpush2.bf16.msra.mxu0 0
  %3917 = vmatprep.subr.bf16.mxu0 0
  %3918 = vmatpush2.bf16.msra.mxu0 0
  %3919 = vmatprep.subr.bf16.mxu0 0
  %3920 = vmatpush2.bf16.msra.mxu0 0
  %3921 = vmatprep.subr.bf16.mxu0 0
  %3922 = vmatpush2.bf16.msra.mxu0 0
  %3923 = vmatprep.subr.bf16.mxu0 0
  %3924 = vmatpush2.bf16.msra.mxu0 0
  %3925 = vmatprep.subr.bf16.mxu0 0
  %3926 = vmatpush2.bf16.msra.mxu0 0
  %3927 = vmatprep.mubr.bf16.mxu0 0
  %3928 = vmatmul.mubr.bf16.gmra.mxu0 %v3525
  %v3929 = vpop.f32.mrf.mxu0
  %v3930 = vadd.f32 0.0, %v3929
  %v3931 = vpop.f32.mrf.mxu0
  %v3932 = vadd.f32 0.0, %v3931
  %v3933 = vpop.f32.mrf.mxu0
  %v3934 = vpop.f32.mrf.mxu0
  %3935 = vdwg.mxu0
  %3936 = vmatprep.subr.bf16.mxu0 %v2857
  %3937 = vmatpush1.bf16.msra.mxu0 %v2856
  %3938 = vmatprep.subr.bf16.mxu0 %v2825
  %3939 = vmatpush1.bf16.msra.mxu0 %v2824
  %3940 = vmatprep.subr.bf16.mxu0 %v2793
  %3941 = vmatpush1.bf16.msra.mxu0 %v2792
  %3942 = vmatprep.subr.bf16.mxu0 %v2761
  %3943 = vmatpush1.bf16.msra.mxu0 %v2760
  %3944 = vmatprep.subr.bf16.mxu0 %v2729
  %3945 = vmatpush1.bf16.msra.mxu0 %v2728
  %3946 = vmatprep.subr.bf16.mxu0 %v2697
  %3947 = vmatpush1.bf16.msra.mxu0 %v2696
  %3948 = vmatprep.subr.bf16.mxu0 %v2665
  %3949 = vmatpush1.bf16.msra.mxu0 %v2664
  %3950 = vmatprep.subr.bf16.mxu0 %v2633
  %3951 = vmatpush1.bf16.msra.mxu0 %v2632
  %3952 = vmatprep.subr.bf16.mxu0 0
  %3953 = vmatpush2.bf16.msra.mxu0 0
  %3954 = vmatprep.subr.bf16.mxu0 0
  %3955 = vmatpush2.bf16.msra.mxu0 0
  %3956 = vmatprep.subr.bf16.mxu0 0
  %3957 = vmatpush2.bf16.msra.mxu0 0
  %3958 = vmatprep.subr.bf16.mxu0 0
  %3959 = vmatpush2.bf16.msra.mxu0 0
  %3960 = vmatprep.subr.bf16.mxu0 0
  %3961 = vmatpush2.bf16.msra.mxu0 0
  %3962 = vmatprep.subr.bf16.mxu0 0
  %3963 = vmatpush2.bf16.msra.mxu0 0
  %3964 = vmatprep.subr.bf16.mxu0 0
  %3965 = vmatpush2.bf16.msra.mxu0 0
  %3966 = vmatprep.subr.bf16.mxu0 0
  %3967 = vmatpush2.bf16.msra.mxu0 0
  %3968 = vmatprep.mubr.bf16.mxu0 0
  %3969 = vmatmul.mubr.bf16.gmra.mxu0 %v3525
  %v3970 = vpop.f32.mrf.mxu0
  %v3971 = vadd.f32 0.0, %v3970
  %v3972 = vpop.f32.mrf.mxu0
  %v3973 = vadd.f32 0.0, %v3972
  %v3974 = vpop.f32.mrf.mxu0
  %v3975 = vpop.f32.mrf.mxu0
  %3976 = vdwg.mxu0
  %3977 = vmatprep.subr.bf16.mxu0 %v2859
  %3978 = vmatpush1.bf16.msra.mxu0 %v2858
  %3979 = vmatprep.subr.bf16.mxu0 %v2827
  %3980 = vmatpush1.bf16.msra.mxu0 %v2826
  %3981 = vmatprep.subr.bf16.mxu0 %v2795
  %3982 = vmatpush1.bf16.msra.mxu0 %v2794
  %3983 = vmatprep.subr.bf16.mxu0 %v2763
  %3984 = vmatpush1.bf16.msra.mxu0 %v2762
  %3985 = vmatprep.subr.bf16.mxu0 %v2731
  %3986 = vmatpush1.bf16.msra.mxu0 %v2730
  %3987 = vmatprep.subr.bf16.mxu0 %v2699
  %3988 = vmatpush1.bf16.msra.mxu0 %v2698
  %3989 = vmatprep.subr.bf16.mxu0 %v2667
  %3990 = vmatpush1.bf16.msra.mxu0 %v2666
  %3991 = vmatprep.subr.bf16.mxu0 %v2635
  %3992 = vmatpush1.bf16.msra.mxu0 %v2634
  %3993 = vmatprep.subr.bf16.mxu0 0
  %3994 = vmatpush2.bf16.msra.mxu0 0
  %3995 = vmatprep.subr.bf16.mxu0 0
  %3996 = vmatpush2.bf16.msra.mxu0 0
  %3997 = vmatprep.subr.bf16.mxu0 0
  %3998 = vmatpush2.bf16.msra.mxu0 0
  %3999 = vmatprep.subr.bf16.mxu0 0
  %4000 = vmatpush2.bf16.msra.mxu0 0
  %4001 = vmatprep.subr.bf16.mxu0 0
  %4002 = vmatpush2.bf16.msra.mxu0 0
  %4003 = vmatprep.subr.bf16.mxu0 0
  %4004 = vmatpush2.bf16.msra.mxu0 0
  %4005 = vmatprep.subr.bf16.mxu0 0
  %4006 = vmatpush2.bf16.msra.mxu0 0
  %4007 = vmatprep.subr.bf16.mxu0 0
  %4008 = vmatpush2.bf16.msra.mxu0 0
  %4009 = vmatprep.mubr.bf16.mxu0 0
  %4010 = vmatmul.mubr.bf16.gmra.mxu0 %v3525
  %v4011 = vpop.f32.mrf.mxu0
  %v4012 = vadd.f32 0.0, %v4011
  %v4013 = vpop.f32.mrf.mxu0
  %v4014 = vadd.f32 0.0, %v4013
  %v4015 = vpop.f32.mrf.mxu0
  %v4016 = vpop.f32.mrf.mxu0
  %4017 = vdwg.mxu0
  %4018 = vmatprep.subr.bf16.mxu0 %v2861
  %4019 = vmatpush1.bf16.msra.mxu0 %v2860
  %4020 = vmatprep.subr.bf16.mxu0 %v2829
  %4021 = vmatpush1.bf16.msra.mxu0 %v2828
  %4022 = vmatprep.subr.bf16.mxu0 %v2797
  %4023 = vmatpush1.bf16.msra.mxu0 %v2796
  %4024 = vmatprep.subr.bf16.mxu0 %v2765
  %4025 = vmatpush1.bf16.msra.mxu0 %v2764
  %4026 = vmatprep.subr.bf16.mxu0 %v2733
  %4027 = vmatpush1.bf16.msra.mxu0 %v2732
  %4028 = vmatprep.subr.bf16.mxu0 %v2701
  %4029 = vmatpush1.bf16.msra.mxu0 %v2700
  %4030 = vmatprep.subr.bf16.mxu0 %v2669
  %4031 = vmatpush1.bf16.msra.mxu0 %v2668
  %4032 = vmatprep.subr.bf16.mxu0 %v2637
  %4033 = vmatpush1.bf16.msra.mxu0 %v2636
  %4034 = vmatprep.subr.bf16.mxu0 0
  %4035 = vmatpush2.bf16.msra.mxu0 0
  %4036 = vmatprep.subr.bf16.mxu0 0
  %4037 = vmatpush2.bf16.msra.mxu0 0
  %4038 = vmatprep.subr.bf16.mxu0 0
  %4039 = vmatpush2.bf16.msra.mxu0 0
  %4040 = vmatprep.subr.bf16.mxu0 0
  %4041 = vmatpush2.bf16.msra.mxu0 0
  %4042 = vmatprep.subr.bf16.mxu0 0
  %4043 = vmatpush2.bf16.msra.mxu0 0
  %4044 = vmatprep.subr.bf16.mxu0 0
  %4045 = vmatpush2.bf16.msra.mxu0 0
  %4046 = vmatprep.subr.bf16.mxu0 0
  %4047 = vmatpush2.bf16.msra.mxu0 0
  %4048 = vmatprep.subr.bf16.mxu0 0
  %4049 = vmatpush2.bf16.msra.mxu0 0
  %4050 = vmatprep.mubr.bf16.mxu0 0
  %4051 = vmatmul.mubr.bf16.gmra.mxu0 %v3525
  %v4052 = vpop.f32.mrf.mxu0
  %v4053 = vadd.f32 0.0, %v4052
  %v4054 = vpop.f32.mrf.mxu0
  %v4055 = vadd.f32 0.0, %v4054
  %v4056 = vpop.f32.mrf.mxu0
  %v4057 = vpop.f32.mrf.mxu0
  %4058 = vdwg.mxu0
  %4059 = vmatprep.subr.bf16.mxu0 %v2863
  %4060 = vmatpush1.bf16.msra.mxu0 %v2862
  %4061 = vmatprep.subr.bf16.mxu0 %v2831
  %4062 = vmatpush1.bf16.msra.mxu0 %v2830
  %4063 = vmatprep.subr.bf16.mxu0 %v2799
  %4064 = vmatpush1.bf16.msra.mxu0 %v2798
  %4065 = vmatprep.subr.bf16.mxu0 %v2767
  %4066 = vmatpush1.bf16.msra.mxu0 %v2766
  %4067 = vmatprep.subr.bf16.mxu0 %v2735
  %4068 = vmatpush1.bf16.msra.mxu0 %v2734
  %4069 = vmatprep.subr.bf16.mxu0 %v2703
  %4070 = vmatpush1.bf16.msra.mxu0 %v2702
  %4071 = vmatprep.subr.bf16.mxu0 %v2671
  %4072 = vmatpush1.bf16.msra.mxu0 %v2670
  %4073 = vmatprep.subr.bf16.mxu0 %v2639
  %4074 = vmatpush1.bf16.msra.mxu0 %v2638
  %4075 = vmatprep.subr.bf16.mxu0 0
  %4076 = vmatpush2.bf16.msra.mxu0 0
  %4077 = vmatprep.subr.bf16.mxu0 0
  %4078 = vmatpush2.bf16.msra.mxu0 0
  %4079 = vmatprep.subr.bf16.mxu0 0
  %4080 = vmatpush2.bf16.msra.mxu0 0
  %4081 = vmatprep.subr.bf16.mxu0 0
  %4082 = vmatpush2.bf16.msra.mxu0 0
  %4083 = vmatprep.subr.bf16.mxu0 0
  %4084 = vmatpush2.bf16.msra.mxu0 0
  %4085 = vmatprep.subr.bf16.mxu0 0
  %4086 = vmatpush2.bf16.msra.mxu0 0
  %4087 = vmatprep.subr.bf16.mxu0 0
  %4088 = vmatpush2.bf16.msra.mxu0 0
  %4089 = vmatprep.subr.bf16.mxu0 0
  %4090 = vmatpush2.bf16.msra.mxu0 0
  %4091 = vmatprep.mubr.bf16.mxu0 0
  %4092 = vmatmul.mubr.bf16.gmra.mxu0 %v3525
  %v4093 = vpop.f32.mrf.mxu0
  %v4094 = vadd.f32 0.0, %v4093
  %v4095 = vpop.f32.mrf.mxu0
  %v4096 = vadd.f32 0.0, %v4095
  %v4097 = vpop.f32.mrf.mxu0
  %v4098 = vpop.f32.mrf.mxu0
  %4099 = vdwg.mxu0
  %4100 = vmatprep.subr.bf16.mxu0 %v2865
  %4101 = vmatpush1.bf16.msra.mxu0 %v2864
  %4102 = vmatprep.subr.bf16.mxu0 %v2833
  %4103 = vmatpush1.bf16.msra.mxu0 %v2832
  %4104 = vmatprep.subr.bf16.mxu0 %v2801
  %4105 = vmatpush1.bf16.msra.mxu0 %v2800
  %4106 = vmatprep.subr.bf16.mxu0 %v2769
  %4107 = vmatpush1.bf16.msra.mxu0 %v2768
  %4108 = vmatprep.subr.bf16.mxu0 %v2737
  %4109 = vmatpush1.bf16.msra.mxu0 %v2736
  %4110 = vmatprep.subr.bf16.mxu0 %v2705
  %4111 = vmatpush1.bf16.msra.mxu0 %v2704
  %4112 = vmatprep.subr.bf16.mxu0 %v2673
  %4113 = vmatpush1.bf16.msra.mxu0 %v2672
  %4114 = vmatprep.subr.bf16.mxu0 %v2641
  %4115 = vmatpush1.bf16.msra.mxu0 %v2640
  %4116 = vmatprep.subr.bf16.mxu0 0
  %4117 = vmatpush2.bf16.msra.mxu0 0
  %4118 = vmatprep.subr.bf16.mxu0 0
  %4119 = vmatpush2.bf16.msra.mxu0 0
  %4120 = vmatprep.subr.bf16.mxu0 0
  %4121 = vmatpush2.bf16.msra.mxu0 0
  %4122 = vmatprep.subr.bf16.mxu0 0
  %4123 = vmatpush2.bf16.msra.mxu0 0
  %4124 = vmatprep.subr.bf16.mxu0 0
  %4125 = vmatpush2.bf16.msra.mxu0 0
  %4126 = vmatprep.subr.bf16.mxu0 0
  %4127 = vmatpush2.bf16.msra.mxu0 0
  %4128 = vmatprep.subr.bf16.mxu0 0
  %4129 = vmatpush2.bf16.msra.mxu0 0
  %4130 = vmatprep.subr.bf16.mxu0 0
  %4131 = vmatpush2.bf16.msra.mxu0 0
  %4132 = vmatprep.mubr.bf16.mxu0 0
  %4133 = vmatmul.mubr.bf16.gmra.mxu0 %v3525
  %v4134 = vpop.f32.mrf.mxu0
  %v4135 = vadd.f32 0.0, %v4134
  %v4136 = vpop.f32.mrf.mxu0
  %v4137 = vadd.f32 0.0, %v4136
  %v4138 = vpop.f32.mrf.mxu0
  %v4139 = vpop.f32.mrf.mxu0
  %4140 = vdwg.mxu0
  %4141 = vmatprep.subr.bf16.mxu0 %v2867
  %4142 = vmatpush1.bf16.msra.mxu0 %v2866
  %4143 = vmatprep.subr.bf16.mxu0 %v2835
  %4144 = vmatpush1.bf16.msra.mxu0 %v2834
  %4145 = vmatprep.subr.bf16.mxu0 %v2803
  %4146 = vmatpush1.bf16.msra.mxu0 %v2802
  %4147 = vmatprep.subr.bf16.mxu0 %v2771
  %4148 = vmatpush1.bf16.msra.mxu0 %v2770
  %4149 = vmatprep.subr.bf16.mxu0 %v2739
  %4150 = vmatpush1.bf16.msra.mxu0 %v2738
  %4151 = vmatprep.subr.bf16.mxu0 %v2707
  %4152 = vmatpush1.bf16.msra.mxu0 %v2706
  %4153 = vmatprep.subr.bf16.mxu0 %v2675
  %4154 = vmatpush1.bf16.msra.mxu0 %v2674
  %4155 = vmatprep.subr.bf16.mxu0 %v2643
  %4156 = vmatpush1.bf16.msra.mxu0 %v2642
  %4157 = vmatprep.subr.bf16.mxu0 0
  %4158 = vmatpush2.bf16.msra.mxu0 0
  %4159 = vmatprep.subr.bf16.mxu0 0
  %4160 = vmatpush2.bf16.msra.mxu0 0
  %4161 = vmatprep.subr.bf16.mxu0 0
  %4162 = vmatpush2.bf16.msra.mxu0 0
  %4163 = vmatprep.subr.bf16.mxu0 0
  %4164 = vmatpush2.bf16.msra.mxu0 0
  %4165 = vmatprep.subr.bf16.mxu0 0
  %4166 = vmatpush2.bf16.msra.mxu0 0
  %4167 = vmatprep.subr.bf16.mxu0 0
  %4168 = vmatpush2.bf16.msra.mxu0 0
  %4169 = vmatprep.subr.bf16.mxu0 0
  %4170 = vmatpush2.bf16.msra.mxu0 0
  %4171 = vmatprep.subr.bf16.mxu0 0
  %4172 = vmatpush2.bf16.msra.mxu0 0
  %4173 = vmatprep.mubr.bf16.mxu0 0
  %4174 = vmatmul.mubr.bf16.gmra.mxu0 %v3525
  %v4175 = vpop.f32.mrf.mxu0
  %v4176 = vadd.f32 0.0, %v4175
  %v4177 = vpop.f32.mrf.mxu0
  %v4178 = vadd.f32 0.0, %v4177
  %v4179 = vpop.f32.mrf.mxu0
  %v4180 = vpop.f32.mrf.mxu0
  %4181 = vdwg.mxu0
  %v4182 = vsub.f32 %v2904, %v3561
  %v4183 = vsub.f32 %v2906, %v3563
  %v4184 = vsub.f32 %v2945, %v3602
  %v4185 = vsub.f32 %v2947, %v3604
  %v4186 = vsub.f32 %v2986, %v3643
  %v4187 = vsub.f32 %v2988, %v3645
  %v4188 = vsub.f32 %v3027, %v3684
  %v4189 = vsub.f32 %v3029, %v3686
  %v4190 = vsub.f32 %v3068, %v3725
  %v4191 = vsub.f32 %v3070, %v3727
  %v4192 = vsub.f32 %v3109, %v3766
  %v4193 = vsub.f32 %v3111, %v3768
  %v4194 = vsub.f32 %v3150, %v3807
  %v4195 = vsub.f32 %v3152, %v3809
  %v4196 = vsub.f32 %v3191, %v3848
  %v4197 = vsub.f32 %v3193, %v3850
  %v4198 = vsub.f32 %v3232, %v3889
  %v4199 = vsub.f32 %v3234, %v3891
  %v4200 = vsub.f32 %v3273, %v3930
  %v4201 = vsub.f32 %v3275, %v3932
  %v4202 = vsub.f32 %v3314, %v3971
  %v4203 = vsub.f32 %v3316, %v3973
  %v4204 = vsub.f32 %v3355, %v4012
  %v4205 = vsub.f32 %v3357, %v4014
  %v4206 = vsub.f32 %v3396, %v4053
  %v4207 = vsub.f32 %v3398, %v4055
  %v4208 = vsub.f32 %v3437, %v4094
  %v4209 = vsub.f32 %v3439, %v4096
  %v4210 = vsub.f32 %v3478, %v4135
  %v4211 = vsub.f32 %v3480, %v4137
  %v4212 = vsub.f32 %v3519, %v4176
  %v4213 = vsub.f32 %v3521, %v4178
  %v4214 = vld [vmem:[%s5] sm:$0xf]
  %v4215 = vld [vmem:[%s5 + $0x4] sm:$0xf]
  %v4216 = vld [vmem:[%s5 + $0x8] sm:$0xf]
  %v4217 = vld [vmem:[%s5 + $0xc] sm:$0xf]
  %v4218 = vld [vmem:[%s5 + $0x10] sm:$0x1]
  %v4219 = vpack.c.bf16 %v4182, %v4182
  %v4220 = vpack.c.bf16 %v4183, %v4183
  %v4221 = vpack.c.bf16 %v4184, %v4184
  %v4222 = vpack.c.bf16 %v4185, %v4185
  %v4223 = vpack.c.bf16 %v4186, %v4186
  %v4224 = vpack.c.bf16 %v4187, %v4187
  %v4225 = vpack.c.bf16 %v4188, %v4188
  %v4226 = vpack.c.bf16 %v4189, %v4189
  %v4227 = vpack.c.bf16 %v4190, %v4190
  %v4228 = vpack.c.bf16 %v4191, %v4191
  %v4229 = vpack.c.bf16 %v4192, %v4192
  %v4230 = vpack.c.bf16 %v4193, %v4193
  %v4231 = vpack.c.bf16 %v4194, %v4194
  %v4232 = vpack.c.bf16 %v4195, %v4195
  %v4233 = vpack.c.bf16 %v4196, %v4196
  %v4234 = vpack.c.bf16 %v4197, %v4197
  %v4235 = vpack.c.bf16 %v4198, %v4198
  %v4236 = vpack.c.bf16 %v4199, %v4199
  %v4237 = vpack.c.bf16 %v4200, %v4200
  %v4238 = vpack.c.bf16 %v4201, %v4201
  %v4239 = vpack.c.bf16 %v4202, %v4202
  %v4240 = vpack.c.bf16 %v4203, %v4203
  %v4241 = vpack.c.bf16 %v4204, %v4204
  %v4242 = vpack.c.bf16 %v4205, %v4205
  %v4243 = vpack.c.bf16 %v4206, %v4206
  %v4244 = vpack.c.bf16 %v4207, %v4207
  %v4245 = vpack.c.bf16 %v4208, %v4208
  %v4246 = vpack.c.bf16 %v4209, %v4209
  %v4247 = vpack.c.bf16 %v4210, %v4210
  %v4248 = vpack.c.bf16 %v4211, %v4211
  %v4249 = vpack.c.bf16 %v4212, %v4212
  %v4250 = vpack.c.bf16 %v4213, %v4213
  %v4256 = vunpack.c.l.b16 %v4214
  %v4257 = vunpack.c.l.b16 %v4215
  %v4258 = vunpack.c.l.b16 %v4216
  %v4259 = vunpack.c.l.b16 %v4217
  %v4260 = vunpack.c.l.b16 %v4218
  %v4261 = vpack.c.b16 %v4257, %v4256
  %v4262 = vpack.c.b16 %v4259, %v4258
  %v4263 = vpack.c.b16 %v4260, %v4260
  %vm4264 = vcmask 64512
  %v4266 = vsel %vm4264, %v4261, 0
  %v4269 = vsel %vm4264, %v4262, 0
  %v4272 = vsel %vm4264, %v4263, 0
  %vm4274 = vcmask 1043456
  %v4276 = vsel %vm4274, %v4219, 0
  %v4279 = vsel %vm4274, %v4220, 0
  %v4282 = vsel %vm4274, %v4221, 0
  %v4285 = vsel %vm4274, %v4222, 0
  %v4288 = vsel %vm4274, %v4223, 0
  %v4291 = vsel %vm4274, %v4224, 0
  %v4294 = vsel %vm4274, %v4225, 0
  %v4297 = vsel %vm4274, %v4226, 0
  %v4300 = vsel %vm4274, %v4227, 0
  %v4303 = vsel %vm4274, %v4228, 0
  %v4306 = vsel %vm4274, %v4229, 0
  %v4309 = vsel %vm4274, %v4230, 0
  %v4312 = vsel %vm4274, %v4231, 0
  %v4315 = vsel %vm4274, %v4232, 0
  %v4318 = vsel %vm4274, %v4233, 0
  %v4321 = vsel %vm4274, %v4234, 0
  %v4324 = vsel %vm4274, %v4235, 0
  %v4327 = vsel %vm4274, %v4236, 0
  %v4330 = vsel %vm4274, %v4237, 0
  %v4333 = vsel %vm4274, %v4238, 0
  %v4336 = vsel %vm4274, %v4239, 0
  %v4339 = vsel %vm4274, %v4240, 0
  %v4342 = vsel %vm4274, %v4241, 0
  %v4345 = vsel %vm4274, %v4242, 0
  %v4348 = vsel %vm4274, %v4243, 0
  %v4351 = vsel %vm4274, %v4244, 0
  %v4354 = vsel %vm4274, %v4245, 0
  %v4357 = vsel %vm4274, %v4246, 0
  %v4360 = vsel %vm4274, %v4247, 0
  %v4363 = vsel %vm4274, %v4248, 0
  %v4366 = vsel %vm4274, %v4249, 0
  %v4369 = vsel %vm4274, %v4250, 0
  %4371 = vmatprep.subr.bf16.mxu0 0
  %4372 = vmatpush1.bf16.msra.mxu0 0
  %4373 = vmatprep.subr.bf16.mxu0 0
  %4374 = vmatpush1.bf16.msra.mxu0 0
  %4375 = vmatprep.subr.bf16.mxu0 0
  %4376 = vmatpush1.bf16.msra.mxu0 0
  %4377 = vmatprep.subr.bf16.mxu0 0
  %4378 = vmatpush1.bf16.msra.mxu0 0
  %4379 = vmatprep.subr.bf16.mxu0 0
  %4380 = vmatpush1.bf16.msra.mxu0 0
  %4381 = vmatprep.subr.bf16.mxu0 0
  %4382 = vmatpush1.bf16.msra.mxu0 0
  %4383 = vmatprep.subr.bf16.mxu0 0
  %4384 = vmatpush1.bf16.msra.mxu0 0
  %4385 = vmatprep.subr.bf16.mxu0 %v4279
  %4386 = vmatpush1.bf16.msra.mxu0 %v4276
  %4387 = vmatprep.subr.bf16.mxu0 0
  %4388 = vmatpush2.bf16.msra.mxu0 0
  %4389 = vmatprep.subr.bf16.mxu0 0
  %4390 = vmatpush2.bf16.msra.mxu0 0
  %4391 = vmatprep.subr.bf16.mxu0 0
  %4392 = vmatpush2.bf16.msra.mxu0 0
  %4393 = vmatprep.subr.bf16.mxu0 0
  %4394 = vmatpush2.bf16.msra.mxu0 0
  %4395 = vmatprep.subr.bf16.mxu0 0
  %4396 = vmatpush2.bf16.msra.mxu0 0
  %4397 = vmatprep.subr.bf16.mxu0 0
  %4398 = vmatpush2.bf16.msra.mxu0 0
  %4399 = vmatprep.subr.bf16.mxu0 0
  %4400 = vmatpush2.bf16.msra.mxu0 0
  %4401 = vmatprep.subr.bf16.mxu0 0
  %4402 = vmatpush2.bf16.msra.mxu0 0
  %4403 = vmatprep.mubr.bf16.mxu0 0
  %4404 = vmatmul.mubr.bf16.gmra.mxu0 %v4266
  %v4405 = vpop.f32.mrf.mxu0
  %v4406 = vadd.f32 0.0, %v4405
  %v4407 = vpop.f32.mrf.mxu0
  %v4408 = vadd.f32 0.0, %v4407
  %v4409 = vpop.f32.mrf.mxu0
  %v4410 = vadd.f32 0.0, %v4409
  %v4411 = vpop.f32.mrf.mxu0
  %v4412 = vadd.f32 0.0, %v4411
  %4413 = vmatprep.mubr.bf16.mxu0 0
  %4414 = vmatmul.mubr.bf16.gmra.mxu0 %v4269
  %v4415 = vpop.f32.mrf.mxu0
  %v4416 = vadd.f32 0.0, %v4415
  %v4417 = vpop.f32.mrf.mxu0
  %v4418 = vadd.f32 0.0, %v4417
  %v4419 = vpop.f32.mrf.mxu0
  %v4420 = vadd.f32 0.0, %v4419
  %v4421 = vpop.f32.mrf.mxu0
  %v4422 = vadd.f32 0.0, %v4421
  %4423 = vmatprep.mubr.bf16.mxu0 0
  %4424 = vmatmul.mubr.bf16.gmra.mxu0 %v4272
  %v4425 = vpop.f32.mrf.mxu0
  %v4426 = vadd.f32 0.0, %v4425
  %v4427 = vpop.f32.mrf.mxu0
  %v4428 = vadd.f32 0.0, %v4427
  %v4429 = vpop.f32.mrf.mxu0
  %v4430 = vpop.f32.mrf.mxu0
  %4431 = vdwg.mxu0
  %4432 = vmatprep.subr.bf16.mxu0 0
  %4433 = vmatpush1.bf16.msra.mxu0 0
  %4434 = vmatprep.subr.bf16.mxu0 0
  %4435 = vmatpush1.bf16.msra.mxu0 0
  %4436 = vmatprep.subr.bf16.mxu0 0
  %4437 = vmatpush1.bf16.msra.mxu0 0
  %4438 = vmatprep.subr.bf16.mxu0 0
  %4439 = vmatpush1.bf16.msra.mxu0 0
  %4440 = vmatprep.subr.bf16.mxu0 0
  %4441 = vmatpush1.bf16.msra.mxu0 0
  %4442 = vmatprep.subr.bf16.mxu0 0
  %4443 = vmatpush1.bf16.msra.mxu0 0
  %4444 = vmatprep.subr.bf16.mxu0 0
  %4445 = vmatpush1.bf16.msra.mxu0 0
  %4446 = vmatprep.subr.bf16.mxu0 %v4285
  %4447 = vmatpush1.bf16.msra.mxu0 %v4282
  %4448 = vmatprep.subr.bf16.mxu0 0
  %4449 = vmatpush2.bf16.msra.mxu0 0
  %4450 = vmatprep.subr.bf16.mxu0 0
  %4451 = vmatpush2.bf16.msra.mxu0 0
  %4452 = vmatprep.subr.bf16.mxu0 0
  %4453 = vmatpush2.bf16.msra.mxu0 0
  %4454 = vmatprep.subr.bf16.mxu0 0
  %4455 = vmatpush2.bf16.msra.mxu0 0
  %4456 = vmatprep.subr.bf16.mxu0 0
  %4457 = vmatpush2.bf16.msra.mxu0 0
  %4458 = vmatprep.subr.bf16.mxu0 0
  %4459 = vmatpush2.bf16.msra.mxu0 0
  %4460 = vmatprep.subr.bf16.mxu0 0
  %4461 = vmatpush2.bf16.msra.mxu0 0
  %4462 = vmatprep.subr.bf16.mxu0 0
  %4463 = vmatpush2.bf16.msra.mxu0 0
  %4464 = vmatprep.mubr.bf16.mxu0 0
  %4465 = vmatmul.mubr.bf16.gmra.mxu0 %v4266
  %v4466 = vpop.f32.mrf.mxu0
  %v4467 = vadd.f32 0.0, %v4466
  %v4468 = vpop.f32.mrf.mxu0
  %v4469 = vadd.f32 0.0, %v4468
  %v4470 = vpop.f32.mrf.mxu0
  %v4471 = vadd.f32 0.0, %v4470
  %v4472 = vpop.f32.mrf.mxu0
  %v4473 = vadd.f32 0.0, %v4472
  %4474 = vmatprep.mubr.bf16.mxu0 0
  %4475 = vmatmul.mubr.bf16.gmra.mxu0 %v4269
  %v4476 = vpop.f32.mrf.mxu0
  %v4477 = vadd.f32 0.0, %v4476
  %v4478 = vpop.f32.mrf.mxu0
  %v4479 = vadd.f32 0.0, %v4478
  %v4480 = vpop.f32.mrf.mxu0
  %v4481 = vadd.f32 0.0, %v4480
  %v4482 = vpop.f32.mrf.mxu0
  %v4483 = vadd.f32 0.0, %v4482
  %4484 = vmatprep.mubr.bf16.mxu0 0
  %4485 = vmatmul.mubr.bf16.gmra.mxu0 %v4272
  %v4486 = vpop.f32.mrf.mxu0
  %v4487 = vadd.f32 0.0, %v4486
  %v4488 = vpop.f32.mrf.mxu0
  %v4489 = vadd.f32 0.0, %v4488
  %v4490 = vpop.f32.mrf.mxu0
  %v4491 = vpop.f32.mrf.mxu0
  %4492 = vdwg.mxu0
  %4493 = vmatprep.subr.bf16.mxu0 0
  %4494 = vmatpush1.bf16.msra.mxu0 0
  %4495 = vmatprep.subr.bf16.mxu0 0
  %4496 = vmatpush1.bf16.msra.mxu0 0
  %4497 = vmatprep.subr.bf16.mxu0 0
  %4498 = vmatpush1.bf16.msra.mxu0 0
  %4499 = vmatprep.subr.bf16.mxu0 0
  %4500 = vmatpush1.bf16.msra.mxu0 0
  %4501 = vmatprep.subr.bf16.mxu0 0
  %4502 = vmatpush1.bf16.msra.mxu0 0
  %4503 = vmatprep.subr.bf16.mxu0 0
  %4504 = vmatpush1.bf16.msra.mxu0 0
  %4505 = vmatprep.subr.bf16.mxu0 0
  %4506 = vmatpush1.bf16.msra.mxu0 0
  %4507 = vmatprep.subr.bf16.mxu0 %v4291
  %4508 = vmatpush1.bf16.msra.mxu0 %v4288
  %4509 = vmatprep.subr.bf16.mxu0 0
  %4510 = vmatpush2.bf16.msra.mxu0 0
  %4511 = vmatprep.subr.bf16.mxu0 0
  %4512 = vmatpush2.bf16.msra.mxu0 0
  %4513 = vmatprep.subr.bf16.mxu0 0
  %4514 = vmatpush2.bf16.msra.mxu0 0
  %4515 = vmatprep.subr.bf16.mxu0 0
  %4516 = vmatpush2.bf16.msra.mxu0 0
  %4517 = vmatprep.subr.bf16.mxu0 0
  %4518 = vmatpush2.bf16.msra.mxu0 0
  %4519 = vmatprep.subr.bf16.mxu0 0
  %4520 = vmatpush2.bf16.msra.mxu0 0
  %4521 = vmatprep.subr.bf16.mxu0 0
  %4522 = vmatpush2.bf16.msra.mxu0 0
  %4523 = vmatprep.subr.bf16.mxu0 0
  %4524 = vmatpush2.bf16.msra.mxu0 0
  %4525 = vmatprep.mubr.bf16.mxu0 0
  %4526 = vmatmul.mubr.bf16.gmra.mxu0 %v4266
  %v4527 = vpop.f32.mrf.mxu0
  %v4528 = vadd.f32 0.0, %v4527
  %v4529 = vpop.f32.mrf.mxu0
  %v4530 = vadd.f32 0.0, %v4529
  %v4531 = vpop.f32.mrf.mxu0
  %v4532 = vadd.f32 0.0, %v4531
  %v4533 = vpop.f32.mrf.mxu0
  %v4534 = vadd.f32 0.0, %v4533
  %4535 = vmatprep.mubr.bf16.mxu0 0
  %4536 = vmatmul.mubr.bf16.gmra.mxu0 %v4269
  %v4537 = vpop.f32.mrf.mxu0
  %v4538 = vadd.f32 0.0, %v4537
  %v4539 = vpop.f32.mrf.mxu0
  %v4540 = vadd.f32 0.0, %v4539
  %v4541 = vpop.f32.mrf.mxu0
  %v4542 = vadd.f32 0.0, %v4541
  %v4543 = vpop.f32.mrf.mxu0
  %v4544 = vadd.f32 0.0, %v4543
  %4545 = vmatprep.mubr.bf16.mxu0 0
  %4546 = vmatmul.mubr.bf16.gmra.mxu0 %v4272
  %v4547 = vpop.f32.mrf.mxu0
  %v4548 = vadd.f32 0.0, %v4547
  %v4549 = vpop.f32.mrf.mxu0
  %v4550 = vadd.f32 0.0, %v4549
  %v4551 = vpop.f32.mrf.mxu0
  %v4552 = vpop.f32.mrf.mxu0
  %4553 = vdwg.mxu0
  %4554 = vmatprep.subr.bf16.mxu0 0
  %4555 = vmatpush1.bf16.msra.mxu0 0
  %4556 = vmatprep.subr.bf16.mxu0 0
  %4557 = vmatpush1.bf16.msra.mxu0 0
  %4558 = vmatprep.subr.bf16.mxu0 0
  %4559 = vmatpush1.bf16.msra.mxu0 0
  %4560 = vmatprep.subr.bf16.mxu0 0
  %4561 = vmatpush1.bf16.msra.mxu0 0
  %4562 = vmatprep.subr.bf16.mxu0 0
  %4563 = vmatpush1.bf16.msra.mxu0 0
  %4564 = vmatprep.subr.bf16.mxu0 0
  %4565 = vmatpush1.bf16.msra.mxu0 0
  %4566 = vmatprep.subr.bf16.mxu0 0
  %4567 = vmatpush1.bf16.msra.mxu0 0
  %4568 = vmatprep.subr.bf16.mxu0 %v4297
  %4569 = vmatpush1.bf16.msra.mxu0 %v4294
  %4570 = vmatprep.subr.bf16.mxu0 0
  %4571 = vmatpush2.bf16.msra.mxu0 0
  %4572 = vmatprep.subr.bf16.mxu0 0
  %4573 = vmatpush2.bf16.msra.mxu0 0
  %4574 = vmatprep.subr.bf16.mxu0 0
  %4575 = vmatpush2.bf16.msra.mxu0 0
  %4576 = vmatprep.subr.bf16.mxu0 0
  %4577 = vmatpush2.bf16.msra.mxu0 0
  %4578 = vmatprep.subr.bf16.mxu0 0
  %4579 = vmatpush2.bf16.msra.mxu0 0
  %4580 = vmatprep.subr.bf16.mxu0 0
  %4581 = vmatpush2.bf16.msra.mxu0 0
  %4582 = vmatprep.subr.bf16.mxu0 0
  %4583 = vmatpush2.bf16.msra.mxu0 0
  %4584 = vmatprep.subr.bf16.mxu0 0
  %4585 = vmatpush2.bf16.msra.mxu0 0
  %4586 = vmatprep.mubr.bf16.mxu0 0
  %4587 = vmatmul.mubr.bf16.gmra.mxu0 %v4266
  %v4588 = vpop.f32.mrf.mxu0
  %v4589 = vadd.f32 0.0, %v4588
  %v4590 = vpop.f32.mrf.mxu0
  %v4591 = vadd.f32 0.0, %v4590
  %v4592 = vpop.f32.mrf.mxu0
  %v4593 = vadd.f32 0.0, %v4592
  %v4594 = vpop.f32.mrf.mxu0
  %v4595 = vadd.f32 0.0, %v4594
  %4596 = vmatprep.mubr.bf16.mxu0 0
  %4597 = vmatmul.mubr.bf16.gmra.mxu0 %v4269
  %v4598 = vpop.f32.mrf.mxu0
  %v4599 = vadd.f32 0.0, %v4598
  %v4600 = vpop.f32.mrf.mxu0
  %v4601 = vadd.f32 0.0, %v4600
  %v4602 = vpop.f32.mrf.mxu0
  %v4603 = vadd.f32 0.0, %v4602
  %v4604 = vpop.f32.mrf.mxu0
  %v4605 = vadd.f32 0.0, %v4604
  %4606 = vmatprep.mubr.bf16.mxu0 0
  %4607 = vmatmul.mubr.bf16.gmra.mxu0 %v4272
  %v4608 = vpop.f32.mrf.mxu0
  %v4609 = vadd.f32 0.0, %v4608
  %v4610 = vpop.f32.mrf.mxu0
  %v4611 = vadd.f32 0.0, %v4610
  %v4612 = vpop.f32.mrf.mxu0
  %v4613 = vpop.f32.mrf.mxu0
  %4614 = vdwg.mxu0
  %4615 = vmatprep.subr.bf16.mxu0 0
  %4616 = vmatpush1.bf16.msra.mxu0 0
  %4617 = vmatprep.subr.bf16.mxu0 0
  %4618 = vmatpush1.bf16.msra.mxu0 0
  %4619 = vmatprep.subr.bf16.mxu0 0
  %4620 = vmatpush1.bf16.msra.mxu0 0
  %4621 = vmatprep.subr.bf16.mxu0 0
  %4622 = vmatpush1.bf16.msra.mxu0 0
  %4623 = vmatprep.subr.bf16.mxu0 0
  %4624 = vmatpush1.bf16.msra.mxu0 0
  %4625 = vmatprep.subr.bf16.mxu0 0
  %4626 = vmatpush1.bf16.msra.mxu0 0
  %4627 = vmatprep.subr.bf16.mxu0 0
  %4628 = vmatpush1.bf16.msra.mxu0 0
  %4629 = vmatprep.subr.bf16.mxu0 %v4303
  %4630 = vmatpush1.bf16.msra.mxu0 %v4300
  %4631 = vmatprep.subr.bf16.mxu0 0
  %4632 = vmatpush2.bf16.msra.mxu0 0
  %4633 = vmatprep.subr.bf16.mxu0 0
  %4634 = vmatpush2.bf16.msra.mxu0 0
  %4635 = vmatprep.subr.bf16.mxu0 0
  %4636 = vmatpush2.bf16.msra.mxu0 0
  %4637 = vmatprep.subr.bf16.mxu0 0
  %4638 = vmatpush2.bf16.msra.mxu0 0
  %4639 = vmatprep.subr.bf16.mxu0 0
  %4640 = vmatpush2.bf16.msra.mxu0 0
  %4641 = vmatprep.subr.bf16.mxu0 0
  %4642 = vmatpush2.bf16.msra.mxu0 0
  %4643 = vmatprep.subr.bf16.mxu0 0
  %4644 = vmatpush2.bf16.msra.mxu0 0
  %4645 = vmatprep.subr.bf16.mxu0 0
  %4646 = vmatpush2.bf16.msra.mxu0 0
  %4647 = vmatprep.mubr.bf16.mxu0 0
  %4648 = vmatmul.mubr.bf16.gmra.mxu0 %v4266
  %v4649 = vpop.f32.mrf.mxu0
  %v4650 = vadd.f32 0.0, %v4649
  %v4651 = vpop.f32.mrf.mxu0
  %v4652 = vadd.f32 0.0, %v4651
  %v4653 = vpop.f32.mrf.mxu0
  %v4654 = vadd.f32 0.0, %v4653
  %v4655 = vpop.f32.mrf.mxu0
  %v4656 = vadd.f32 0.0, %v4655
  %4657 = vmatprep.mubr.bf16.mxu0 0
  %4658 = vmatmul.mubr.bf16.gmra.mxu0 %v4269
  %v4659 = vpop.f32.mrf.mxu0
  %v4660 = vadd.f32 0.0, %v4659
  %v4661 = vpop.f32.mrf.mxu0
  %v4662 = vadd.f32 0.0, %v4661
  %v4663 = vpop.f32.mrf.mxu0
  %v4664 = vadd.f32 0.0, %v4663
  %v4665 = vpop.f32.mrf.mxu0
  %v4666 = vadd.f32 0.0, %v4665
  %4667 = vmatprep.mubr.bf16.mxu0 0
  %4668 = vmatmul.mubr.bf16.gmra.mxu0 %v4272
  %v4669 = vpop.f32.mrf.mxu0
  %v4670 = vadd.f32 0.0, %v4669
  %v4671 = vpop.f32.mrf.mxu0
  %v4672 = vadd.f32 0.0, %v4671
  %v4673 = vpop.f32.mrf.mxu0
  %v4674 = vpop.f32.mrf.mxu0
  %4675 = vdwg.mxu0
  %4676 = vmatprep.subr.bf16.mxu0 0
  %4677 = vmatpush1.bf16.msra.mxu0 0
  %4678 = vmatprep.subr.bf16.mxu0 0
  %4679 = vmatpush1.bf16.msra.mxu0 0
  %4680 = vmatprep.subr.bf16.mxu0 0
  %4681 = vmatpush1.bf16.msra.mxu0 0
  %4682 = vmatprep.subr.bf16.mxu0 0
  %4683 = vmatpush1.bf16.msra.mxu0 0
  %4684 = vmatprep.subr.bf16.mxu0 0
  %4685 = vmatpush1.bf16.msra.mxu0 0
  %4686 = vmatprep.subr.bf16.mxu0 0
  %4687 = vmatpush1.bf16.msra.mxu0 0
  %4688 = vmatprep.subr.bf16.mxu0 0
  %4689 = vmatpush1.bf16.msra.mxu0 0
  %4690 = vmatprep.subr.bf16.mxu0 %v4309
  %4691 = vmatpush1.bf16.msra.mxu0 %v4306
  %4692 = vmatprep.subr.bf16.mxu0 0
  %4693 = vmatpush2.bf16.msra.mxu0 0
  %4694 = vmatprep.subr.bf16.mxu0 0
  %4695 = vmatpush2.bf16.msra.mxu0 0
  %4696 = vmatprep.subr.bf16.mxu0 0
  %4697 = vmatpush2.bf16.msra.mxu0 0
  %4698 = vmatprep.subr.bf16.mxu0 0
  %4699 = vmatpush2.bf16.msra.mxu0 0
  %4700 = vmatprep.subr.bf16.mxu0 0
  %4701 = vmatpush2.bf16.msra.mxu0 0
  %4702 = vmatprep.subr.bf16.mxu0 0
  %4703 = vmatpush2.bf16.msra.mxu0 0
  %4704 = vmatprep.subr.bf16.mxu0 0
  %4705 = vmatpush2.bf16.msra.mxu0 0
  %4706 = vmatprep.subr.bf16.mxu0 0
  %4707 = vmatpush2.bf16.msra.mxu0 0
  %4708 = vmatprep.mubr.bf16.mxu0 0
  %4709 = vmatmul.mubr.bf16.gmra.mxu0 %v4266
  %v4710 = vpop.f32.mrf.mxu0
  %v4711 = vadd.f32 0.0, %v4710
  %v4712 = vpop.f32.mrf.mxu0
  %v4713 = vadd.f32 0.0, %v4712
  %v4714 = vpop.f32.mrf.mxu0
  %v4715 = vadd.f32 0.0, %v4714
  %v4716 = vpop.f32.mrf.mxu0
  %v4717 = vadd.f32 0.0, %v4716
  %4718 = vmatprep.mubr.bf16.mxu0 0
  %4719 = vmatmul.mubr.bf16.gmra.mxu0 %v4269
  %v4720 = vpop.f32.mrf.mxu0
  %v4721 = vadd.f32 0.0, %v4720
  %v4722 = vpop.f32.mrf.mxu0
  %v4723 = vadd.f32 0.0, %v4722
  %v4724 = vpop.f32.mrf.mxu0
  %v4725 = vadd.f32 0.0, %v4724
  %v4726 = vpop.f32.mrf.mxu0
  %v4727 = vadd.f32 0.0, %v4726
  %4728 = vmatprep.mubr.bf16.mxu0 0
  %4729 = vmatmul.mubr.bf16.gmra.mxu0 %v4272
  %v4730 = vpop.f32.mrf.mxu0
  %v4731 = vadd.f32 0.0, %v4730
  %v4732 = vpop.f32.mrf.mxu0
  %v4733 = vadd.f32 0.0, %v4732
  %v4734 = vpop.f32.mrf.mxu0
  %v4735 = vpop.f32.mrf.mxu0
  %4736 = vdwg.mxu0
  %4737 = vmatprep.subr.bf16.mxu0 0
  %4738 = vmatpush1.bf16.msra.mxu0 0
  %4739 = vmatprep.subr.bf16.mxu0 0
  %4740 = vmatpush1.bf16.msra.mxu0 0
  %4741 = vmatprep.subr.bf16.mxu0 0
  %4742 = vmatpush1.bf16.msra.mxu0 0
  %4743 = vmatprep.subr.bf16.mxu0 0
  %4744 = vmatpush1.bf16.msra.mxu0 0
  %4745 = vmatprep.subr.bf16.mxu0 0
  %4746 = vmatpush1.bf16.msra.mxu0 0
  %4747 = vmatprep.subr.bf16.mxu0 0
  %4748 = vmatpush1.bf16.msra.mxu0 0
  %4749 = vmatprep.subr.bf16.mxu0 0
  %4750 = vmatpush1.bf16.msra.mxu0 0
  %4751 = vmatprep.subr.bf16.mxu0 %v4315
  %4752 = vmatpush1.bf16.msra.mxu0 %v4312
  %4753 = vmatprep.subr.bf16.mxu0 0
  %4754 = vmatpush2.bf16.msra.mxu0 0
  %4755 = vmatprep.subr.bf16.mxu0 0
  %4756 = vmatpush2.bf16.msra.mxu0 0
  %4757 = vmatprep.subr.bf16.mxu0 0
  %4758 = vmatpush2.bf16.msra.mxu0 0
  %4759 = vmatprep.subr.bf16.mxu0 0
  %4760 = vmatpush2.bf16.msra.mxu0 0
  %4761 = vmatprep.subr.bf16.mxu0 0
  %4762 = vmatpush2.bf16.msra.mxu0 0
  %4763 = vmatprep.subr.bf16.mxu0 0
  %4764 = vmatpush2.bf16.msra.mxu0 0
  %4765 = vmatprep.subr.bf16.mxu0 0
  %4766 = vmatpush2.bf16.msra.mxu0 0
  %4767 = vmatprep.subr.bf16.mxu0 0
  %4768 = vmatpush2.bf16.msra.mxu0 0
  %4769 = vmatprep.mubr.bf16.mxu0 0
  %4770 = vmatmul.mubr.bf16.gmra.mxu0 %v4266
  %v4771 = vpop.f32.mrf.mxu0
  %v4772 = vadd.f32 0.0, %v4771
  %v4773 = vpop.f32.mrf.mxu0
  %v4774 = vadd.f32 0.0, %v4773
  %v4775 = vpop.f32.mrf.mxu0
  %v4776 = vadd.f32 0.0, %v4775
  %v4777 = vpop.f32.mrf.mxu0
  %v4778 = vadd.f32 0.0, %v4777
  %4779 = vmatprep.mubr.bf16.mxu0 0
  %4780 = vmatmul.mubr.bf16.gmra.mxu0 %v4269
  %v4781 = vpop.f32.mrf.mxu0
  %v4782 = vadd.f32 0.0, %v4781
  %v4783 = vpop.f32.mrf.mxu0
  %v4784 = vadd.f32 0.0, %v4783
  %v4785 = vpop.f32.mrf.mxu0
  %v4786 = vadd.f32 0.0, %v4785
  %v4787 = vpop.f32.mrf.mxu0
  %v4788 = vadd.f32 0.0, %v4787
  %4789 = vmatprep.mubr.bf16.mxu0 0
  %4790 = vmatmul.mubr.bf16.gmra.mxu0 %v4272
  %v4791 = vpop.f32.mrf.mxu0
  %v4792 = vadd.f32 0.0, %v4791
  %v4793 = vpop.f32.mrf.mxu0
  %v4794 = vadd.f32 0.0, %v4793
  %v4795 = vpop.f32.mrf.mxu0
  %v4796 = vpop.f32.mrf.mxu0
  %4797 = vdwg.mxu0
  %4798 = vmatprep.subr.bf16.mxu0 0
  %4799 = vmatpush1.bf16.msra.mxu0 0
  %4800 = vmatprep.subr.bf16.mxu0 0
  %4801 = vmatpush1.bf16.msra.mxu0 0
  %4802 = vmatprep.subr.bf16.mxu0 0
  %4803 = vmatpush1.bf16.msra.mxu0 0
  %4804 = vmatprep.subr.bf16.mxu0 0
  %4805 = vmatpush1.bf16.msra.mxu0 0
  %4806 = vmatprep.subr.bf16.mxu0 0
  %4807 = vmatpush1.bf16.msra.mxu0 0
  %4808 = vmatprep.subr.bf16.mxu0 0
  %4809 = vmatpush1.bf16.msra.mxu0 0
  %4810 = vmatprep.subr.bf16.mxu0 0
  %4811 = vmatpush1.bf16.msra.mxu0 0
  %4812 = vmatprep.subr.bf16.mxu0 %v4321
  %4813 = vmatpush1.bf16.msra.mxu0 %v4318
  %4814 = vmatprep.subr.bf16.mxu0 0
  %4815 = vmatpush2.bf16.msra.mxu0 0
  %4816 = vmatprep.subr.bf16.mxu0 0
  %4817 = vmatpush2.bf16.msra.mxu0 0
  %4818 = vmatprep.subr.bf16.mxu0 0
  %4819 = vmatpush2.bf16.msra.mxu0 0
  %4820 = vmatprep.subr.bf16.mxu0 0
  %4821 = vmatpush2.bf16.msra.mxu0 0
  %4822 = vmatprep.subr.bf16.mxu0 0
  %4823 = vmatpush2.bf16.msra.mxu0 0
  %4824 = vmatprep.subr.bf16.mxu0 0
  %4825 = vmatpush2.bf16.msra.mxu0 0
  %4826 = vmatprep.subr.bf16.mxu0 0
  %4827 = vmatpush2.bf16.msra.mxu0 0
  %4828 = vmatprep.subr.bf16.mxu0 0
  %4829 = vmatpush2.bf16.msra.mxu0 0
  %4830 = vmatprep.mubr.bf16.mxu0 0
  %4831 = vmatmul.mubr.bf16.gmra.mxu0 %v4266
  %v4832 = vpop.f32.mrf.mxu0
  %v4833 = vadd.f32 0.0, %v4832
  %v4834 = vpop.f32.mrf.mxu0
  %v4835 = vadd.f32 0.0, %v4834
  %v4836 = vpop.f32.mrf.mxu0
  %v4837 = vadd.f32 0.0, %v4836
  %v4838 = vpop.f32.mrf.mxu0
  %v4839 = vadd.f32 0.0, %v4838
  %4840 = vmatprep.mubr.bf16.mxu0 0
  %4841 = vmatmul.mubr.bf16.gmra.mxu0 %v4269
  %v4842 = vpop.f32.mrf.mxu0
  %v4843 = vadd.f32 0.0, %v4842
  %v4844 = vpop.f32.mrf.mxu0
  %v4845 = vadd.f32 0.0, %v4844
  %v4846 = vpop.f32.mrf.mxu0
  %v4847 = vadd.f32 0.0, %v4846
  %v4848 = vpop.f32.mrf.mxu0
  %v4849 = vadd.f32 0.0, %v4848
  %4850 = vmatprep.mubr.bf16.mxu0 0
  %4851 = vmatmul.mubr.bf16.gmra.mxu0 %v4272
  %v4852 = vpop.f32.mrf.mxu0
  %v4853 = vadd.f32 0.0, %v4852
  %v4854 = vpop.f32.mrf.mxu0
  %v4855 = vadd.f32 0.0, %v4854
  %v4856 = vpop.f32.mrf.mxu0
  %v4857 = vpop.f32.mrf.mxu0
  %4858 = vdwg.mxu0
  %4859 = vmatprep.subr.bf16.mxu0 0
  %4860 = vmatpush1.bf16.msra.mxu0 0
  %4861 = vmatprep.subr.bf16.mxu0 0
  %4862 = vmatpush1.bf16.msra.mxu0 0
  %4863 = vmatprep.subr.bf16.mxu0 0
  %4864 = vmatpush1.bf16.msra.mxu0 0
  %4865 = vmatprep.subr.bf16.mxu0 0
  %4866 = vmatpush1.bf16.msra.mxu0 0
  %4867 = vmatprep.subr.bf16.mxu0 0
  %4868 = vmatpush1.bf16.msra.mxu0 0
  %4869 = vmatprep.subr.bf16.mxu0 0
  %4870 = vmatpush1.bf16.msra.mxu0 0
  %4871 = vmatprep.subr.bf16.mxu0 0
  %4872 = vmatpush1.bf16.msra.mxu0 0
  %4873 = vmatprep.subr.bf16.mxu0 %v4327
  %4874 = vmatpush1.bf16.msra.mxu0 %v4324
  %4875 = vmatprep.subr.bf16.mxu0 0
  %4876 = vmatpush2.bf16.msra.mxu0 0
  %4877 = vmatprep.subr.bf16.mxu0 0
  %4878 = vmatpush2.bf16.msra.mxu0 0
  %4879 = vmatprep.subr.bf16.mxu0 0
  %4880 = vmatpush2.bf16.msra.mxu0 0
  %4881 = vmatprep.subr.bf16.mxu0 0
  %4882 = vmatpush2.bf16.msra.mxu0 0
  %4883 = vmatprep.subr.bf16.mxu0 0
  %4884 = vmatpush2.bf16.msra.mxu0 0
  %4885 = vmatprep.subr.bf16.mxu0 0
  %4886 = vmatpush2.bf16.msra.mxu0 0
  %4887 = vmatprep.subr.bf16.mxu0 0
  %4888 = vmatpush2.bf16.msra.mxu0 0
  %4889 = vmatprep.subr.bf16.mxu0 0
  %4890 = vmatpush2.bf16.msra.mxu0 0
  %4891 = vmatprep.mubr.bf16.mxu0 0
  %4892 = vmatmul.mubr.bf16.gmra.mxu0 %v4266
  %v4893 = vpop.f32.mrf.mxu0
  %v4894 = vadd.f32 0.0, %v4893
  %v4895 = vpop.f32.mrf.mxu0
  %v4896 = vadd.f32 0.0, %v4895
  %v4897 = vpop.f32.mrf.mxu0
  %v4898 = vadd.f32 0.0, %v4897
  %v4899 = vpop.f32.mrf.mxu0
  %v4900 = vadd.f32 0.0, %v4899
  %4901 = vmatprep.mubr.bf16.mxu0 0
  %4902 = vmatmul.mubr.bf16.gmra.mxu0 %v4269
  %v4903 = vpop.f32.mrf.mxu0
  %v4904 = vadd.f32 0.0, %v4903
  %v4905 = vpop.f32.mrf.mxu0
  %v4906 = vadd.f32 0.0, %v4905
  %v4907 = vpop.f32.mrf.mxu0
  %v4908 = vadd.f32 0.0, %v4907
  %v4909 = vpop.f32.mrf.mxu0
  %v4910 = vadd.f32 0.0, %v4909
  %4911 = vmatprep.mubr.bf16.mxu0 0
  %4912 = vmatmul.mubr.bf16.gmra.mxu0 %v4272
  %v4913 = vpop.f32.mrf.mxu0
  %v4914 = vadd.f32 0.0, %v4913
  %v4915 = vpop.f32.mrf.mxu0
  %v4916 = vadd.f32 0.0, %v4915
  %v4917 = vpop.f32.mrf.mxu0
  %v4918 = vpop.f32.mrf.mxu0
  %4919 = vdwg.mxu0
  %4920 = vmatprep.subr.bf16.mxu0 0
  %4921 = vmatpush1.bf16.msra.mxu0 0
  %4922 = vmatprep.subr.bf16.mxu0 0
  %4923 = vmatpush1.bf16.msra.mxu0 0
  %4924 = vmatprep.subr.bf16.mxu0 0
  %4925 = vmatpush1.bf16.msra.mxu0 0
  %4926 = vmatprep.subr.bf16.mxu0 0
  %4927 = vmatpush1.bf16.msra.mxu0 0
  %4928 = vmatprep.subr.bf16.mxu0 0
  %4929 = vmatpush1.bf16.msra.mxu0 0
  %4930 = vmatprep.subr.bf16.mxu0 0
  %4931 = vmatpush1.bf16.msra.mxu0 0
  %4932 = vmatprep.subr.bf16.mxu0 0
  %4933 = vmatpush1.bf16.msra.mxu0 0
  %4934 = vmatprep.subr.bf16.mxu0 %v4333
  %4935 = vmatpush1.bf16.msra.mxu0 %v4330
  %4936 = vmatprep.subr.bf16.mxu0 0
  %4937 = vmatpush2.bf16.msra.mxu0 0
  %4938 = vmatprep.subr.bf16.mxu0 0
  %4939 = vmatpush2.bf16.msra.mxu0 0
  %4940 = vmatprep.subr.bf16.mxu0 0
  %4941 = vmatpush2.bf16.msra.mxu0 0
  %4942 = vmatprep.subr.bf16.mxu0 0
  %4943 = vmatpush2.bf16.msra.mxu0 0
  %4944 = vmatprep.subr.bf16.mxu0 0
  %4945 = vmatpush2.bf16.msra.mxu0 0
  %4946 = vmatprep.subr.bf16.mxu0 0
  %4947 = vmatpush2.bf16.msra.mxu0 0
  %4948 = vmatprep.subr.bf16.mxu0 0
  %4949 = vmatpush2.bf16.msra.mxu0 0
  %4950 = vmatprep.subr.bf16.mxu0 0
  %4951 = vmatpush2.bf16.msra.mxu0 0
  %4952 = vmatprep.mubr.bf16.mxu0 0
  %4953 = vmatmul.mubr.bf16.gmra.mxu0 %v4266
  %v4954 = vpop.f32.mrf.mxu0
  %v4955 = vadd.f32 0.0, %v4954
  %v4956 = vpop.f32.mrf.mxu0
  %v4957 = vadd.f32 0.0, %v4956
  %v4958 = vpop.f32.mrf.mxu0
  %v4959 = vadd.f32 0.0, %v4958
  %v4960 = vpop.f32.mrf.mxu0
  %v4961 = vadd.f32 0.0, %v4960
  %4962 = vmatprep.mubr.bf16.mxu0 0
  %4963 = vmatmul.mubr.bf16.gmra.mxu0 %v4269
  %v4964 = vpop.f32.mrf.mxu0
  %v4965 = vadd.f32 0.0, %v4964
  %v4966 = vpop.f32.mrf.mxu0
  %v4967 = vadd.f32 0.0, %v4966
  %v4968 = vpop.f32.mrf.mxu0
  %v4969 = vadd.f32 0.0, %v4968
  %v4970 = vpop.f32.mrf.mxu0
  %v4971 = vadd.f32 0.0, %v4970
  %4972 = vmatprep.mubr.bf16.mxu0 0
  %4973 = vmatmul.mubr.bf16.gmra.mxu0 %v4272
  %v4974 = vpop.f32.mrf.mxu0
  %v4975 = vadd.f32 0.0, %v4974
  %v4976 = vpop.f32.mrf.mxu0
  %v4977 = vadd.f32 0.0, %v4976
  %v4978 = vpop.f32.mrf.mxu0
  %v4979 = vpop.f32.mrf.mxu0
  %4980 = vdwg.mxu0
  %4981 = vmatprep.subr.bf16.mxu0 0
  %4982 = vmatpush1.bf16.msra.mxu0 0
  %4983 = vmatprep.subr.bf16.mxu0 0
  %4984 = vmatpush1.bf16.msra.mxu0 0
  %4985 = vmatprep.subr.bf16.mxu0 0
  %4986 = vmatpush1.bf16.msra.mxu0 0
  %4987 = vmatprep.subr.bf16.mxu0 0
  %4988 = vmatpush1.bf16.msra.mxu0 0
  %4989 = vmatprep.subr.bf16.mxu0 0
  %4990 = vmatpush1.bf16.msra.mxu0 0
  %4991 = vmatprep.subr.bf16.mxu0 0
  %4992 = vmatpush1.bf16.msra.mxu0 0
  %4993 = vmatprep.subr.bf16.mxu0 0
  %4994 = vmatpush1.bf16.msra.mxu0 0
  %4995 = vmatprep.subr.bf16.mxu0 %v4339
  %4996 = vmatpush1.bf16.msra.mxu0 %v4336
  %4997 = vmatprep.subr.bf16.mxu0 0
  %4998 = vmatpush2.bf16.msra.mxu0 0
  %4999 = vmatprep.subr.bf16.mxu0 0
  %5000 = vmatpush2.bf16.msra.mxu0 0
  %5001 = vmatprep.subr.bf16.mxu0 0
  %5002 = vmatpush2.bf16.msra.mxu0 0
  %5003 = vmatprep.subr.bf16.mxu0 0
  %5004 = vmatpush2.bf16.msra.mxu0 0
  %5005 = vmatprep.subr.bf16.mxu0 0
  %5006 = vmatpush2.bf16.msra.mxu0 0
  %5007 = vmatprep.subr.bf16.mxu0 0
  %5008 = vmatpush2.bf16.msra.mxu0 0
  %5009 = vmatprep.subr.bf16.mxu0 0
  %5010 = vmatpush2.bf16.msra.mxu0 0
  %5011 = vmatprep.subr.bf16.mxu0 0
  %5012 = vmatpush2.bf16.msra.mxu0 0
  %5013 = vmatprep.mubr.bf16.mxu0 0
  %5014 = vmatmul.mubr.bf16.gmra.mxu0 %v4266
  %v5015 = vpop.f32.mrf.mxu0
  %v5016 = vadd.f32 0.0, %v5015
  %v5017 = vpop.f32.mrf.mxu0
  %v5018 = vadd.f32 0.0, %v5017
  %v5019 = vpop.f32.mrf.mxu0
  %v5020 = vadd.f32 0.0, %v5019
  %v5021 = vpop.f32.mrf.mxu0
  %v5022 = vadd.f32 0.0, %v5021
  %5023 = vmatprep.mubr.bf16.mxu0 0
  %5024 = vmatmul.mubr.bf16.gmra.mxu0 %v4269
  %v5025 = vpop.f32.mrf.mxu0
  %v5026 = vadd.f32 0.0, %v5025
  %v5027 = vpop.f32.mrf.mxu0
  %v5028 = vadd.f32 0.0, %v5027
  %v5029 = vpop.f32.mrf.mxu0
  %v5030 = vadd.f32 0.0, %v5029
  %v5031 = vpop.f32.mrf.mxu0
  %v5032 = vadd.f32 0.0, %v5031
  %5033 = vmatprep.mubr.bf16.mxu0 0
  %5034 = vmatmul.mubr.bf16.gmra.mxu0 %v4272
  %v5035 = vpop.f32.mrf.mxu0
  %v5036 = vadd.f32 0.0, %v5035
  %v5037 = vpop.f32.mrf.mxu0
  %v5038 = vadd.f32 0.0, %v5037
  %v5039 = vpop.f32.mrf.mxu0
  %v5040 = vpop.f32.mrf.mxu0
  %5041 = vdwg.mxu0
  %5042 = vmatprep.subr.bf16.mxu0 0
  %5043 = vmatpush1.bf16.msra.mxu0 0
  %5044 = vmatprep.subr.bf16.mxu0 0
  %5045 = vmatpush1.bf16.msra.mxu0 0
  %5046 = vmatprep.subr.bf16.mxu0 0
  %5047 = vmatpush1.bf16.msra.mxu0 0
  %5048 = vmatprep.subr.bf16.mxu0 0
  %5049 = vmatpush1.bf16.msra.mxu0 0
  %5050 = vmatprep.subr.bf16.mxu0 0
  %5051 = vmatpush1.bf16.msra.mxu0 0
  %5052 = vmatprep.subr.bf16.mxu0 0
  %5053 = vmatpush1.bf16.msra.mxu0 0
  %5054 = vmatprep.subr.bf16.mxu0 0
  %5055 = vmatpush1.bf16.msra.mxu0 0
  %5056 = vmatprep.subr.bf16.mxu0 %v4345
  %5057 = vmatpush1.bf16.msra.mxu0 %v4342
  %5058 = vmatprep.subr.bf16.mxu0 0
  %5059 = vmatpush2.bf16.msra.mxu0 0
  %5060 = vmatprep.subr.bf16.mxu0 0
  %5061 = vmatpush2.bf16.msra.mxu0 0
  %5062 = vmatprep.subr.bf16.mxu0 0
  %5063 = vmatpush2.bf16.msra.mxu0 0
  %5064 = vmatprep.subr.bf16.mxu0 0
  %5065 = vmatpush2.bf16.msra.mxu0 0
  %5066 = vmatprep.subr.bf16.mxu0 0
  %5067 = vmatpush2.bf16.msra.mxu0 0
  %5068 = vmatprep.subr.bf16.mxu0 0
  %5069 = vmatpush2.bf16.msra.mxu0 0
  %5070 = vmatprep.subr.bf16.mxu0 0
  %5071 = vmatpush2.bf16.msra.mxu0 0
  %5072 = vmatprep.subr.bf16.mxu0 0
  %5073 = vmatpush2.bf16.msra.mxu0 0
  %5074 = vmatprep.mubr.bf16.mxu0 0
  %5075 = vmatmul.mubr.bf16.gmra.mxu0 %v4266
  %v5076 = vpop.f32.mrf.mxu0
  %v5077 = vadd.f32 0.0, %v5076
  %v5078 = vpop.f32.mrf.mxu0
  %v5079 = vadd.f32 0.0, %v5078
  %v5080 = vpop.f32.mrf.mxu0
  %v5081 = vadd.f32 0.0, %v5080
  %v5082 = vpop.f32.mrf.mxu0
  %v5083 = vadd.f32 0.0, %v5082
  %5084 = vmatprep.mubr.bf16.mxu0 0
  %5085 = vmatmul.mubr.bf16.gmra.mxu0 %v4269
  %v5086 = vpop.f32.mrf.mxu0
  %v5087 = vadd.f32 0.0, %v5086
  %v5088 = vpop.f32.mrf.mxu0
  %v5089 = vadd.f32 0.0, %v5088
  %v5090 = vpop.f32.mrf.mxu0
  %v5091 = vadd.f32 0.0, %v5090
  %v5092 = vpop.f32.mrf.mxu0
  %v5093 = vadd.f32 0.0, %v5092
  %5094 = vmatprep.mubr.bf16.mxu0 0
  %5095 = vmatmul.mubr.bf16.gmra.mxu0 %v4272
  %v5096 = vpop.f32.mrf.mxu0
  %v5097 = vadd.f32 0.0, %v5096
  %v5098 = vpop.f32.mrf.mxu0
  %v5099 = vadd.f32 0.0, %v5098
  %v5100 = vpop.f32.mrf.mxu0
  %v5101 = vpop.f32.mrf.mxu0
  %5102 = vdwg.mxu0
  %5103 = vmatprep.subr.bf16.mxu0 0
  %5104 = vmatpush1.bf16.msra.mxu0 0
  %5105 = vmatprep.subr.bf16.mxu0 0
  %5106 = vmatpush1.bf16.msra.mxu0 0
  %5107 = vmatprep.subr.bf16.mxu0 0
  %5108 = vmatpush1.bf16.msra.mxu0 0
  %5109 = vmatprep.subr.bf16.mxu0 0
  %5110 = vmatpush1.bf16.msra.mxu0 0
  %5111 = vmatprep.subr.bf16.mxu0 0
  %5112 = vmatpush1.bf16.msra.mxu0 0
  %5113 = vmatprep.subr.bf16.mxu0 0
  %5114 = vmatpush1.bf16.msra.mxu0 0
  %5115 = vmatprep.subr.bf16.mxu0 0
  %5116 = vmatpush1.bf16.msra.mxu0 0
  %5117 = vmatprep.subr.bf16.mxu0 %v4351
  %5118 = vmatpush1.bf16.msra.mxu0 %v4348
  %5119 = vmatprep.subr.bf16.mxu0 0
  %5120 = vmatpush2.bf16.msra.mxu0 0
  %5121 = vmatprep.subr.bf16.mxu0 0
  %5122 = vmatpush2.bf16.msra.mxu0 0
  %5123 = vmatprep.subr.bf16.mxu0 0
  %5124 = vmatpush2.bf16.msra.mxu0 0
  %5125 = vmatprep.subr.bf16.mxu0 0
  %5126 = vmatpush2.bf16.msra.mxu0 0
  %5127 = vmatprep.subr.bf16.mxu0 0
  %5128 = vmatpush2.bf16.msra.mxu0 0
  %5129 = vmatprep.subr.bf16.mxu0 0
  %5130 = vmatpush2.bf16.msra.mxu0 0
  %5131 = vmatprep.subr.bf16.mxu0 0
  %5132 = vmatpush2.bf16.msra.mxu0 0
  %5133 = vmatprep.subr.bf16.mxu0 0
  %5134 = vmatpush2.bf16.msra.mxu0 0
  %5135 = vmatprep.mubr.bf16.mxu0 0
  %5136 = vmatmul.mubr.bf16.gmra.mxu0 %v4266
  %v5137 = vpop.f32.mrf.mxu0
  %v5138 = vadd.f32 0.0, %v5137
  %v5139 = vpop.f32.mrf.mxu0
  %v5140 = vadd.f32 0.0, %v5139
  %v5141 = vpop.f32.mrf.mxu0
  %v5142 = vadd.f32 0.0, %v5141
  %v5143 = vpop.f32.mrf.mxu0
  %v5144 = vadd.f32 0.0, %v5143
  %5145 = vmatprep.mubr.bf16.mxu0 0
  %5146 = vmatmul.mubr.bf16.gmra.mxu0 %v4269
  %v5147 = vpop.f32.mrf.mxu0
  %v5148 = vadd.f32 0.0, %v5147
  %v5149 = vpop.f32.mrf.mxu0
  %v5150 = vadd.f32 0.0, %v5149
  %v5151 = vpop.f32.mrf.mxu0
  %v5152 = vadd.f32 0.0, %v5151
  %v5153 = vpop.f32.mrf.mxu0
  %v5154 = vadd.f32 0.0, %v5153
  %5155 = vmatprep.mubr.bf16.mxu0 0
  %5156 = vmatmul.mubr.bf16.gmra.mxu0 %v4272
  %v5157 = vpop.f32.mrf.mxu0
  %v5158 = vadd.f32 0.0, %v5157
  %v5159 = vpop.f32.mrf.mxu0
  %v5160 = vadd.f32 0.0, %v5159
  %v5161 = vpop.f32.mrf.mxu0
  %v5162 = vpop.f32.mrf.mxu0
  %5163 = vdwg.mxu0
  %5164 = vmatprep.subr.bf16.mxu0 0
  %5165 = vmatpush1.bf16.msra.mxu0 0
  %5166 = vmatprep.subr.bf16.mxu0 0
  %5167 = vmatpush1.bf16.msra.mxu0 0
  %5168 = vmatprep.subr.bf16.mxu0 0
  %5169 = vmatpush1.bf16.msra.mxu0 0
  %5170 = vmatprep.subr.bf16.mxu0 0
  %5171 = vmatpush1.bf16.msra.mxu0 0
  %5172 = vmatprep.subr.bf16.mxu0 0
  %5173 = vmatpush1.bf16.msra.mxu0 0
  %5174 = vmatprep.subr.bf16.mxu0 0
  %5175 = vmatpush1.bf16.msra.mxu0 0
  %5176 = vmatprep.subr.bf16.mxu0 0
  %5177 = vmatpush1.bf16.msra.mxu0 0
  %5178 = vmatprep.subr.bf16.mxu0 %v4357
  %5179 = vmatpush1.bf16.msra.mxu0 %v4354
  %5180 = vmatprep.subr.bf16.mxu0 0
  %5181 = vmatpush2.bf16.msra.mxu0 0
  %5182 = vmatprep.subr.bf16.mxu0 0
  %5183 = vmatpush2.bf16.msra.mxu0 0
  %5184 = vmatprep.subr.bf16.mxu0 0
  %5185 = vmatpush2.bf16.msra.mxu0 0
  %5186 = vmatprep.subr.bf16.mxu0 0
  %5187 = vmatpush2.bf16.msra.mxu0 0
  %5188 = vmatprep.subr.bf16.mxu0 0
  %5189 = vmatpush2.bf16.msra.mxu0 0
  %5190 = vmatprep.subr.bf16.mxu0 0
  %5191 = vmatpush2.bf16.msra.mxu0 0
  %5192 = vmatprep.subr.bf16.mxu0 0
  %5193 = vmatpush2.bf16.msra.mxu0 0
  %5194 = vmatprep.subr.bf16.mxu0 0
  %5195 = vmatpush2.bf16.msra.mxu0 0
  %5196 = vmatprep.mubr.bf16.mxu0 0
  %5197 = vmatmul.mubr.bf16.gmra.mxu0 %v4266
  %v5198 = vpop.f32.mrf.mxu0
  %v5199 = vadd.f32 0.0, %v5198
  %v5200 = vpop.f32.mrf.mxu0
  %v5201 = vadd.f32 0.0, %v5200
  %v5202 = vpop.f32.mrf.mxu0
  %v5203 = vadd.f32 0.0, %v5202
  %v5204 = vpop.f32.mrf.mxu0
  %v5205 = vadd.f32 0.0, %v5204
  %5206 = vmatprep.mubr.bf16.mxu0 0
  %5207 = vmatmul.mubr.bf16.gmra.mxu0 %v4269
  %v5208 = vpop.f32.mrf.mxu0
  %v5209 = vadd.f32 0.0, %v5208
  %v5210 = vpop.f32.mrf.mxu0
  %v5211 = vadd.f32 0.0, %v5210
  %v5212 = vpop.f32.mrf.mxu0
  %v5213 = vadd.f32 0.0, %v5212
  %v5214 = vpop.f32.mrf.mxu0
  %v5215 = vadd.f32 0.0, %v5214
  %5216 = vmatprep.mubr.bf16.mxu0 0
  %5217 = vmatmul.mubr.bf16.gmra.mxu0 %v4272
  %v5218 = vpop.f32.mrf.mxu0
  %v5219 = vadd.f32 0.0, %v5218
  %v5220 = vpop.f32.mrf.mxu0
  %v5221 = vadd.f32 0.0, %v5220
  %v5222 = vpop.f32.mrf.mxu0
  %v5223 = vpop.f32.mrf.mxu0
  %5224 = vdwg.mxu0
  %5225 = vmatprep.subr.bf16.mxu0 0
  %5226 = vmatpush1.bf16.msra.mxu0 0
  %5227 = vmatprep.subr.bf16.mxu0 0
  %5228 = vmatpush1.bf16.msra.mxu0 0
  %5229 = vmatprep.subr.bf16.mxu0 0
  %5230 = vmatpush1.bf16.msra.mxu0 0
  %5231 = vmatprep.subr.bf16.mxu0 0
  %5232 = vmatpush1.bf16.msra.mxu0 0
  %5233 = vmatprep.subr.bf16.mxu0 0
  %5234 = vmatpush1.bf16.msra.mxu0 0
  %5235 = vmatprep.subr.bf16.mxu0 0
  %5236 = vmatpush1.bf16.msra.mxu0 0
  %5237 = vmatprep.subr.bf16.mxu0 0
  %5238 = vmatpush1.bf16.msra.mxu0 0
  %5239 = vmatprep.subr.bf16.mxu0 %v4363
  %5240 = vmatpush1.bf16.msra.mxu0 %v4360
  %5241 = vmatprep.subr.bf16.mxu0 0
  %5242 = vmatpush2.bf16.msra.mxu0 0
  %5243 = vmatprep.subr.bf16.mxu0 0
  %5244 = vmatpush2.bf16.msra.mxu0 0
  %5245 = vmatprep.subr.bf16.mxu0 0
  %5246 = vmatpush2.bf16.msra.mxu0 0
  %5247 = vmatprep.subr.bf16.mxu0 0
  %5248 = vmatpush2.bf16.msra.mxu0 0
  %5249 = vmatprep.subr.bf16.mxu0 0
  %5250 = vmatpush2.bf16.msra.mxu0 0
  %5251 = vmatprep.subr.bf16.mxu0 0
  %5252 = vmatpush2.bf16.msra.mxu0 0
  %5253 = vmatprep.subr.bf16.mxu0 0
  %5254 = vmatpush2.bf16.msra.mxu0 0
  %5255 = vmatprep.subr.bf16.mxu0 0
  %5256 = vmatpush2.bf16.msra.mxu0 0
  %5257 = vmatprep.mubr.bf16.mxu0 0
  %5258 = vmatmul.mubr.bf16.gmra.mxu0 %v4266
  %v5259 = vpop.f32.mrf.mxu0
  %v5260 = vadd.f32 0.0, %v5259
  %v5261 = vpop.f32.mrf.mxu0
  %v5262 = vadd.f32 0.0, %v5261
  %v5263 = vpop.f32.mrf.mxu0
  %v5264 = vadd.f32 0.0, %v5263
  %v5265 = vpop.f32.mrf.mxu0
  %v5266 = vadd.f32 0.0, %v5265
  %5267 = vmatprep.mubr.bf16.mxu0 0
  %5268 = vmatmul.mubr.bf16.gmra.mxu0 %v4269
  %v5269 = vpop.f32.mrf.mxu0
  %v5270 = vadd.f32 0.0, %v5269
  %v5271 = vpop.f32.mrf.mxu0
  %v5272 = vadd.f32 0.0, %v5271
  %v5273 = vpop.f32.mrf.mxu0
  %v5274 = vadd.f32 0.0, %v5273
  %v5275 = vpop.f32.mrf.mxu0
  %v5276 = vadd.f32 0.0, %v5275
  %5277 = vmatprep.mubr.bf16.mxu0 0
  %5278 = vmatmul.mubr.bf16.gmra.mxu0 %v4272
  %v5279 = vpop.f32.mrf.mxu0
  %v5280 = vadd.f32 0.0, %v5279
  %v5281 = vpop.f32.mrf.mxu0
  %v5282 = vadd.f32 0.0, %v5281
  %v5283 = vpop.f32.mrf.mxu0
  %v5284 = vpop.f32.mrf.mxu0
  %5285 = vdwg.mxu0
  %5286 = vmatprep.subr.bf16.mxu0 0
  %5287 = vmatpush1.bf16.msra.mxu0 0
  %5288 = vmatprep.subr.bf16.mxu0 0
  %5289 = vmatpush1.bf16.msra.mxu0 0
  %5290 = vmatprep.subr.bf16.mxu0 0
  %5291 = vmatpush1.bf16.msra.mxu0 0
  %5292 = vmatprep.subr.bf16.mxu0 0
  %5293 = vmatpush1.bf16.msra.mxu0 0
  %5294 = vmatprep.subr.bf16.mxu0 0
  %5295 = vmatpush1.bf16.msra.mxu0 0
  %5296 = vmatprep.subr.bf16.mxu0 0
  %5297 = vmatpush1.bf16.msra.mxu0 0
  %5298 = vmatprep.subr.bf16.mxu0 0
  %5299 = vmatpush1.bf16.msra.mxu0 0
  %5300 = vmatprep.subr.bf16.mxu0 %v4369
  %5301 = vmatpush1.bf16.msra.mxu0 %v4366
  %5302 = vmatprep.subr.bf16.mxu0 0
  %5303 = vmatpush2.bf16.msra.mxu0 0
  %5304 = vmatprep.subr.bf16.mxu0 0
  %5305 = vmatpush2.bf16.msra.mxu0 0
  %5306 = vmatprep.subr.bf16.mxu0 0
  %5307 = vmatpush2.bf16.msra.mxu0 0
  %5308 = vmatprep.subr.bf16.mxu0 0
  %5309 = vmatpush2.bf16.msra.mxu0 0
  %5310 = vmatprep.subr.bf16.mxu0 0
  %5311 = vmatpush2.bf16.msra.mxu0 0
  %5312 = vmatprep.subr.bf16.mxu0 0
  %5313 = vmatpush2.bf16.msra.mxu0 0
  %5314 = vmatprep.subr.bf16.mxu0 0
  %5315 = vmatpush2.bf16.msra.mxu0 0
  %5316 = vmatprep.subr.bf16.mxu0 0
  %5317 = vmatpush2.bf16.msra.mxu0 0
  %5318 = vmatprep.mubr.bf16.mxu0 0
  %5319 = vmatmul.mubr.bf16.gmra.mxu0 %v4266
  %v5320 = vpop.f32.mrf.mxu0
  %v5321 = vadd.f32 0.0, %v5320
  %v5322 = vpop.f32.mrf.mxu0
  %v5323 = vadd.f32 0.0, %v5322
  %v5324 = vpop.f32.mrf.mxu0
  %v5325 = vadd.f32 0.0, %v5324
  %v5326 = vpop.f32.mrf.mxu0
  %v5327 = vadd.f32 0.0, %v5326
  %5328 = vmatprep.mubr.bf16.mxu0 0
  %5329 = vmatmul.mubr.bf16.gmra.mxu0 %v4269
  %v5330 = vpop.f32.mrf.mxu0
  %v5331 = vadd.f32 0.0, %v5330
  %v5332 = vpop.f32.mrf.mxu0
  %v5333 = vadd.f32 0.0, %v5332
  %v5334 = vpop.f32.mrf.mxu0
  %v5335 = vadd.f32 0.0, %v5334
  %v5336 = vpop.f32.mrf.mxu0
  %v5337 = vadd.f32 0.0, %v5336
  %5338 = vmatprep.mubr.bf16.mxu0 0
  %5339 = vmatmul.mubr.bf16.gmra.mxu0 %v4272
  %v5340 = vpop.f32.mrf.mxu0
  %v5341 = vadd.f32 0.0, %v5340
  %v5342 = vpop.f32.mrf.mxu0
  %v5343 = vadd.f32 0.0, %v5342
  %v5344 = vpop.f32.mrf.mxu0
  %v5345 = vpop.f32.mrf.mxu0
  %5346 = vdwg.mxu0
  %v5347 = vmax.f32 %v4406, 0.0
  %v5348 = vmax.f32 %v4408, 0.0
  %v5349 = vmax.f32 %v4467, 0.0
  %v5350 = vmax.f32 %v4469, 0.0
  %v5351 = vmax.f32 %v4528, 0.0
  %v5352 = vmax.f32 %v4530, 0.0
  %v5353 = vmax.f32 %v4589, 0.0
  %v5354 = vmax.f32 %v4591, 0.0
  %v5355 = vmax.f32 %v4650, 0.0
  %v5356 = vmax.f32 %v4652, 0.0
  %v5357 = vmax.f32 %v4711, 0.0
  %v5358 = vmax.f32 %v4713, 0.0
  %v5359 = vmax.f32 %v4772, 0.0
  %v5360 = vmax.f32 %v4774, 0.0
  %v5361 = vmax.f32 %v4833, 0.0
  %v5362 = vmax.f32 %v4835, 0.0
  %v5363 = vmax.f32 %v4894, 0.0
  %v5364 = vmax.f32 %v4896, 0.0
  %v5365 = vmax.f32 %v4955, 0.0
  %v5366 = vmax.f32 %v4957, 0.0
  %v5367 = vmax.f32 %v5016, 0.0
  %v5368 = vmax.f32 %v5018, 0.0
  %v5369 = vmax.f32 %v5077, 0.0
  %v5370 = vmax.f32 %v5079, 0.0
  %v5371 = vmax.f32 %v5138, 0.0
  %v5372 = vmax.f32 %v5140, 0.0
  %v5373 = vmax.f32 %v5199, 0.0
  %v5374 = vmax.f32 %v5201, 0.0
  %v5375 = vmax.f32 %v5260, 0.0
  %v5376 = vmax.f32 %v5262, 0.0
  %v5377 = vmax.f32 %v5321, 0.0
  %v5378 = vmax.f32 %v5323, 0.0
  %v5379 = vmax.f32 %v4410, 0.0
  %v5380 = vmax.f32 %v4412, 0.0
  %v5381 = vmax.f32 %v4471, 0.0
  %v5382 = vmax.f32 %v4473, 0.0
  %v5383 = vmax.f32 %v4532, 0.0
  %v5384 = vmax.f32 %v4534, 0.0
  %v5385 = vmax.f32 %v4593, 0.0
  %v5386 = vmax.f32 %v4595, 0.0
  %v5387 = vmax.f32 %v4654, 0.0
  %v5388 = vmax.f32 %v4656, 0.0
  %v5389 = vmax.f32 %v4715, 0.0
  %v5390 = vmax.f32 %v4717, 0.0
  %v5391 = vmax.f32 %v4776, 0.0
  %v5392 = vmax.f32 %v4778, 0.0
  %v5393 = vmax.f32 %v4837, 0.0
  %v5394 = vmax.f32 %v4839, 0.0
  %v5395 = vmax.f32 %v4898, 0.0
  %v5396 = vmax.f32 %v4900, 0.0
  %v5397 = vmax.f32 %v4959, 0.0
  %v5398 = vmax.f32 %v4961, 0.0
  %v5399 = vmax.f32 %v5020, 0.0
  %v5400 = vmax.f32 %v5022, 0.0
  %v5401 = vmax.f32 %v5081, 0.0
  %v5402 = vmax.f32 %v5083, 0.0
  %v5403 = vmax.f32 %v5142, 0.0
  %v5404 = vmax.f32 %v5144, 0.0
  %v5405 = vmax.f32 %v5203, 0.0
  %v5406 = vmax.f32 %v5205, 0.0
  %v5407 = vmax.f32 %v5264, 0.0
  %v5408 = vmax.f32 %v5266, 0.0
  %v5409 = vmax.f32 %v5325, 0.0
  %v5410 = vmax.f32 %v5327, 0.0
  %v5411 = vmax.f32 %v4416, 0.0
  %v5412 = vmax.f32 %v4418, 0.0
  %v5413 = vmax.f32 %v4477, 0.0
  %v5414 = vmax.f32 %v4479, 0.0
  %v5415 = vmax.f32 %v4538, 0.0
  %v5416 = vmax.f32 %v4540, 0.0
  %v5417 = vmax.f32 %v4599, 0.0
  %v5418 = vmax.f32 %v4601, 0.0
  %v5419 = vmax.f32 %v4660, 0.0
  %v5420 = vmax.f32 %v4662, 0.0
  %v5421 = vmax.f32 %v4721, 0.0
  %v5422 = vmax.f32 %v4723, 0.0
  %v5423 = vmax.f32 %v4782, 0.0
  %v5424 = vmax.f32 %v4784, 0.0
  %v5425 = vmax.f32 %v4843, 0.0
  %v5426 = vmax.f32 %v4845, 0.0
  %v5427 = vmax.f32 %v4904, 0.0
  %v5428 = vmax.f32 %v4906, 0.0
  %v5429 = vmax.f32 %v4965, 0.0
  %v5430 = vmax.f32 %v4967, 0.0
  %v5431 = vmax.f32 %v5026, 0.0
  %v5432 = vmax.f32 %v5028, 0.0
  %v5433 = vmax.f32 %v5087, 0.0
  %v5434 = vmax.f32 %v5089, 0.0
  %v5435 = vmax.f32 %v5148, 0.0
  %v5436 = vmax.f32 %v5150, 0.0
  %v5437 = vmax.f32 %v5209, 0.0
  %v5438 = vmax.f32 %v5211, 0.0
  %v5439 = vmax.f32 %v5270, 0.0
  %v5440 = vmax.f32 %v5272, 0.0
  %v5441 = vmax.f32 %v5331, 0.0
  %v5442 = vmax.f32 %v5333, 0.0
  %v5443 = vmax.f32 %v4420, 0.0
  %v5444 = vmax.f32 %v4422, 0.0
  %v5445 = vmax.f32 %v4481, 0.0
  %v5446 = vmax.f32 %v4483, 0.0
  %v5447 = vmax.f32 %v4542, 0.0
  %v5448 = vmax.f32 %v4544, 0.0
  %v5449 = vmax.f32 %v4603, 0.0
  %v5450 = vmax.f32 %v4605, 0.0
  %v5451 = vmax.f32 %v4664, 0.0
  %v5452 = vmax.f32 %v4666, 0.0
  %v5453 = vmax.f32 %v4725, 0.0
  %v5454 = vmax.f32 %v4727, 0.0
  %v5455 = vmax.f32 %v4786, 0.0
  %v5456 = vmax.f32 %v4788, 0.0
  %v5457 = vmax.f32 %v4847, 0.0
  %v5458 = vmax.f32 %v4849, 0.0
  %v5459 = vmax.f32 %v4908, 0.0
  %v5460 = vmax.f32 %v4910, 0.0
  %v5461 = vmax.f32 %v4969, 0.0
  %v5462 = vmax.f32 %v4971, 0.0
  %v5463 = vmax.f32 %v5030, 0.0
  %v5464 = vmax.f32 %v5032, 0.0
  %v5465 = vmax.f32 %v5091, 0.0
  %v5466 = vmax.f32 %v5093, 0.0
  %v5467 = vmax.f32 %v5152, 0.0
  %v5468 = vmax.f32 %v5154, 0.0
  %v5469 = vmax.f32 %v5213, 0.0
  %v5470 = vmax.f32 %v5215, 0.0
  %v5471 = vmax.f32 %v5274, 0.0
  %v5472 = vmax.f32 %v5276, 0.0
  %v5473 = vmax.f32 %v5335, 0.0
  %v5474 = vmax.f32 %v5337, 0.0
  %v5475 = vmax.f32 %v4426, 0.0
  %v5476 = vmax.f32 %v4428, 0.0
  %v5477 = vmax.f32 %v4487, 0.0
  %v5478 = vmax.f32 %v4489, 0.0
  %v5479 = vmax.f32 %v4548, 0.0
  %v5480 = vmax.f32 %v4550, 0.0
  %v5481 = vmax.f32 %v4609, 0.0
  %v5482 = vmax.f32 %v4611, 0.0
  %v5483 = vmax.f32 %v4670, 0.0
  %v5484 = vmax.f32 %v4672, 0.0
  %v5485 = vmax.f32 %v4731, 0.0
  %v5486 = vmax.f32 %v4733, 0.0
  %v5487 = vmax.f32 %v4792, 0.0
  %v5488 = vmax.f32 %v4794, 0.0
  %v5489 = vmax.f32 %v4853, 0.0
  %v5490 = vmax.f32 %v4855, 0.0
  %v5491 = vmax.f32 %v4914, 0.0
  %v5492 = vmax.f32 %v4916, 0.0
  %v5493 = vmax.f32 %v4975, 0.0
  %v5494 = vmax.f32 %v4977, 0.0
  %v5495 = vmax.f32 %v5036, 0.0
  %v5496 = vmax.f32 %v5038, 0.0
  %v5497 = vmax.f32 %v5097, 0.0
  %v5498 = vmax.f32 %v5099, 0.0
  %v5499 = vmax.f32 %v5158, 0.0
  %v5500 = vmax.f32 %v5160, 0.0
  %v5501 = vmax.f32 %v5219, 0.0
  %v5502 = vmax.f32 %v5221, 0.0
  %v5503 = vmax.f32 %v5280, 0.0
  %v5504 = vmax.f32 %v5282, 0.0
  %v5505 = vmax.f32 %v5341, 0.0
  %v5506 = vmax.f32 %v5343, 0.0
  %v5507 = vld [vmem:[%s6] sm:$0xf]
  %v5508 = vld [vmem:[%s6 + $0x4] sm:$0xf]
  %v5509 = vld [vmem:[%s6 + $0x8] sm:$0xf]
  %v5510 = vld [vmem:[%s6 + $0xc] sm:$0xf]
  %v5511 = vpack.c.bf16 %v5379, %v5347
  %v5512 = vpack.c.bf16 %v5380, %v5348
  %v5513 = vpack.c.bf16 %v5381, %v5349
  %v5514 = vpack.c.bf16 %v5382, %v5350
  %v5515 = vpack.c.bf16 %v5383, %v5351
  %v5516 = vpack.c.bf16 %v5384, %v5352
  %v5517 = vpack.c.bf16 %v5385, %v5353
  %v5518 = vpack.c.bf16 %v5386, %v5354
  %v5519 = vpack.c.bf16 %v5387, %v5355
  %v5520 = vpack.c.bf16 %v5388, %v5356
  %v5521 = vpack.c.bf16 %v5389, %v5357
  %v5522 = vpack.c.bf16 %v5390, %v5358
  %v5523 = vpack.c.bf16 %v5391, %v5359
  %v5524 = vpack.c.bf16 %v5392, %v5360
  %v5525 = vpack.c.bf16 %v5393, %v5361
  %v5526 = vpack.c.bf16 %v5394, %v5362
  %v5527 = vpack.c.bf16 %v5395, %v5363
  %v5528 = vpack.c.bf16 %v5396, %v5364
  %v5529 = vpack.c.bf16 %v5397, %v5365
  %v5530 = vpack.c.bf16 %v5398, %v5366
  %v5531 = vpack.c.bf16 %v5399, %v5367
  %v5532 = vpack.c.bf16 %v5400, %v5368
  %v5533 = vpack.c.bf16 %v5401, %v5369
  %v5534 = vpack.c.bf16 %v5402, %v5370
  %v5535 = vpack.c.bf16 %v5403, %v5371
  %v5536 = vpack.c.bf16 %v5404, %v5372
  %v5537 = vpack.c.bf16 %v5405, %v5373
  %v5538 = vpack.c.bf16 %v5406, %v5374
  %v5539 = vpack.c.bf16 %v5407, %v5375
  %v5540 = vpack.c.bf16 %v5408, %v5376
  %v5541 = vpack.c.bf16 %v5409, %v5377
  %v5542 = vpack.c.bf16 %v5410, %v5378
  %v5543 = vpack.c.bf16 %v5443, %v5411
  %v5544 = vpack.c.bf16 %v5444, %v5412
  %v5545 = vpack.c.bf16 %v5445, %v5413
  %v5546 = vpack.c.bf16 %v5446, %v5414
  %v5547 = vpack.c.bf16 %v5447, %v5415
  %v5548 = vpack.c.bf16 %v5448, %v5416
  %v5549 = vpack.c.bf16 %v5449, %v5417
  %v5550 = vpack.c.bf16 %v5450, %v5418
  %v5551 = vpack.c.bf16 %v5451, %v5419
  %v5552 = vpack.c.bf16 %v5452, %v5420
  %v5553 = vpack.c.bf16 %v5453, %v5421
  %v5554 = vpack.c.bf16 %v5454, %v5422
  %v5555 = vpack.c.bf16 %v5455, %v5423
  %v5556 = vpack.c.bf16 %v5456, %v5424
  %v5557 = vpack.c.bf16 %v5457, %v5425
  %v5558 = vpack.c.bf16 %v5458, %v5426
  %v5559 = vpack.c.bf16 %v5459, %v5427
  %v5560 = vpack.c.bf16 %v5460, %v5428
  %v5561 = vpack.c.bf16 %v5461, %v5429
  %v5562 = vpack.c.bf16 %v5462, %v5430
  %v5563 = vpack.c.bf16 %v5463, %v5431
  %v5564 = vpack.c.bf16 %v5464, %v5432
  %v5565 = vpack.c.bf16 %v5465, %v5433
  %v5566 = vpack.c.bf16 %v5466, %v5434
  %v5567 = vpack.c.bf16 %v5467, %v5435
  %v5568 = vpack.c.bf16 %v5468, %v5436
  %v5569 = vpack.c.bf16 %v5469, %v5437
  %v5570 = vpack.c.bf16 %v5470, %v5438
  %v5571 = vpack.c.bf16 %v5471, %v5439
  %v5572 = vpack.c.bf16 %v5472, %v5440
  %v5573 = vpack.c.bf16 %v5473, %v5441
  %v5574 = vpack.c.bf16 %v5474, %v5442
  %v5575 = vpack.c.bf16 %v5475, %v5475
  %v5576 = vpack.c.bf16 %v5476, %v5476
  %v5577 = vpack.c.bf16 %v5477, %v5477
  %v5578 = vpack.c.bf16 %v5478, %v5478
  %v5579 = vpack.c.bf16 %v5479, %v5479
  %v5580 = vpack.c.bf16 %v5480, %v5480
  %v5581 = vpack.c.bf16 %v5481, %v5481
  %v5582 = vpack.c.bf16 %v5482, %v5482
  %v5583 = vpack.c.bf16 %v5483, %v5483
  %v5584 = vpack.c.bf16 %v5484, %v5484
  %v5585 = vpack.c.bf16 %v5485, %v5485
  %v5586 = vpack.c.bf16 %v5486, %v5486
  %v5587 = vpack.c.bf16 %v5487, %v5487
  %v5588 = vpack.c.bf16 %v5488, %v5488
  %v5589 = vpack.c.bf16 %v5489, %v5489
  %v5590 = vpack.c.bf16 %v5490, %v5490
  %v5591 = vpack.c.bf16 %v5491, %v5491
  %v5592 = vpack.c.bf16 %v5492, %v5492
  %v5593 = vpack.c.bf16 %v5493, %v5493
  %v5594 = vpack.c.bf16 %v5494, %v5494
  %v5595 = vpack.c.bf16 %v5495, %v5495
  %v5596 = vpack.c.bf16 %v5496, %v5496
  %v5597 = vpack.c.bf16 %v5497, %v5497
  %v5598 = vpack.c.bf16 %v5498, %v5498
  %v5599 = vpack.c.bf16 %v5499, %v5499
  %v5600 = vpack.c.bf16 %v5500, %v5500
  %v5601 = vpack.c.bf16 %v5501, %v5501
  %v5602 = vpack.c.bf16 %v5502, %v5502
  %v5603 = vpack.c.bf16 %v5503, %v5503
  %v5604 = vpack.c.bf16 %v5504, %v5504
  %v5605 = vpack.c.bf16 %v5505, %v5505
  %v5606 = vpack.c.bf16 %v5506, %v5506
  %v5611 = vunpack.c.l.b16 %v5507
  %v5612 = vunpack.c.l.b16 %v5508
  %v5613 = vunpack.c.l.b16 %v5509
  %v5614 = vunpack.c.l.b16 %v5510
  %v5615 = vpack.c.b16 %v5612, %v5611
  %v5616 = vpack.c.b16 %v5614, %v5613
  %vm5617 = vcmask 269312
  %v5619 = vsel %vm5617, %v5615, 0
  %v5622 = vsel %vm5617, %v5616, 0
  %vm5624 = vcmask 1040384
  %v5625 = vsel 0, 4294967295, 65535
  %v5626 = vsel %vm5624, %v5625, 0
  %v5628 = vand.u32 %v5575, %v5626
  %v5631 = vand.u32 %v5576, %v5626
  %v5634 = vand.u32 %v5577, %v5626
  %v5637 = vand.u32 %v5578, %v5626
  %v5640 = vand.u32 %v5579, %v5626
  %v5643 = vand.u32 %v5580, %v5626
  %v5646 = vand.u32 %v5581, %v5626
  %v5649 = vand.u32 %v5582, %v5626
  %v5652 = vand.u32 %v5583, %v5626
  %v5655 = vand.u32 %v5584, %v5626
  %v5658 = vand.u32 %v5585, %v5626
  %v5661 = vand.u32 %v5586, %v5626
  %v5664 = vand.u32 %v5587, %v5626
  %v5667 = vand.u32 %v5588, %v5626
  %v5670 = vand.u32 %v5589, %v5626
  %v5673 = vand.u32 %v5590, %v5626
  %v5676 = vand.u32 %v5591, %v5626
  %v5679 = vand.u32 %v5592, %v5626
  %v5682 = vand.u32 %v5593, %v5626
  %v5685 = vand.u32 %v5594, %v5626
  %v5688 = vand.u32 %v5595, %v5626
  %v5691 = vand.u32 %v5596, %v5626
  %v5694 = vand.u32 %v5597, %v5626
  %v5697 = vand.u32 %v5598, %v5626
  %v5700 = vand.u32 %v5599, %v5626
  %v5703 = vand.u32 %v5600, %v5626
  %v5706 = vand.u32 %v5601, %v5626
  %v5709 = vand.u32 %v5602, %v5626
  %v5712 = vand.u32 %v5603, %v5626
  %v5715 = vand.u32 %v5604, %v5626
  %v5718 = vand.u32 %v5605, %v5626
  %v5721 = vand.u32 %v5606, %v5626
  %5723 = vmatprep.subr.bf16.mxu0 0
  %5724 = vmatpush1.bf16.msra.mxu0 0
  %5725 = vmatprep.subr.bf16.mxu0 0
  %5726 = vmatpush1.bf16.msra.mxu0 0
  %5727 = vmatprep.subr.bf16.mxu0 0
  %5728 = vmatpush1.bf16.msra.mxu0 0
  %5729 = vmatprep.subr.bf16.mxu0 0
  %5730 = vmatpush1.bf16.msra.mxu0 0
  %5731 = vmatprep.subr.bf16.mxu0 0
  %5732 = vmatpush1.bf16.msra.mxu0 0
  %5733 = vmatprep.subr.bf16.mxu0 %v5631
  %5734 = vmatpush1.bf16.msra.mxu0 %v5628
  %5735 = vmatprep.subr.bf16.mxu0 %v5544
  %5736 = vmatpush1.bf16.msra.mxu0 %v5543
  %5737 = vmatprep.subr.bf16.mxu0 %v5512
  %5738 = vmatpush1.bf16.msra.mxu0 %v5511
  %5739 = vmatprep.subr.bf16.mxu0 0
  %5740 = vmatpush2.bf16.msra.mxu0 0
  %5741 = vmatprep.subr.bf16.mxu0 0
  %5742 = vmatpush2.bf16.msra.mxu0 0
  %5743 = vmatprep.subr.bf16.mxu0 0
  %5744 = vmatpush2.bf16.msra.mxu0 0
  %5745 = vmatprep.subr.bf16.mxu0 0
  %5746 = vmatpush2.bf16.msra.mxu0 0
  %5747 = vmatprep.subr.bf16.mxu0 0
  %5748 = vmatpush2.bf16.msra.mxu0 0
  %5749 = vmatprep.subr.bf16.mxu0 0
  %5750 = vmatpush2.bf16.msra.mxu0 0
  %5751 = vmatprep.subr.bf16.mxu0 0
  %5752 = vmatpush2.bf16.msra.mxu0 0
  %5753 = vmatprep.subr.bf16.mxu0 0
  %5754 = vmatpush2.bf16.msra.mxu0 0
  %5755 = vmatprep.mubr.bf16.mxu0 0
  %5756 = vmatmul.mubr.bf16.gmra.mxu0 %v5619
  %v5757 = vpop.f32.mrf.mxu0
  %v5758 = vadd.f32 0.0, %v5757
  %v5759 = vpop.f32.mrf.mxu0
  %v5760 = vadd.f32 0.0, %v5759
  %v5761 = vpop.f32.mrf.mxu0
  %v5762 = vadd.f32 0.0, %v5761
  %v5763 = vpop.f32.mrf.mxu0
  %v5764 = vadd.f32 0.0, %v5763
  %5765 = vmatprep.mubr.bf16.mxu0 0
  %5766 = vmatmul.mubr.bf16.gmra.mxu0 %v5622
  %v5767 = vpop.f32.mrf.mxu0
  %v5768 = vadd.f32 0.0, %v5767
  %v5769 = vpop.f32.mrf.mxu0
  %v5770 = vadd.f32 0.0, %v5769
  %v5771 = vpop.f32.mrf.mxu0
  %v5772 = vadd.f32 0.0, %v5771
  %v5773 = vpop.f32.mrf.mxu0
  %v5774 = vadd.f32 0.0, %v5773
  %5775 = vdwg.mxu0
  %5776 = vmatprep.subr.bf16.mxu0 0
  %5777 = vmatpush1.bf16.msra.mxu0 0
  %5778 = vmatprep.subr.bf16.mxu0 0
  %5779 = vmatpush1.bf16.msra.mxu0 0
  %5780 = vmatprep.subr.bf16.mxu0 0
  %5781 = vmatpush1.bf16.msra.mxu0 0
  %5782 = vmatprep.subr.bf16.mxu0 0
  %5783 = vmatpush1.bf16.msra.mxu0 0
  %5784 = vmatprep.subr.bf16.mxu0 0
  %5785 = vmatpush1.bf16.msra.mxu0 0
  %5786 = vmatprep.subr.bf16.mxu0 %v5637
  %5787 = vmatpush1.bf16.msra.mxu0 %v5634
  %5788 = vmatprep.subr.bf16.mxu0 %v5546
  %5789 = vmatpush1.bf16.msra.mxu0 %v5545
  %5790 = vmatprep.subr.bf16.mxu0 %v5514
  %5791 = vmatpush1.bf16.msra.mxu0 %v5513
  %5792 = vmatprep.subr.bf16.mxu0 0
  %5793 = vmatpush2.bf16.msra.mxu0 0
  %5794 = vmatprep.subr.bf16.mxu0 0
  %5795 = vmatpush2.bf16.msra.mxu0 0
  %5796 = vmatprep.subr.bf16.mxu0 0
  %5797 = vmatpush2.bf16.msra.mxu0 0
  %5798 = vmatprep.subr.bf16.mxu0 0
  %5799 = vmatpush2.bf16.msra.mxu0 0
  %5800 = vmatprep.subr.bf16.mxu0 0
  %5801 = vmatpush2.bf16.msra.mxu0 0
  %5802 = vmatprep.subr.bf16.mxu0 0
  %5803 = vmatpush2.bf16.msra.mxu0 0
  %5804 = vmatprep.subr.bf16.mxu0 0
  %5805 = vmatpush2.bf16.msra.mxu0 0
  %5806 = vmatprep.subr.bf16.mxu0 0
  %5807 = vmatpush2.bf16.msra.mxu0 0
  %5808 = vmatprep.mubr.bf16.mxu0 0
  %5809 = vmatmul.mubr.bf16.gmra.mxu0 %v5619
  %v5810 = vpop.f32.mrf.mxu0
  %v5811 = vadd.f32 0.0, %v5810
  %v5812 = vpop.f32.mrf.mxu0
  %v5813 = vadd.f32 0.0, %v5812
  %v5814 = vpop.f32.mrf.mxu0
  %v5815 = vadd.f32 0.0, %v5814
  %v5816 = vpop.f32.mrf.mxu0
  %v5817 = vadd.f32 0.0, %v5816
  %5818 = vmatprep.mubr.bf16.mxu0 0
  %5819 = vmatmul.mubr.bf16.gmra.mxu0 %v5622
  %v5820 = vpop.f32.mrf.mxu0
  %v5821 = vadd.f32 0.0, %v5820
  %v5822 = vpop.f32.mrf.mxu0
  %v5823 = vadd.f32 0.0, %v5822
  %v5824 = vpop.f32.mrf.mxu0
  %v5825 = vadd.f32 0.0, %v5824
  %v5826 = vpop.f32.mrf.mxu0
  %v5827 = vadd.f32 0.0, %v5826
  %5828 = vdwg.mxu0
  %5829 = vmatprep.subr.bf16.mxu0 0
  %5830 = vmatpush1.bf16.msra.mxu0 0
  %5831 = vmatprep.subr.bf16.mxu0 0
  %5832 = vmatpush1.bf16.msra.mxu0 0
  %5833 = vmatprep.subr.bf16.mxu0 0
  %5834 = vmatpush1.bf16.msra.mxu0 0
  %5835 = vmatprep.subr.bf16.mxu0 0
  %5836 = vmatpush1.bf16.msra.mxu0 0
  %5837 = vmatprep.subr.bf16.mxu0 0
  %5838 = vmatpush1.bf16.msra.mxu0 0
  %5839 = vmatprep.subr.bf16.mxu0 %v5643
  %5840 = vmatpush1.bf16.msra.mxu0 %v5640
  %5841 = vmatprep.subr.bf16.mxu0 %v5548
  %5842 = vmatpush1.bf16.msra.mxu0 %v5547
  %5843 = vmatprep.subr.bf16.mxu0 %v5516
  %5844 = vmatpush1.bf16.msra.mxu0 %v5515
  %5845 = vmatprep.subr.bf16.mxu0 0
  %5846 = vmatpush2.bf16.msra.mxu0 0
  %5847 = vmatprep.subr.bf16.mxu0 0
  %5848 = vmatpush2.bf16.msra.mxu0 0
  %5849 = vmatprep.subr.bf16.mxu0 0
  %5850 = vmatpush2.bf16.msra.mxu0 0
  %5851 = vmatprep.subr.bf16.mxu0 0
  %5852 = vmatpush2.bf16.msra.mxu0 0
  %5853 = vmatprep.subr.bf16.mxu0 0
  %5854 = vmatpush2.bf16.msra.mxu0 0
  %5855 = vmatprep.subr.bf16.mxu0 0
  %5856 = vmatpush2.bf16.msra.mxu0 0
  %5857 = vmatprep.subr.bf16.mxu0 0
  %5858 = vmatpush2.bf16.msra.mxu0 0
  %5859 = vmatprep.subr.bf16.mxu0 0
  %5860 = vmatpush2.bf16.msra.mxu0 0
  %5861 = vmatprep.mubr.bf16.mxu0 0
  %5862 = vmatmul.mubr.bf16.gmra.mxu0 %v5619
  %v5863 = vpop.f32.mrf.mxu0
  %v5864 = vadd.f32 0.0, %v5863
  %v5865 = vpop.f32.mrf.mxu0
  %v5866 = vadd.f32 0.0, %v5865
  %v5867 = vpop.f32.mrf.mxu0
  %v5868 = vadd.f32 0.0, %v5867
  %v5869 = vpop.f32.mrf.mxu0
  %v5870 = vadd.f32 0.0, %v5869
  %5871 = vmatprep.mubr.bf16.mxu0 0
  %5872 = vmatmul.mubr.bf16.gmra.mxu0 %v5622
  %v5873 = vpop.f32.mrf.mxu0
  %v5874 = vadd.f32 0.0, %v5873
  %v5875 = vpop.f32.mrf.mxu0
  %v5876 = vadd.f32 0.0, %v5875
  %v5877 = vpop.f32.mrf.mxu0
  %v5878 = vadd.f32 0.0, %v5877
  %v5879 = vpop.f32.mrf.mxu0
  %v5880 = vadd.f32 0.0, %v5879
  %5881 = vdwg.mxu0
  %5882 = vmatprep.subr.bf16.mxu0 0
  %5883 = vmatpush1.bf16.msra.mxu0 0
  %5884 = vmatprep.subr.bf16.mxu0 0
  %5885 = vmatpush1.bf16.msra.mxu0 0
  %5886 = vmatprep.subr.bf16.mxu0 0
  %5887 = vmatpush1.bf16.msra.mxu0 0
  %5888 = vmatprep.subr.bf16.mxu0 0
  %5889 = vmatpush1.bf16.msra.mxu0 0
  %5890 = vmatprep.subr.bf16.mxu0 0
  %5891 = vmatpush1.bf16.msra.mxu0 0
  %5892 = vmatprep.subr.bf16.mxu0 %v5649
  %5893 = vmatpush1.bf16.msra.mxu0 %v5646
  %5894 = vmatprep.subr.bf16.mxu0 %v5550
  %5895 = vmatpush1.bf16.msra.mxu0 %v5549
  %5896 = vmatprep.subr.bf16.mxu0 %v5518
  %5897 = vmatpush1.bf16.msra.mxu0 %v5517
  %5898 = vmatprep.subr.bf16.mxu0 0
  %5899 = vmatpush2.bf16.msra.mxu0 0
  %5900 = vmatprep.subr.bf16.mxu0 0
  %5901 = vmatpush2.bf16.msra.mxu0 0
  %5902 = vmatprep.subr.bf16.mxu0 0
  %5903 = vmatpush2.bf16.msra.mxu0 0
  %5904 = vmatprep.subr.bf16.mxu0 0
  %5905 = vmatpush2.bf16.msra.mxu0 0
  %5906 = vmatprep.subr.bf16.mxu0 0
  %5907 = vmatpush2.bf16.msra.mxu0 0
  %5908 = vmatprep.subr.bf16.mxu0 0
  %5909 = vmatpush2.bf16.msra.mxu0 0
  %5910 = vmatprep.subr.bf16.mxu0 0
  %5911 = vmatpush2.bf16.msra.mxu0 0
  %5912 = vmatprep.subr.bf16.mxu0 0
  %5913 = vmatpush2.bf16.msra.mxu0 0
  %5914 = vmatprep.mubr.bf16.mxu0 0
  %5915 = vmatmul.mubr.bf16.gmra.mxu0 %v5619
  %v5916 = vpop.f32.mrf.mxu0
  %v5917 = vadd.f32 0.0, %v5916
  %v5918 = vpop.f32.mrf.mxu0
  %v5919 = vadd.f32 0.0, %v5918
  %v5920 = vpop.f32.mrf.mxu0
  %v5921 = vadd.f32 0.0, %v5920
  %v5922 = vpop.f32.mrf.mxu0
  %v5923 = vadd.f32 0.0, %v5922
  %5924 = vmatprep.mubr.bf16.mxu0 0
  %5925 = vmatmul.mubr.bf16.gmra.mxu0 %v5622
  %v5926 = vpop.f32.mrf.mxu0
  %v5927 = vadd.f32 0.0, %v5926
  %v5928 = vpop.f32.mrf.mxu0
  %v5929 = vadd.f32 0.0, %v5928
  %v5930 = vpop.f32.mrf.mxu0
  %v5931 = vadd.f32 0.0, %v5930
  %v5932 = vpop.f32.mrf.mxu0
  %v5933 = vadd.f32 0.0, %v5932
  %5934 = vdwg.mxu0
  %5935 = vmatprep.subr.bf16.mxu0 0
  %5936 = vmatpush1.bf16.msra.mxu0 0
  %5937 = vmatprep.subr.bf16.mxu0 0
  %5938 = vmatpush1.bf16.msra.mxu0 0
  %5939 = vmatprep.subr.bf16.mxu0 0
  %5940 = vmatpush1.bf16.msra.mxu0 0
  %5941 = vmatprep.subr.bf16.mxu0 0
  %5942 = vmatpush1.bf16.msra.mxu0 0
  %5943 = vmatprep.subr.bf16.mxu0 0
  %5944 = vmatpush1.bf16.msra.mxu0 0
  %5945 = vmatprep.subr.bf16.mxu0 %v5655
  %5946 = vmatpush1.bf16.msra.mxu0 %v5652
  %5947 = vmatprep.subr.bf16.mxu0 %v5552
  %5948 = vmatpush1.bf16.msra.mxu0 %v5551
  %5949 = vmatprep.subr.bf16.mxu0 %v5520
  %5950 = vmatpush1.bf16.msra.mxu0 %v5519
  %5951 = vmatprep.subr.bf16.mxu0 0
  %5952 = vmatpush2.bf16.msra.mxu0 0
  %5953 = vmatprep.subr.bf16.mxu0 0
  %5954 = vmatpush2.bf16.msra.mxu0 0
  %5955 = vmatprep.subr.bf16.mxu0 0
  %5956 = vmatpush2.bf16.msra.mxu0 0
  %5957 = vmatprep.subr.bf16.mxu0 0
  %5958 = vmatpush2.bf16.msra.mxu0 0
  %5959 = vmatprep.subr.bf16.mxu0 0
  %5960 = vmatpush2.bf16.msra.mxu0 0
  %5961 = vmatprep.subr.bf16.mxu0 0
  %5962 = vmatpush2.bf16.msra.mxu0 0
  %5963 = vmatprep.subr.bf16.mxu0 0
  %5964 = vmatpush2.bf16.msra.mxu0 0
  %5965 = vmatprep.subr.bf16.mxu0 0
  %5966 = vmatpush2.bf16.msra.mxu0 0
  %5967 = vmatprep.mubr.bf16.mxu0 0
  %5968 = vmatmul.mubr.bf16.gmra.mxu0 %v5619
  %v5969 = vpop.f32.mrf.mxu0
  %v5970 = vadd.f32 0.0, %v5969
  %v5971 = vpop.f32.mrf.mxu0
  %v5972 = vadd.f32 0.0, %v5971
  %v5973 = vpop.f32.mrf.mxu0
  %v5974 = vadd.f32 0.0, %v5973
  %v5975 = vpop.f32.mrf.mxu0
  %v5976 = vadd.f32 0.0, %v5975
  %5977 = vmatprep.mubr.bf16.mxu0 0
  %5978 = vmatmul.mubr.bf16.gmra.mxu0 %v5622
  %v5979 = vpop.f32.mrf.mxu0
  %v5980 = vadd.f32 0.0, %v5979
  %v5981 = vpop.f32.mrf.mxu0
  %v5982 = vadd.f32 0.0, %v5981
  %v5983 = vpop.f32.mrf.mxu0
  %v5984 = vadd.f32 0.0, %v5983
  %v5985 = vpop.f32.mrf.mxu0
  %v5986 = vadd.f32 0.0, %v5985
  %5987 = vdwg.mxu0
  %5988 = vmatprep.subr.bf16.mxu0 0
  %5989 = vmatpush1.bf16.msra.mxu0 0
  %5990 = vmatprep.subr.bf16.mxu0 0
  %5991 = vmatpush1.bf16.msra.mxu0 0
  %5992 = vmatprep.subr.bf16.mxu0 0
  %5993 = vmatpush1.bf16.msra.mxu0 0
  %5994 = vmatprep.subr.bf16.mxu0 0
  %5995 = vmatpush1.bf16.msra.mxu0 0
  %5996 = vmatprep.subr.bf16.mxu0 0
  %5997 = vmatpush1.bf16.msra.mxu0 0
  %5998 = vmatprep.subr.bf16.mxu0 %v5661
  %5999 = vmatpush1.bf16.msra.mxu0 %v5658
  %6000 = vmatprep.subr.bf16.mxu0 %v5554
  %6001 = vmatpush1.bf16.msra.mxu0 %v5553
  %6002 = vmatprep.subr.bf16.mxu0 %v5522
  %6003 = vmatpush1.bf16.msra.mxu0 %v5521
  %6004 = vmatprep.subr.bf16.mxu0 0
  %6005 = vmatpush2.bf16.msra.mxu0 0
  %6006 = vmatprep.subr.bf16.mxu0 0
  %6007 = vmatpush2.bf16.msra.mxu0 0
  %6008 = vmatprep.subr.bf16.mxu0 0
  %6009 = vmatpush2.bf16.msra.mxu0 0
  %6010 = vmatprep.subr.bf16.mxu0 0
  %6011 = vmatpush2.bf16.msra.mxu0 0
  %6012 = vmatprep.subr.bf16.mxu0 0
  %6013 = vmatpush2.bf16.msra.mxu0 0
  %6014 = vmatprep.subr.bf16.mxu0 0
  %6015 = vmatpush2.bf16.msra.mxu0 0
  %6016 = vmatprep.subr.bf16.mxu0 0
  %6017 = vmatpush2.bf16.msra.mxu0 0
  %6018 = vmatprep.subr.bf16.mxu0 0
  %6019 = vmatpush2.bf16.msra.mxu0 0
  %6020 = vmatprep.mubr.bf16.mxu0 0
  %6021 = vmatmul.mubr.bf16.gmra.mxu0 %v5619
  %v6022 = vpop.f32.mrf.mxu0
  %v6023 = vadd.f32 0.0, %v6022
  %v6024 = vpop.f32.mrf.mxu0
  %v6025 = vadd.f32 0.0, %v6024
  %v6026 = vpop.f32.mrf.mxu0
  %v6027 = vadd.f32 0.0, %v6026
  %v6028 = vpop.f32.mrf.mxu0
  %v6029 = vadd.f32 0.0, %v6028
  %6030 = vmatprep.mubr.bf16.mxu0 0
  %6031 = vmatmul.mubr.bf16.gmra.mxu0 %v5622
  %v6032 = vpop.f32.mrf.mxu0
  %v6033 = vadd.f32 0.0, %v6032
  %v6034 = vpop.f32.mrf.mxu0
  %v6035 = vadd.f32 0.0, %v6034
  %v6036 = vpop.f32.mrf.mxu0
  %v6037 = vadd.f32 0.0, %v6036
  %v6038 = vpop.f32.mrf.mxu0
  %v6039 = vadd.f32 0.0, %v6038
  %6040 = vdwg.mxu0
  %6041 = vmatprep.subr.bf16.mxu0 0
  %6042 = vmatpush1.bf16.msra.mxu0 0
  %6043 = vmatprep.subr.bf16.mxu0 0
  %6044 = vmatpush1.bf16.msra.mxu0 0
  %6045 = vmatprep.subr.bf16.mxu0 0
  %6046 = vmatpush1.bf16.msra.mxu0 0
  %6047 = vmatprep.subr.bf16.mxu0 0
  %6048 = vmatpush1.bf16.msra.mxu0 0
  %6049 = vmatprep.subr.bf16.mxu0 0
  %6050 = vmatpush1.bf16.msra.mxu0 0
  %6051 = vmatprep.subr.bf16.mxu0 %v5667
  %6052 = vmatpush1.bf16.msra.mxu0 %v5664
  %6053 = vmatprep.subr.bf16.mxu0 %v5556
  %6054 = vmatpush1.bf16.msra.mxu0 %v5555
  %6055 = vmatprep.subr.bf16.mxu0 %v5524
  %6056 = vmatpush1.bf16.msra.mxu0 %v5523
  %6057 = vmatprep.subr.bf16.mxu0 0
  %6058 = vmatpush2.bf16.msra.mxu0 0
  %6059 = vmatprep.subr.bf16.mxu0 0
  %6060 = vmatpush2.bf16.msra.mxu0 0
  %6061 = vmatprep.subr.bf16.mxu0 0
  %6062 = vmatpush2.bf16.msra.mxu0 0
  %6063 = vmatprep.subr.bf16.mxu0 0
  %6064 = vmatpush2.bf16.msra.mxu0 0
  %6065 = vmatprep.subr.bf16.mxu0 0
  %6066 = vmatpush2.bf16.msra.mxu0 0
  %6067 = vmatprep.subr.bf16.mxu0 0
  %6068 = vmatpush2.bf16.msra.mxu0 0
  %6069 = vmatprep.subr.bf16.mxu0 0
  %6070 = vmatpush2.bf16.msra.mxu0 0
  %6071 = vmatprep.subr.bf16.mxu0 0
  %6072 = vmatpush2.bf16.msra.mxu0 0
  %6073 = vmatprep.mubr.bf16.mxu0 0
  %6074 = vmatmul.mubr.bf16.gmra.mxu0 %v5619
  %v6075 = vpop.f32.mrf.mxu0
  %v6076 = vadd.f32 0.0, %v6075
  %v6077 = vpop.f32.mrf.mxu0
  %v6078 = vadd.f32 0.0, %v6077
  %v6079 = vpop.f32.mrf.mxu0
  %v6080 = vadd.f32 0.0, %v6079
  %v6081 = vpop.f32.mrf.mxu0
  %v6082 = vadd.f32 0.0, %v6081
  %6083 = vmatprep.mubr.bf16.mxu0 0
  %6084 = vmatmul.mubr.bf16.gmra.mxu0 %v5622
  %v6085 = vpop.f32.mrf.mxu0
  %v6086 = vadd.f32 0.0, %v6085
  %v6087 = vpop.f32.mrf.mxu0
  %v6088 = vadd.f32 0.0, %v6087
  %v6089 = vpop.f32.mrf.mxu0
  %v6090 = vadd.f32 0.0, %v6089
  %v6091 = vpop.f32.mrf.mxu0
  %v6092 = vadd.f32 0.0, %v6091
  %6093 = vdwg.mxu0
  %6094 = vmatprep.subr.bf16.mxu0 0
  %6095 = vmatpush1.bf16.msra.mxu0 0
  %6096 = vmatprep.subr.bf16.mxu0 0
  %6097 = vmatpush1.bf16.msra.mxu0 0
  %6098 = vmatprep.subr.bf16.mxu0 0
  %6099 = vmatpush1.bf16.msra.mxu0 0
  %6100 = vmatprep.subr.bf16.mxu0 0
  %6101 = vmatpush1.bf16.msra.mxu0 0
  %6102 = vmatprep.subr.bf16.mxu0 0
  %6103 = vmatpush1.bf16.msra.mxu0 0
  %6104 = vmatprep.subr.bf16.mxu0 %v5673
  %6105 = vmatpush1.bf16.msra.mxu0 %v5670
  %6106 = vmatprep.subr.bf16.mxu0 %v5558
  %6107 = vmatpush1.bf16.msra.mxu0 %v5557
  %6108 = vmatprep.subr.bf16.mxu0 %v5526
  %6109 = vmatpush1.bf16.msra.mxu0 %v5525
  %6110 = vmatprep.subr.bf16.mxu0 0
  %6111 = vmatpush2.bf16.msra.mxu0 0
  %6112 = vmatprep.subr.bf16.mxu0 0
  %6113 = vmatpush2.bf16.msra.mxu0 0
  %6114 = vmatprep.subr.bf16.mxu0 0
  %6115 = vmatpush2.bf16.msra.mxu0 0
  %6116 = vmatprep.subr.bf16.mxu0 0
  %6117 = vmatpush2.bf16.msra.mxu0 0
  %6118 = vmatprep.subr.bf16.mxu0 0
  %6119 = vmatpush2.bf16.msra.mxu0 0
  %6120 = vmatprep.subr.bf16.mxu0 0
  %6121 = vmatpush2.bf16.msra.mxu0 0
  %6122 = vmatprep.subr.bf16.mxu0 0
  %6123 = vmatpush2.bf16.msra.mxu0 0
  %6124 = vmatprep.subr.bf16.mxu0 0
  %6125 = vmatpush2.bf16.msra.mxu0 0
  %6126 = vmatprep.mubr.bf16.mxu0 0
  %6127 = vmatmul.mubr.bf16.gmra.mxu0 %v5619
  %v6128 = vpop.f32.mrf.mxu0
  %v6129 = vadd.f32 0.0, %v6128
  %v6130 = vpop.f32.mrf.mxu0
  %v6131 = vadd.f32 0.0, %v6130
  %v6132 = vpop.f32.mrf.mxu0
  %v6133 = vadd.f32 0.0, %v6132
  %v6134 = vpop.f32.mrf.mxu0
  %v6135 = vadd.f32 0.0, %v6134
  %6136 = vmatprep.mubr.bf16.mxu0 0
  %6137 = vmatmul.mubr.bf16.gmra.mxu0 %v5622
  %v6138 = vpop.f32.mrf.mxu0
  %v6139 = vadd.f32 0.0, %v6138
  %v6140 = vpop.f32.mrf.mxu0
  %v6141 = vadd.f32 0.0, %v6140
  %v6142 = vpop.f32.mrf.mxu0
  %v6143 = vadd.f32 0.0, %v6142
  %v6144 = vpop.f32.mrf.mxu0
  %v6145 = vadd.f32 0.0, %v6144
  %6146 = vdwg.mxu0
  %6147 = vmatprep.subr.bf16.mxu0 0
  %6148 = vmatpush1.bf16.msra.mxu0 0
  %6149 = vmatprep.subr.bf16.mxu0 0
  %6150 = vmatpush1.bf16.msra.mxu0 0
  %6151 = vmatprep.subr.bf16.mxu0 0
  %6152 = vmatpush1.bf16.msra.mxu0 0
  %6153 = vmatprep.subr.bf16.mxu0 0
  %6154 = vmatpush1.bf16.msra.mxu0 0
  %6155 = vmatprep.subr.bf16.mxu0 0
  %6156 = vmatpush1.bf16.msra.mxu0 0
  %6157 = vmatprep.subr.bf16.mxu0 %v5679
  %6158 = vmatpush1.bf16.msra.mxu0 %v5676
  %6159 = vmatprep.subr.bf16.mxu0 %v5560
  %6160 = vmatpush1.bf16.msra.mxu0 %v5559
  %6161 = vmatprep.subr.bf16.mxu0 %v5528
  %6162 = vmatpush1.bf16.msra.mxu0 %v5527
  %6163 = vmatprep.subr.bf16.mxu0 0
  %6164 = vmatpush2.bf16.msra.mxu0 0
  %6165 = vmatprep.subr.bf16.mxu0 0
  %6166 = vmatpush2.bf16.msra.mxu0 0
  %6167 = vmatprep.subr.bf16.mxu0 0
  %6168 = vmatpush2.bf16.msra.mxu0 0
  %6169 = vmatprep.subr.bf16.mxu0 0
  %6170 = vmatpush2.bf16.msra.mxu0 0
  %6171 = vmatprep.subr.bf16.mxu0 0
  %6172 = vmatpush2.bf16.msra.mxu0 0
  %6173 = vmatprep.subr.bf16.mxu0 0
  %6174 = vmatpush2.bf16.msra.mxu0 0
  %6175 = vmatprep.subr.bf16.mxu0 0
  %6176 = vmatpush2.bf16.msra.mxu0 0
  %6177 = vmatprep.subr.bf16.mxu0 0
  %6178 = vmatpush2.bf16.msra.mxu0 0
  %6179 = vmatprep.mubr.bf16.mxu0 0
  %6180 = vmatmul.mubr.bf16.gmra.mxu0 %v5619
  %v6181 = vpop.f32.mrf.mxu0
  %v6182 = vadd.f32 0.0, %v6181
  %v6183 = vpop.f32.mrf.mxu0
  %v6184 = vadd.f32 0.0, %v6183
  %v6185 = vpop.f32.mrf.mxu0
  %v6186 = vadd.f32 0.0, %v6185
  %v6187 = vpop.f32.mrf.mxu0
  %v6188 = vadd.f32 0.0, %v6187
  %6189 = vmatprep.mubr.bf16.mxu0 0
  %6190 = vmatmul.mubr.bf16.gmra.mxu0 %v5622
  %v6191 = vpop.f32.mrf.mxu0
  %v6192 = vadd.f32 0.0, %v6191
  %v6193 = vpop.f32.mrf.mxu0
  %v6194 = vadd.f32 0.0, %v6193
  %v6195 = vpop.f32.mrf.mxu0
  %v6196 = vadd.f32 0.0, %v6195
  %v6197 = vpop.f32.mrf.mxu0
  %v6198 = vadd.f32 0.0, %v6197
  %6199 = vdwg.mxu0
  %6200 = vmatprep.subr.bf16.mxu0 0
  %6201 = vmatpush1.bf16.msra.mxu0 0
  %6202 = vmatprep.subr.bf16.mxu0 0
  %6203 = vmatpush1.bf16.msra.mxu0 0
  %6204 = vmatprep.subr.bf16.mxu0 0
  %6205 = vmatpush1.bf16.msra.mxu0 0
  %6206 = vmatprep.subr.bf16.mxu0 0
  %6207 = vmatpush1.bf16.msra.mxu0 0
  %6208 = vmatprep.subr.bf16.mxu0 0
  %6209 = vmatpush1.bf16.msra.mxu0 0
  %6210 = vmatprep.subr.bf16.mxu0 %v5685
  %6211 = vmatpush1.bf16.msra.mxu0 %v5682
  %6212 = vmatprep.subr.bf16.mxu0 %v5562
  %6213 = vmatpush1.bf16.msra.mxu0 %v5561
  %6214 = vmatprep.subr.bf16.mxu0 %v5530
  %6215 = vmatpush1.bf16.msra.mxu0 %v5529
  %6216 = vmatprep.subr.bf16.mxu0 0
  %6217 = vmatpush2.bf16.msra.mxu0 0
  %6218 = vmatprep.subr.bf16.mxu0 0
  %6219 = vmatpush2.bf16.msra.mxu0 0
  %6220 = vmatprep.subr.bf16.mxu0 0
  %6221 = vmatpush2.bf16.msra.mxu0 0
  %6222 = vmatprep.subr.bf16.mxu0 0
  %6223 = vmatpush2.bf16.msra.mxu0 0
  %6224 = vmatprep.subr.bf16.mxu0 0
  %6225 = vmatpush2.bf16.msra.mxu0 0
  %6226 = vmatprep.subr.bf16.mxu0 0
  %6227 = vmatpush2.bf16.msra.mxu0 0
  %6228 = vmatprep.subr.bf16.mxu0 0
  %6229 = vmatpush2.bf16.msra.mxu0 0
  %6230 = vmatprep.subr.bf16.mxu0 0
  %6231 = vmatpush2.bf16.msra.mxu0 0
  %6232 = vmatprep.mubr.bf16.mxu0 0
  %6233 = vmatmul.mubr.bf16.gmra.mxu0 %v5619
  %v6234 = vpop.f32.mrf.mxu0
  %v6235 = vadd.f32 0.0, %v6234
  %v6236 = vpop.f32.mrf.mxu0
  %v6237 = vadd.f32 0.0, %v6236
  %v6238 = vpop.f32.mrf.mxu0
  %v6239 = vadd.f32 0.0, %v6238
  %v6240 = vpop.f32.mrf.mxu0
  %v6241 = vadd.f32 0.0, %v6240
  %6242 = vmatprep.mubr.bf16.mxu0 0
  %6243 = vmatmul.mubr.bf16.gmra.mxu0 %v5622
  %v6244 = vpop.f32.mrf.mxu0
  %v6245 = vadd.f32 0.0, %v6244
  %v6246 = vpop.f32.mrf.mxu0
  %v6247 = vadd.f32 0.0, %v6246
  %v6248 = vpop.f32.mrf.mxu0
  %v6249 = vadd.f32 0.0, %v6248
  %v6250 = vpop.f32.mrf.mxu0
  %v6251 = vadd.f32 0.0, %v6250
  %6252 = vdwg.mxu0
  %6253 = vmatprep.subr.bf16.mxu0 0
  %6254 = vmatpush1.bf16.msra.mxu0 0
  %6255 = vmatprep.subr.bf16.mxu0 0
  %6256 = vmatpush1.bf16.msra.mxu0 0
  %6257 = vmatprep.subr.bf16.mxu0 0
  %6258 = vmatpush1.bf16.msra.mxu0 0
  %6259 = vmatprep.subr.bf16.mxu0 0
  %6260 = vmatpush1.bf16.msra.mxu0 0
  %6261 = vmatprep.subr.bf16.mxu0 0
  %6262 = vmatpush1.bf16.msra.mxu0 0
  %6263 = vmatprep.subr.bf16.mxu0 %v5691
  %6264 = vmatpush1.bf16.msra.mxu0 %v5688
  %6265 = vmatprep.subr.bf16.mxu0 %v5564
  %6266 = vmatpush1.bf16.msra.mxu0 %v5563
  %6267 = vmatprep.subr.bf16.mxu0 %v5532
  %6268 = vmatpush1.bf16.msra.mxu0 %v5531
  %6269 = vmatprep.subr.bf16.mxu0 0
  %6270 = vmatpush2.bf16.msra.mxu0 0
  %6271 = vmatprep.subr.bf16.mxu0 0
  %6272 = vmatpush2.bf16.msra.mxu0 0
  %6273 = vmatprep.subr.bf16.mxu0 0
  %6274 = vmatpush2.bf16.msra.mxu0 0
  %6275 = vmatprep.subr.bf16.mxu0 0
  %6276 = vmatpush2.bf16.msra.mxu0 0
  %6277 = vmatprep.subr.bf16.mxu0 0
  %6278 = vmatpush2.bf16.msra.mxu0 0
  %6279 = vmatprep.subr.bf16.mxu0 0
  %6280 = vmatpush2.bf16.msra.mxu0 0
  %6281 = vmatprep.subr.bf16.mxu0 0
  %6282 = vmatpush2.bf16.msra.mxu0 0
  %6283 = vmatprep.subr.bf16.mxu0 0
  %6284 = vmatpush2.bf16.msra.mxu0 0
  %6285 = vmatprep.mubr.bf16.mxu0 0
  %6286 = vmatmul.mubr.bf16.gmra.mxu0 %v5619
  %v6287 = vpop.f32.mrf.mxu0
  %v6288 = vadd.f32 0.0, %v6287
  %v6289 = vpop.f32.mrf.mxu0
  %v6290 = vadd.f32 0.0, %v6289
  %v6291 = vpop.f32.mrf.mxu0
  %v6292 = vadd.f32 0.0, %v6291
  %v6293 = vpop.f32.mrf.mxu0
  %v6294 = vadd.f32 0.0, %v6293
  %6295 = vmatprep.mubr.bf16.mxu0 0
  %6296 = vmatmul.mubr.bf16.gmra.mxu0 %v5622
  %v6297 = vpop.f32.mrf.mxu0
  %v6298 = vadd.f32 0.0, %v6297
  %v6299 = vpop.f32.mrf.mxu0
  %v6300 = vadd.f32 0.0, %v6299
  %v6301 = vpop.f32.mrf.mxu0
  %v6302 = vadd.f32 0.0, %v6301
  %v6303 = vpop.f32.mrf.mxu0
  %v6304 = vadd.f32 0.0, %v6303
  %6305 = vdwg.mxu0
  %6306 = vmatprep.subr.bf16.mxu0 0
  %6307 = vmatpush1.bf16.msra.mxu0 0
  %6308 = vmatprep.subr.bf16.mxu0 0
  %6309 = vmatpush1.bf16.msra.mxu0 0
  %6310 = vmatprep.subr.bf16.mxu0 0
  %6311 = vmatpush1.bf16.msra.mxu0 0
  %6312 = vmatprep.subr.bf16.mxu0 0
  %6313 = vmatpush1.bf16.msra.mxu0 0
  %6314 = vmatprep.subr.bf16.mxu0 0
  %6315 = vmatpush1.bf16.msra.mxu0 0
  %6316 = vmatprep.subr.bf16.mxu0 %v5697
  %6317 = vmatpush1.bf16.msra.mxu0 %v5694
  %6318 = vmatprep.subr.bf16.mxu0 %v5566
  %6319 = vmatpush1.bf16.msra.mxu0 %v5565
  %6320 = vmatprep.subr.bf16.mxu0 %v5534
  %6321 = vmatpush1.bf16.msra.mxu0 %v5533
  %6322 = vmatprep.subr.bf16.mxu0 0
  %6323 = vmatpush2.bf16.msra.mxu0 0
  %6324 = vmatprep.subr.bf16.mxu0 0
  %6325 = vmatpush2.bf16.msra.mxu0 0
  %6326 = vmatprep.subr.bf16.mxu0 0
  %6327 = vmatpush2.bf16.msra.mxu0 0
  %6328 = vmatprep.subr.bf16.mxu0 0
  %6329 = vmatpush2.bf16.msra.mxu0 0
  %6330 = vmatprep.subr.bf16.mxu0 0
  %6331 = vmatpush2.bf16.msra.mxu0 0
  %6332 = vmatprep.subr.bf16.mxu0 0
  %6333 = vmatpush2.bf16.msra.mxu0 0
  %6334 = vmatprep.subr.bf16.mxu0 0
  %6335 = vmatpush2.bf16.msra.mxu0 0
  %6336 = vmatprep.subr.bf16.mxu0 0
  %6337 = vmatpush2.bf16.msra.mxu0 0
  %6338 = vmatprep.mubr.bf16.mxu0 0
  %6339 = vmatmul.mubr.bf16.gmra.mxu0 %v5619
  %v6340 = vpop.f32.mrf.mxu0
  %v6341 = vadd.f32 0.0, %v6340
  %v6342 = vpop.f32.mrf.mxu0
  %v6343 = vadd.f32 0.0, %v6342
  %v6344 = vpop.f32.mrf.mxu0
  %v6345 = vadd.f32 0.0, %v6344
  %v6346 = vpop.f32.mrf.mxu0
  %v6347 = vadd.f32 0.0, %v6346
  %6348 = vmatprep.mubr.bf16.mxu0 0
  %6349 = vmatmul.mubr.bf16.gmra.mxu0 %v5622
  %v6350 = vpop.f32.mrf.mxu0
  %v6351 = vadd.f32 0.0, %v6350
  %v6352 = vpop.f32.mrf.mxu0
  %v6353 = vadd.f32 0.0, %v6352
  %v6354 = vpop.f32.mrf.mxu0
  %v6355 = vadd.f32 0.0, %v6354
  %v6356 = vpop.f32.mrf.mxu0
  %v6357 = vadd.f32 0.0, %v6356
  %6358 = vdwg.mxu0
  %6359 = vmatprep.subr.bf16.mxu0 0
  %6360 = vmatpush1.bf16.msra.mxu0 0
  %6361 = vmatprep.subr.bf16.mxu0 0
  %6362 = vmatpush1.bf16.msra.mxu0 0
  %6363 = vmatprep.subr.bf16.mxu0 0
  %6364 = vmatpush1.bf16.msra.mxu0 0
  %6365 = vmatprep.subr.bf16.mxu0 0
  %6366 = vmatpush1.bf16.msra.mxu0 0
  %6367 = vmatprep.subr.bf16.mxu0 0
  %6368 = vmatpush1.bf16.msra.mxu0 0
  %6369 = vmatprep.subr.bf16.mxu0 %v5703
  %6370 = vmatpush1.bf16.msra.mxu0 %v5700
  %6371 = vmatprep.subr.bf16.mxu0 %v5568
  %6372 = vmatpush1.bf16.msra.mxu0 %v5567
  %6373 = vmatprep.subr.bf16.mxu0 %v5536
  %6374 = vmatpush1.bf16.msra.mxu0 %v5535
  %6375 = vmatprep.subr.bf16.mxu0 0
  %6376 = vmatpush2.bf16.msra.mxu0 0
  %6377 = vmatprep.subr.bf16.mxu0 0
  %6378 = vmatpush2.bf16.msra.mxu0 0
  %6379 = vmatprep.subr.bf16.mxu0 0
  %6380 = vmatpush2.bf16.msra.mxu0 0
  %6381 = vmatprep.subr.bf16.mxu0 0
  %6382 = vmatpush2.bf16.msra.mxu0 0
  %6383 = vmatprep.subr.bf16.mxu0 0
  %6384 = vmatpush2.bf16.msra.mxu0 0
  %6385 = vmatprep.subr.bf16.mxu0 0
  %6386 = vmatpush2.bf16.msra.mxu0 0
  %6387 = vmatprep.subr.bf16.mxu0 0
  %6388 = vmatpush2.bf16.msra.mxu0 0
  %6389 = vmatprep.subr.bf16.mxu0 0
  %6390 = vmatpush2.bf16.msra.mxu0 0
  %6391 = vmatprep.mubr.bf16.mxu0 0
  %6392 = vmatmul.mubr.bf16.gmra.mxu0 %v5619
  %v6393 = vpop.f32.mrf.mxu0
  %v6394 = vadd.f32 0.0, %v6393
  %v6395 = vpop.f32.mrf.mxu0
  %v6396 = vadd.f32 0.0, %v6395
  %v6397 = vpop.f32.mrf.mxu0
  %v6398 = vadd.f32 0.0, %v6397
  %v6399 = vpop.f32.mrf.mxu0
  %v6400 = vadd.f32 0.0, %v6399
  %6401 = vmatprep.mubr.bf16.mxu0 0
  %6402 = vmatmul.mubr.bf16.gmra.mxu0 %v5622
  %v6403 = vpop.f32.mrf.mxu0
  %v6404 = vadd.f32 0.0, %v6403
  %v6405 = vpop.f32.mrf.mxu0
  %v6406 = vadd.f32 0.0, %v6405
  %v6407 = vpop.f32.mrf.mxu0
  %v6408 = vadd.f32 0.0, %v6407
  %v6409 = vpop.f32.mrf.mxu0
  %v6410 = vadd.f32 0.0, %v6409
  %6411 = vdwg.mxu0
  %6412 = vmatprep.subr.bf16.mxu0 0
  %6413 = vmatpush1.bf16.msra.mxu0 0
  %6414 = vmatprep.subr.bf16.mxu0 0
  %6415 = vmatpush1.bf16.msra.mxu0 0
  %6416 = vmatprep.subr.bf16.mxu0 0
  %6417 = vmatpush1.bf16.msra.mxu0 0
  %6418 = vmatprep.subr.bf16.mxu0 0
  %6419 = vmatpush1.bf16.msra.mxu0 0
  %6420 = vmatprep.subr.bf16.mxu0 0
  %6421 = vmatpush1.bf16.msra.mxu0 0
  %6422 = vmatprep.subr.bf16.mxu0 %v5709
  %6423 = vmatpush1.bf16.msra.mxu0 %v5706
  %6424 = vmatprep.subr.bf16.mxu0 %v5570
  %6425 = vmatpush1.bf16.msra.mxu0 %v5569
  %6426 = vmatprep.subr.bf16.mxu0 %v5538
  %6427 = vmatpush1.bf16.msra.mxu0 %v5537
  %6428 = vmatprep.subr.bf16.mxu0 0
  %6429 = vmatpush2.bf16.msra.mxu0 0
  %6430 = vmatprep.subr.bf16.mxu0 0
  %6431 = vmatpush2.bf16.msra.mxu0 0
  %6432 = vmatprep.subr.bf16.mxu0 0
  %6433 = vmatpush2.bf16.msra.mxu0 0
  %6434 = vmatprep.subr.bf16.mxu0 0
  %6435 = vmatpush2.bf16.msra.mxu0 0
  %6436 = vmatprep.subr.bf16.mxu0 0
  %6437 = vmatpush2.bf16.msra.mxu0 0
  %6438 = vmatprep.subr.bf16.mxu0 0
  %6439 = vmatpush2.bf16.msra.mxu0 0
  %6440 = vmatprep.subr.bf16.mxu0 0
  %6441 = vmatpush2.bf16.msra.mxu0 0
  %6442 = vmatprep.subr.bf16.mxu0 0
  %6443 = vmatpush2.bf16.msra.mxu0 0
  %6444 = vmatprep.mubr.bf16.mxu0 0
  %6445 = vmatmul.mubr.bf16.gmra.mxu0 %v5619
  %v6446 = vpop.f32.mrf.mxu0
  %v6447 = vadd.f32 0.0, %v6446
  %v6448 = vpop.f32.mrf.mxu0
  %v6449 = vadd.f32 0.0, %v6448
  %v6450 = vpop.f32.mrf.mxu0
  %v6451 = vadd.f32 0.0, %v6450
  %v6452 = vpop.f32.mrf.mxu0
  %v6453 = vadd.f32 0.0, %v6452
  %6454 = vmatprep.mubr.bf16.mxu0 0
  %6455 = vmatmul.mubr.bf16.gmra.mxu0 %v5622
  %v6456 = vpop.f32.mrf.mxu0
  %v6457 = vadd.f32 0.0, %v6456
  %v6458 = vpop.f32.mrf.mxu0
  %v6459 = vadd.f32 0.0, %v6458
  %v6460 = vpop.f32.mrf.mxu0
  %v6461 = vadd.f32 0.0, %v6460
  %v6462 = vpop.f32.mrf.mxu0
  %v6463 = vadd.f32 0.0, %v6462
  %6464 = vdwg.mxu0
  %6465 = vmatprep.subr.bf16.mxu0 0
  %6466 = vmatpush1.bf16.msra.mxu0 0
  %6467 = vmatprep.subr.bf16.mxu0 0
  %6468 = vmatpush1.bf16.msra.mxu0 0
  %6469 = vmatprep.subr.bf16.mxu0 0
  %6470 = vmatpush1.bf16.msra.mxu0 0
  %6471 = vmatprep.subr.bf16.mxu0 0
  %6472 = vmatpush1.bf16.msra.mxu0 0
  %6473 = vmatprep.subr.bf16.mxu0 0
  %6474 = vmatpush1.bf16.msra.mxu0 0
  %6475 = vmatprep.subr.bf16.mxu0 %v5715
  %6476 = vmatpush1.bf16.msra.mxu0 %v5712
  %6477 = vmatprep.subr.bf16.mxu0 %v5572
  %6478 = vmatpush1.bf16.msra.mxu0 %v5571
  %6479 = vmatprep.subr.bf16.mxu0 %v5540
  %6480 = vmatpush1.bf16.msra.mxu0 %v5539
  %6481 = vmatprep.subr.bf16.mxu0 0
  %6482 = vmatpush2.bf16.msra.mxu0 0
  %6483 = vmatprep.subr.bf16.mxu0 0
  %6484 = vmatpush2.bf16.msra.mxu0 0
  %6485 = vmatprep.subr.bf16.mxu0 0
  %6486 = vmatpush2.bf16.msra.mxu0 0
  %6487 = vmatprep.subr.bf16.mxu0 0
  %6488 = vmatpush2.bf16.msra.mxu0 0
  %6489 = vmatprep.subr.bf16.mxu0 0
  %6490 = vmatpush2.bf16.msra.mxu0 0
  %6491 = vmatprep.subr.bf16.mxu0 0
  %6492 = vmatpush2.bf16.msra.mxu0 0
  %6493 = vmatprep.subr.bf16.mxu0 0
  %6494 = vmatpush2.bf16.msra.mxu0 0
  %6495 = vmatprep.subr.bf16.mxu0 0
  %6496 = vmatpush2.bf16.msra.mxu0 0
  %6497 = vmatprep.mubr.bf16.mxu0 0
  %6498 = vmatmul.mubr.bf16.gmra.mxu0 %v5619
  %v6499 = vpop.f32.mrf.mxu0
  %v6500 = vadd.f32 0.0, %v6499
  %v6501 = vpop.f32.mrf.mxu0
  %v6502 = vadd.f32 0.0, %v6501
  %v6503 = vpop.f32.mrf.mxu0
  %v6504 = vadd.f32 0.0, %v6503
  %v6505 = vpop.f32.mrf.mxu0
  %v6506 = vadd.f32 0.0, %v6505
  %6507 = vmatprep.mubr.bf16.mxu0 0
  %6508 = vmatmul.mubr.bf16.gmra.mxu0 %v5622
  %v6509 = vpop.f32.mrf.mxu0
  %v6510 = vadd.f32 0.0, %v6509
  %v6511 = vpop.f32.mrf.mxu0
  %v6512 = vadd.f32 0.0, %v6511
  %v6513 = vpop.f32.mrf.mxu0
  %v6514 = vadd.f32 0.0, %v6513
  %v6515 = vpop.f32.mrf.mxu0
  %v6516 = vadd.f32 0.0, %v6515
  %6517 = vdwg.mxu0
  %6518 = vmatprep.subr.bf16.mxu0 0
  %6519 = vmatpush1.bf16.msra.mxu0 0
  %6520 = vmatprep.subr.bf16.mxu0 0
  %6521 = vmatpush1.bf16.msra.mxu0 0
  %6522 = vmatprep.subr.bf16.mxu0 0
  %6523 = vmatpush1.bf16.msra.mxu0 0
  %6524 = vmatprep.subr.bf16.mxu0 0
  %6525 = vmatpush1.bf16.msra.mxu0 0
  %6526 = vmatprep.subr.bf16.mxu0 0
  %6527 = vmatpush1.bf16.msra.mxu0 0
  %6528 = vmatprep.subr.bf16.mxu0 %v5721
  %6529 = vmatpush1.bf16.msra.mxu0 %v5718
  %6530 = vmatprep.subr.bf16.mxu0 %v5574
  %6531 = vmatpush1.bf16.msra.mxu0 %v5573
  %6532 = vmatprep.subr.bf16.mxu0 %v5542
  %6533 = vmatpush1.bf16.msra.mxu0 %v5541
  %6534 = vmatprep.subr.bf16.mxu0 0
  %6535 = vmatpush2.bf16.msra.mxu0 0
  %6536 = vmatprep.subr.bf16.mxu0 0
  %6537 = vmatpush2.bf16.msra.mxu0 0
  %6538 = vmatprep.subr.bf16.mxu0 0
  %6539 = vmatpush2.bf16.msra.mxu0 0
  %6540 = vmatprep.subr.bf16.mxu0 0
  %6541 = vmatpush2.bf16.msra.mxu0 0
  %6542 = vmatprep.subr.bf16.mxu0 0
  %6543 = vmatpush2.bf16.msra.mxu0 0
  %6544 = vmatprep.subr.bf16.mxu0 0
  %6545 = vmatpush2.bf16.msra.mxu0 0
  %6546 = vmatprep.subr.bf16.mxu0 0
  %6547 = vmatpush2.bf16.msra.mxu0 0
  %6548 = vmatprep.subr.bf16.mxu0 0
  %6549 = vmatpush2.bf16.msra.mxu0 0
  %6550 = vmatprep.mubr.bf16.mxu0 0
  %6551 = vmatmul.mubr.bf16.gmra.mxu0 %v5619
  %v6552 = vpop.f32.mrf.mxu0
  %v6553 = vadd.f32 0.0, %v6552
  %v6554 = vpop.f32.mrf.mxu0
  %v6555 = vadd.f32 0.0, %v6554
  %v6556 = vpop.f32.mrf.mxu0
  %v6557 = vadd.f32 0.0, %v6556
  %v6558 = vpop.f32.mrf.mxu0
  %v6559 = vadd.f32 0.0, %v6558
  %6560 = vmatprep.mubr.bf16.mxu0 0
  %6561 = vmatmul.mubr.bf16.gmra.mxu0 %v5622
  %v6562 = vpop.f32.mrf.mxu0
  %v6563 = vadd.f32 0.0, %v6562
  %v6564 = vpop.f32.mrf.mxu0
  %v6565 = vadd.f32 0.0, %v6564
  %v6566 = vpop.f32.mrf.mxu0
  %v6567 = vadd.f32 0.0, %v6566
  %v6568 = vpop.f32.mrf.mxu0
  %v6569 = vadd.f32 0.0, %v6568
  %6570 = vdwg.mxu0
  %v6571 = vmax.f32 %v5758, 0.0
  %v6572 = vmax.f32 %v5760, 0.0
  %v6573 = vmax.f32 %v5811, 0.0
  %v6574 = vmax.f32 %v5813, 0.0
  %v6575 = vmax.f32 %v5864, 0.0
  %v6576 = vmax.f32 %v5866, 0.0
  %v6577 = vmax.f32 %v5917, 0.0
  %v6578 = vmax.f32 %v5919, 0.0
  %v6579 = vmax.f32 %v5970, 0.0
  %v6580 = vmax.f32 %v5972, 0.0
  %v6581 = vmax.f32 %v6023, 0.0
  %v6582 = vmax.f32 %v6025, 0.0
  %v6583 = vmax.f32 %v6076, 0.0
  %v6584 = vmax.f32 %v6078, 0.0
  %v6585 = vmax.f32 %v6129, 0.0
  %v6586 = vmax.f32 %v6131, 0.0
  %v6587 = vmax.f32 %v6182, 0.0
  %v6588 = vmax.f32 %v6184, 0.0
  %v6589 = vmax.f32 %v6235, 0.0
  %v6590 = vmax.f32 %v6237, 0.0
  %v6591 = vmax.f32 %v6288, 0.0
  %v6592 = vmax.f32 %v6290, 0.0
  %v6593 = vmax.f32 %v6341, 0.0
  %v6594 = vmax.f32 %v6343, 0.0
  %v6595 = vmax.f32 %v6394, 0.0
  %v6596 = vmax.f32 %v6396, 0.0
  %v6597 = vmax.f32 %v6447, 0.0
  %v6598 = vmax.f32 %v6449, 0.0
  %v6599 = vmax.f32 %v6500, 0.0
  %v6600 = vmax.f32 %v6502, 0.0
  %v6601 = vmax.f32 %v6553, 0.0
  %v6602 = vmax.f32 %v6555, 0.0
  %v6603 = vmax.f32 %v5762, 0.0
  %v6604 = vmax.f32 %v5764, 0.0
  %v6605 = vmax.f32 %v5815, 0.0
  %v6606 = vmax.f32 %v5817, 0.0
  %v6607 = vmax.f32 %v5868, 0.0
  %v6608 = vmax.f32 %v5870, 0.0
  %v6609 = vmax.f32 %v5921, 0.0
  %v6610 = vmax.f32 %v5923, 0.0
  %v6611 = vmax.f32 %v5974, 0.0
  %v6612 = vmax.f32 %v5976, 0.0
  %v6613 = vmax.f32 %v6027, 0.0
  %v6614 = vmax.f32 %v6029, 0.0
  %v6615 = vmax.f32 %v6080, 0.0
  %v6616 = vmax.f32 %v6082, 0.0
  %v6617 = vmax.f32 %v6133, 0.0
  %v6618 = vmax.f32 %v6135, 0.0
  %v6619 = vmax.f32 %v6186, 0.0
  %v6620 = vmax.f32 %v6188, 0.0
  %v6621 = vmax.f32 %v6239, 0.0
  %v6622 = vmax.f32 %v6241, 0.0
  %v6623 = vmax.f32 %v6292, 0.0
  %v6624 = vmax.f32 %v6294, 0.0
  %v6625 = vmax.f32 %v6345, 0.0
  %v6626 = vmax.f32 %v6347, 0.0
  %v6627 = vmax.f32 %v6398, 0.0
  %v6628 = vmax.f32 %v6400, 0.0
  %v6629 = vmax.f32 %v6451, 0.0
  %v6630 = vmax.f32 %v6453, 0.0
  %v6631 = vmax.f32 %v6504, 0.0
  %v6632 = vmax.f32 %v6506, 0.0
  %v6633 = vmax.f32 %v6557, 0.0
  %v6634 = vmax.f32 %v6559, 0.0
  %v6635 = vmax.f32 %v5768, 0.0
  %v6636 = vmax.f32 %v5770, 0.0
  %v6637 = vmax.f32 %v5821, 0.0
  %v6638 = vmax.f32 %v5823, 0.0
  %v6639 = vmax.f32 %v5874, 0.0
  %v6640 = vmax.f32 %v5876, 0.0
  %v6641 = vmax.f32 %v5927, 0.0
  %v6642 = vmax.f32 %v5929, 0.0
  %v6643 = vmax.f32 %v5980, 0.0
  %v6644 = vmax.f32 %v5982, 0.0
  %v6645 = vmax.f32 %v6033, 0.0
  %v6646 = vmax.f32 %v6035, 0.0
  %v6647 = vmax.f32 %v6086, 0.0
  %v6648 = vmax.f32 %v6088, 0.0
  %v6649 = vmax.f32 %v6139, 0.0
  %v6650 = vmax.f32 %v6141, 0.0
  %v6651 = vmax.f32 %v6192, 0.0
  %v6652 = vmax.f32 %v6194, 0.0
  %v6653 = vmax.f32 %v6245, 0.0
  %v6654 = vmax.f32 %v6247, 0.0
  %v6655 = vmax.f32 %v6298, 0.0
  %v6656 = vmax.f32 %v6300, 0.0
  %v6657 = vmax.f32 %v6351, 0.0
  %v6658 = vmax.f32 %v6353, 0.0
  %v6659 = vmax.f32 %v6404, 0.0
  %v6660 = vmax.f32 %v6406, 0.0
  %v6661 = vmax.f32 %v6457, 0.0
  %v6662 = vmax.f32 %v6459, 0.0
  %v6663 = vmax.f32 %v6510, 0.0
  %v6664 = vmax.f32 %v6512, 0.0
  %v6665 = vmax.f32 %v6563, 0.0
  %v6666 = vmax.f32 %v6565, 0.0
  %v6667 = vmax.f32 %v5772, 0.0
  %v6668 = vmax.f32 %v5774, 0.0
  %v6669 = vmax.f32 %v5825, 0.0
  %v6670 = vmax.f32 %v5827, 0.0
  %v6671 = vmax.f32 %v5878, 0.0
  %v6672 = vmax.f32 %v5880, 0.0
  %v6673 = vmax.f32 %v5931, 0.0
  %v6674 = vmax.f32 %v5933, 0.0
  %v6675 = vmax.f32 %v5984, 0.0
  %v6676 = vmax.f32 %v5986, 0.0
  %v6677 = vmax.f32 %v6037, 0.0
  %v6678 = vmax.f32 %v6039, 0.0
  %v6679 = vmax.f32 %v6090, 0.0
  %v6680 = vmax.f32 %v6092, 0.0
  %v6681 = vmax.f32 %v6143, 0.0
  %v6682 = vmax.f32 %v6145, 0.0
  %v6683 = vmax.f32 %v6196, 0.0
  %v6684 = vmax.f32 %v6198, 0.0
  %v6685 = vmax.f32 %v6249, 0.0
  %v6686 = vmax.f32 %v6251, 0.0
  %v6687 = vmax.f32 %v6302, 0.0
  %v6688 = vmax.f32 %v6304, 0.0
  %v6689 = vmax.f32 %v6355, 0.0
  %v6690 = vmax.f32 %v6357, 0.0
  %v6691 = vmax.f32 %v6408, 0.0
  %v6692 = vmax.f32 %v6410, 0.0
  %v6693 = vmax.f32 %v6461, 0.0
  %v6694 = vmax.f32 %v6463, 0.0
  %v6695 = vmax.f32 %v6514, 0.0
  %v6696 = vmax.f32 %v6516, 0.0
  %v6697 = vmax.f32 %v6567, 0.0
  %v6698 = vmax.f32 %v6569, 0.0
  %v6699 = vld [vmem:[%s4] sm:$0xff]
  %v6700 = vld [vmem:[%s4 + $0x8] sm:$0xff]
  %v6701 = vld [vmem:[%s4 + $0x10] sm:$0xff]
  %v6702 = vld [vmem:[%s4 + $0x18] sm:$0xff]
  %v6707 = vlaneseq
  %v6708 = vshrl.u32 %v6707, 7
  %v6709 = vsub.s32 0, %v6708
  %v6710 = vrot.slane %v6699, %v6709
  %v6711 = vlaneseq
  %v6712 = vshrl.u32 %v6711, 7
  %v6713 = vsub.s32 1, %v6712
  %v6714 = vrot.slane %v6699, %v6713
  %v6715 = vlaneseq
  %v6716 = vshrl.u32 %v6715, 7
  %v6717 = vsub.s32 2, %v6716
  %v6718 = vrot.slane %v6699, %v6717
  %v6719 = vlaneseq
  %v6720 = vshrl.u32 %v6719, 7
  %v6721 = vsub.s32 3, %v6720
  %v6722 = vrot.slane %v6699, %v6721
  %v6723 = vlaneseq
  %v6724 = vshrl.u32 %v6723, 7
  %v6725 = vsub.s32 4, %v6724
  %v6726 = vrot.slane %v6699, %v6725
  %v6727 = vlaneseq
  %v6728 = vshrl.u32 %v6727, 7
  %v6729 = vsub.s32 5, %v6728
  %v6730 = vrot.slane %v6699, %v6729
  %v6731 = vlaneseq
  %v6732 = vshrl.u32 %v6731, 7
  %v6733 = vsub.s32 6, %v6732
  %v6734 = vrot.slane %v6699, %v6733
  %v6735 = vlaneseq
  %v6736 = vshrl.u32 %v6735, 7
  %v6737 = vsub.s32 7, %v6736
  %v6738 = vrot.slane %v6699, %v6737
  %v6739 = vlaneseq
  %v6740 = vshrl.u32 %v6739, 7
  %v6741 = vsub.s32 0, %v6740
  %v6742 = vrot.slane %v6700, %v6741
  %v6743 = vlaneseq
  %v6744 = vshrl.u32 %v6743, 7
  %v6745 = vsub.s32 1, %v6744
  %v6746 = vrot.slane %v6700, %v6745
  %v6747 = vlaneseq
  %v6748 = vshrl.u32 %v6747, 7
  %v6749 = vsub.s32 2, %v6748
  %v6750 = vrot.slane %v6700, %v6749
  %v6751 = vlaneseq
  %v6752 = vshrl.u32 %v6751, 7
  %v6753 = vsub.s32 3, %v6752
  %v6754 = vrot.slane %v6700, %v6753
  %v6755 = vlaneseq
  %v6756 = vshrl.u32 %v6755, 7
  %v6757 = vsub.s32 4, %v6756
  %v6758 = vrot.slane %v6700, %v6757
  %v6759 = vlaneseq
  %v6760 = vshrl.u32 %v6759, 7
  %v6761 = vsub.s32 5, %v6760
  %v6762 = vrot.slane %v6700, %v6761
  %v6763 = vlaneseq
  %v6764 = vshrl.u32 %v6763, 7
  %v6765 = vsub.s32 6, %v6764
  %v6766 = vrot.slane %v6700, %v6765
  %v6767 = vlaneseq
  %v6768 = vshrl.u32 %v6767, 7
  %v6769 = vsub.s32 7, %v6768
  %v6770 = vrot.slane %v6700, %v6769
  %v6771 = vlaneseq
  %v6772 = vshrl.u32 %v6771, 7
  %v6773 = vsub.s32 0, %v6772
  %v6774 = vrot.slane %v6701, %v6773
  %v6775 = vlaneseq
  %v6776 = vshrl.u32 %v6775, 7
  %v6777 = vsub.s32 1, %v6776
  %v6778 = vrot.slane %v6701, %v6777
  %v6779 = vlaneseq
  %v6780 = vshrl.u32 %v6779, 7
  %v6781 = vsub.s32 2, %v6780
  %v6782 = vrot.slane %v6701, %v6781
  %v6783 = vlaneseq
  %v6784 = vshrl.u32 %v6783, 7
  %v6785 = vsub.s32 3, %v6784
  %v6786 = vrot.slane %v6701, %v6785
  %v6787 = vlaneseq
  %v6788 = vshrl.u32 %v6787, 7
  %v6789 = vsub.s32 4, %v6788
  %v6790 = vrot.slane %v6701, %v6789
  %v6791 = vlaneseq
  %v6792 = vshrl.u32 %v6791, 7
  %v6793 = vsub.s32 5, %v6792
  %v6794 = vrot.slane %v6701, %v6793
  %v6795 = vlaneseq
  %v6796 = vshrl.u32 %v6795, 7
  %v6797 = vsub.s32 6, %v6796
  %v6798 = vrot.slane %v6701, %v6797
  %v6799 = vlaneseq
  %v6800 = vshrl.u32 %v6799, 7
  %v6801 = vsub.s32 7, %v6800
  %v6802 = vrot.slane %v6701, %v6801
  %v6803 = vlaneseq
  %v6804 = vshrl.u32 %v6803, 7
  %v6805 = vsub.s32 0, %v6804
  %v6806 = vrot.slane %v6702, %v6805
  %v6807 = vlaneseq
  %v6808 = vshrl.u32 %v6807, 7
  %v6809 = vsub.s32 1, %v6808
  %v6810 = vrot.slane %v6702, %v6809
  %v6811 = vlaneseq
  %v6812 = vshrl.u32 %v6811, 7
  %v6813 = vsub.s32 2, %v6812
  %v6814 = vrot.slane %v6702, %v6813
  %v6815 = vlaneseq
  %v6816 = vshrl.u32 %v6815, 7
  %v6817 = vsub.s32 3, %v6816
  %v6818 = vrot.slane %v6702, %v6817
  %v6819 = vlaneseq
  %v6820 = vshrl.u32 %v6819, 7
  %v6821 = vsub.s32 4, %v6820
  %v6822 = vrot.slane %v6702, %v6821
  %v6823 = vlaneseq
  %v6824 = vshrl.u32 %v6823, 7
  %v6825 = vsub.s32 5, %v6824
  %v6826 = vrot.slane %v6702, %v6825
  %v6827 = vlaneseq
  %v6828 = vshrl.u32 %v6827, 7
  %v6829 = vsub.s32 6, %v6828
  %v6830 = vrot.slane %v6702, %v6829
  %v6831 = vlaneseq
  %v6832 = vshrl.u32 %v6831, 7
  %v6833 = vsub.s32 7, %v6832
  %v6834 = vrot.slane %v6702, %v6833
  %v6867 = vmul.f32 %v6571, %v6710
  %v6868 = vmul.f32 %v6572, %v6714
  %v6869 = vmul.f32 %v6573, %v6718
  %v6870 = vmul.f32 %v6574, %v6722
  %v6871 = vmul.f32 %v6575, %v6726
  %v6872 = vmul.f32 %v6576, %v6730
  %v6873 = vmul.f32 %v6577, %v6734
  %v6874 = vmul.f32 %v6578, %v6738
  %v6875 = vmul.f32 %v6579, %v6742
  %v6876 = vmul.f32 %v6580, %v6746
  %v6877 = vmul.f32 %v6581, %v6750
  %v6878 = vmul.f32 %v6582, %v6754
  %v6879 = vmul.f32 %v6583, %v6758
  %v6880 = vmul.f32 %v6584, %v6762
  %v6881 = vmul.f32 %v6585, %v6766
  %v6882 = vmul.f32 %v6586, %v6770
  %v6883 = vmul.f32 %v6587, %v6774
  %v6884 = vmul.f32 %v6588, %v6778
  %v6885 = vmul.f32 %v6589, %v6782
  %v6886 = vmul.f32 %v6590, %v6786
  %v6887 = vmul.f32 %v6591, %v6790
  %v6888 = vmul.f32 %v6592, %v6794
  %v6889 = vmul.f32 %v6593, %v6798
  %v6890 = vmul.f32 %v6594, %v6802
  %v6891 = vmul.f32 %v6595, %v6806
  %v6892 = vmul.f32 %v6596, %v6810
  %v6893 = vmul.f32 %v6597, %v6814
  %v6894 = vmul.f32 %v6598, %v6818
  %v6895 = vmul.f32 %v6599, %v6822
  %v6896 = vmul.f32 %v6600, %v6826
  %v6897 = vmul.f32 %v6601, %v6830
  %v6898 = vmul.f32 %v6602, %v6834
  %v6899 = vmul.f32 %v6603, %v6710
  %v6900 = vmul.f32 %v6604, %v6714
  %v6901 = vmul.f32 %v6605, %v6718
  %v6902 = vmul.f32 %v6606, %v6722
  %v6903 = vmul.f32 %v6607, %v6726
  %v6904 = vmul.f32 %v6608, %v6730
  %v6905 = vmul.f32 %v6609, %v6734
  %v6906 = vmul.f32 %v6610, %v6738
  %v6907 = vmul.f32 %v6611, %v6742
  %v6908 = vmul.f32 %v6612, %v6746
  %v6909 = vmul.f32 %v6613, %v6750
  %v6910 = vmul.f32 %v6614, %v6754
  %v6911 = vmul.f32 %v6615, %v6758
  %v6912 = vmul.f32 %v6616, %v6762
  %v6913 = vmul.f32 %v6617, %v6766
  %v6914 = vmul.f32 %v6618, %v6770
  %v6915 = vmul.f32 %v6619, %v6774
  %v6916 = vmul.f32 %v6620, %v6778
  %v6917 = vmul.f32 %v6621, %v6782
  %v6918 = vmul.f32 %v6622, %v6786
  %v6919 = vmul.f32 %v6623, %v6790
  %v6920 = vmul.f32 %v6624, %v6794
  %v6921 = vmul.f32 %v6625, %v6798
  %v6922 = vmul.f32 %v6626, %v6802
  %v6923 = vmul.f32 %v6627, %v6806
  %v6924 = vmul.f32 %v6628, %v6810
  %v6925 = vmul.f32 %v6629, %v6814
  %v6926 = vmul.f32 %v6630, %v6818
  %v6927 = vmul.f32 %v6631, %v6822
  %v6928 = vmul.f32 %v6632, %v6826
  %v6929 = vmul.f32 %v6633, %v6830
  %v6930 = vmul.f32 %v6634, %v6834
  %v6931 = vmul.f32 %v6635, %v6710
  %v6932 = vmul.f32 %v6636, %v6714
  %v6933 = vmul.f32 %v6637, %v6718
  %v6934 = vmul.f32 %v6638, %v6722
  %v6935 = vmul.f32 %v6639, %v6726
  %v6936 = vmul.f32 %v6640, %v6730
  %v6937 = vmul.f32 %v6641, %v6734
  %v6938 = vmul.f32 %v6642, %v6738
  %v6939 = vmul.f32 %v6643, %v6742
  %v6940 = vmul.f32 %v6644, %v6746
  %v6941 = vmul.f32 %v6645, %v6750
  %v6942 = vmul.f32 %v6646, %v6754
  %v6943 = vmul.f32 %v6647, %v6758
  %v6944 = vmul.f32 %v6648, %v6762
  %v6945 = vmul.f32 %v6649, %v6766
  %v6946 = vmul.f32 %v6650, %v6770
  %v6947 = vmul.f32 %v6651, %v6774
  %v6948 = vmul.f32 %v6652, %v6778
  %v6949 = vmul.f32 %v6653, %v6782
  %v6950 = vmul.f32 %v6654, %v6786
  %v6951 = vmul.f32 %v6655, %v6790
  %v6952 = vmul.f32 %v6656, %v6794
  %v6953 = vmul.f32 %v6657, %v6798
  %v6954 = vmul.f32 %v6658, %v6802
  %v6955 = vmul.f32 %v6659, %v6806
  %v6956 = vmul.f32 %v6660, %v6810
  %v6957 = vmul.f32 %v6661, %v6814
  %v6958 = vmul.f32 %v6662, %v6818
  %v6959 = vmul.f32 %v6663, %v6822
  %v6960 = vmul.f32 %v6664, %v6826
  %v6961 = vmul.f32 %v6665, %v6830
  %v6962 = vmul.f32 %v6666, %v6834
  %v6963 = vmul.f32 %v6667, %v6710
  %v6964 = vmul.f32 %v6668, %v6714
  %v6965 = vmul.f32 %v6669, %v6718
  %v6966 = vmul.f32 %v6670, %v6722
  %v6967 = vmul.f32 %v6671, %v6726
  %v6968 = vmul.f32 %v6672, %v6730
  %v6969 = vmul.f32 %v6673, %v6734
  %v6970 = vmul.f32 %v6674, %v6738
  %v6971 = vmul.f32 %v6675, %v6742
  %v6972 = vmul.f32 %v6676, %v6746
  %v6973 = vmul.f32 %v6677, %v6750
  %v6974 = vmul.f32 %v6678, %v6754
  %v6975 = vmul.f32 %v6679, %v6758
  %v6976 = vmul.f32 %v6680, %v6762
  %v6977 = vmul.f32 %v6681, %v6766
  %v6978 = vmul.f32 %v6682, %v6770
  %v6979 = vmul.f32 %v6683, %v6774
  %v6980 = vmul.f32 %v6684, %v6778
  %v6981 = vmul.f32 %v6685, %v6782
  %v6982 = vmul.f32 %v6686, %v6786
  %v6983 = vmul.f32 %v6687, %v6790
  %v6984 = vmul.f32 %v6688, %v6794
  %v6985 = vmul.f32 %v6689, %v6798
  %v6986 = vmul.f32 %v6690, %v6802
  %v6987 = vmul.f32 %v6691, %v6806
  %v6988 = vmul.f32 %v6692, %v6810
  %v6989 = vmul.f32 %v6693, %v6814
  %v6990 = vmul.f32 %v6694, %v6818
  %v6991 = vmul.f32 %v6695, %v6822
  %v6992 = vmul.f32 %v6696, %v6826
  %v6993 = vmul.f32 %v6697, %v6830
  %v6994 = vmul.f32 %v6698, %v6834
  %v6995 = vmax.f32 %v6867, %v6883
  %v6996 = vmax.f32 %v6868, %v6884
  %v6997 = vmax.f32 %v6869, %v6885
  %v6998 = vmax.f32 %v6870, %v6886
  %v6999 = vmax.f32 %v6871, %v6887
  %v7000 = vmax.f32 %v6872, %v6888
  %v7001 = vmax.f32 %v6873, %v6889
  %v7002 = vmax.f32 %v6874, %v6890
  %v7003 = vmax.f32 %v6875, %v6891
  %v7004 = vmax.f32 %v6876, %v6892
  %v7005 = vmax.f32 %v6877, %v6893
  %v7006 = vmax.f32 %v6878, %v6894
  %v7007 = vmax.f32 %v6879, %v6895
  %v7008 = vmax.f32 %v6880, %v6896
  %v7009 = vmax.f32 %v6881, %v6897
  %v7010 = vmax.f32 %v6882, %v6898
  %v7011 = vmax.f32 %v6899, %v6915
  %v7012 = vmax.f32 %v6900, %v6916
  %v7013 = vmax.f32 %v6901, %v6917
  %v7014 = vmax.f32 %v6902, %v6918
  %v7015 = vmax.f32 %v6903, %v6919
  %v7016 = vmax.f32 %v6904, %v6920
  %v7017 = vmax.f32 %v6905, %v6921
  %v7018 = vmax.f32 %v6906, %v6922
  %v7019 = vmax.f32 %v6907, %v6923
  %v7020 = vmax.f32 %v6908, %v6924
  %v7021 = vmax.f32 %v6909, %v6925
  %v7022 = vmax.f32 %v6910, %v6926
  %v7023 = vmax.f32 %v6911, %v6927
  %v7024 = vmax.f32 %v6912, %v6928
  %v7025 = vmax.f32 %v6913, %v6929
  %v7026 = vmax.f32 %v6914, %v6930
  %v7027 = vmax.f32 %v6931, %v6947
  %v7028 = vmax.f32 %v6932, %v6948
  %v7029 = vmax.f32 %v6933, %v6949
  %v7030 = vmax.f32 %v6934, %v6950
  %v7031 = vmax.f32 %v6935, %v6951
  %v7032 = vmax.f32 %v6936, %v6952
  %v7033 = vmax.f32 %v6937, %v6953
  %v7034 = vmax.f32 %v6938, %v6954
  %v7035 = vmax.f32 %v6939, %v6955
  %v7036 = vmax.f32 %v6940, %v6956
  %v7037 = vmax.f32 %v6941, %v6957
  %v7038 = vmax.f32 %v6942, %v6958
  %v7039 = vmax.f32 %v6943, %v6959
  %v7040 = vmax.f32 %v6944, %v6960
  %v7041 = vmax.f32 %v6945, %v6961
  %v7042 = vmax.f32 %v6946, %v6962
  %v7043 = vmax.f32 %v6963, %v6979
  %v7044 = vmax.f32 %v6964, %v6980
  %v7045 = vmax.f32 %v6965, %v6981
  %v7046 = vmax.f32 %v6966, %v6982
  %v7047 = vmax.f32 %v6967, %v6983
  %v7048 = vmax.f32 %v6968, %v6984
  %v7049 = vmax.f32 %v6969, %v6985
  %v7050 = vmax.f32 %v6970, %v6986
  %v7051 = vmax.f32 %v6971, %v6987
  %v7052 = vmax.f32 %v6972, %v6988
  %v7053 = vmax.f32 %v6973, %v6989
  %v7054 = vmax.f32 %v6974, %v6990
  %v7055 = vmax.f32 %v6975, %v6991
  %v7056 = vmax.f32 %v6976, %v6992
  %v7057 = vmax.f32 %v6977, %v6993
  %v7058 = vmax.f32 %v6978, %v6994
  %v7059 = vmax.f32 %v6995, %v7003
  %v7060 = vmax.f32 %v6996, %v7004
  %v7061 = vmax.f32 %v6997, %v7005
  %v7062 = vmax.f32 %v6998, %v7006
  %v7063 = vmax.f32 %v6999, %v7007
  %v7064 = vmax.f32 %v7000, %v7008
  %v7065 = vmax.f32 %v7001, %v7009
  %v7066 = vmax.f32 %v7002, %v7010
  %v7067 = vmax.f32 %v7011, %v7019
  %v7068 = vmax.f32 %v7012, %v7020
  %v7069 = vmax.f32 %v7013, %v7021
  %v7070 = vmax.f32 %v7014, %v7022
  %v7071 = vmax.f32 %v7015, %v7023
  %v7072 = vmax.f32 %v7016, %v7024
  %v7073 = vmax.f32 %v7017, %v7025
  %v7074 = vmax.f32 %v7018, %v7026
  %v7075 = vmax.f32 %v7027, %v7035
  %v7076 = vmax.f32 %v7028, %v7036
  %v7077 = vmax.f32 %v7029, %v7037
  %v7078 = vmax.f32 %v7030, %v7038
  %v7079 = vmax.f32 %v7031, %v7039
  %v7080 = vmax.f32 %v7032, %v7040
  %v7081 = vmax.f32 %v7033, %v7041
  %v7082 = vmax.f32 %v7034, %v7042
  %v7083 = vmax.f32 %v7043, %v7051
  %v7084 = vmax.f32 %v7044, %v7052
  %v7085 = vmax.f32 %v7045, %v7053
  %v7086 = vmax.f32 %v7046, %v7054
  %v7087 = vmax.f32 %v7047, %v7055
  %v7088 = vmax.f32 %v7048, %v7056
  %v7089 = vmax.f32 %v7049, %v7057
  %v7090 = vmax.f32 %v7050, %v7058
  %v7091 = vmax.f32 %v7059, %v7063
  %v7092 = vmax.f32 %v7060, %v7064
  %v7093 = vmax.f32 %v7061, %v7065
  %v7094 = vmax.f32 %v7062, %v7066
  %v7095 = vmax.f32 %v7067, %v7071
  %v7096 = vmax.f32 %v7068, %v7072
  %v7097 = vmax.f32 %v7069, %v7073
  %v7098 = vmax.f32 %v7070, %v7074
  %v7099 = vmax.f32 %v7075, %v7079
  %v7100 = vmax.f32 %v7076, %v7080
  %v7101 = vmax.f32 %v7077, %v7081
  %v7102 = vmax.f32 %v7078, %v7082
  %v7103 = vmax.f32 %v7083, %v7087
  %v7104 = vmax.f32 %v7084, %v7088
  %v7105 = vmax.f32 %v7085, %v7089
  %v7106 = vmax.f32 %v7086, %v7090
  %v7107 = vmax.f32 %v7091, %v7093
  %v7108 = vmax.f32 %v7092, %v7094
  %v7109 = vmax.f32 %v7095, %v7097
  %v7110 = vmax.f32 %v7096, %v7098
  %v7111 = vmax.f32 %v7099, %v7101
  %v7112 = vmax.f32 %v7100, %v7102
  %v7113 = vmax.f32 %v7103, %v7105
  %v7114 = vmax.f32 %v7104, %v7106
  %v7115 = vmax.f32 %v7107, %v7108
  %v7116 = vmax.f32 %v7109, %v7110
  %v7117 = vmax.f32 %v7111, %v7112
  %v7118 = vmax.f32 %v7113, %v7114
  %7119 = vst [vmem:[%s7] sm:$0xff] %v7115
  %7120 = vst [vmem:[%s7 + $0x8] sm:$0xff] %v7116
  %7121 = vst [vmem:[%s7 + $0x10] sm:$0xff] %v7117
  %7122 = vst [vmem:[%s7 + $0x18] sm:$0xff] %v7118
  // Predicated region
  $region30: #{sa_module_forward.1} parent=0 // pred_check
    _
  $region31: #{sa_module_forward.1} parent=0 // pred_check_branch
    %7124 = sbr.rel (0) target = $region33
  $region32: #{sa_module_forward.1} parent=0 // pred_region
    _
  $region33: #{sa_module_forward.1} parent=0 // pred_fallthru
    _
  // Predicated region
  $region34: #{sa_module_forward.1} parent=0 // pred_check
    _
  $region35: #{sa_module_forward.1} parent=0 // pred_check_branch
    %7126 = sbr.rel (0) target = $region37
  $region36: #{sa_module_forward.1} parent=0 // pred_region
    _
  $region37: #{sa_module_forward.1} parent=0 // pred_fallthru
    _

</llo_original>
